<compile_context>
chip_gen: v7x
topology: tpu7x:2x2x1
jax: 0.10.0
libtpu: 0.0.40
codegen_flags: <defaults>
</compile_context>

<pallas_src>
import functools

import numpy as np
import jax
import jax.numpy as jnp
from jax.experimental import pallas as pl
from jax.experimental.pallas import tpu as pltpu


# ------------------------------ fused kernel -------------------------------

def _encoder_layer_kernel(x_ref, w1_ref, w2_ref, s_ref, b_ref, out_ref,
                          pad1_ref, pad2_ref, *, ksize, pad, seq_len,
                          c_in, c_mid, c_gr, mm_dtype):
    """relu -> conv1 -> bn2 -> relu -> conv2 -> concat, one batch element.

    Layouts inside the kernel (sequence on sublanes, channels on lanes):
      x_ref   : (L, c_in)            input slice
      w1_ref  : (K, c_in, c_mid)     dense (block-diagonal) conv1 taps
      w2_ref  : (K, c_mid, c_gr)     dense (block-diagonal) conv2 taps
      s_ref   : (1, c_mid)           folded BatchNorm scale
      b_ref   : (1, c_mid)           folded BatchNorm shift
      out_ref : (L, c_in + c_gr)     cat([relu(x), conv2(...)], channel axis)
      pad1_ref: (L + 2*pad, c_in)    VMEM scratch: zero-padded relu(x)
      pad2_ref: (L + 2*pad, c_mid)   VMEM scratch: zero-padded hidden act
    """
    L, P, K = seq_len, pad, ksize

    # in-place ReLU on the input (this is also the first half of the concat)
    xr = jnp.maximum(x_ref[...], 0.0)

    # ---- conv1: zero-pad along L, then K shifted MXU matmuls --------------
    pad1_ref[...] = jnp.zeros_like(pad1_ref)
    pad1_ref[P:P + L, :] = xr
    h = jnp.zeros((L, c_mid), jnp.float32)
    for k in range(K):                      # static unroll, K = 2*pad + 1
        win = pad1_ref[k:k + L, :]          # sublane-offset window of the pad
        h = h + jnp.dot(win.astype(mm_dtype), w1_ref[k].astype(mm_dtype),
                        preferred_element_type=jnp.float32)

    # ---- BatchNorm1d (eval; folded to scale/shift) + ReLU -----------------
    h = jnp.maximum(h * s_ref[...] + b_ref[...], 0.0)

    # ---- conv2 -------------------------------------------------------------
    pad2_ref[...] = jnp.zeros_like(pad2_ref)
    pad2_ref[P:P + L, :] = h
    g = jnp.zeros((L, c_gr), jnp.float32)
    for k in range(K):
        win = pad2_ref[k:k + L, :]
        g = g + jnp.dot(win.astype(mm_dtype), w2_ref[k].astype(mm_dtype),
                        preferred_element_type=jnp.float32)

    # ---- torch.cat([x, xn], dim=1): channel axis == lane axis here --------
    out_ref[...] = jnp.concatenate([xr, g], axis=-1)


# --------------------------- host-side parameter prep ----------------------

def _expand_grouped_weight(w, groups):
    """Torch Conv1d weight (C_out, C_in//G, K) -> dense (K, C_in, C_out).

    Grouped conv becomes a dense conv with a block-diagonal weight so the
    kernel can run a single dense MXU matmul per tap.
    """
    c_out, c_in_g, ksize = w.shape
    assert c_out % groups == 0
    c_in = c_in_g * groups
    c_out_g = c_out // groups
    wk = jnp.transpose(w, (2, 1, 0))                       # (K, C_in//G, C_out)
    dense = jnp.zeros((ksize, c_in, c_out), w.dtype)
    for g in range(groups):
        dense = dense.at[:, g * c_in_g:(g + 1) * c_in_g,
                         g * c_out_g:(g + 1) * c_out_g].set(
            wk[:, :, g * c_out_g:(g + 1) * c_out_g])
    return dense


def prepare_encoder_params(params, groups, eps=1e-5):
    """One-time prep: fold BN into scale/shift, densify grouped conv weights."""
    scale = params["bn2_gamma"] / jnp.sqrt(params["bn2_var"] + eps)
    shift = params["bn2_beta"] - params["bn2_mean"] * scale
    c_mid = scale.shape[0]
    return {
        "w1": _expand_grouped_weight(params["conv1_w"], groups),  # (K,Cin,Cmid)
        "w2": _expand_grouped_weight(params["conv2_w"], groups),  # (K,Cmid,Cgr)
        "bn_scale": scale.reshape(1, c_mid).astype(jnp.float32),
        "bn_shift": shift.reshape(1, c_mid).astype(jnp.float32),
    }


# --------------------------------- forward ---------------------------------

def encoder_layer_forward(x, prep, *, pad, mm_dtype=jnp.float32):
    """EncoderLayer.forward. x: (B, C_in, L) f32 -> (B, C_in + growth, L) f32."""
    B, c_in, L = x.shape
    ksize, _, c_mid = prep["w1"].shape
    c_gr = prep["w2"].shape[2]
    assert ksize == 2 * pad + 1
    c_tot = c_in + c_gr

    # Channels-last inside the kernel: conv taps become sublane shifts and the
    # MXU contraction runs over channels (NCL <-> NLC only at the boundary).
    x_nlc = jnp.transpose(x, (0, 2, 1))                    # (B, L, C_in)

    kernel = functools.partial(
        _encoder_layer_kernel, ksize=ksize, pad=pad, seq_len=L,
        c_in=c_in, c_mid=c_mid, c_gr=c_gr, mm_dtype=mm_dtype)

    out_nlc = pl.pallas_call(
        kernel,
        out_shape=jax.ShapeDtypeStruct((B, L, c_tot), jnp.float32),
        grid=(B,),
        in_specs=[
            pl.BlockSpec((None, L, c_in), lambda b: (b, 0, 0)),       # x
            pl.BlockSpec((ksize, c_in, c_mid), lambda b: (0, 0, 0)),  # w1
            pl.BlockSpec((ksize, c_mid, c_gr), lambda b: (0, 0, 0)),  # w2
            pl.BlockSpec((1, c_mid), lambda b: (0, 0)),               # bn scale
            pl.BlockSpec((1, c_mid), lambda b: (0, 0)),               # bn shift
        ],
        out_specs=pl.BlockSpec((None, L, c_tot), lambda b: (b, 0, 0)),
        scratch_shapes=[
            pltpu.VMEM((L + 2 * pad, c_in), jnp.float32),
            pltpu.VMEM((L + 2 * pad, c_mid), jnp.float32),
        ],
        compiler_params=pltpu.CompilerParams(
            dimension_semantics=("parallel",)),
    )(x_nlc, prep["w1"], prep["w2"], prep["bn_scale"], prep["bn_shift"])

    return jnp.transpose(out_nlc, (0, 2, 1))               # back to (B, C, L)


# --------------------------- plain-XLA reference ----------------------------

def encoder_layer_reference(x, params, *, groups, pad, eps=1e-5):
    """Mirrors the PyTorch module (eval-mode BatchNorm, inplace first ReLU)."""
    dn = ("NCH", "OIH", "NCH")
    x = jnp.maximum(x, 0.0)                                # inplace ReLU on x
    xn = jax.lax.conv_general_dilated(
        x, params["conv1_w"], window_strides=(1,), padding=[(pad, pad)],
        dimension_numbers=dn, feature_group_count=groups)
    scale = params["bn2_gamma"] / jnp.sqrt(params["bn2_var"] + eps)
    shift = params["bn2_beta"] - params["bn2_mean"] * scale
    xn = xn * scale[None, :, None] + shift[None, :, None]
    xn = jnp.maximum(xn, 0.0)
    xn = jax.lax.conv_general_dilated(
        xn, params["conv2_w"], window_strides=(1,), padding=[(pad, pad)],
        dimension_numbers=dn, feature_group_count=groups)
    return jnp.concatenate([x, xn], axis=1)


# ----------------------------------- init -----------------------------------

def init_encoder_params(key, i_channel, o_channel, growth_rate, groups, ksize):
    k1, k2, k3, k4, k5, k6 = jax.random.split(key, 6)

    def conv_w(k, c_out, c_in_g, ks):
        bound = 1.0 / np.sqrt(c_in_g * ks)     # PyTorch kaiming_uniform(a=sqrt(5))
        return jax.random.uniform(k, (c_out, c_in_g, ks), jnp.float32,
                                  -bound, bound)

    return {
        "conv1_w": conv_w(k1, o_channel, i_channel // groups, ksize),
        "conv2_w": conv_w(k2, growth_rate, o_channel // groups, ksize),
        # bn2 affine + running statistics (randomized so the BN path is
        # actually exercised; bn1 exists in __init__ but is unused in forward).
        "bn2_gamma": jax.random.uniform(k3, (o_channel,), jnp.float32, 0.5, 1.5),
        "bn2_beta": 0.1 * jax.random.normal(k4, (o_channel,), jnp.float32),
        "bn2_mean": 0.1 * jax.random.normal(k5, (o_channel,), jnp.float32),
        "bn2_var": jax.random.uniform(k6, (o_channel,), jnp.float32, 0.5, 1.5),
    }


# ----------------------------------- main -----------------------------------

if __name__ == "__main__":
    # EncoderLayer(i_channel=16, o_channel=32, growth_rate=16, groups=2, pad2=7)
    B, L = 2, 128
    i_channel, o_channel, growth_rate, groups, pad2 = 16, 32, 16, 2, 7
    ksize = 2 * pad2 + 1

    key = jax.random.PRNGKey(0)
    kx, kp = jax.random.split(key)
    x = jax.random.normal(kx, (B, i_channel, L), jnp.float32)
    params = init_encoder_params(kp, i_channel, o_channel, growth_rate,
                                 groups, ksize)
    prep = prepare_encoder_params(params, groups)          # one-time host prep

    fwd = jax.jit(functools.partial(encoder_layer_forward, pad=pad2))
    out = fwd(x, prep)
    jax.block_until_ready(out)
    assert out.shape == (B, i_channel + growth_rate, L)
    assert out.dtype == jnp.float32

    # correctness vs. a plain-XLA reference of the same module
    ref = jax.jit(functools.partial(encoder_layer_reference,
                                    groups=groups, pad=pad2))(x, params)
    np.testing.assert_allclose(np.asarray(out), np.asarray(ref),
                               rtol=1e-2, atol=1e-2)

    print("KERNEL_OK")
</pallas_src>

<mosaic_0001>
module attributes {stable_mosaic.version = 11 : i64} {
  func.func @_encoder_layer_kernel(%arg0: i32, %arg1: memref<1x128x16xf32, #tpu.memory_space<vmem>>, %arg2: memref<15x16x32xf32, #tpu.memory_space<vmem>>, %arg3: memref<15x32x16xf32, #tpu.memory_space<vmem>>, %arg4: memref<1x32xf32, #tpu.memory_space<vmem>>, %arg5: memref<1x32xf32, #tpu.memory_space<vmem>>, %arg6: memref<1x128x32xf32, #tpu.memory_space<vmem>>, %arg7: memref<142x16xf32, #tpu.memory_space<vmem>>, %arg8: memref<142x32xf32, #tpu.memory_space<vmem>>) attributes {dimension_semantics = [#tpu.dimension_semantics<parallel>], iteration_bounds = array<i64: 2>, scalar_prefetch = 0 : i64, scratch_operands = 2 : i64, tpu.core_type = #tpu.core_type<tc>, window_params = [{transform_indices = @transform_0, window_bounds = array<i64: 1, 128, 16>}, {pipeline_mode = #tpu.pipeline_mode<synchronous>, transform_indices = @transform_1, window_bounds = array<i64: 15, 16, 32>}, {pipeline_mode = #tpu.pipeline_mode<synchronous>, transform_indices = @transform_2, window_bounds = array<i64: 15, 32, 16>}, {pipeline_mode = #tpu.pipeline_mode<synchronous>, transform_indices = @transform_3, window_bounds = array<i64: 1, 32>}, {pipeline_mode = #tpu.pipeline_mode<synchronous>, transform_indices = @transform_4, window_bounds = array<i64: 1, 32>}, {transform_indices = @transform_5, window_bounds = array<i64: 1, 128, 32>}]} {
    %c0 = arith.constant 0 : index
    %c0_0 = arith.constant 0 : index
    %c0_1 = arith.constant 0 : index
    %0 = vector.load %arg1[%c0, %c0_0, %c0_1] : memref<1x128x16xf32, #tpu.memory_space<vmem>>, vector<1x128x16xf32>
    %1 = vector.shape_cast %0 : vector<1x128x16xf32> to vector<128x16xf32>
    %cst = arith.constant 0.000000e+00 : f32
    %2 = vector.broadcast %cst : f32 to vector<128x16xf32>
    %3 = arith.maximumf %1, %2 : vector<128x16xf32>
    %cst_2 = arith.constant 0.000000e+00 : f32
    %4 = vector.broadcast %cst_2 : f32 to vector<142x16xf32>
    %c0_3 = arith.constant 0 : index
    %c0_4 = arith.constant 0 : index
    %5 = vector.load %arg7[%c0_3, %c0_4] : memref<142x16xf32, #tpu.memory_space<vmem>>, vector<142x16xf32>
    tpu.vector_store %arg7[%c0_3, %c0_4], %4 {strides = array<i32>} : memref<142x16xf32, #tpu.memory_space<vmem>>, vector<142x16xf32>,
    %c7 = arith.constant 7 : index
    %c0_5 = arith.constant 0 : index
    %6 = vector.load %arg7[%c7, %c0_5] : memref<142x16xf32, #tpu.memory_space<vmem>>, vector<128x16xf32>
    tpu.vector_store %arg7[%c7, %c0_5], %3 {strides = array<i32>} : memref<142x16xf32, #tpu.memory_space<vmem>>, vector<128x16xf32>,
    %cst_6 = arith.constant 0.000000e+00 : f32
    %7 = vector.broadcast %cst_6 : f32 to vector<128x32xf32>
    %c0_7 = arith.constant 0 : index
    %c0_8 = arith.constant 0 : index
    %8 = vector.load %arg7[%c0_7, %c0_8] : memref<142x16xf32, #tpu.memory_space<vmem>>, vector<128x16xf32>
    %c0_9 = arith.constant 0 : index
    %c0_10 = arith.constant 0 : index
    %c0_11 = arith.constant 0 : index
    %9 = vector.load %arg2[%c0_9, %c0_10, %c0_11] : memref<15x16x32xf32, #tpu.memory_space<vmem>>, vector<1x16x32xf32>
    %10 = vector.shape_cast %9 : vector<1x16x32xf32> to vector<16x32xf32>
    %cst_12 = arith.constant dense<0.000000e+00> : vector<128x32xf32>
    %11 = tpu.matmul %8, %10, %cst_12 {dimension_numbers = #tpu.dot_dimension_numbers<[1], [0], [0], [1], [0, 0, 1, 1], [], []>} : vector<128x16xf32>, vector<16x32xf32>, vector<128x32xf32> -> vector<128x32xf32>
    %12 = arith.addf %7, %11 : vector<128x32xf32>
    %c1 = arith.constant 1 : index
    %c0_13 = arith.constant 0 : index
    %13 = vector.load %arg7[%c1, %c0_13] : memref<142x16xf32, #tpu.memory_space<vmem>>, vector<128x16xf32>
    %c1_14 = arith.constant 1 : index
    %c0_15 = arith.constant 0 : index
    %c0_16 = arith.constant 0 : index
    %14 = vector.load %arg2[%c1_14, %c0_15, %c0_16] : memref<15x16x32xf32, #tpu.memory_space<vmem>>, vector<1x16x32xf32>
    %15 = vector.shape_cast %14 : vector<1x16x32xf32> to vector<16x32xf32>
    %cst_17 = arith.constant dense<0.000000e+00> : vector<128x32xf32>
    %16 = tpu.matmul %13, %15, %cst_17 {dimension_numbers = #tpu.dot_dimension_numbers<[1], [0], [0], [1], [0, 0, 1, 1], [], []>} : vector<128x16xf32>, vector<16x32xf32>, vector<128x32xf32> -> vector<128x32xf32>
    %17 = arith.addf %12, %16 : vector<128x32xf32>
    %c2 = arith.constant 2 : index
    %c0_18 = arith.constant 0 : index
    %18 = vector.load %arg7[%c2, %c0_18] : memref<142x16xf32, #tpu.memory_space<vmem>>, vector<128x16xf32>
    %c2_19 = arith.constant 2 : index
    %c0_20 = arith.constant 0 : index
    %c0_21 = arith.constant 0 : index
    %19 = vector.load %arg2[%c2_19, %c0_20, %c0_21] : memref<15x16x32xf32, #tpu.memory_space<vmem>>, vector<1x16x32xf32>
    %20 = vector.shape_cast %19 : vector<1x16x32xf32> to vector<16x32xf32>
    %cst_22 = arith.constant dense<0.000000e+00> : vector<128x32xf32>
    %21 = tpu.matmul %18, %20, %cst_22 {dimension_numbers = #tpu.dot_dimension_numbers<[1], [0], [0], [1], [0, 0, 1, 1], [], []>} : vector<128x16xf32>, vector<16x32xf32>, vector<128x32xf32> -> vector<128x32xf32>
    %22 = arith.addf %17, %21 : vector<128x32xf32>
    %c3 = arith.constant 3 : index
    %c0_23 = arith.constant 0 : index
    %23 = vector.load %arg7[%c3, %c0_23] : memref<142x16xf32, #tpu.memory_space<vmem>>, vector<128x16xf32>
    %c3_24 = arith.constant 3 : index
    %c0_25 = arith.constant 0 : index
    %c0_26 = arith.constant 0 : index
    %24 = vector.load %arg2[%c3_24, %c0_25, %c0_26] : memref<15x16x32xf32, #tpu.memory_space<vmem>>, vector<1x16x32xf32>
    %25 = vector.shape_cast %24 : vector<1x16x32xf32> to vector<16x32xf32>
    %cst_27 = arith.constant dense<0.000000e+00> : vector<128x32xf32>
    %26 = tpu.matmul %23, %25, %cst_27 {dimension_numbers = #tpu.dot_dimension_numbers<[1], [0], [0], [1], [0, 0, 1, 1], [], []>} : vector<128x16xf32>, vector<16x32xf32>, vector<128x32xf32> -> vector<128x32xf32>
    %27 = arith.addf %22, %26 : vector<128x32xf32>
    %c4 = arith.constant 4 : index
    %c0_28 = arith.constant 0 : index
    %28 = vector.load %arg7[%c4, %c0_28] : memref<142x16xf32, #tpu.memory_space<vmem>>, vector<128x16xf32>
    %c4_29 = arith.constant 4 : index
    %c0_30 = arith.constant 0 : index
    %c0_31 = arith.constant 0 : index
    %29 = vector.load %arg2[%c4_29, %c0_30, %c0_31] : memref<15x16x32xf32, #tpu.memory_space<vmem>>, vector<1x16x32xf32>
    %30 = vector.shape_cast %29 : vector<1x16x32xf32> to vector<16x32xf32>
    %cst_32 = arith.constant dense<0.000000e+00> : vector<128x32xf32>
    %31 = tpu.matmul %28, %30, %cst_32 {dimension_numbers = #tpu.dot_dimension_numbers<[1], [0], [0], [1], [0, 0, 1, 1], [], []>} : vector<128x16xf32>, vector<16x32xf32>, vector<128x32xf32> -> vector<128x32xf32>
    %32 = arith.addf %27, %31 : vector<128x32xf32>
    %c5 = arith.constant 5 : index
    %c0_33 = arith.constant 0 : index
    %33 = vector.load %arg7[%c5, %c0_33] : memref<142x16xf32, #tpu.memory_space<vmem>>, vector<128x16xf32>
    %c5_34 = arith.constant 5 : index
    %c0_35 = arith.constant 0 : index
    %c0_36 = arith.constant 0 : index
    %34 = vector.load %arg2[%c5_34, %c0_35, %c0_36] : memref<15x16x32xf32, #tpu.memory_space<vmem>>, vector<1x16x32xf32>
    %35 = vector.shape_cast %34 : vector<1x16x32xf32> to vector<16x32xf32>
    %cst_37 = arith.constant dense<0.000000e+00> : vector<128x32xf32>
    %36 = tpu.matmul %33, %35, %cst_37 {dimension_numbers = #tpu.dot_dimension_numbers<[1], [0], [0], [1], [0, 0, 1, 1], [], []>} : vector<128x16xf32>, vector<16x32xf32>, vector<128x32xf32> -> vector<128x32xf32>
    %37 = arith.addf %32, %36 : vector<128x32xf32>
    %c6 = arith.constant 6 : index
    %c0_38 = arith.constant 0 : index
    %38 = vector.load %arg7[%c6, %c0_38] : memref<142x16xf32, #tpu.memory_space<vmem>>, vector<128x16xf32>
    %c6_39 = arith.constant 6 : index
    %c0_40 = arith.constant 0 : index
    %c0_41 = arith.constant 0 : index
    %39 = vector.load %arg2[%c6_39, %c0_40, %c0_41] : memref<15x16x32xf32, #tpu.memory_space<vmem>>, vector<1x16x32xf32>
    %40 = vector.shape_cast %39 : vector<1x16x32xf32> to vector<16x32xf32>
    %cst_42 = arith.constant dense<0.000000e+00> : vector<128x32xf32>
    %41 = tpu.matmul %38, %40, %cst_42 {dimension_numbers = #tpu.dot_dimension_numbers<[1], [0], [0], [1], [0, 0, 1, 1], [], []>} : vector<128x16xf32>, vector<16x32xf32>, vector<128x32xf32> -> vector<128x32xf32>
    %42 = arith.addf %37, %41 : vector<128x32xf32>
    %c7_43 = arith.constant 7 : index
    %c0_44 = arith.constant 0 : index
    %43 = vector.load %arg7[%c7_43, %c0_44] : memref<142x16xf32, #tpu.memory_space<vmem>>, vector<128x16xf32>
    %c7_45 = arith.constant 7 : index
    %c0_46 = arith.constant 0 : index
    %c0_47 = arith.constant 0 : index
    %44 = vector.load %arg2[%c7_45, %c0_46, %c0_47] : memref<15x16x32xf32, #tpu.memory_space<vmem>>, vector<1x16x32xf32>
    %45 = vector.shape_cast %44 : vector<1x16x32xf32> to vector<16x32xf32>
    %cst_48 = arith.constant dense<0.000000e+00> : vector<128x32xf32>
    %46 = tpu.matmul %43, %45, %cst_48 {dimension_numbers = #tpu.dot_dimension_numbers<[1], [0], [0], [1], [0, 0, 1, 1], [], []>} : vector<128x16xf32>, vector<16x32xf32>, vector<128x32xf32> -> vector<128x32xf32>
    %47 = arith.addf %42, %46 : vector<128x32xf32>
    %c8 = arith.constant 8 : index
    %c0_49 = arith.constant 0 : index
    %48 = vector.load %arg7[%c8, %c0_49] : memref<142x16xf32, #tpu.memory_space<vmem>>, vector<128x16xf32>
    %c8_50 = arith.constant 8 : index
    %c0_51 = arith.constant 0 : index
    %c0_52 = arith.constant 0 : index
    %49 = vector.load %arg2[%c8_50, %c0_51, %c0_52] : memref<15x16x32xf32, #tpu.memory_space<vmem>>, vector<1x16x32xf32>
    %50 = vector.shape_cast %49 : vector<1x16x32xf32> to vector<16x32xf32>
    %cst_53 = arith.constant dense<0.000000e+00> : vector<128x32xf32>
    %51 = tpu.matmul %48, %50, %cst_53 {dimension_numbers = #tpu.dot_dimension_numbers<[1], [0], [0], [1], [0, 0, 1, 1], [], []>} : vector<128x16xf32>, vector<16x32xf32>, vector<128x32xf32> -> vector<128x32xf32>
    %52 = arith.addf %47, %51 : vector<128x32xf32>
    %c9 = arith.constant 9 : index
    %c0_54 = arith.constant 0 : index
    %53 = vector.load %arg7[%c9, %c0_54] : memref<142x16xf32, #tpu.memory_space<vmem>>, vector<128x16xf32>
    %c9_55 = arith.constant 9 : index
    %c0_56 = arith.constant 0 : index
    %c0_57 = arith.constant 0 : index
    %54 = vector.load %arg2[%c9_55, %c0_56, %c0_57] : memref<15x16x32xf32, #tpu.memory_space<vmem>>, vector<1x16x32xf32>
    %55 = vector.shape_cast %54 : vector<1x16x32xf32> to vector<16x32xf32>
    %cst_58 = arith.constant dense<0.000000e+00> : vector<128x32xf32>
    %56 = tpu.matmul %53, %55, %cst_58 {dimension_numbers = #tpu.dot_dimension_numbers<[1], [0], [0], [1], [0, 0, 1, 1], [], []>} : vector<128x16xf32>, vector<16x32xf32>, vector<128x32xf32> -> vector<128x32xf32>
    %57 = arith.addf %52, %56 : vector<128x32xf32>
    %c10 = arith.constant 10 : index
    %c0_59 = arith.constant 0 : index
    %58 = vector.load %arg7[%c10, %c0_59] : memref<142x16xf32, #tpu.memory_space<vmem>>, vector<128x16xf32>
    %c10_60 = arith.constant 10 : index
    %c0_61 = arith.constant 0 : index
    %c0_62 = arith.constant 0 : index
    %59 = vector.load %arg2[%c10_60, %c0_61, %c0_62] : memref<15x16x32xf32, #tpu.memory_space<vmem>>, vector<1x16x32xf32>
    %60 = vector.shape_cast %59 : vector<1x16x32xf32> to vector<16x32xf32>
    %cst_63 = arith.constant dense<0.000000e+00> : vector<128x32xf32>
    %61 = tpu.matmul %58, %60, %cst_63 {dimension_numbers = #tpu.dot_dimension_numbers<[1], [0], [0], [1], [0, 0, 1, 1], [], []>} : vector<128x16xf32>, vector<16x32xf32>, vector<128x32xf32> -> vector<128x32xf32>
    %62 = arith.addf %57, %61 : vector<128x32xf32>
    %c11 = arith.constant 11 : index
    %c0_64 = arith.constant 0 : index
    %63 = vector.load %arg7[%c11, %c0_64] : memref<142x16xf32, #tpu.memory_space<vmem>>, vector<128x16xf32>
    %c11_65 = arith.constant 11 : index
    %c0_66 = arith.constant 0 : index
    %c0_67 = arith.constant 0 : index
    %64 = vector.load %arg2[%c11_65, %c0_66, %c0_67] : memref<15x16x32xf32, #tpu.memory_space<vmem>>, vector<1x16x32xf32>
    %65 = vector.shape_cast %64 : vector<1x16x32xf32> to vector<16x32xf32>
    %cst_68 = arith.constant dense<0.000000e+00> : vector<128x32xf32>
    %66 = tpu.matmul %63, %65, %cst_68 {dimension_numbers = #tpu.dot_dimension_numbers<[1], [0], [0], [1], [0, 0, 1, 1], [], []>} : vector<128x16xf32>, vector<16x32xf32>, vector<128x32xf32> -> vector<128x32xf32>
    %67 = arith.addf %62, %66 : vector<128x32xf32>
    %c12 = arith.constant 12 : index
    %c0_69 = arith.constant 0 : index
    %68 = vector.load %arg7[%c12, %c0_69] : memref<142x16xf32, #tpu.memory_space<vmem>>, vector<128x16xf32>
    %c12_70 = arith.constant 12 : index
    %c0_71 = arith.constant 0 : index
    %c0_72 = arith.constant 0 : index
    %69 = vector.load %arg2[%c12_70, %c0_71, %c0_72] : memref<15x16x32xf32, #tpu.memory_space<vmem>>, vector<1x16x32xf32>
    %70 = vector.shape_cast %69 : vector<1x16x32xf32> to vector<16x32xf32>
    %cst_73 = arith.constant dense<0.000000e+00> : vector<128x32xf32>
    %71 = tpu.matmul %68, %70, %cst_73 {dimension_numbers = #tpu.dot_dimension_numbers<[1], [0], [0], [1], [0, 0, 1, 1], [], []>} : vector<128x16xf32>, vector<16x32xf32>, vector<128x32xf32> -> vector<128x32xf32>
    %72 = arith.addf %67, %71 : vector<128x32xf32>
    %c13 = arith.constant 13 : index
    %c0_74 = arith.constant 0 : index
    %73 = vector.load %arg7[%c13, %c0_74] : memref<142x16xf32, #tpu.memory_space<vmem>>, vector<128x16xf32>
    %c13_75 = arith.constant 13 : index
    %c0_76 = arith.constant 0 : index
    %c0_77 = arith.constant 0 : index
    %74 = vector.load %arg2[%c13_75, %c0_76, %c0_77] : memref<15x16x32xf32, #tpu.memory_space<vmem>>, vector<1x16x32xf32>
    %75 = vector.shape_cast %74 : vector<1x16x32xf32> to vector<16x32xf32>
    %cst_78 = arith.constant dense<0.000000e+00> : vector<128x32xf32>
    %76 = tpu.matmul %73, %75, %cst_78 {dimension_numbers = #tpu.dot_dimension_numbers<[1], [0], [0], [1], [0, 0, 1, 1], [], []>} : vector<128x16xf32>, vector<16x32xf32>, vector<128x32xf32> -> vector<128x32xf32>
    %77 = arith.addf %72, %76 : vector<128x32xf32>
    %c14 = arith.constant 14 : index
    %c0_79 = arith.constant 0 : index
    %78 = vector.load %arg7[%c14, %c0_79] : memref<142x16xf32, #tpu.memory_space<vmem>>, vector<128x16xf32>
    %c14_80 = arith.constant 14 : index
    %c0_81 = arith.constant 0 : index
    %c0_82 = arith.constant 0 : index
    %79 = vector.load %arg2[%c14_80, %c0_81, %c0_82] : memref<15x16x32xf32, #tpu.memory_space<vmem>>, vector<1x16x32xf32>
    %80 = vector.shape_cast %79 : vector<1x16x32xf32> to vector<16x32xf32>
    %cst_83 = arith.constant dense<0.000000e+00> : vector<128x32xf32>
    %81 = tpu.matmul %78, %80, %cst_83 {dimension_numbers = #tpu.dot_dimension_numbers<[1], [0], [0], [1], [0, 0, 1, 1], [], []>} : vector<128x16xf32>, vector<16x32xf32>, vector<128x32xf32> -> vector<128x32xf32>
    %82 = arith.addf %77, %81 : vector<128x32xf32>
    %c0_84 = arith.constant 0 : index
    %c0_85 = arith.constant 0 : index
    %83 = vector.load %arg4[%c0_84, %c0_85] : memref<1x32xf32, #tpu.memory_space<vmem>>, vector<1x32xf32>
    %84 = vector.broadcast %83 : vector<1x32xf32> to vector<128x32xf32>
    %85 = arith.mulf %82, %84 : vector<128x32xf32>
    %c0_86 = arith.constant 0 : index
    %c0_87 = arith.constant 0 : index
    %86 = vector.load %arg5[%c0_86, %c0_87] : memref<1x32xf32, #tpu.memory_space<vmem>>, vector<1x32xf32>
    %87 = vector.broadcast %86 : vector<1x32xf32> to vector<128x32xf32>
    %88 = arith.addf %85, %87 : vector<128x32xf32>
    %cst_88 = arith.constant 0.000000e+00 : f32
    %89 = vector.broadcast %cst_88 : f32 to vector<128x32xf32>
    %90 = arith.maximumf %88, %89 : vector<128x32xf32>
    %cst_89 = arith.constant 0.000000e+00 : f32
    %91 = vector.broadcast %cst_89 : f32 to vector<142x32xf32>
    %c0_90 = arith.constant 0 : index
    %c0_91 = arith.constant 0 : index
    %92 = vector.load %arg8[%c0_90, %c0_91] : memref<142x32xf32, #tpu.memory_space<vmem>>, vector<142x32xf32>
    tpu.vector_store %arg8[%c0_90, %c0_91], %91 {strides = array<i32>} : memref<142x32xf32, #tpu.memory_space<vmem>>, vector<142x32xf32>,
    %c7_92 = arith.constant 7 : index
    %c0_93 = arith.constant 0 : index
    %93 = vector.load %arg8[%c7_92, %c0_93] : memref<142x32xf32, #tpu.memory_space<vmem>>, vector<128x32xf32>
    tpu.vector_store %arg8[%c7_92, %c0_93], %90 {strides = array<i32>} : memref<142x32xf32, #tpu.memory_space<vmem>>, vector<128x32xf32>,
    %cst_94 = arith.constant 0.000000e+00 : f32
    %94 = vector.broadcast %cst_94 : f32 to vector<128x16xf32>
    %c0_95 = arith.constant 0 : index
    %c0_96 = arith.constant 0 : index
    %95 = vector.load %arg8[%c0_95, %c0_96] : memref<142x32xf32, #tpu.memory_space<vmem>>, vector<128x32xf32>
    %c0_97 = arith.constant 0 : index
    %c0_98 = arith.constant 0 : index
    %c0_99 = arith.constant 0 : index
    %96 = vector.load %arg3[%c0_97, %c0_98, %c0_99] : memref<15x32x16xf32, #tpu.memory_space<vmem>>, vector<1x32x16xf32>
    %97 = vector.shape_cast %96 : vector<1x32x16xf32> to vector<32x16xf32>
    %cst_100 = arith.constant dense<0.000000e+00> : vector<128x16xf32>
    %98 = tpu.matmul %95, %97, %cst_100 {dimension_numbers = #tpu.dot_dimension_numbers<[1], [0], [0], [1], [0, 0, 1, 1], [], []>} : vector<128x32xf32>, vector<32x16xf32>, vector<128x16xf32> -> vector<128x16xf32>
    %99 = arith.addf %94, %98 : vector<128x16xf32>
    %c1_101 = arith.constant 1 : index
    %c0_102 = arith.constant 0 : index
    %100 = vector.load %arg8[%c1_101, %c0_102] : memref<142x32xf32, #tpu.memory_space<vmem>>, vector<128x32xf32>
    %c1_103 = arith.constant 1 : index
    %c0_104 = arith.constant 0 : index
    %c0_105 = arith.constant 0 : index
    %101 = vector.load %arg3[%c1_103, %c0_104, %c0_105] : memref<15x32x16xf32, #tpu.memory_space<vmem>>, vector<1x32x16xf32>
    %102 = vector.shape_cast %101 : vector<1x32x16xf32> to vector<32x16xf32>
    %cst_106 = arith.constant dense<0.000000e+00> : vector<128x16xf32>
    %103 = tpu.matmul %100, %102, %cst_106 {dimension_numbers = #tpu.dot_dimension_numbers<[1], [0], [0], [1], [0, 0, 1, 1], [], []>} : vector<128x32xf32>, vector<32x16xf32>, vector<128x16xf32> -> vector<128x16xf32>
    %104 = arith.addf %99, %103 : vector<128x16xf32>
    %c2_107 = arith.constant 2 : index
    %c0_108 = arith.constant 0 : index
    %105 = vector.load %arg8[%c2_107, %c0_108] : memref<142x32xf32, #tpu.memory_space<vmem>>, vector<128x32xf32>
    %c2_109 = arith.constant 2 : index
    %c0_110 = arith.constant 0 : index
    %c0_111 = arith.constant 0 : index
    %106 = vector.load %arg3[%c2_109, %c0_110, %c0_111] : memref<15x32x16xf32, #tpu.memory_space<vmem>>, vector<1x32x16xf32>
    %107 = vector.shape_cast %106 : vector<1x32x16xf32> to vector<32x16xf32>
    %cst_112 = arith.constant dense<0.000000e+00> : vector<128x16xf32>
    %108 = tpu.matmul %105, %107, %cst_112 {dimension_numbers = #tpu.dot_dimension_numbers<[1], [0], [0], [1], [0, 0, 1, 1], [], []>} : vector<128x32xf32>, vector<32x16xf32>, vector<128x16xf32> -> vector<128x16xf32>
    %109 = arith.addf %104, %108 : vector<128x16xf32>
    %c3_113 = arith.constant 3 : index
    %c0_114 = arith.constant 0 : index
    %110 = vector.load %arg8[%c3_113, %c0_114] : memref<142x32xf32, #tpu.memory_space<vmem>>, vector<128x32xf32>
    %c3_115 = arith.constant 3 : index
    %c0_116 = arith.constant 0 : index
    %c0_117 = arith.constant 0 : index
    %111 = vector.load %arg3[%c3_115, %c0_116, %c0_117] : memref<15x32x16xf32, #tpu.memory_space<vmem>>, vector<1x32x16xf32>
    %112 = vector.shape_cast %111 : vector<1x32x16xf32> to vector<32x16xf32>
    %cst_118 = arith.constant dense<0.000000e+00> : vector<128x16xf32>
    %113 = tpu.matmul %110, %112, %cst_118 {dimension_numbers = #tpu.dot_dimension_numbers<[1], [0], [0], [1], [0, 0, 1, 1], [], []>} : vector<128x32xf32>, vector<32x16xf32>, vector<128x16xf32> -> vector<128x16xf32>
    %114 = arith.addf %109, %113 : vector<128x16xf32>
    %c4_119 = arith.constant 4 : index
    %c0_120 = arith.constant 0 : index
    %115 = vector.load %arg8[%c4_119, %c0_120] : memref<142x32xf32, #tpu.memory_space<vmem>>, vector<128x32xf32>
    %c4_121 = arith.constant 4 : index
    %c0_122 = arith.constant 0 : index
    %c0_123 = arith.constant 0 : index
    %116 = vector.load %arg3[%c4_121, %c0_122, %c0_123] : memref<15x32x16xf32, #tpu.memory_space<vmem>>, vector<1x32x16xf32>
    %117 = vector.shape_cast %116 : vector<1x32x16xf32> to vector<32x16xf32>
    %cst_124 = arith.constant dense<0.000000e+00> : vector<128x16xf32>
    %118 = tpu.matmul %115, %117, %cst_124 {dimension_numbers = #tpu.dot_dimension_numbers<[1], [0], [0], [1], [0, 0, 1, 1], [], []>} : vector<128x32xf32>, vector<32x16xf32>, vector<128x16xf32> -> vector<128x16xf32>
    %119 = arith.addf %114, %118 : vector<128x16xf32>
    %c5_125 = arith.constant 5 : index
    %c0_126 = arith.constant 0 : index
    %120 = vector.load %arg8[%c5_125, %c0_126] : memref<142x32xf32, #tpu.memory_space<vmem>>, vector<128x32xf32>
    %c5_127 = arith.constant 5 : index
    %c0_128 = arith.constant 0 : index
    %c0_129 = arith.constant 0 : index
    %121 = vector.load %arg3[%c5_127, %c0_128, %c0_129] : memref<15x32x16xf32, #tpu.memory_space<vmem>>, vector<1x32x16xf32>
    %122 = vector.shape_cast %121 : vector<1x32x16xf32> to vector<32x16xf32>
    %cst_130 = arith.constant dense<0.000000e+00> : vector<128x16xf32>
    %123 = tpu.matmul %120, %122, %cst_130 {dimension_numbers = #tpu.dot_dimension_numbers<[1], [0], [0], [1], [0, 0, 1, 1], [], []>} : vector<128x32xf32>, vector<32x16xf32>, vector<128x16xf32> -> vector<128x16xf32>
    %124 = arith.addf %119, %123 : vector<128x16xf32>
    %c6_131 = arith.constant 6 : index
    %c0_132 = arith.constant 0 : index
    %125 = vector.load %arg8[%c6_131, %c0_132] : memref<142x32xf32, #tpu.memory_space<vmem>>, vector<128x32xf32>
    %c6_133 = arith.constant 6 : index
    %c0_134 = arith.constant 0 : index
    %c0_135 = arith.constant 0 : index
    %126 = vector.load %arg3[%c6_133, %c0_134, %c0_135] : memref<15x32x16xf32, #tpu.memory_space<vmem>>, vector<1x32x16xf32>
    %127 = vector.shape_cast %126 : vector<1x32x16xf32> to vector<32x16xf32>
    %cst_136 = arith.constant dense<0.000000e+00> : vector<128x16xf32>
    %128 = tpu.matmul %125, %127, %cst_136 {dimension_numbers = #tpu.dot_dimension_numbers<[1], [0], [0], [1], [0, 0, 1, 1], [], []>} : vector<128x32xf32>, vector<32x16xf32>, vector<128x16xf32> -> vector<128x16xf32>
    %129 = arith.addf %124, %128 : vector<128x16xf32>
    %c7_137 = arith.constant 7 : index
    %c0_138 = arith.constant 0 : index
    %130 = vector.load %arg8[%c7_137, %c0_138] : memref<142x32xf32, #tpu.memory_space<vmem>>, vector<128x32xf32>
    %c7_139 = arith.constant 7 : index
    %c0_140 = arith.constant 0 : index
    %c0_141 = arith.constant 0 : index
    %131 = vector.load %arg3[%c7_139, %c0_140, %c0_141] : memref<15x32x16xf32, #tpu.memory_space<vmem>>, vector<1x32x16xf32>
    %132 = vector.shape_cast %131 : vector<1x32x16xf32> to vector<32x16xf32>
    %cst_142 = arith.constant dense<0.000000e+00> : vector<128x16xf32>
    %133 = tpu.matmul %130, %132, %cst_142 {dimension_numbers = #tpu.dot_dimension_numbers<[1], [0], [0], [1], [0, 0, 1, 1], [], []>} : vector<128x32xf32>, vector<32x16xf32>, vector<128x16xf32> -> vector<128x16xf32>
    %134 = arith.addf %129, %133 : vector<128x16xf32>
    %c8_143 = arith.constant 8 : index
    %c0_144 = arith.constant 0 : index
    %135 = vector.load %arg8[%c8_143, %c0_144] : memref<142x32xf32, #tpu.memory_space<vmem>>, vector<128x32xf32>
    %c8_145 = arith.constant 8 : index
    %c0_146 = arith.constant 0 : index
    %c0_147 = arith.constant 0 : index
    %136 = vector.load %arg3[%c8_145, %c0_146, %c0_147] : memref<15x32x16xf32, #tpu.memory_space<vmem>>, vector<1x32x16xf32>
    %137 = vector.shape_cast %136 : vector<1x32x16xf32> to vector<32x16xf32>
    %cst_148 = arith.constant dense<0.000000e+00> : vector<128x16xf32>
    %138 = tpu.matmul %135, %137, %cst_148 {dimension_numbers = #tpu.dot_dimension_numbers<[1], [0], [0], [1], [0, 0, 1, 1], [], []>} : vector<128x32xf32>, vector<32x16xf32>, vector<128x16xf32> -> vector<128x16xf32>
    %139 = arith.addf %134, %138 : vector<128x16xf32>
    %c9_149 = arith.constant 9 : index
    %c0_150 = arith.constant 0 : index
    %140 = vector.load %arg8[%c9_149, %c0_150] : memref<142x32xf32, #tpu.memory_space<vmem>>, vector<128x32xf32>
    %c9_151 = arith.constant 9 : index
    %c0_152 = arith.constant 0 : index
    %c0_153 = arith.constant 0 : index
    %141 = vector.load %arg3[%c9_151, %c0_152, %c0_153] : memref<15x32x16xf32, #tpu.memory_space<vmem>>, vector<1x32x16xf32>
    %142 = vector.shape_cast %141 : vector<1x32x16xf32> to vector<32x16xf32>
    %cst_154 = arith.constant dense<0.000000e+00> : vector<128x16xf32>
    %143 = tpu.matmul %140, %142, %cst_154 {dimension_numbers = #tpu.dot_dimension_numbers<[1], [0], [0], [1], [0, 0, 1, 1], [], []>} : vector<128x32xf32>, vector<32x16xf32>, vector<128x16xf32> -> vector<128x16xf32>
    %144 = arith.addf %139, %143 : vector<128x16xf32>
    %c10_155 = arith.constant 10 : index
    %c0_156 = arith.constant 0 : index
    %145 = vector.load %arg8[%c10_155, %c0_156] : memref<142x32xf32, #tpu.memory_space<vmem>>, vector<128x32xf32>
    %c10_157 = arith.constant 10 : index
    %c0_158 = arith.constant 0 : index
    %c0_159 = arith.constant 0 : index
    %146 = vector.load %arg3[%c10_157, %c0_158, %c0_159] : memref<15x32x16xf32, #tpu.memory_space<vmem>>, vector<1x32x16xf32>
    %147 = vector.shape_cast %146 : vector<1x32x16xf32> to vector<32x16xf32>
    %cst_160 = arith.constant dense<0.000000e+00> : vector<128x16xf32>
    %148 = tpu.matmul %145, %147, %cst_160 {dimension_numbers = #tpu.dot_dimension_numbers<[1], [0], [0], [1], [0, 0, 1, 1], [], []>} : vector<128x32xf32>, vector<32x16xf32>, vector<128x16xf32> -> vector<128x16xf32>
    %149 = arith.addf %144, %148 : vector<128x16xf32>
    %c11_161 = arith.constant 11 : index
    %c0_162 = arith.constant 0 : index
    %150 = vector.load %arg8[%c11_161, %c0_162] : memref<142x32xf32, #tpu.memory_space<vmem>>, vector<128x32xf32>
    %c11_163 = arith.constant 11 : index
    %c0_164 = arith.constant 0 : index
    %c0_165 = arith.constant 0 : index
    %151 = vector.load %arg3[%c11_163, %c0_164, %c0_165] : memref<15x32x16xf32, #tpu.memory_space<vmem>>, vector<1x32x16xf32>
    %152 = vector.shape_cast %151 : vector<1x32x16xf32> to vector<32x16xf32>
    %cst_166 = arith.constant dense<0.000000e+00> : vector<128x16xf32>
    %153 = tpu.matmul %150, %152, %cst_166 {dimension_numbers = #tpu.dot_dimension_numbers<[1], [0], [0], [1], [0, 0, 1, 1], [], []>} : vector<128x32xf32>, vector<32x16xf32>, vector<128x16xf32> -> vector<128x16xf32>
    %154 = arith.addf %149, %153 : vector<128x16xf32>
    %c12_167 = arith.constant 12 : index
    %c0_168 = arith.constant 0 : index
    %155 = vector.load %arg8[%c12_167, %c0_168] : memref<142x32xf32, #tpu.memory_space<vmem>>, vector<128x32xf32>
    %c12_169 = arith.constant 12 : index
    %c0_170 = arith.constant 0 : index
    %c0_171 = arith.constant 0 : index
    %156 = vector.load %arg3[%c12_169, %c0_170, %c0_171] : memref<15x32x16xf32, #tpu.memory_space<vmem>>, vector<1x32x16xf32>
    %157 = vector.shape_cast %156 : vector<1x32x16xf32> to vector<32x16xf32>
    %cst_172 = arith.constant dense<0.000000e+00> : vector<128x16xf32>
    %158 = tpu.matmul %155, %157, %cst_172 {dimension_numbers = #tpu.dot_dimension_numbers<[1], [0], [0], [1], [0, 0, 1, 1], [], []>} : vector<128x32xf32>, vector<32x16xf32>, vector<128x16xf32> -> vector<128x16xf32>
    %159 = arith.addf %154, %158 : vector<128x16xf32>
    %c13_173 = arith.constant 13 : index
    %c0_174 = arith.constant 0 : index
    %160 = vector.load %arg8[%c13_173, %c0_174] : memref<142x32xf32, #tpu.memory_space<vmem>>, vector<128x32xf32>
    %c13_175 = arith.constant 13 : index
    %c0_176 = arith.constant 0 : index
    %c0_177 = arith.constant 0 : index
    %161 = vector.load %arg3[%c13_175, %c0_176, %c0_177] : memref<15x32x16xf32, #tpu.memory_space<vmem>>, vector<1x32x16xf32>
    %162 = vector.shape_cast %161 : vector<1x32x16xf32> to vector<32x16xf32>
    %cst_178 = arith.constant dense<0.000000e+00> : vector<128x16xf32>
    %163 = tpu.matmul %160, %162, %cst_178 {dimension_numbers = #tpu.dot_dimension_numbers<[1], [0], [0], [1], [0, 0, 1, 1], [], []>} : vector<128x32xf32>, vector<32x16xf32>, vector<128x16xf32> -> vector<128x16xf32>
    %164 = arith.addf %159, %163 : vector<128x16xf32>
    %c14_179 = arith.constant 14 : index
    %c0_180 = arith.constant 0 : index
    %165 = vector.load %arg8[%c14_179, %c0_180] : memref<142x32xf32, #tpu.memory_space<vmem>>, vector<128x32xf32>
    %c14_181 = arith.constant 14 : index
    %c0_182 = arith.constant 0 : index
    %c0_183 = arith.constant 0 : index
    %166 = vector.load %arg3[%c14_181, %c0_182, %c0_183] : memref<15x32x16xf32, #tpu.memory_space<vmem>>, vector<1x32x16xf32>
    %167 = vector.shape_cast %166 : vector<1x32x16xf32> to vector<32x16xf32>
    %cst_184 = arith.constant dense<0.000000e+00> : vector<128x16xf32>
    %168 = tpu.matmul %165, %167, %cst_184 {dimension_numbers = #tpu.dot_dimension_numbers<[1], [0], [0], [1], [0, 0, 1, 1], [], []>} : vector<128x32xf32>, vector<32x16xf32>, vector<128x16xf32> -> vector<128x16xf32>
    %169 = arith.addf %164, %168 : vector<128x16xf32>
    %170 = tpu.concatenate %3, %169 in 1 : vector<128x16xf32>, vector<128x16xf32> -> vector<128x32xf32>
    %c0_185 = arith.constant 0 : index
    %c0_186 = arith.constant 0 : index
    %c0_187 = arith.constant 0 : index
    %171 = vector.load %arg6[%c0_185, %c0_186, %c0_187] : memref<1x128x32xf32, #tpu.memory_space<vmem>>, vector<1x128x32xf32>
    %172 = vector.shape_cast %171 : vector<1x128x32xf32> to vector<128x32xf32>
    %173 = vector.shape_cast %170 : vector<128x32xf32> to vector<1x128x32xf32>
    tpu.vector_store %arg6[%c0_185, %c0_186, %c0_187], %173 {strides = array<i32>} : memref<1x128x32xf32, #tpu.memory_space<vmem>>, vector<1x128x32xf32>,
    return
  }
  func.func @transform_0(%arg0: i32) -> (i32, i32, i32) {
    %c0_i32 = arith.constant 0 : i32
    %c0_i32_0 = arith.constant 0 : i32
    %c0_i32_1 = arith.constant 0 : i32
    return %arg0, %c0_i32, %c0_i32_0 : i32, i32, i32
  }
  func.func @transform_1(%arg0: i32) -> (i32, i32, i32) {
    %c0_i32 = arith.constant 0 : i32
    %c0_i32_0 = arith.constant 0 : i32
    %c0_i32_1 = arith.constant 0 : i32
    %c0_i32_2 = arith.constant 0 : i32
    return %c0_i32, %c0_i32_0, %c0_i32_1 : i32, i32, i32
  }
  func.func @transform_2(%arg0: i32) -> (i32, i32, i32) {
    %c0_i32 = arith.constant 0 : i32
    %c0_i32_0 = arith.constant 0 : i32
    %c0_i32_1 = arith.constant 0 : i32
    %c0_i32_2 = arith.constant 0 : i32
    return %c0_i32, %c0_i32_0, %c0_i32_1 : i32, i32, i32
  }
  func.func @transform_3(%arg0: i32) -> (i32, i32) {
    %c0_i32 = arith.constant 0 : i32
    %c0_i32_0 = arith.constant 0 : i32
    %c0_i32_1 = arith.constant 0 : i32
    return %c0_i32, %c0_i32_0 : i32, i32
  }
  func.func @transform_4(%arg0: i32) -> (i32, i32) {
    %c0_i32 = arith.constant 0 : i32
    %c0_i32_0 = arith.constant 0 : i32
    %c0_i32_1 = arith.constant 0 : i32
    return %c0_i32, %c0_i32_0 : i32, i32
  }
  func.func @transform_5(%arg0: i32) -> (i32, i32, i32) {
    %c0_i32 = arith.constant 0 : i32
    %c0_i32_0 = arith.constant 0 : i32
    %c0_i32_1 = arith.constant 0 : i32
    return %arg0, %c0_i32, %c0_i32_0 : i32, i32, i32
  }
}

</mosaic_0001>

<llo_original>
// kernel: encoder_layer_forward.1
$region0: #{encoder_layer_forward.1}
  #allocation0 [shape = 'u32[]', space=smem, size = 0x4, offset = 0x4, fixed_abs, tag = 'smem constant byte address 0x4 - core index']
  #allocation1 [shape = 'u32[144,128]{1,0:T(1,128)}', space=vmem, size = 0x12000, scoped, tag = 'internal scratch']
  #allocation2 [shape = 'f32[142,16]{1,0:T(8,128)}', space=vmem, size = 0x12000, scoped, tag = 'scratch operand']
  #allocation3 [shape = 'f32[142,32]{1,0:T(8,128)}', space=vmem, size = 0x12000, scoped, tag = 'scratch operand']
  %s0 = inlined_call_operand.vmem [shape: f32[2,128,16], index: 0, kind: input, shape index: {}]
  %s1 = inlined_call_operand.vmem [shape: f32[15,16,32], index: 1, kind: input, shape index: {}]
  %s2 = inlined_call_operand.vmem [shape: f32[15,32,16], index: 2, kind: input, shape index: {}]
  %s3 = inlined_call_operand.vmem [shape: f32[1,32], index: 3, kind: input, shape index: {}]
  %s4 = inlined_call_operand.vmem [shape: f32[1,32], index: 4, kind: input, shape index: {}]
  %s5 = inlined_call_operand.vmem [shape: f32[2,128,32], index: 5, kind: output, shape index: {}]
  %s6 = sld [smem:[#allocation0]]
  $region53: #{encoder_layer_forward.1} parent=0
    _
  %s8 = ssub.s32 1, %s6
  %s9 = scalar_select 0, %s8, %s6
  loop: start=0, step=1, limit=4
  $region2: #{encoder_layer_forward.1} parent=0 // loop_pre_header
    _
  $region3: #{encoder_layer_forward.1} parent=0 // loop_header
    %s11 = sphi 0, %s15
    %p12 = scmp.ge.s32.totalorder %s11, 4
    %s21 = sphi 0, %s23
    %s24 = sphi 0, %s21
    %s25 = sphi 0, %s24
    %s41 = sphi 0, %s25
    %s45 = sphi 0, %s45
    %s47 = sphi 0, %s45
    %s48 = sphi 0, %s47
    %s62 = sphi 0, %s48
    %s66 = sphi 0, %s66
    %s68 = sphi 0, %s66
    %s69 = sphi 0, %s68
    %s83 = sphi 0, %s69
    %s87 = sphi 0, %s87
    %s89 = sphi 0, %s87
    %s90 = sphi 0, %s89
    %s104 = sphi 0, %s90
    %s108 = sphi 0, %s108
    %s110 = sphi 0, %s108
    %s111 = sphi 0, %s110
    %s125 = sphi 0, %s111
    %s131 = sphi 0, %s133
    %s134 = sphi 0, %s131
    %s135 = sphi 0, %s134
    %s151 = sphi 0, %s135
  $region4: #{encoder_layer_forward.1} parent=0 // loop_header_branch
    %14 = sbr.rel (%p12) target = $region8
  $region5: #{encoder_layer_forward.1} parent=0 // loop_body
    %s16 = ssub.s32 %s11, 1
    %s17 = ssub.s32 %s11, 2
    %s18 = sadd.s32 %s11, 1
    %s19 = ssub.s32 %s11, %s18
    %p20 = scmp.eq.s32.totalorder %s19, 0
    %s22 = sadd.s32 %s21, 1
    %s23 = scalar_select %p20, %s21, %s22
    %p26 = pneg %p20
    %p27 = scmp.eq.s32.totalorder %s11, 1
    %p28 = por %p26, %p27
    %p29 = scmp.ne.s32.totalorder %s21, %s24
    %p30 = scmp.eq.s32.totalorder %s11, 0
    %p31 = por %p29, %p30
    %p32 = scmp.ne.s32.totalorder %s21, %s24
    %p33 = scmp.eq.s32.totalorder %s16, 1
    %p34 = por %p32, %p33
    %p35 = scmp.ne.s32.totalorder %s24, %s25
    %p36 = scmp.eq.s32.totalorder %s16, 0
    %p37 = por %p35, %p36
    %p38 = scmp.ne.s32.totalorder %s24, %s25
    %p39 = scmp.eq.s32.totalorder %s17, 1
    %p40 = por %p38, %p39
    %p42 = scmp.ne.s32.totalorder %s25, %s41
    %p43 = scmp.eq.s32.totalorder %s17, 0
    %p44 = por %p42, %p43
    %s46 = sadd.s32 %s45, 1
    %p49 = scmp.eq.s32.totalorder %s11, 1
    %p50 = scmp.ne.s32.totalorder %s45, %s47
    %p51 = scmp.eq.s32.totalorder %s11, 0
    %p52 = por %p50, %p51
    %p53 = scmp.ne.s32.totalorder %s45, %s47
    %p54 = scmp.eq.s32.totalorder %s16, 1
    %p55 = por %p53, %p54
    %p56 = scmp.ne.s32.totalorder %s47, %s48
    %p57 = scmp.eq.s32.totalorder %s16, 0
    %p58 = por %p56, %p57
    %p59 = scmp.ne.s32.totalorder %s47, %s48
    %p60 = scmp.eq.s32.totalorder %s17, 1
    %p61 = por %p59, %p60
    %p63 = scmp.ne.s32.totalorder %s48, %s62
    %p64 = scmp.eq.s32.totalorder %s17, 0
    %p65 = por %p63, %p64
    %s67 = sadd.s32 %s66, 1
    %p70 = scmp.eq.s32.totalorder %s11, 1
    %p71 = scmp.ne.s32.totalorder %s66, %s68
    %p72 = scmp.eq.s32.totalorder %s11, 0
    %p73 = por %p71, %p72
    %p74 = scmp.ne.s32.totalorder %s66, %s68
    %p75 = scmp.eq.s32.totalorder %s16, 1
    %p76 = por %p74, %p75
    %p77 = scmp.ne.s32.totalorder %s68, %s69
    %p78 = scmp.eq.s32.totalorder %s16, 0
    %p79 = por %p77, %p78
    %p80 = scmp.ne.s32.totalorder %s68, %s69
    %p81 = scmp.eq.s32.totalorder %s17, 1
    %p82 = por %p80, %p81
    %p84 = scmp.ne.s32.totalorder %s69, %s83
    %p85 = scmp.eq.s32.totalorder %s17, 0
    %p86 = por %p84, %p85
    %s88 = sadd.s32 %s87, 1
    %p91 = scmp.eq.s32.totalorder %s11, 1
    %p92 = scmp.ne.s32.totalorder %s87, %s89
    %p93 = scmp.eq.s32.totalorder %s11, 0
    %p94 = por %p92, %p93
    %p95 = scmp.ne.s32.totalorder %s87, %s89
    %p96 = scmp.eq.s32.totalorder %s16, 1
    %p97 = por %p95, %p96
    %p98 = scmp.ne.s32.totalorder %s89, %s90
    %p99 = scmp.eq.s32.totalorder %s16, 0
    %p100 = por %p98, %p99
    %p101 = scmp.ne.s32.totalorder %s89, %s90
    %p102 = scmp.eq.s32.totalorder %s17, 1
    %p103 = por %p101, %p102
    %p105 = scmp.ne.s32.totalorder %s90, %s104
    %p106 = scmp.eq.s32.totalorder %s17, 0
    %p107 = por %p105, %p106
    %s109 = sadd.s32 %s108, 1
    %p112 = scmp.eq.s32.totalorder %s11, 1
    %p113 = scmp.ne.s32.totalorder %s108, %s110
    %p114 = scmp.eq.s32.totalorder %s11, 0
    %p115 = por %p113, %p114
    %p116 = scmp.ne.s32.totalorder %s108, %s110
    %p117 = scmp.eq.s32.totalorder %s16, 1
    %p118 = por %p116, %p117
    %p119 = scmp.ne.s32.totalorder %s110, %s111
    %p120 = scmp.eq.s32.totalorder %s16, 0
    %p121 = por %p119, %p120
    %p122 = scmp.ne.s32.totalorder %s110, %s111
    %p123 = scmp.eq.s32.totalorder %s17, 1
    %p124 = por %p122, %p123
    %p126 = scmp.ne.s32.totalorder %s111, %s125
    %p127 = scmp.eq.s32.totalorder %s17, 0
    %p128 = por %p126, %p127
    %s129 = ssub.s32 %s11, %s18
    %p130 = scmp.eq.s32.totalorder %s129, 0
    %s132 = sadd.s32 %s131, 1
    %s133 = scalar_select %p130, %s131, %s132
    %p136 = pneg %p130
    %p137 = scmp.eq.s32.totalorder %s11, 1
    %p138 = por %p136, %p137
    %p139 = scmp.ne.s32.totalorder %s131, %s134
    %p140 = scmp.eq.s32.totalorder %s11, 0
    %p141 = por %p139, %p140
    %p142 = scmp.ne.s32.totalorder %s131, %s134
    %p143 = scmp.eq.s32.totalorder %s16, 1
    %p144 = por %p142, %p143
    %p145 = scmp.ne.s32.totalorder %s134, %s135
    %p146 = scmp.eq.s32.totalorder %s16, 0
    %p147 = por %p145, %p146
    %p148 = scmp.ne.s32.totalorder %s134, %s135
    %p149 = scmp.eq.s32.totalorder %s17, 1
    %p150 = por %p148, %p149
    %p152 = scmp.ne.s32.totalorder %s135, %s151
    %p153 = scmp.eq.s32.totalorder %s17, 0
    %p154 = por %p152, %p153
    %p155 = scmp.le.s32.totalorder 1, %s11
    %p156 = scmp.lt.s32.totalorder %s11, 3
    %p157 = pnand %p155, %p156
    %p158 = pneg %p157
    // Predicated region
    $region9: #{encoder_layer_forward.1} parent=5 // pred_check
      _
    $region10: #{encoder_layer_forward.1} parent=5 // pred_check_branch
      %160 = sbr.rel (%p157) target = $region12
    $region11: #{encoder_layer_forward.1} parent=5 // pred_region
      %s161 = ssub.s32 %s11, 1
      // Predicated region
      $region13: #{encoder_layer_forward.1} parent=11 // pred_check
        %p162 = pneg %p58
      $region14: #{encoder_layer_forward.1} parent=11 // pred_check_branch
        %164 = sbr.rel (%p162) target = $region16
      $region15: #{encoder_layer_forward.1} parent=11 // pred_region
        _
      $region16: #{encoder_layer_forward.1} parent=11 // pred_fallthru
        _
      // Predicated region
      $region17: #{encoder_layer_forward.1} parent=11 // pred_check
        %p165 = pneg %p79
      $region18: #{encoder_layer_forward.1} parent=11 // pred_check_branch
        %167 = sbr.rel (%p165) target = $region20
      $region19: #{encoder_layer_forward.1} parent=11 // pred_region
        _
      $region20: #{encoder_layer_forward.1} parent=11 // pred_fallthru
        _
      // Predicated region
      $region21: #{encoder_layer_forward.1} parent=11 // pred_check
        %p168 = pneg %p100
      $region22: #{encoder_layer_forward.1} parent=11 // pred_check_branch
        %170 = sbr.rel (%p168) target = $region24
      $region23: #{encoder_layer_forward.1} parent=11 // pred_region
        _
      $region24: #{encoder_layer_forward.1} parent=11 // pred_fallthru
        _
      // Predicated region
      $region25: #{encoder_layer_forward.1} parent=11 // pred_check
        %p171 = pneg %p121
      $region26: #{encoder_layer_forward.1} parent=11 // pred_check_branch
        %173 = sbr.rel (%p171) target = $region28
      $region27: #{encoder_layer_forward.1} parent=11 // pred_region
        _
      $region28: #{encoder_layer_forward.1} parent=11 // pred_fallthru
        _
    $region12: #{encoder_layer_forward.1} parent=5 // pred_fallthru
      _
    %p174 = scmp.lt.s32.totalorder %s11, 2
    // Predicated region
    $region29: #{encoder_layer_forward.1} parent=5 // pred_check
      %p175 = pneg %p174
    $region30: #{encoder_layer_forward.1} parent=5 // pred_check_branch
      %177 = sbr.rel (%p175) target = $region32
    $region31: #{encoder_layer_forward.1} parent=5 // pred_region
      // Predicated region
      $region33: #{encoder_layer_forward.1} parent=31 // pred_check
        %p178 = pneg %p31
      $region34: #{encoder_layer_forward.1} parent=31 // pred_check_branch
        %180 = sbr.rel (%p178) target = $region36
      $region35: #{encoder_layer_forward.1} parent=31 // pred_region
        %p181 = scmp.lt.s32.totalorder %s11, 1
        %s182 = scalar_select %p181, %s11, 1
        %s183 = smul.addr %s182, 16
        %s184 = smul.addr %s183, 8
        %s185 = scalar_lea.vmem %s0, %s184
      $region36: #{encoder_layer_forward.1} parent=31 // pred_fallthru
        _
    $region32: #{encoder_layer_forward.1} parent=5 // pred_fallthru
      _
    %p186 = scmp.le.s32.totalorder 1, %s11
    %p187 = scmp.lt.s32.totalorder %s11, 3
    %p188 = pnand %p186, %p187
    %p189 = pneg %p188
    // Predicated region
    $region37: #{encoder_layer_forward.1} parent=5 // pred_check
      _
    $region38: #{encoder_layer_forward.1} parent=5 // pred_check_branch
      %191 = sbr.rel (%p188) target = $region40
    $region39: #{encoder_layer_forward.1} parent=5 // pred_region
      %s192 = ssub.s32 %s11, 1
      %p193 = scmp.lt.s32.totalorder %s16, 1
      %s194 = scalar_select %p193, %s16, 1
      %s195 = smul.addr %s194, 16
      %s196 = smul.addr %s195, 8
      %s197 = scalar_lea.vmem %s0, %s196
      %p198 = pneg %p37
      %p199 = pneg %p34
      %p200 = pneg %p58
      %p201 = pneg %p55
      %p202 = pneg %p79
      %p203 = pneg %p76
      %p204 = pneg %p100
      %p205 = pneg %p97
      %p206 = pneg %p121
      %p207 = pneg %p118
      %p208 = pneg %p147
      %p209 = pneg %p144
      %p210 = scmp.lt.s32.totalorder %s16, 1
      %s211 = scalar_select %p210, %s16, 1
      %s212 = smul.addr %s211, 16
      %s213 = smul.addr %s212, 8
      %s214 = scalar_lea.vmem %s5, %s213
      %p215 = scmp.lt.s32.totalorder %s16, 1
      %s216 = scalar_select %p215, %s16, 1
      %s217 = smul.addr %s216, 16
      %s218 = smul.addr %s217, 8
      %s219 = scalar_lea.vmem %s0, %s218
      %p220 = scmp.lt.s32.totalorder %s16, 1
      %s221 = scalar_select %p220, %s16, 1
      %s222 = smul.addr %s221, 16
      %s223 = smul.addr %s222, 8
      %s224 = scalar_lea.vmem %s5, %s223
      %v225 = vld [vmem:[%s219] sm:$0xff]
      %v226 = vld [vmem:[%s219 + $0x8] sm:$0xff]
      %v227 = vld [vmem:[%s219 + $0x10] sm:$0xff]
      %v228 = vld [vmem:[%s219 + $0x18] sm:$0xff]
      %v229 = vld [vmem:[%s219 + $0x20] sm:$0xff]
      %v230 = vld [vmem:[%s219 + $0x28] sm:$0xff]
      %v231 = vld [vmem:[%s219 + $0x30] sm:$0xff]
      %v232 = vld [vmem:[%s219 + $0x38] sm:$0xff]
      %v233 = vld [vmem:[%s219 + $0x40] sm:$0xff]
      %v234 = vld [vmem:[%s219 + $0x48] sm:$0xff]
      %v235 = vld [vmem:[%s219 + $0x50] sm:$0xff]
      %v236 = vld [vmem:[%s219 + $0x58] sm:$0xff]
      %v237 = vld [vmem:[%s219 + $0x60] sm:$0xff]
      %v238 = vld [vmem:[%s219 + $0x68] sm:$0xff]
      %v239 = vld [vmem:[%s219 + $0x70] sm:$0xff]
      %v240 = vld [vmem:[%s219 + $0x78] sm:$0xff]
      %v241 = vmax.f32 %v225, 0.0
      %v242 = vmax.f32 %v226, 0.0
      %v243 = vmax.f32 %v227, 0.0
      %v244 = vmax.f32 %v228, 0.0
      %v245 = vmax.f32 %v229, 0.0
      %v246 = vmax.f32 %v230, 0.0
      %v247 = vmax.f32 %v231, 0.0
      %v248 = vmax.f32 %v232, 0.0
      %v249 = vmax.f32 %v233, 0.0
      %v250 = vmax.f32 %v234, 0.0
      %v251 = vmax.f32 %v235, 0.0
      %v252 = vmax.f32 %v236, 0.0
      %v253 = vmax.f32 %v237, 0.0
      %v254 = vmax.f32 %v238, 0.0
      %v255 = vmax.f32 %v239, 0.0
      %v256 = vmax.f32 %v240, 0.0
      %vm257 = vcmask 130048
      %258 = vst.msk [vmem:[#allocation2] sm:$0xff] %vm257, 0.0
      %259 = vst.msk [vmem:[#allocation2 + $0x8] sm:$0xff] %vm257, 0.0
      %260 = vst.msk [vmem:[#allocation2 + $0x10] sm:$0xff] %vm257, 0.0
      %261 = vst.msk [vmem:[#allocation2 + $0x18] sm:$0xff] %vm257, 0.0
      %262 = vst.msk [vmem:[#allocation2 + $0x20] sm:$0xff] %vm257, 0.0
      %263 = vst.msk [vmem:[#allocation2 + $0x28] sm:$0xff] %vm257, 0.0
      %264 = vst.msk [vmem:[#allocation2 + $0x30] sm:$0xff] %vm257, 0.0
      %265 = vst.msk [vmem:[#allocation2 + $0x38] sm:$0xff] %vm257, 0.0
      %266 = vst.msk [vmem:[#allocation2 + $0x40] sm:$0xff] %vm257, 0.0
      %267 = vst.msk [vmem:[#allocation2 + $0x48] sm:$0xff] %vm257, 0.0
      %268 = vst.msk [vmem:[#allocation2 + $0x50] sm:$0xff] %vm257, 0.0
      %269 = vst.msk [vmem:[#allocation2 + $0x58] sm:$0xff] %vm257, 0.0
      %270 = vst.msk [vmem:[#allocation2 + $0x60] sm:$0xff] %vm257, 0.0
      %271 = vst.msk [vmem:[#allocation2 + $0x68] sm:$0xff] %vm257, 0.0
      %272 = vst.msk [vmem:[#allocation2 + $0x70] sm:$0xff] %vm257, 0.0
      %273 = vst.msk [vmem:[#allocation2 + $0x78] sm:$0xff] %vm257, 0.0
      %274 = vst.msk [vmem:[#allocation2 + $0x80] sm:$0xff] %vm257, 0.0
      %vm275 = vcmask 128000
      %276 = vst.msk [vmem:[#allocation2 + $0x88] sm:$0x3f] %vm275, 0.0
      %277 = vst.msk [vmem:[#allocation2 + $0x7] sm:$0xff] %vm257, %v241
      %278 = vst.msk [vmem:[#allocation2 + $0xf] sm:$0xff] %vm257, %v242
      %279 = vst.msk [vmem:[#allocation2 + $0x17] sm:$0xff] %vm257, %v243
      %280 = vst.msk [vmem:[#allocation2 + $0x1f] sm:$0xff] %vm257, %v244
      %281 = vst.msk [vmem:[#allocation2 + $0x27] sm:$0xff] %vm257, %v245
      %282 = vst.msk [vmem:[#allocation2 + $0x2f] sm:$0xff] %vm257, %v246
      %283 = vst.msk [vmem:[#allocation2 + $0x37] sm:$0xff] %vm257, %v247
      %284 = vst.msk [vmem:[#allocation2 + $0x3f] sm:$0xff] %vm257, %v248
      %285 = vst.msk [vmem:[#allocation2 + $0x47] sm:$0xff] %vm257, %v249
      %286 = vst.msk [vmem:[#allocation2 + $0x4f] sm:$0xff] %vm257, %v250
      %287 = vst.msk [vmem:[#allocation2 + $0x57] sm:$0xff] %vm257, %v251
      %288 = vst.msk [vmem:[#allocation2 + $0x5f] sm:$0xff] %vm257, %v252
      %289 = vst.msk [vmem:[#allocation2 + $0x67] sm:$0xff] %vm257, %v253
      %290 = vst.msk [vmem:[#allocation2 + $0x6f] sm:$0xff] %vm257, %v254
      %291 = vst.msk [vmem:[#allocation2 + $0x77] sm:$0xff] %vm257, %v255
      %292 = vst.msk [vmem:[#allocation2 + $0x7f] sm:$0xff] %vm257, %v256
      %v293 = vld [vmem:[#allocation2] sm:$0xff]
      %v294 = vld [vmem:[#allocation2 + $0x8] sm:$0xff]
      %v295 = vld [vmem:[#allocation2 + $0x10] sm:$0xff]
      %v296 = vld [vmem:[#allocation2 + $0x18] sm:$0xff]
      %v297 = vld [vmem:[#allocation2 + $0x20] sm:$0xff]
      %v298 = vld [vmem:[#allocation2 + $0x28] sm:$0xff]
      %v299 = vld [vmem:[#allocation2 + $0x30] sm:$0xff]
      %v300 = vld [vmem:[#allocation2 + $0x38] sm:$0xff]
      %v301 = vld [vmem:[#allocation2 + $0x40] sm:$0xff]
      %v302 = vld [vmem:[#allocation2 + $0x48] sm:$0xff]
      %v303 = vld [vmem:[#allocation2 + $0x50] sm:$0xff]
      %v304 = vld [vmem:[#allocation2 + $0x58] sm:$0xff]
      %v305 = vld [vmem:[#allocation2 + $0x60] sm:$0xff]
      %v306 = vld [vmem:[#allocation2 + $0x68] sm:$0xff]
      %v307 = vld [vmem:[#allocation2 + $0x70] sm:$0xff]
      %v308 = vld [vmem:[#allocation2 + $0x78] sm:$0xff]
      %v309 = vld [vmem:[%s1] sm:$0xff]
      %v310 = vld [vmem:[%s1 + $0x8] sm:$0xff]
      %v311 = vld [vmem:[#allocation2 + $0x1] sm:$0xff]
      %v312 = vld [vmem:[#allocation2 + $0x9] sm:$0xff]
      %v313 = vld [vmem:[#allocation2 + $0x11] sm:$0xff]
      %v314 = vld [vmem:[#allocation2 + $0x19] sm:$0xff]
      %v315 = vld [vmem:[#allocation2 + $0x21] sm:$0xff]
      %v316 = vld [vmem:[#allocation2 + $0x29] sm:$0xff]
      %v317 = vld [vmem:[#allocation2 + $0x31] sm:$0xff]
      %v318 = vld [vmem:[#allocation2 + $0x39] sm:$0xff]
      %v319 = vld [vmem:[#allocation2 + $0x41] sm:$0xff]
      %v320 = vld [vmem:[#allocation2 + $0x49] sm:$0xff]
      %v321 = vld [vmem:[#allocation2 + $0x51] sm:$0xff]
      %v322 = vld [vmem:[#allocation2 + $0x59] sm:$0xff]
      %v323 = vld [vmem:[#allocation2 + $0x61] sm:$0xff]
      %v324 = vld [vmem:[#allocation2 + $0x69] sm:$0xff]
      %v325 = vld [vmem:[#allocation2 + $0x71] sm:$0xff]
      %v326 = vld [vmem:[#allocation2 + $0x79] sm:$0xff]
      %s327 = scalar_lea.vmem %s1, 16
      %v328 = vld [vmem:[%s327] sm:$0xff]
      %v329 = vld [vmem:[%s327 + $0x8] sm:$0xff]
      %v331 = vsel %vm257, %v311, 0
      %v334 = vsel %vm257, %v312, 0
      %v337 = vsel %vm257, %v313, 0
      %v340 = vsel %vm257, %v314, 0
      %v343 = vsel %vm257, %v315, 0
      %v346 = vsel %vm257, %v316, 0
      %v349 = vsel %vm257, %v317, 0
      %v352 = vsel %vm257, %v318, 0
      %v355 = vsel %vm257, %v319, 0
      %v358 = vsel %vm257, %v320, 0
      %v361 = vsel %vm257, %v321, 0
      %v364 = vsel %vm257, %v322, 0
      %v367 = vsel %vm257, %v323, 0
      %v370 = vsel %vm257, %v324, 0
      %v373 = vsel %vm257, %v325, 0
      %v376 = vsel %vm257, %v326, 0
      %378 = vmatprep.subr.mxu0 0.0
      %379 = vmatpush1.msra.mxu0 %v328
      %380 = vmatprep.subr.mxu0 0.0
      %381 = vmatpush1.msra.mxu0 %v329
      %382 = vmatprep.subr.mxu0 0.0
      %383 = vmatpush1.msra.mxu0 0.0
      %384 = vmatprep.subr.mxu0 0.0
      %385 = vmatpush1.msra.mxu0 0.0
      %386 = vmatprep.subr.mxu0 0.0
      %387 = vmatpush1.msra.mxu0 0.0
      %388 = vmatprep.subr.mxu0 0.0
      %389 = vmatpush1.msra.mxu0 0.0
      %390 = vmatprep.subr.mxu0 0.0
      %391 = vmatpush1.msra.mxu0 0.0
      %392 = vmatprep.subr.mxu0 0.0
      %393 = vmatpush1.msra.mxu0 0.0
      %394 = vmatprep.subr.mxu0 0.0
      %395 = vmatpush1.msra.mxu0 0.0
      %396 = vmatprep.subr.mxu0 0.0
      %397 = vmatpush1.msra.mxu0 0.0
      %398 = vmatprep.subr.mxu0 0.0
      %399 = vmatpush1.msra.mxu0 0.0
      %400 = vmatprep.subr.mxu0 0.0
      %401 = vmatpush1.msra.mxu0 0.0
      %402 = vmatprep.subr.mxu0 0.0
      %403 = vmatpush1.msra.mxu0 0.0
      %404 = vmatprep.subr.mxu0 0.0
      %405 = vmatpush1.msra.mxu0 0.0
      %406 = vmatprep.subr.mxu0 0.0
      %407 = vmatpush1.msra.mxu0 0.0
      %408 = vmatprep.subr.mxu0 0.0
      %409 = vmatpush1.msra.mxu0 0.0
      %410 = vmatprep.subr.mxu0 0.0
      %411 = vmatpush1.msra.mxu0 0.0
      %412 = vmatprep.subr.mxu0 0.0
      %413 = vmatpush1.msra.mxu0 0.0
      %414 = vmatprep.subr.mxu0 0.0
      %415 = vmatpush1.msra.mxu0 0.0
      %416 = vmatprep.subr.mxu0 0.0
      %417 = vmatpush1.msra.mxu0 0.0
      %418 = vmatprep.subr.mxu0 0.0
      %419 = vmatpush1.msra.mxu0 0.0
      %420 = vmatprep.subr.mxu0 0.0
      %421 = vmatpush1.msra.mxu0 0.0
      %422 = vmatprep.subr.mxu0 0.0
      %423 = vmatpush1.msra.mxu0 0.0
      %424 = vmatprep.subr.mxu0 0.0
      %425 = vmatpush1.msra.mxu0 0.0
      %426 = vmatprep.subr.mxu0 0.0
      %427 = vmatpush1.msra.mxu0 0.0
      %428 = vmatprep.subr.mxu0 0.0
      %429 = vmatpush1.msra.mxu0 0.0
      %430 = vmatprep.subr.mxu0 0.0
      %431 = vmatpush1.msra.mxu0 0.0
      %432 = vmatprep.subr.mxu0 0.0
      %433 = vmatpush1.msra.mxu0 0.0
      %434 = vmatprep.subr.mxu0 0.0
      %435 = vmatpush1.msra.mxu0 0.0
      %436 = vmatprep.subr.mxu0 0.0
      %437 = vmatpush1.msra.mxu0 0.0
      %438 = vmatprep.subr.mxu0 0.0
      %439 = vmatpush1.msra.mxu0 0.0
      %440 = vmatprep.subr.mxu0 0.0
      %441 = vmatpush1.msra.mxu0 0.0
      %442 = vmatprep.mubr.f32.mxu0 0.0
      %443 = vmatmul.mubr.f32.gmra.mrb[0].mxu0 %v331
      %v444 = vpop.f32.mrb[0].mxu0
      %v445 = vadd.f32 0.0, %v444
      %v446 = vpop.f32.mrb[0].mxu0
      %447 = vmatprep.mubr.f32.mxu0 0.0
      %448 = vmatmul.mubr.f32.gmra.mrb[0].mxu0 %v334
      %v449 = vpop.f32.mrb[0].mxu0
      %v450 = vadd.f32 0.0, %v449
      %v451 = vpop.f32.mrb[0].mxu0
      %452 = vmatprep.mubr.f32.mxu0 0.0
      %453 = vmatmul.mubr.f32.gmra.mrb[0].mxu0 %v337
      %v454 = vpop.f32.mrb[0].mxu0
      %v455 = vadd.f32 0.0, %v454
      %v456 = vpop.f32.mrb[0].mxu0
      %457 = vmatprep.mubr.f32.mxu0 0.0
      %458 = vmatmul.mubr.f32.gmra.mrb[0].mxu0 %v340
      %v459 = vpop.f32.mrb[0].mxu0
      %v460 = vadd.f32 0.0, %v459
      %v461 = vpop.f32.mrb[0].mxu0
      %462 = vmatprep.mubr.f32.mxu0 0.0
      %463 = vmatmul.mubr.f32.gmra.mrb[0].mxu0 %v343
      %v464 = vpop.f32.mrb[0].mxu0
      %v465 = vadd.f32 0.0, %v464
      %v466 = vpop.f32.mrb[0].mxu0
      %467 = vmatprep.mubr.f32.mxu0 0.0
      %468 = vmatmul.mubr.f32.gmra.mrb[0].mxu0 %v346
      %v469 = vpop.f32.mrb[0].mxu0
      %v470 = vadd.f32 0.0, %v469
      %v471 = vpop.f32.mrb[0].mxu0
      %472 = vmatprep.mubr.f32.mxu0 0.0
      %473 = vmatmul.mubr.f32.gmra.mrb[0].mxu0 %v349
      %v474 = vpop.f32.mrb[0].mxu0
      %v475 = vadd.f32 0.0, %v474
      %v476 = vpop.f32.mrb[0].mxu0
      %477 = vmatprep.mubr.f32.mxu0 0.0
      %478 = vmatmul.mubr.f32.gmra.mrb[0].mxu0 %v352
      %v479 = vpop.f32.mrb[0].mxu0
      %v480 = vadd.f32 0.0, %v479
      %v481 = vpop.f32.mrb[0].mxu0
      %482 = vmatprep.mubr.f32.mxu0 0.0
      %483 = vmatmul.mubr.f32.gmra.mrb[0].mxu0 %v355
      %v484 = vpop.f32.mrb[0].mxu0
      %v485 = vadd.f32 0.0, %v484
      %v486 = vpop.f32.mrb[0].mxu0
      %487 = vmatprep.mubr.f32.mxu0 0.0
      %488 = vmatmul.mubr.f32.gmra.mrb[0].mxu0 %v358
      %v489 = vpop.f32.mrb[0].mxu0
      %v490 = vadd.f32 0.0, %v489
      %v491 = vpop.f32.mrb[0].mxu0
      %492 = vmatprep.mubr.f32.mxu0 0.0
      %493 = vmatmul.mubr.f32.gmra.mrb[0].mxu0 %v361
      %v494 = vpop.f32.mrb[0].mxu0
      %v495 = vadd.f32 0.0, %v494
      %v496 = vpop.f32.mrb[0].mxu0
      %497 = vmatprep.mubr.f32.mxu0 0.0
      %498 = vmatmul.mubr.f32.gmra.mrb[0].mxu0 %v364
      %v499 = vpop.f32.mrb[0].mxu0
      %v500 = vadd.f32 0.0, %v499
      %v501 = vpop.f32.mrb[0].mxu0
      %502 = vmatprep.mubr.f32.mxu0 0.0
      %503 = vmatmul.mubr.f32.gmra.mrb[0].mxu0 %v367
      %v504 = vpop.f32.mrb[0].mxu0
      %v505 = vadd.f32 0.0, %v504
      %v506 = vpop.f32.mrb[0].mxu0
      %507 = vmatprep.mubr.f32.mxu0 0.0
      %508 = vmatmul.mubr.f32.gmra.mrb[0].mxu0 %v370
      %v509 = vpop.f32.mrb[0].mxu0
      %v510 = vadd.f32 0.0, %v509
      %v511 = vpop.f32.mrb[0].mxu0
      %512 = vmatprep.mubr.f32.mxu0 0.0
      %513 = vmatmul.mubr.f32.gmra.mrb[0].mxu0 %v373
      %v514 = vpop.f32.mrb[0].mxu0
      %v515 = vadd.f32 0.0, %v514
      %v516 = vpop.f32.mrb[0].mxu0
      %517 = vmatprep.mubr.f32.mxu0 0.0
      %518 = vmatmul.mubr.f32.gmra.mrb[0].mxu0 %v376
      %v519 = vpop.f32.mrb[0].mxu0
      %v520 = vadd.f32 0.0, %v519
      %v521 = vpop.f32.mrb[0].mxu0
      %522 = vdwg.mxu0
      %v524 = vsel %vm257, %v293, 0
      %v527 = vsel %vm257, %v294, 0
      %v530 = vsel %vm257, %v295, 0
      %v533 = vsel %vm257, %v296, 0
      %v536 = vsel %vm257, %v297, 0
      %v539 = vsel %vm257, %v298, 0
      %v542 = vsel %vm257, %v299, 0
      %v545 = vsel %vm257, %v300, 0
      %v548 = vsel %vm257, %v301, 0
      %v551 = vsel %vm257, %v302, 0
      %v554 = vsel %vm257, %v303, 0
      %v557 = vsel %vm257, %v304, 0
      %v560 = vsel %vm257, %v305, 0
      %v563 = vsel %vm257, %v306, 0
      %v566 = vsel %vm257, %v307, 0
      %v569 = vsel %vm257, %v308, 0
      %571 = vmatprep.subr.mxu0 0.0
      %572 = vmatpush1.msra.mxu0 %v309
      %573 = vmatprep.subr.mxu0 0.0
      %574 = vmatpush1.msra.mxu0 %v310
      %575 = vmatprep.subr.mxu0 0.0
      %576 = vmatpush1.msra.mxu0 0.0
      %577 = vmatprep.subr.mxu0 0.0
      %578 = vmatpush1.msra.mxu0 0.0
      %579 = vmatprep.subr.mxu0 0.0
      %580 = vmatpush1.msra.mxu0 0.0
      %581 = vmatprep.subr.mxu0 0.0
      %582 = vmatpush1.msra.mxu0 0.0
      %583 = vmatprep.subr.mxu0 0.0
      %584 = vmatpush1.msra.mxu0 0.0
      %585 = vmatprep.subr.mxu0 0.0
      %586 = vmatpush1.msra.mxu0 0.0
      %587 = vmatprep.subr.mxu0 0.0
      %588 = vmatpush1.msra.mxu0 0.0
      %589 = vmatprep.subr.mxu0 0.0
      %590 = vmatpush1.msra.mxu0 0.0
      %591 = vmatprep.subr.mxu0 0.0
      %592 = vmatpush1.msra.mxu0 0.0
      %593 = vmatprep.subr.mxu0 0.0
      %594 = vmatpush1.msra.mxu0 0.0
      %595 = vmatprep.subr.mxu0 0.0
      %596 = vmatpush1.msra.mxu0 0.0
      %597 = vmatprep.subr.mxu0 0.0
      %598 = vmatpush1.msra.mxu0 0.0
      %599 = vmatprep.subr.mxu0 0.0
      %600 = vmatpush1.msra.mxu0 0.0
      %601 = vmatprep.subr.mxu0 0.0
      %602 = vmatpush1.msra.mxu0 0.0
      %603 = vmatprep.subr.mxu0 0.0
      %604 = vmatpush1.msra.mxu0 0.0
      %605 = vmatprep.subr.mxu0 0.0
      %606 = vmatpush1.msra.mxu0 0.0
      %607 = vmatprep.subr.mxu0 0.0
      %608 = vmatpush1.msra.mxu0 0.0
      %609 = vmatprep.subr.mxu0 0.0
      %610 = vmatpush1.msra.mxu0 0.0
      %611 = vmatprep.subr.mxu0 0.0
      %612 = vmatpush1.msra.mxu0 0.0
      %613 = vmatprep.subr.mxu0 0.0
      %614 = vmatpush1.msra.mxu0 0.0
      %615 = vmatprep.subr.mxu0 0.0
      %616 = vmatpush1.msra.mxu0 0.0
      %617 = vmatprep.subr.mxu0 0.0
      %618 = vmatpush1.msra.mxu0 0.0
      %619 = vmatprep.subr.mxu0 0.0
      %620 = vmatpush1.msra.mxu0 0.0
      %621 = vmatprep.subr.mxu0 0.0
      %622 = vmatpush1.msra.mxu0 0.0
      %623 = vmatprep.subr.mxu0 0.0
      %624 = vmatpush1.msra.mxu0 0.0
      %625 = vmatprep.subr.mxu0 0.0
      %626 = vmatpush1.msra.mxu0 0.0
      %627 = vmatprep.subr.mxu0 0.0
      %628 = vmatpush1.msra.mxu0 0.0
      %629 = vmatprep.subr.mxu0 0.0
      %630 = vmatpush1.msra.mxu0 0.0
      %631 = vmatprep.subr.mxu0 0.0
      %632 = vmatpush1.msra.mxu0 0.0
      %633 = vmatprep.subr.mxu0 0.0
      %634 = vmatpush1.msra.mxu0 0.0
      %635 = vmatprep.mubr.f32.mxu0 0.0
      %636 = vmatmul.mubr.f32.gmra.mrb[0].mxu0 %v524
      %v637 = vpop.f32.mrb[0].mxu0
      %v638 = vadd.f32 %v445, %v637
      %v639 = vpop.f32.mrb[0].mxu0
      %640 = vmatprep.mubr.f32.mxu0 0.0
      %641 = vmatmul.mubr.f32.gmra.mrb[0].mxu0 %v527
      %v642 = vpop.f32.mrb[0].mxu0
      %v643 = vadd.f32 %v450, %v642
      %v644 = vpop.f32.mrb[0].mxu0
      %645 = vmatprep.mubr.f32.mxu0 0.0
      %646 = vmatmul.mubr.f32.gmra.mrb[0].mxu0 %v530
      %v647 = vpop.f32.mrb[0].mxu0
      %v648 = vadd.f32 %v455, %v647
      %v649 = vpop.f32.mrb[0].mxu0
      %650 = vmatprep.mubr.f32.mxu0 0.0
      %651 = vmatmul.mubr.f32.gmra.mrb[0].mxu0 %v533
      %v652 = vpop.f32.mrb[0].mxu0
      %v653 = vadd.f32 %v460, %v652
      %v654 = vpop.f32.mrb[0].mxu0
      %655 = vmatprep.mubr.f32.mxu0 0.0
      %656 = vmatmul.mubr.f32.gmra.mrb[0].mxu0 %v536
      %v657 = vpop.f32.mrb[0].mxu0
      %v658 = vadd.f32 %v465, %v657
      %v659 = vpop.f32.mrb[0].mxu0
      %660 = vmatprep.mubr.f32.mxu0 0.0
      %661 = vmatmul.mubr.f32.gmra.mrb[0].mxu0 %v539
      %v662 = vpop.f32.mrb[0].mxu0
      %v663 = vadd.f32 %v470, %v662
      %v664 = vpop.f32.mrb[0].mxu0
      %665 = vmatprep.mubr.f32.mxu0 0.0
      %666 = vmatmul.mubr.f32.gmra.mrb[0].mxu0 %v542
      %v667 = vpop.f32.mrb[0].mxu0
      %v668 = vadd.f32 %v475, %v667
      %v669 = vpop.f32.mrb[0].mxu0
      %670 = vmatprep.mubr.f32.mxu0 0.0
      %671 = vmatmul.mubr.f32.gmra.mrb[0].mxu0 %v545
      %v672 = vpop.f32.mrb[0].mxu0
      %v673 = vadd.f32 %v480, %v672
      %v674 = vpop.f32.mrb[0].mxu0
      %675 = vmatprep.mubr.f32.mxu0 0.0
      %676 = vmatmul.mubr.f32.gmra.mrb[0].mxu0 %v548
      %v677 = vpop.f32.mrb[0].mxu0
      %v678 = vadd.f32 %v485, %v677
      %v679 = vpop.f32.mrb[0].mxu0
      %680 = vmatprep.mubr.f32.mxu0 0.0
      %681 = vmatmul.mubr.f32.gmra.mrb[0].mxu0 %v551
      %v682 = vpop.f32.mrb[0].mxu0
      %v683 = vadd.f32 %v490, %v682
      %v684 = vpop.f32.mrb[0].mxu0
      %685 = vmatprep.mubr.f32.mxu0 0.0
      %686 = vmatmul.mubr.f32.gmra.mrb[0].mxu0 %v554
      %v687 = vpop.f32.mrb[0].mxu0
      %v688 = vadd.f32 %v495, %v687
      %v689 = vpop.f32.mrb[0].mxu0
      %690 = vmatprep.mubr.f32.mxu0 0.0
      %691 = vmatmul.mubr.f32.gmra.mrb[0].mxu0 %v557
      %v692 = vpop.f32.mrb[0].mxu0
      %v693 = vadd.f32 %v500, %v692
      %v694 = vpop.f32.mrb[0].mxu0
      %695 = vmatprep.mubr.f32.mxu0 0.0
      %696 = vmatmul.mubr.f32.gmra.mrb[0].mxu0 %v560
      %v697 = vpop.f32.mrb[0].mxu0
      %v698 = vadd.f32 %v505, %v697
      %v699 = vpop.f32.mrb[0].mxu0
      %700 = vmatprep.mubr.f32.mxu0 0.0
      %701 = vmatmul.mubr.f32.gmra.mrb[0].mxu0 %v563
      %v702 = vpop.f32.mrb[0].mxu0
      %v703 = vadd.f32 %v510, %v702
      %v704 = vpop.f32.mrb[0].mxu0
      %705 = vmatprep.mubr.f32.mxu0 0.0
      %706 = vmatmul.mubr.f32.gmra.mrb[0].mxu0 %v566
      %v707 = vpop.f32.mrb[0].mxu0
      %v708 = vadd.f32 %v515, %v707
      %v709 = vpop.f32.mrb[0].mxu0
      %710 = vmatprep.mubr.f32.mxu0 0.0
      %711 = vmatmul.mubr.f32.gmra.mrb[0].mxu0 %v569
      %v712 = vpop.f32.mrb[0].mxu0
      %v713 = vadd.f32 %v520, %v712
      %v714 = vpop.f32.mrb[0].mxu0
      %715 = vdwg.mxu0
      %v716 = vld [vmem:[#allocation2 + $0x2] sm:$0xff]
      %v717 = vld [vmem:[#allocation2 + $0xa] sm:$0xff]
      %v718 = vld [vmem:[#allocation2 + $0x12] sm:$0xff]
      %v719 = vld [vmem:[#allocation2 + $0x1a] sm:$0xff]
      %v720 = vld [vmem:[#allocation2 + $0x22] sm:$0xff]
      %v721 = vld [vmem:[#allocation2 + $0x2a] sm:$0xff]
      %v722 = vld [vmem:[#allocation2 + $0x32] sm:$0xff]
      %v723 = vld [vmem:[#allocation2 + $0x3a] sm:$0xff]
      %v724 = vld [vmem:[#allocation2 + $0x42] sm:$0xff]
      %v725 = vld [vmem:[#allocation2 + $0x4a] sm:$0xff]
      %v726 = vld [vmem:[#allocation2 + $0x52] sm:$0xff]
      %v727 = vld [vmem:[#allocation2 + $0x5a] sm:$0xff]
      %v728 = vld [vmem:[#allocation2 + $0x62] sm:$0xff]
      %v729 = vld [vmem:[#allocation2 + $0x6a] sm:$0xff]
      %v730 = vld [vmem:[#allocation2 + $0x72] sm:$0xff]
      %v731 = vld [vmem:[#allocation2 + $0x7a] sm:$0xff]
      %s732 = scalar_lea.vmem %s1, 32
      %v733 = vld [vmem:[%s732] sm:$0xff]
      %v734 = vld [vmem:[%s732 + $0x8] sm:$0xff]
      %v736 = vsel %vm257, %v716, 0
      %v739 = vsel %vm257, %v717, 0
      %v742 = vsel %vm257, %v718, 0
      %v745 = vsel %vm257, %v719, 0
      %v748 = vsel %vm257, %v720, 0
      %v751 = vsel %vm257, %v721, 0
      %v754 = vsel %vm257, %v722, 0
      %v757 = vsel %vm257, %v723, 0
      %v760 = vsel %vm257, %v724, 0
      %v763 = vsel %vm257, %v725, 0
      %v766 = vsel %vm257, %v726, 0
      %v769 = vsel %vm257, %v727, 0
      %v772 = vsel %vm257, %v728, 0
      %v775 = vsel %vm257, %v729, 0
      %v778 = vsel %vm257, %v730, 0
      %v781 = vsel %vm257, %v731, 0
      %783 = vmatprep.subr.mxu0 0.0
      %784 = vmatpush1.msra.mxu0 %v733
      %785 = vmatprep.subr.mxu0 0.0
      %786 = vmatpush1.msra.mxu0 %v734
      %787 = vmatprep.subr.mxu0 0.0
      %788 = vmatpush1.msra.mxu0 0.0
      %789 = vmatprep.subr.mxu0 0.0
      %790 = vmatpush1.msra.mxu0 0.0
      %791 = vmatprep.subr.mxu0 0.0
      %792 = vmatpush1.msra.mxu0 0.0
      %793 = vmatprep.subr.mxu0 0.0
      %794 = vmatpush1.msra.mxu0 0.0
      %795 = vmatprep.subr.mxu0 0.0
      %796 = vmatpush1.msra.mxu0 0.0
      %797 = vmatprep.subr.mxu0 0.0
      %798 = vmatpush1.msra.mxu0 0.0
      %799 = vmatprep.subr.mxu0 0.0
      %800 = vmatpush1.msra.mxu0 0.0
      %801 = vmatprep.subr.mxu0 0.0
      %802 = vmatpush1.msra.mxu0 0.0
      %803 = vmatprep.subr.mxu0 0.0
      %804 = vmatpush1.msra.mxu0 0.0
      %805 = vmatprep.subr.mxu0 0.0
      %806 = vmatpush1.msra.mxu0 0.0
      %807 = vmatprep.subr.mxu0 0.0
      %808 = vmatpush1.msra.mxu0 0.0
      %809 = vmatprep.subr.mxu0 0.0
      %810 = vmatpush1.msra.mxu0 0.0
      %811 = vmatprep.subr.mxu0 0.0
      %812 = vmatpush1.msra.mxu0 0.0
      %813 = vmatprep.subr.mxu0 0.0
      %814 = vmatpush1.msra.mxu0 0.0
      %815 = vmatprep.subr.mxu0 0.0
      %816 = vmatpush1.msra.mxu0 0.0
      %817 = vmatprep.subr.mxu0 0.0
      %818 = vmatpush1.msra.mxu0 0.0
      %819 = vmatprep.subr.mxu0 0.0
      %820 = vmatpush1.msra.mxu0 0.0
      %821 = vmatprep.subr.mxu0 0.0
      %822 = vmatpush1.msra.mxu0 0.0
      %823 = vmatprep.subr.mxu0 0.0
      %824 = vmatpush1.msra.mxu0 0.0
      %825 = vmatprep.subr.mxu0 0.0
      %826 = vmatpush1.msra.mxu0 0.0
      %827 = vmatprep.subr.mxu0 0.0
      %828 = vmatpush1.msra.mxu0 0.0
      %829 = vmatprep.subr.mxu0 0.0
      %830 = vmatpush1.msra.mxu0 0.0
      %831 = vmatprep.subr.mxu0 0.0
      %832 = vmatpush1.msra.mxu0 0.0
      %833 = vmatprep.subr.mxu0 0.0
      %834 = vmatpush1.msra.mxu0 0.0
      %835 = vmatprep.subr.mxu0 0.0
      %836 = vmatpush1.msra.mxu0 0.0
      %837 = vmatprep.subr.mxu0 0.0
      %838 = vmatpush1.msra.mxu0 0.0
      %839 = vmatprep.subr.mxu0 0.0
      %840 = vmatpush1.msra.mxu0 0.0
      %841 = vmatprep.subr.mxu0 0.0
      %842 = vmatpush1.msra.mxu0 0.0
      %843 = vmatprep.subr.mxu0 0.0
      %844 = vmatpush1.msra.mxu0 0.0
      %845 = vmatprep.subr.mxu0 0.0
      %846 = vmatpush1.msra.mxu0 0.0
      %847 = vmatprep.mubr.f32.mxu0 0.0
      %848 = vmatmul.mubr.f32.gmra.mrb[0].mxu0 %v736
      %v849 = vpop.f32.mrb[0].mxu0
      %v850 = vadd.f32 0.0, %v849
      %v851 = vpop.f32.mrb[0].mxu0
      %852 = vmatprep.mubr.f32.mxu0 0.0
      %853 = vmatmul.mubr.f32.gmra.mrb[0].mxu0 %v739
      %v854 = vpop.f32.mrb[0].mxu0
      %v855 = vadd.f32 0.0, %v854
      %v856 = vpop.f32.mrb[0].mxu0
      %857 = vmatprep.mubr.f32.mxu0 0.0
      %858 = vmatmul.mubr.f32.gmra.mrb[0].mxu0 %v742
      %v859 = vpop.f32.mrb[0].mxu0
      %v860 = vadd.f32 0.0, %v859
      %v861 = vpop.f32.mrb[0].mxu0
      %862 = vmatprep.mubr.f32.mxu0 0.0
      %863 = vmatmul.mubr.f32.gmra.mrb[0].mxu0 %v745
      %v864 = vpop.f32.mrb[0].mxu0
      %v865 = vadd.f32 0.0, %v864
      %v866 = vpop.f32.mrb[0].mxu0
      %867 = vmatprep.mubr.f32.mxu0 0.0
      %868 = vmatmul.mubr.f32.gmra.mrb[0].mxu0 %v748
      %v869 = vpop.f32.mrb[0].mxu0
      %v870 = vadd.f32 0.0, %v869
      %v871 = vpop.f32.mrb[0].mxu0
      %872 = vmatprep.mubr.f32.mxu0 0.0
      %873 = vmatmul.mubr.f32.gmra.mrb[0].mxu0 %v751
      %v874 = vpop.f32.mrb[0].mxu0
      %v875 = vadd.f32 0.0, %v874
      %v876 = vpop.f32.mrb[0].mxu0
      %877 = vmatprep.mubr.f32.mxu0 0.0
      %878 = vmatmul.mubr.f32.gmra.mrb[0].mxu0 %v754
      %v879 = vpop.f32.mrb[0].mxu0
      %v880 = vadd.f32 0.0, %v879
      %v881 = vpop.f32.mrb[0].mxu0
      %882 = vmatprep.mubr.f32.mxu0 0.0
      %883 = vmatmul.mubr.f32.gmra.mrb[0].mxu0 %v757
      %v884 = vpop.f32.mrb[0].mxu0
      %v885 = vadd.f32 0.0, %v884
      %v886 = vpop.f32.mrb[0].mxu0
      %887 = vmatprep.mubr.f32.mxu0 0.0
      %888 = vmatmul.mubr.f32.gmra.mrb[0].mxu0 %v760
      %v889 = vpop.f32.mrb[0].mxu0
      %v890 = vadd.f32 0.0, %v889
      %v891 = vpop.f32.mrb[0].mxu0
      %892 = vmatprep.mubr.f32.mxu0 0.0
      %893 = vmatmul.mubr.f32.gmra.mrb[0].mxu0 %v763
      %v894 = vpop.f32.mrb[0].mxu0
      %v895 = vadd.f32 0.0, %v894
      %v896 = vpop.f32.mrb[0].mxu0
      %897 = vmatprep.mubr.f32.mxu0 0.0
      %898 = vmatmul.mubr.f32.gmra.mrb[0].mxu0 %v766
      %v899 = vpop.f32.mrb[0].mxu0
      %v900 = vadd.f32 0.0, %v899
      %v901 = vpop.f32.mrb[0].mxu0
      %902 = vmatprep.mubr.f32.mxu0 0.0
      %903 = vmatmul.mubr.f32.gmra.mrb[0].mxu0 %v769
      %v904 = vpop.f32.mrb[0].mxu0
      %v905 = vadd.f32 0.0, %v904
      %v906 = vpop.f32.mrb[0].mxu0
      %907 = vmatprep.mubr.f32.mxu0 0.0
      %908 = vmatmul.mubr.f32.gmra.mrb[0].mxu0 %v772
      %v909 = vpop.f32.mrb[0].mxu0
      %v910 = vadd.f32 0.0, %v909
      %v911 = vpop.f32.mrb[0].mxu0
      %912 = vmatprep.mubr.f32.mxu0 0.0
      %913 = vmatmul.mubr.f32.gmra.mrb[0].mxu0 %v775
      %v914 = vpop.f32.mrb[0].mxu0
      %v915 = vadd.f32 0.0, %v914
      %v916 = vpop.f32.mrb[0].mxu0
      %917 = vmatprep.mubr.f32.mxu0 0.0
      %918 = vmatmul.mubr.f32.gmra.mrb[0].mxu0 %v778
      %v919 = vpop.f32.mrb[0].mxu0
      %v920 = vadd.f32 0.0, %v919
      %v921 = vpop.f32.mrb[0].mxu0
      %922 = vmatprep.mubr.f32.mxu0 0.0
      %923 = vmatmul.mubr.f32.gmra.mrb[0].mxu0 %v781
      %v924 = vpop.f32.mrb[0].mxu0
      %v925 = vadd.f32 0.0, %v924
      %v926 = vpop.f32.mrb[0].mxu0
      %927 = vdwg.mxu0
      %v928 = vadd.f32 %v638, %v850
      %v929 = vadd.f32 %v643, %v855
      %v930 = vadd.f32 %v648, %v860
      %v931 = vadd.f32 %v653, %v865
      %v932 = vadd.f32 %v658, %v870
      %v933 = vadd.f32 %v663, %v875
      %v934 = vadd.f32 %v668, %v880
      %v935 = vadd.f32 %v673, %v885
      %v936 = vadd.f32 %v678, %v890
      %v937 = vadd.f32 %v683, %v895
      %v938 = vadd.f32 %v688, %v900
      %v939 = vadd.f32 %v693, %v905
      %v940 = vadd.f32 %v698, %v910
      %v941 = vadd.f32 %v703, %v915
      %v942 = vadd.f32 %v708, %v920
      %v943 = vadd.f32 %v713, %v925
      %v944 = vld [vmem:[#allocation2 + $0x3] sm:$0xff]
      %v945 = vld [vmem:[#allocation2 + $0xb] sm:$0xff]
      %v946 = vld [vmem:[#allocation2 + $0x13] sm:$0xff]
      %v947 = vld [vmem:[#allocation2 + $0x1b] sm:$0xff]
      %v948 = vld [vmem:[#allocation2 + $0x23] sm:$0xff]
      %v949 = vld [vmem:[#allocation2 + $0x2b] sm:$0xff]
      %v950 = vld [vmem:[#allocation2 + $0x33] sm:$0xff]
      %v951 = vld [vmem:[#allocation2 + $0x3b] sm:$0xff]
      %v952 = vld [vmem:[#allocation2 + $0x43] sm:$0xff]
      %v953 = vld [vmem:[#allocation2 + $0x4b] sm:$0xff]
      %v954 = vld [vmem:[#allocation2 + $0x53] sm:$0xff]
      %v955 = vld [vmem:[#allocation2 + $0x5b] sm:$0xff]
      %v956 = vld [vmem:[#allocation2 + $0x63] sm:$0xff]
      %v957 = vld [vmem:[#allocation2 + $0x6b] sm:$0xff]
      %v958 = vld [vmem:[#allocation2 + $0x73] sm:$0xff]
      %v959 = vld [vmem:[#allocation2 + $0x7b] sm:$0xff]
      %s960 = scalar_lea.vmem %s1, 48
      %v961 = vld [vmem:[%s960] sm:$0xff]
      %v962 = vld [vmem:[%s960 + $0x8] sm:$0xff]
      %v964 = vsel %vm257, %v944, 0
      %v967 = vsel %vm257, %v945, 0
      %v970 = vsel %vm257, %v946, 0
      %v973 = vsel %vm257, %v947, 0
      %v976 = vsel %vm257, %v948, 0
      %v979 = vsel %vm257, %v949, 0
      %v982 = vsel %vm257, %v950, 0
      %v985 = vsel %vm257, %v951, 0
      %v988 = vsel %vm257, %v952, 0
      %v991 = vsel %vm257, %v953, 0
      %v994 = vsel %vm257, %v954, 0
      %v997 = vsel %vm257, %v955, 0
      %v1000 = vsel %vm257, %v956, 0
      %v1003 = vsel %vm257, %v957, 0
      %v1006 = vsel %vm257, %v958, 0
      %v1009 = vsel %vm257, %v959, 0
      %1011 = vmatprep.subr.mxu0 0.0
      %1012 = vmatpush1.msra.mxu0 %v961
      %1013 = vmatprep.subr.mxu0 0.0
      %1014 = vmatpush1.msra.mxu0 %v962
      %1015 = vmatprep.subr.mxu0 0.0
      %1016 = vmatpush1.msra.mxu0 0.0
      %1017 = vmatprep.subr.mxu0 0.0
      %1018 = vmatpush1.msra.mxu0 0.0
      %1019 = vmatprep.subr.mxu0 0.0
      %1020 = vmatpush1.msra.mxu0 0.0
      %1021 = vmatprep.subr.mxu0 0.0
      %1022 = vmatpush1.msra.mxu0 0.0
      %1023 = vmatprep.subr.mxu0 0.0
      %1024 = vmatpush1.msra.mxu0 0.0
      %1025 = vmatprep.subr.mxu0 0.0
      %1026 = vmatpush1.msra.mxu0 0.0
      %1027 = vmatprep.subr.mxu0 0.0
      %1028 = vmatpush1.msra.mxu0 0.0
      %1029 = vmatprep.subr.mxu0 0.0
      %1030 = vmatpush1.msra.mxu0 0.0
      %1031 = vmatprep.subr.mxu0 0.0
      %1032 = vmatpush1.msra.mxu0 0.0
      %1033 = vmatprep.subr.mxu0 0.0
      %1034 = vmatpush1.msra.mxu0 0.0
      %1035 = vmatprep.subr.mxu0 0.0
      %1036 = vmatpush1.msra.mxu0 0.0
      %1037 = vmatprep.subr.mxu0 0.0
      %1038 = vmatpush1.msra.mxu0 0.0
      %1039 = vmatprep.subr.mxu0 0.0
      %1040 = vmatpush1.msra.mxu0 0.0
      %1041 = vmatprep.subr.mxu0 0.0
      %1042 = vmatpush1.msra.mxu0 0.0
      %1043 = vmatprep.subr.mxu0 0.0
      %1044 = vmatpush1.msra.mxu0 0.0
      %1045 = vmatprep.subr.mxu0 0.0
      %1046 = vmatpush1.msra.mxu0 0.0
      %1047 = vmatprep.subr.mxu0 0.0
      %1048 = vmatpush1.msra.mxu0 0.0
      %1049 = vmatprep.subr.mxu0 0.0
      %1050 = vmatpush1.msra.mxu0 0.0
      %1051 = vmatprep.subr.mxu0 0.0
      %1052 = vmatpush1.msra.mxu0 0.0
      %1053 = vmatprep.subr.mxu0 0.0
      %1054 = vmatpush1.msra.mxu0 0.0
      %1055 = vmatprep.subr.mxu0 0.0
      %1056 = vmatpush1.msra.mxu0 0.0
      %1057 = vmatprep.subr.mxu0 0.0
      %1058 = vmatpush1.msra.mxu0 0.0
      %1059 = vmatprep.subr.mxu0 0.0
      %1060 = vmatpush1.msra.mxu0 0.0
      %1061 = vmatprep.subr.mxu0 0.0
      %1062 = vmatpush1.msra.mxu0 0.0
      %1063 = vmatprep.subr.mxu0 0.0
      %1064 = vmatpush1.msra.mxu0 0.0
      %1065 = vmatprep.subr.mxu0 0.0
      %1066 = vmatpush1.msra.mxu0 0.0
      %1067 = vmatprep.subr.mxu0 0.0
      %1068 = vmatpush1.msra.mxu0 0.0
      %1069 = vmatprep.subr.mxu0 0.0
      %1070 = vmatpush1.msra.mxu0 0.0
      %1071 = vmatprep.subr.mxu0 0.0
      %1072 = vmatpush1.msra.mxu0 0.0
      %1073 = vmatprep.subr.mxu0 0.0
      %1074 = vmatpush1.msra.mxu0 0.0
      %1075 = vmatprep.mubr.f32.mxu0 0.0
      %1076 = vmatmul.mubr.f32.gmra.mrb[0].mxu0 %v964
      %v1077 = vpop.f32.mrb[0].mxu0
      %v1078 = vadd.f32 0.0, %v1077
      %v1079 = vpop.f32.mrb[0].mxu0
      %1080 = vmatprep.mubr.f32.mxu0 0.0
      %1081 = vmatmul.mubr.f32.gmra.mrb[0].mxu0 %v967
      %v1082 = vpop.f32.mrb[0].mxu0
      %v1083 = vadd.f32 0.0, %v1082
      %v1084 = vpop.f32.mrb[0].mxu0
      %1085 = vmatprep.mubr.f32.mxu0 0.0
      %1086 = vmatmul.mubr.f32.gmra.mrb[0].mxu0 %v970
      %v1087 = vpop.f32.mrb[0].mxu0
      %v1088 = vadd.f32 0.0, %v1087
      %v1089 = vpop.f32.mrb[0].mxu0
      %1090 = vmatprep.mubr.f32.mxu0 0.0
      %1091 = vmatmul.mubr.f32.gmra.mrb[0].mxu0 %v973
      %v1092 = vpop.f32.mrb[0].mxu0
      %v1093 = vadd.f32 0.0, %v1092
      %v1094 = vpop.f32.mrb[0].mxu0
      %1095 = vmatprep.mubr.f32.mxu0 0.0
      %1096 = vmatmul.mubr.f32.gmra.mrb[0].mxu0 %v976
      %v1097 = vpop.f32.mrb[0].mxu0
      %v1098 = vadd.f32 0.0, %v1097
      %v1099 = vpop.f32.mrb[0].mxu0
      %1100 = vmatprep.mubr.f32.mxu0 0.0
      %1101 = vmatmul.mubr.f32.gmra.mrb[0].mxu0 %v979
      %v1102 = vpop.f32.mrb[0].mxu0
      %v1103 = vadd.f32 0.0, %v1102
      %v1104 = vpop.f32.mrb[0].mxu0
      %1105 = vmatprep.mubr.f32.mxu0 0.0
      %1106 = vmatmul.mubr.f32.gmra.mrb[0].mxu0 %v982
      %v1107 = vpop.f32.mrb[0].mxu0
      %v1108 = vadd.f32 0.0, %v1107
      %v1109 = vpop.f32.mrb[0].mxu0
      %1110 = vmatprep.mubr.f32.mxu0 0.0
      %1111 = vmatmul.mubr.f32.gmra.mrb[0].mxu0 %v985
      %v1112 = vpop.f32.mrb[0].mxu0
      %v1113 = vadd.f32 0.0, %v1112
      %v1114 = vpop.f32.mrb[0].mxu0
      %1115 = vmatprep.mubr.f32.mxu0 0.0
      %1116 = vmatmul.mubr.f32.gmra.mrb[0].mxu0 %v988
      %v1117 = vpop.f32.mrb[0].mxu0
      %v1118 = vadd.f32 0.0, %v1117
      %v1119 = vpop.f32.mrb[0].mxu0
      %1120 = vmatprep.mubr.f32.mxu0 0.0
      %1121 = vmatmul.mubr.f32.gmra.mrb[0].mxu0 %v991
      %v1122 = vpop.f32.mrb[0].mxu0
      %v1123 = vadd.f32 0.0, %v1122
      %v1124 = vpop.f32.mrb[0].mxu0
      %1125 = vmatprep.mubr.f32.mxu0 0.0
      %1126 = vmatmul.mubr.f32.gmra.mrb[0].mxu0 %v994
      %v1127 = vpop.f32.mrb[0].mxu0
      %v1128 = vadd.f32 0.0, %v1127
      %v1129 = vpop.f32.mrb[0].mxu0
      %1130 = vmatprep.mubr.f32.mxu0 0.0
      %1131 = vmatmul.mubr.f32.gmra.mrb[0].mxu0 %v997
      %v1132 = vpop.f32.mrb[0].mxu0
      %v1133 = vadd.f32 0.0, %v1132
      %v1134 = vpop.f32.mrb[0].mxu0
      %1135 = vmatprep.mubr.f32.mxu0 0.0
      %1136 = vmatmul.mubr.f32.gmra.mrb[0].mxu0 %v1000
      %v1137 = vpop.f32.mrb[0].mxu0
      %v1138 = vadd.f32 0.0, %v1137
      %v1139 = vpop.f32.mrb[0].mxu0
      %1140 = vmatprep.mubr.f32.mxu0 0.0
      %1141 = vmatmul.mubr.f32.gmra.mrb[0].mxu0 %v1003
      %v1142 = vpop.f32.mrb[0].mxu0
      %v1143 = vadd.f32 0.0, %v1142
      %v1144 = vpop.f32.mrb[0].mxu0
      %1145 = vmatprep.mubr.f32.mxu0 0.0
      %1146 = vmatmul.mubr.f32.gmra.mrb[0].mxu0 %v1006
      %v1147 = vpop.f32.mrb[0].mxu0
      %v1148 = vadd.f32 0.0, %v1147
      %v1149 = vpop.f32.mrb[0].mxu0
      %1150 = vmatprep.mubr.f32.mxu0 0.0
      %1151 = vmatmul.mubr.f32.gmra.mrb[0].mxu0 %v1009
      %v1152 = vpop.f32.mrb[0].mxu0
      %v1153 = vadd.f32 0.0, %v1152
      %v1154 = vpop.f32.mrb[0].mxu0
      %1155 = vdwg.mxu0
      %v1156 = vadd.f32 %v928, %v1078
      %v1157 = vadd.f32 %v929, %v1083
      %v1158 = vadd.f32 %v930, %v1088
      %v1159 = vadd.f32 %v931, %v1093
      %v1160 = vadd.f32 %v932, %v1098
      %v1161 = vadd.f32 %v933, %v1103
      %v1162 = vadd.f32 %v934, %v1108
      %v1163 = vadd.f32 %v935, %v1113
      %v1164 = vadd.f32 %v936, %v1118
      %v1165 = vadd.f32 %v937, %v1123
      %v1166 = vadd.f32 %v938, %v1128
      %v1167 = vadd.f32 %v939, %v1133
      %v1168 = vadd.f32 %v940, %v1138
      %v1169 = vadd.f32 %v941, %v1143
      %v1170 = vadd.f32 %v942, %v1148
      %v1171 = vadd.f32 %v943, %v1153
      %v1172 = vld [vmem:[#allocation2 + $0x4] sm:$0xff]
      %v1173 = vld [vmem:[#allocation2 + $0xc] sm:$0xff]
      %v1174 = vld [vmem:[#allocation2 + $0x14] sm:$0xff]
      %v1175 = vld [vmem:[#allocation2 + $0x1c] sm:$0xff]
      %v1176 = vld [vmem:[#allocation2 + $0x24] sm:$0xff]
      %v1177 = vld [vmem:[#allocation2 + $0x2c] sm:$0xff]
      %v1178 = vld [vmem:[#allocation2 + $0x34] sm:$0xff]
      %v1179 = vld [vmem:[#allocation2 + $0x3c] sm:$0xff]
      %v1180 = vld [vmem:[#allocation2 + $0x44] sm:$0xff]
      %v1181 = vld [vmem:[#allocation2 + $0x4c] sm:$0xff]
      %v1182 = vld [vmem:[#allocation2 + $0x54] sm:$0xff]
      %v1183 = vld [vmem:[#allocation2 + $0x5c] sm:$0xff]
      %v1184 = vld [vmem:[#allocation2 + $0x64] sm:$0xff]
      %v1185 = vld [vmem:[#allocation2 + $0x6c] sm:$0xff]
      %v1186 = vld [vmem:[#allocation2 + $0x74] sm:$0xff]
      %v1187 = vld [vmem:[#allocation2 + $0x7c] sm:$0xff]
      %s1188 = scalar_lea.vmem %s1, 64
      %v1189 = vld [vmem:[%s1188] sm:$0xff]
      %v1190 = vld [vmem:[%s1188 + $0x8] sm:$0xff]
      %v1192 = vsel %vm257, %v1172, 0
      %v1195 = vsel %vm257, %v1173, 0
      %v1198 = vsel %vm257, %v1174, 0
      %v1201 = vsel %vm257, %v1175, 0
      %v1204 = vsel %vm257, %v1176, 0
      %v1207 = vsel %vm257, %v1177, 0
      %v1210 = vsel %vm257, %v1178, 0
      %v1213 = vsel %vm257, %v1179, 0
      %v1216 = vsel %vm257, %v1180, 0
      %v1219 = vsel %vm257, %v1181, 0
      %v1222 = vsel %vm257, %v1182, 0
      %v1225 = vsel %vm257, %v1183, 0
      %v1228 = vsel %vm257, %v1184, 0
      %v1231 = vsel %vm257, %v1185, 0
      %v1234 = vsel %vm257, %v1186, 0
      %v1237 = vsel %vm257, %v1187, 0
      %1239 = vmatprep.subr.mxu0 0.0
      %1240 = vmatpush1.msra.mxu0 %v1189
      %1241 = vmatprep.subr.mxu0 0.0
      %1242 = vmatpush1.msra.mxu0 %v1190
      %1243 = vmatprep.subr.mxu0 0.0
      %1244 = vmatpush1.msra.mxu0 0.0
      %1245 = vmatprep.subr.mxu0 0.0
      %1246 = vmatpush1.msra.mxu0 0.0
      %1247 = vmatprep.subr.mxu0 0.0
      %1248 = vmatpush1.msra.mxu0 0.0
      %1249 = vmatprep.subr.mxu0 0.0
      %1250 = vmatpush1.msra.mxu0 0.0
      %1251 = vmatprep.subr.mxu0 0.0
      %1252 = vmatpush1.msra.mxu0 0.0
      %1253 = vmatprep.subr.mxu0 0.0
      %1254 = vmatpush1.msra.mxu0 0.0
      %1255 = vmatprep.subr.mxu0 0.0
      %1256 = vmatpush1.msra.mxu0 0.0
      %1257 = vmatprep.subr.mxu0 0.0
      %1258 = vmatpush1.msra.mxu0 0.0
      %1259 = vmatprep.subr.mxu0 0.0
      %1260 = vmatpush1.msra.mxu0 0.0
      %1261 = vmatprep.subr.mxu0 0.0
      %1262 = vmatpush1.msra.mxu0 0.0
      %1263 = vmatprep.subr.mxu0 0.0
      %1264 = vmatpush1.msra.mxu0 0.0
      %1265 = vmatprep.subr.mxu0 0.0
      %1266 = vmatpush1.msra.mxu0 0.0
      %1267 = vmatprep.subr.mxu0 0.0
      %1268 = vmatpush1.msra.mxu0 0.0
      %1269 = vmatprep.subr.mxu0 0.0
      %1270 = vmatpush1.msra.mxu0 0.0
      %1271 = vmatprep.subr.mxu0 0.0
      %1272 = vmatpush1.msra.mxu0 0.0
      %1273 = vmatprep.subr.mxu0 0.0
      %1274 = vmatpush1.msra.mxu0 0.0
      %1275 = vmatprep.subr.mxu0 0.0
      %1276 = vmatpush1.msra.mxu0 0.0
      %1277 = vmatprep.subr.mxu0 0.0
      %1278 = vmatpush1.msra.mxu0 0.0
      %1279 = vmatprep.subr.mxu0 0.0
      %1280 = vmatpush1.msra.mxu0 0.0
      %1281 = vmatprep.subr.mxu0 0.0
      %1282 = vmatpush1.msra.mxu0 0.0
      %1283 = vmatprep.subr.mxu0 0.0
      %1284 = vmatpush1.msra.mxu0 0.0
      %1285 = vmatprep.subr.mxu0 0.0
      %1286 = vmatpush1.msra.mxu0 0.0
      %1287 = vmatprep.subr.mxu0 0.0
      %1288 = vmatpush1.msra.mxu0 0.0
      %1289 = vmatprep.subr.mxu0 0.0
      %1290 = vmatpush1.msra.mxu0 0.0
      %1291 = vmatprep.subr.mxu0 0.0
      %1292 = vmatpush1.msra.mxu0 0.0
      %1293 = vmatprep.subr.mxu0 0.0
      %1294 = vmatpush1.msra.mxu0 0.0
      %1295 = vmatprep.subr.mxu0 0.0
      %1296 = vmatpush1.msra.mxu0 0.0
      %1297 = vmatprep.subr.mxu0 0.0
      %1298 = vmatpush1.msra.mxu0 0.0
      %1299 = vmatprep.subr.mxu0 0.0
      %1300 = vmatpush1.msra.mxu0 0.0
      %1301 = vmatprep.subr.mxu0 0.0
      %1302 = vmatpush1.msra.mxu0 0.0
      %1303 = vmatprep.mubr.f32.mxu0 0.0
      %1304 = vmatmul.mubr.f32.gmra.mrb[0].mxu0 %v1192
      %v1305 = vpop.f32.mrb[0].mxu0
      %v1306 = vadd.f32 0.0, %v1305
      %v1307 = vpop.f32.mrb[0].mxu0
      %1308 = vmatprep.mubr.f32.mxu0 0.0
      %1309 = vmatmul.mubr.f32.gmra.mrb[0].mxu0 %v1195
      %v1310 = vpop.f32.mrb[0].mxu0
      %v1311 = vadd.f32 0.0, %v1310
      %v1312 = vpop.f32.mrb[0].mxu0
      %1313 = vmatprep.mubr.f32.mxu0 0.0
      %1314 = vmatmul.mubr.f32.gmra.mrb[0].mxu0 %v1198
      %v1315 = vpop.f32.mrb[0].mxu0
      %v1316 = vadd.f32 0.0, %v1315
      %v1317 = vpop.f32.mrb[0].mxu0
      %1318 = vmatprep.mubr.f32.mxu0 0.0
      %1319 = vmatmul.mubr.f32.gmra.mrb[0].mxu0 %v1201
      %v1320 = vpop.f32.mrb[0].mxu0
      %v1321 = vadd.f32 0.0, %v1320
      %v1322 = vpop.f32.mrb[0].mxu0
      %1323 = vmatprep.mubr.f32.mxu0 0.0
      %1324 = vmatmul.mubr.f32.gmra.mrb[0].mxu0 %v1204
      %v1325 = vpop.f32.mrb[0].mxu0
      %v1326 = vadd.f32 0.0, %v1325
      %v1327 = vpop.f32.mrb[0].mxu0
      %1328 = vmatprep.mubr.f32.mxu0 0.0
      %1329 = vmatmul.mubr.f32.gmra.mrb[0].mxu0 %v1207
      %v1330 = vpop.f32.mrb[0].mxu0
      %v1331 = vadd.f32 0.0, %v1330
      %v1332 = vpop.f32.mrb[0].mxu0
      %1333 = vmatprep.mubr.f32.mxu0 0.0
      %1334 = vmatmul.mubr.f32.gmra.mrb[0].mxu0 %v1210
      %v1335 = vpop.f32.mrb[0].mxu0
      %v1336 = vadd.f32 0.0, %v1335
      %v1337 = vpop.f32.mrb[0].mxu0
      %1338 = vmatprep.mubr.f32.mxu0 0.0
      %1339 = vmatmul.mubr.f32.gmra.mrb[0].mxu0 %v1213
      %v1340 = vpop.f32.mrb[0].mxu0
      %v1341 = vadd.f32 0.0, %v1340
      %v1342 = vpop.f32.mrb[0].mxu0
      %1343 = vmatprep.mubr.f32.mxu0 0.0
      %1344 = vmatmul.mubr.f32.gmra.mrb[0].mxu0 %v1216
      %v1345 = vpop.f32.mrb[0].mxu0
      %v1346 = vadd.f32 0.0, %v1345
      %v1347 = vpop.f32.mrb[0].mxu0
      %1348 = vmatprep.mubr.f32.mxu0 0.0
      %1349 = vmatmul.mubr.f32.gmra.mrb[0].mxu0 %v1219
      %v1350 = vpop.f32.mrb[0].mxu0
      %v1351 = vadd.f32 0.0, %v1350
      %v1352 = vpop.f32.mrb[0].mxu0
      %1353 = vmatprep.mubr.f32.mxu0 0.0
      %1354 = vmatmul.mubr.f32.gmra.mrb[0].mxu0 %v1222
      %v1355 = vpop.f32.mrb[0].mxu0
      %v1356 = vadd.f32 0.0, %v1355
      %v1357 = vpop.f32.mrb[0].mxu0
      %1358 = vmatprep.mubr.f32.mxu0 0.0
      %1359 = vmatmul.mubr.f32.gmra.mrb[0].mxu0 %v1225
      %v1360 = vpop.f32.mrb[0].mxu0
      %v1361 = vadd.f32 0.0, %v1360
      %v1362 = vpop.f32.mrb[0].mxu0
      %1363 = vmatprep.mubr.f32.mxu0 0.0
      %1364 = vmatmul.mubr.f32.gmra.mrb[0].mxu0 %v1228
      %v1365 = vpop.f32.mrb[0].mxu0
      %v1366 = vadd.f32 0.0, %v1365
      %v1367 = vpop.f32.mrb[0].mxu0
      %1368 = vmatprep.mubr.f32.mxu0 0.0
      %1369 = vmatmul.mubr.f32.gmra.mrb[0].mxu0 %v1231
      %v1370 = vpop.f32.mrb[0].mxu0
      %v1371 = vadd.f32 0.0, %v1370
      %v1372 = vpop.f32.mrb[0].mxu0
      %1373 = vmatprep.mubr.f32.mxu0 0.0
      %1374 = vmatmul.mubr.f32.gmra.mrb[0].mxu0 %v1234
      %v1375 = vpop.f32.mrb[0].mxu0
      %v1376 = vadd.f32 0.0, %v1375
      %v1377 = vpop.f32.mrb[0].mxu0
      %1378 = vmatprep.mubr.f32.mxu0 0.0
      %1379 = vmatmul.mubr.f32.gmra.mrb[0].mxu0 %v1237
      %v1380 = vpop.f32.mrb[0].mxu0
      %v1381 = vadd.f32 0.0, %v1380
      %v1382 = vpop.f32.mrb[0].mxu0
      %1383 = vdwg.mxu0
      %v1384 = vadd.f32 %v1156, %v1306
      %v1385 = vadd.f32 %v1157, %v1311
      %v1386 = vadd.f32 %v1158, %v1316
      %v1387 = vadd.f32 %v1159, %v1321
      %v1388 = vadd.f32 %v1160, %v1326
      %v1389 = vadd.f32 %v1161, %v1331
      %v1390 = vadd.f32 %v1162, %v1336
      %v1391 = vadd.f32 %v1163, %v1341
      %v1392 = vadd.f32 %v1164, %v1346
      %v1393 = vadd.f32 %v1165, %v1351
      %v1394 = vadd.f32 %v1166, %v1356
      %v1395 = vadd.f32 %v1167, %v1361
      %v1396 = vadd.f32 %v1168, %v1366
      %v1397 = vadd.f32 %v1169, %v1371
      %v1398 = vadd.f32 %v1170, %v1376
      %v1399 = vadd.f32 %v1171, %v1381
      %v1400 = vld [vmem:[#allocation2 + $0x5] sm:$0xff]
      %v1401 = vld [vmem:[#allocation2 + $0xd] sm:$0xff]
      %v1402 = vld [vmem:[#allocation2 + $0x15] sm:$0xff]
      %v1403 = vld [vmem:[#allocation2 + $0x1d] sm:$0xff]
      %v1404 = vld [vmem:[#allocation2 + $0x25] sm:$0xff]
      %v1405 = vld [vmem:[#allocation2 + $0x2d] sm:$0xff]
      %v1406 = vld [vmem:[#allocation2 + $0x35] sm:$0xff]
      %v1407 = vld [vmem:[#allocation2 + $0x3d] sm:$0xff]
      %v1408 = vld [vmem:[#allocation2 + $0x45] sm:$0xff]
      %v1409 = vld [vmem:[#allocation2 + $0x4d] sm:$0xff]
      %v1410 = vld [vmem:[#allocation2 + $0x55] sm:$0xff]
      %v1411 = vld [vmem:[#allocation2 + $0x5d] sm:$0xff]
      %v1412 = vld [vmem:[#allocation2 + $0x65] sm:$0xff]
      %v1413 = vld [vmem:[#allocation2 + $0x6d] sm:$0xff]
      %v1414 = vld [vmem:[#allocation2 + $0x75] sm:$0xff]
      %v1415 = vld [vmem:[#allocation2 + $0x7d] sm:$0xff]
      %s1416 = scalar_lea.vmem %s1, 80
      %v1417 = vld [vmem:[%s1416] sm:$0xff]
      %v1418 = vld [vmem:[%s1416 + $0x8] sm:$0xff]
      %v1420 = vsel %vm257, %v1400, 0
      %v1423 = vsel %vm257, %v1401, 0
      %v1426 = vsel %vm257, %v1402, 0
      %v1429 = vsel %vm257, %v1403, 0
      %v1432 = vsel %vm257, %v1404, 0
      %v1435 = vsel %vm257, %v1405, 0
      %v1438 = vsel %vm257, %v1406, 0
      %v1441 = vsel %vm257, %v1407, 0
      %v1444 = vsel %vm257, %v1408, 0
      %v1447 = vsel %vm257, %v1409, 0
      %v1450 = vsel %vm257, %v1410, 0
      %v1453 = vsel %vm257, %v1411, 0
      %v1456 = vsel %vm257, %v1412, 0
      %v1459 = vsel %vm257, %v1413, 0
      %v1462 = vsel %vm257, %v1414, 0
      %v1465 = vsel %vm257, %v1415, 0
      %1467 = vmatprep.subr.mxu0 0.0
      %1468 = vmatpush1.msra.mxu0 %v1417
      %1469 = vmatprep.subr.mxu0 0.0
      %1470 = vmatpush1.msra.mxu0 %v1418
      %1471 = vmatprep.subr.mxu0 0.0
      %1472 = vmatpush1.msra.mxu0 0.0
      %1473 = vmatprep.subr.mxu0 0.0
      %1474 = vmatpush1.msra.mxu0 0.0
      %1475 = vmatprep.subr.mxu0 0.0
      %1476 = vmatpush1.msra.mxu0 0.0
      %1477 = vmatprep.subr.mxu0 0.0
      %1478 = vmatpush1.msra.mxu0 0.0
      %1479 = vmatprep.subr.mxu0 0.0
      %1480 = vmatpush1.msra.mxu0 0.0
      %1481 = vmatprep.subr.mxu0 0.0
      %1482 = vmatpush1.msra.mxu0 0.0
      %1483 = vmatprep.subr.mxu0 0.0
      %1484 = vmatpush1.msra.mxu0 0.0
      %1485 = vmatprep.subr.mxu0 0.0
      %1486 = vmatpush1.msra.mxu0 0.0
      %1487 = vmatprep.subr.mxu0 0.0
      %1488 = vmatpush1.msra.mxu0 0.0
      %1489 = vmatprep.subr.mxu0 0.0
      %1490 = vmatpush1.msra.mxu0 0.0
      %1491 = vmatprep.subr.mxu0 0.0
      %1492 = vmatpush1.msra.mxu0 0.0
      %1493 = vmatprep.subr.mxu0 0.0
      %1494 = vmatpush1.msra.mxu0 0.0
      %1495 = vmatprep.subr.mxu0 0.0
      %1496 = vmatpush1.msra.mxu0 0.0
      %1497 = vmatprep.subr.mxu0 0.0
      %1498 = vmatpush1.msra.mxu0 0.0
      %1499 = vmatprep.subr.mxu0 0.0
      %1500 = vmatpush1.msra.mxu0 0.0
      %1501 = vmatprep.subr.mxu0 0.0
      %1502 = vmatpush1.msra.mxu0 0.0
      %1503 = vmatprep.subr.mxu0 0.0
      %1504 = vmatpush1.msra.mxu0 0.0
      %1505 = vmatprep.subr.mxu0 0.0
      %1506 = vmatpush1.msra.mxu0 0.0
      %1507 = vmatprep.subr.mxu0 0.0
      %1508 = vmatpush1.msra.mxu0 0.0
      %1509 = vmatprep.subr.mxu0 0.0
      %1510 = vmatpush1.msra.mxu0 0.0
      %1511 = vmatprep.subr.mxu0 0.0
      %1512 = vmatpush1.msra.mxu0 0.0
      %1513 = vmatprep.subr.mxu0 0.0
      %1514 = vmatpush1.msra.mxu0 0.0
      %1515 = vmatprep.subr.mxu0 0.0
      %1516 = vmatpush1.msra.mxu0 0.0
      %1517 = vmatprep.subr.mxu0 0.0
      %1518 = vmatpush1.msra.mxu0 0.0
      %1519 = vmatprep.subr.mxu0 0.0
      %1520 = vmatpush1.msra.mxu0 0.0
      %1521 = vmatprep.subr.mxu0 0.0
      %1522 = vmatpush1.msra.mxu0 0.0
      %1523 = vmatprep.subr.mxu0 0.0
      %1524 = vmatpush1.msra.mxu0 0.0
      %1525 = vmatprep.subr.mxu0 0.0
      %1526 = vmatpush1.msra.mxu0 0.0
      %1527 = vmatprep.subr.mxu0 0.0
      %1528 = vmatpush1.msra.mxu0 0.0
      %1529 = vmatprep.subr.mxu0 0.0
      %1530 = vmatpush1.msra.mxu0 0.0
      %1531 = vmatprep.mubr.f32.mxu0 0.0
      %1532 = vmatmul.mubr.f32.gmra.mrb[0].mxu0 %v1420
      %v1533 = vpop.f32.mrb[0].mxu0
      %v1534 = vadd.f32 0.0, %v1533
      %v1535 = vpop.f32.mrb[0].mxu0
      %1536 = vmatprep.mubr.f32.mxu0 0.0
      %1537 = vmatmul.mubr.f32.gmra.mrb[0].mxu0 %v1423
      %v1538 = vpop.f32.mrb[0].mxu0
      %v1539 = vadd.f32 0.0, %v1538
      %v1540 = vpop.f32.mrb[0].mxu0
      %1541 = vmatprep.mubr.f32.mxu0 0.0
      %1542 = vmatmul.mubr.f32.gmra.mrb[0].mxu0 %v1426
      %v1543 = vpop.f32.mrb[0].mxu0
      %v1544 = vadd.f32 0.0, %v1543
      %v1545 = vpop.f32.mrb[0].mxu0
      %1546 = vmatprep.mubr.f32.mxu0 0.0
      %1547 = vmatmul.mubr.f32.gmra.mrb[0].mxu0 %v1429
      %v1548 = vpop.f32.mrb[0].mxu0
      %v1549 = vadd.f32 0.0, %v1548
      %v1550 = vpop.f32.mrb[0].mxu0
      %1551 = vmatprep.mubr.f32.mxu0 0.0
      %1552 = vmatmul.mubr.f32.gmra.mrb[0].mxu0 %v1432
      %v1553 = vpop.f32.mrb[0].mxu0
      %v1554 = vadd.f32 0.0, %v1553
      %v1555 = vpop.f32.mrb[0].mxu0
      %1556 = vmatprep.mubr.f32.mxu0 0.0
      %1557 = vmatmul.mubr.f32.gmra.mrb[0].mxu0 %v1435
      %v1558 = vpop.f32.mrb[0].mxu0
      %v1559 = vadd.f32 0.0, %v1558
      %v1560 = vpop.f32.mrb[0].mxu0
      %1561 = vmatprep.mubr.f32.mxu0 0.0
      %1562 = vmatmul.mubr.f32.gmra.mrb[0].mxu0 %v1438
      %v1563 = vpop.f32.mrb[0].mxu0
      %v1564 = vadd.f32 0.0, %v1563
      %v1565 = vpop.f32.mrb[0].mxu0
      %1566 = vmatprep.mubr.f32.mxu0 0.0
      %1567 = vmatmul.mubr.f32.gmra.mrb[0].mxu0 %v1441
      %v1568 = vpop.f32.mrb[0].mxu0
      %v1569 = vadd.f32 0.0, %v1568
      %v1570 = vpop.f32.mrb[0].mxu0
      %1571 = vmatprep.mubr.f32.mxu0 0.0
      %1572 = vmatmul.mubr.f32.gmra.mrb[0].mxu0 %v1444
      %v1573 = vpop.f32.mrb[0].mxu0
      %v1574 = vadd.f32 0.0, %v1573
      %v1575 = vpop.f32.mrb[0].mxu0
      %1576 = vmatprep.mubr.f32.mxu0 0.0
      %1577 = vmatmul.mubr.f32.gmra.mrb[0].mxu0 %v1447
      %v1578 = vpop.f32.mrb[0].mxu0
      %v1579 = vadd.f32 0.0, %v1578
      %v1580 = vpop.f32.mrb[0].mxu0
      %1581 = vmatprep.mubr.f32.mxu0 0.0
      %1582 = vmatmul.mubr.f32.gmra.mrb[0].mxu0 %v1450
      %v1583 = vpop.f32.mrb[0].mxu0
      %v1584 = vadd.f32 0.0, %v1583
      %v1585 = vpop.f32.mrb[0].mxu0
      %1586 = vmatprep.mubr.f32.mxu0 0.0
      %1587 = vmatmul.mubr.f32.gmra.mrb[0].mxu0 %v1453
      %v1588 = vpop.f32.mrb[0].mxu0
      %v1589 = vadd.f32 0.0, %v1588
      %v1590 = vpop.f32.mrb[0].mxu0
      %1591 = vmatprep.mubr.f32.mxu0 0.0
      %1592 = vmatmul.mubr.f32.gmra.mrb[0].mxu0 %v1456
      %v1593 = vpop.f32.mrb[0].mxu0
      %v1594 = vadd.f32 0.0, %v1593
      %v1595 = vpop.f32.mrb[0].mxu0
      %1596 = vmatprep.mubr.f32.mxu0 0.0
      %1597 = vmatmul.mubr.f32.gmra.mrb[0].mxu0 %v1459
      %v1598 = vpop.f32.mrb[0].mxu0
      %v1599 = vadd.f32 0.0, %v1598
      %v1600 = vpop.f32.mrb[0].mxu0
      %1601 = vmatprep.mubr.f32.mxu0 0.0
      %1602 = vmatmul.mubr.f32.gmra.mrb[0].mxu0 %v1462
      %v1603 = vpop.f32.mrb[0].mxu0
      %v1604 = vadd.f32 0.0, %v1603
      %v1605 = vpop.f32.mrb[0].mxu0
      %1606 = vmatprep.mubr.f32.mxu0 0.0
      %1607 = vmatmul.mubr.f32.gmra.mrb[0].mxu0 %v1465
      %v1608 = vpop.f32.mrb[0].mxu0
      %v1609 = vadd.f32 0.0, %v1608
      %v1610 = vpop.f32.mrb[0].mxu0
      %1611 = vdwg.mxu0
      %v1612 = vadd.f32 %v1384, %v1534
      %v1613 = vadd.f32 %v1385, %v1539
      %v1614 = vadd.f32 %v1386, %v1544
      %v1615 = vadd.f32 %v1387, %v1549
      %v1616 = vadd.f32 %v1388, %v1554
      %v1617 = vadd.f32 %v1389, %v1559
      %v1618 = vadd.f32 %v1390, %v1564
      %v1619 = vadd.f32 %v1391, %v1569
      %v1620 = vadd.f32 %v1392, %v1574
      %v1621 = vadd.f32 %v1393, %v1579
      %v1622 = vadd.f32 %v1394, %v1584
      %v1623 = vadd.f32 %v1395, %v1589
      %v1624 = vadd.f32 %v1396, %v1594
      %v1625 = vadd.f32 %v1397, %v1599
      %v1626 = vadd.f32 %v1398, %v1604
      %v1627 = vadd.f32 %v1399, %v1609
      %v1628 = vld [vmem:[#allocation2 + $0x6] sm:$0xff]
      %v1629 = vld [vmem:[#allocation2 + $0xe] sm:$0xff]
      %v1630 = vld [vmem:[#allocation2 + $0x16] sm:$0xff]
      %v1631 = vld [vmem:[#allocation2 + $0x1e] sm:$0xff]
      %v1632 = vld [vmem:[#allocation2 + $0x26] sm:$0xff]
      %v1633 = vld [vmem:[#allocation2 + $0x2e] sm:$0xff]
      %v1634 = vld [vmem:[#allocation2 + $0x36] sm:$0xff]
      %v1635 = vld [vmem:[#allocation2 + $0x3e] sm:$0xff]
      %v1636 = vld [vmem:[#allocation2 + $0x46] sm:$0xff]
      %v1637 = vld [vmem:[#allocation2 + $0x4e] sm:$0xff]
      %v1638 = vld [vmem:[#allocation2 + $0x56] sm:$0xff]
      %v1639 = vld [vmem:[#allocation2 + $0x5e] sm:$0xff]
      %v1640 = vld [vmem:[#allocation2 + $0x66] sm:$0xff]
      %v1641 = vld [vmem:[#allocation2 + $0x6e] sm:$0xff]
      %v1642 = vld [vmem:[#allocation2 + $0x76] sm:$0xff]
      %v1643 = vld [vmem:[#allocation2 + $0x7e] sm:$0xff]
      %s1644 = scalar_lea.vmem %s1, 96
      %v1645 = vld [vmem:[%s1644] sm:$0xff]
      %v1646 = vld [vmem:[%s1644 + $0x8] sm:$0xff]
      %v1648 = vsel %vm257, %v1628, 0
      %v1651 = vsel %vm257, %v1629, 0
      %v1654 = vsel %vm257, %v1630, 0
      %v1657 = vsel %vm257, %v1631, 0
      %v1660 = vsel %vm257, %v1632, 0
      %v1663 = vsel %vm257, %v1633, 0
      %v1666 = vsel %vm257, %v1634, 0
      %v1669 = vsel %vm257, %v1635, 0
      %v1672 = vsel %vm257, %v1636, 0
      %v1675 = vsel %vm257, %v1637, 0
      %v1678 = vsel %vm257, %v1638, 0
      %v1681 = vsel %vm257, %v1639, 0
      %v1684 = vsel %vm257, %v1640, 0
      %v1687 = vsel %vm257, %v1641, 0
      %v1690 = vsel %vm257, %v1642, 0
      %v1693 = vsel %vm257, %v1643, 0
      %1695 = vmatprep.subr.mxu0 0.0
      %1696 = vmatpush1.msra.mxu0 %v1645
      %1697 = vmatprep.subr.mxu0 0.0
      %1698 = vmatpush1.msra.mxu0 %v1646
      %1699 = vmatprep.subr.mxu0 0.0
      %1700 = vmatpush1.msra.mxu0 0.0
      %1701 = vmatprep.subr.mxu0 0.0
      %1702 = vmatpush1.msra.mxu0 0.0
      %1703 = vmatprep.subr.mxu0 0.0
      %1704 = vmatpush1.msra.mxu0 0.0
      %1705 = vmatprep.subr.mxu0 0.0
      %1706 = vmatpush1.msra.mxu0 0.0
      %1707 = vmatprep.subr.mxu0 0.0
      %1708 = vmatpush1.msra.mxu0 0.0
      %1709 = vmatprep.subr.mxu0 0.0
      %1710 = vmatpush1.msra.mxu0 0.0
      %1711 = vmatprep.subr.mxu0 0.0
      %1712 = vmatpush1.msra.mxu0 0.0
      %1713 = vmatprep.subr.mxu0 0.0
      %1714 = vmatpush1.msra.mxu0 0.0
      %1715 = vmatprep.subr.mxu0 0.0
      %1716 = vmatpush1.msra.mxu0 0.0
      %1717 = vmatprep.subr.mxu0 0.0
      %1718 = vmatpush1.msra.mxu0 0.0
      %1719 = vmatprep.subr.mxu0 0.0
      %1720 = vmatpush1.msra.mxu0 0.0
      %1721 = vmatprep.subr.mxu0 0.0
      %1722 = vmatpush1.msra.mxu0 0.0
      %1723 = vmatprep.subr.mxu0 0.0
      %1724 = vmatpush1.msra.mxu0 0.0
      %1725 = vmatprep.subr.mxu0 0.0
      %1726 = vmatpush1.msra.mxu0 0.0
      %1727 = vmatprep.subr.mxu0 0.0
      %1728 = vmatpush1.msra.mxu0 0.0
      %1729 = vmatprep.subr.mxu0 0.0
      %1730 = vmatpush1.msra.mxu0 0.0
      %1731 = vmatprep.subr.mxu0 0.0
      %1732 = vmatpush1.msra.mxu0 0.0
      %1733 = vmatprep.subr.mxu0 0.0
      %1734 = vmatpush1.msra.mxu0 0.0
      %1735 = vmatprep.subr.mxu0 0.0
      %1736 = vmatpush1.msra.mxu0 0.0
      %1737 = vmatprep.subr.mxu0 0.0
      %1738 = vmatpush1.msra.mxu0 0.0
      %1739 = vmatprep.subr.mxu0 0.0
      %1740 = vmatpush1.msra.mxu0 0.0
      %1741 = vmatprep.subr.mxu0 0.0
      %1742 = vmatpush1.msra.mxu0 0.0
      %1743 = vmatprep.subr.mxu0 0.0
      %1744 = vmatpush1.msra.mxu0 0.0
      %1745 = vmatprep.subr.mxu0 0.0
      %1746 = vmatpush1.msra.mxu0 0.0
      %1747 = vmatprep.subr.mxu0 0.0
      %1748 = vmatpush1.msra.mxu0 0.0
      %1749 = vmatprep.subr.mxu0 0.0
      %1750 = vmatpush1.msra.mxu0 0.0
      %1751 = vmatprep.subr.mxu0 0.0
      %1752 = vmatpush1.msra.mxu0 0.0
      %1753 = vmatprep.subr.mxu0 0.0
      %1754 = vmatpush1.msra.mxu0 0.0
      %1755 = vmatprep.subr.mxu0 0.0
      %1756 = vmatpush1.msra.mxu0 0.0
      %1757 = vmatprep.subr.mxu0 0.0
      %1758 = vmatpush1.msra.mxu0 0.0
      %1759 = vmatprep.mubr.f32.mxu0 0.0
      %1760 = vmatmul.mubr.f32.gmra.mrb[0].mxu0 %v1648
      %v1761 = vpop.f32.mrb[0].mxu0
      %v1762 = vadd.f32 0.0, %v1761
      %v1763 = vpop.f32.mrb[0].mxu0
      %1764 = vmatprep.mubr.f32.mxu0 0.0
      %1765 = vmatmul.mubr.f32.gmra.mrb[0].mxu0 %v1651
      %v1766 = vpop.f32.mrb[0].mxu0
      %v1767 = vadd.f32 0.0, %v1766
      %v1768 = vpop.f32.mrb[0].mxu0
      %1769 = vmatprep.mubr.f32.mxu0 0.0
      %1770 = vmatmul.mubr.f32.gmra.mrb[0].mxu0 %v1654
      %v1771 = vpop.f32.mrb[0].mxu0
      %v1772 = vadd.f32 0.0, %v1771
      %v1773 = vpop.f32.mrb[0].mxu0
      %1774 = vmatprep.mubr.f32.mxu0 0.0
      %1775 = vmatmul.mubr.f32.gmra.mrb[0].mxu0 %v1657
      %v1776 = vpop.f32.mrb[0].mxu0
      %v1777 = vadd.f32 0.0, %v1776
      %v1778 = vpop.f32.mrb[0].mxu0
      %1779 = vmatprep.mubr.f32.mxu0 0.0
      %1780 = vmatmul.mubr.f32.gmra.mrb[0].mxu0 %v1660
      %v1781 = vpop.f32.mrb[0].mxu0
      %v1782 = vadd.f32 0.0, %v1781
      %v1783 = vpop.f32.mrb[0].mxu0
      %1784 = vmatprep.mubr.f32.mxu0 0.0
      %1785 = vmatmul.mubr.f32.gmra.mrb[0].mxu0 %v1663
      %v1786 = vpop.f32.mrb[0].mxu0
      %v1787 = vadd.f32 0.0, %v1786
      %v1788 = vpop.f32.mrb[0].mxu0
      %1789 = vmatprep.mubr.f32.mxu0 0.0
      %1790 = vmatmul.mubr.f32.gmra.mrb[0].mxu0 %v1666
      %v1791 = vpop.f32.mrb[0].mxu0
      %v1792 = vadd.f32 0.0, %v1791
      %v1793 = vpop.f32.mrb[0].mxu0
      %1794 = vmatprep.mubr.f32.mxu0 0.0
      %1795 = vmatmul.mubr.f32.gmra.mrb[0].mxu0 %v1669
      %v1796 = vpop.f32.mrb[0].mxu0
      %v1797 = vadd.f32 0.0, %v1796
      %v1798 = vpop.f32.mrb[0].mxu0
      %1799 = vmatprep.mubr.f32.mxu0 0.0
      %1800 = vmatmul.mubr.f32.gmra.mrb[0].mxu0 %v1672
      %v1801 = vpop.f32.mrb[0].mxu0
      %v1802 = vadd.f32 0.0, %v1801
      %v1803 = vpop.f32.mrb[0].mxu0
      %1804 = vmatprep.mubr.f32.mxu0 0.0
      %1805 = vmatmul.mubr.f32.gmra.mrb[0].mxu0 %v1675
      %v1806 = vpop.f32.mrb[0].mxu0
      %v1807 = vadd.f32 0.0, %v1806
      %v1808 = vpop.f32.mrb[0].mxu0
      %1809 = vmatprep.mubr.f32.mxu0 0.0
      %1810 = vmatmul.mubr.f32.gmra.mrb[0].mxu0 %v1678
      %v1811 = vpop.f32.mrb[0].mxu0
      %v1812 = vadd.f32 0.0, %v1811
      %v1813 = vpop.f32.mrb[0].mxu0
      %1814 = vmatprep.mubr.f32.mxu0 0.0
      %1815 = vmatmul.mubr.f32.gmra.mrb[0].mxu0 %v1681
      %v1816 = vpop.f32.mrb[0].mxu0
      %v1817 = vadd.f32 0.0, %v1816
      %v1818 = vpop.f32.mrb[0].mxu0
      %1819 = vmatprep.mubr.f32.mxu0 0.0
      %1820 = vmatmul.mubr.f32.gmra.mrb[0].mxu0 %v1684
      %v1821 = vpop.f32.mrb[0].mxu0
      %v1822 = vadd.f32 0.0, %v1821
      %v1823 = vpop.f32.mrb[0].mxu0
      %1824 = vmatprep.mubr.f32.mxu0 0.0
      %1825 = vmatmul.mubr.f32.gmra.mrb[0].mxu0 %v1687
      %v1826 = vpop.f32.mrb[0].mxu0
      %v1827 = vadd.f32 0.0, %v1826
      %v1828 = vpop.f32.mrb[0].mxu0
      %1829 = vmatprep.mubr.f32.mxu0 0.0
      %1830 = vmatmul.mubr.f32.gmra.mrb[0].mxu0 %v1690
      %v1831 = vpop.f32.mrb[0].mxu0
      %v1832 = vadd.f32 0.0, %v1831
      %v1833 = vpop.f32.mrb[0].mxu0
      %1834 = vmatprep.mubr.f32.mxu0 0.0
      %1835 = vmatmul.mubr.f32.gmra.mrb[0].mxu0 %v1693
      %v1836 = vpop.f32.mrb[0].mxu0
      %v1837 = vadd.f32 0.0, %v1836
      %v1838 = vpop.f32.mrb[0].mxu0
      %1839 = vdwg.mxu0
      %v1840 = vadd.f32 %v1612, %v1762
      %v1841 = vadd.f32 %v1613, %v1767
      %v1842 = vadd.f32 %v1614, %v1772
      %v1843 = vadd.f32 %v1615, %v1777
      %v1844 = vadd.f32 %v1616, %v1782
      %v1845 = vadd.f32 %v1617, %v1787
      %v1846 = vadd.f32 %v1618, %v1792
      %v1847 = vadd.f32 %v1619, %v1797
      %v1848 = vadd.f32 %v1620, %v1802
      %v1849 = vadd.f32 %v1621, %v1807
      %v1850 = vadd.f32 %v1622, %v1812
      %v1851 = vadd.f32 %v1623, %v1817
      %v1852 = vadd.f32 %v1624, %v1822
      %v1853 = vadd.f32 %v1625, %v1827
      %v1854 = vadd.f32 %v1626, %v1832
      %v1855 = vadd.f32 %v1627, %v1837
      %v1856 = vld [vmem:[#allocation2 + $0x7] sm:$0xff]
      %v1857 = vld [vmem:[#allocation2 + $0xf] sm:$0xff]
      %v1858 = vld [vmem:[#allocation2 + $0x17] sm:$0xff]
      %v1859 = vld [vmem:[#allocation2 + $0x1f] sm:$0xff]
      %v1860 = vld [vmem:[#allocation2 + $0x27] sm:$0xff]
      %v1861 = vld [vmem:[#allocation2 + $0x2f] sm:$0xff]
      %v1862 = vld [vmem:[#allocation2 + $0x37] sm:$0xff]
      %v1863 = vld [vmem:[#allocation2 + $0x3f] sm:$0xff]
      %v1864 = vld [vmem:[#allocation2 + $0x47] sm:$0xff]
      %v1865 = vld [vmem:[#allocation2 + $0x4f] sm:$0xff]
      %v1866 = vld [vmem:[#allocation2 + $0x57] sm:$0xff]
      %v1867 = vld [vmem:[#allocation2 + $0x5f] sm:$0xff]
      %v1868 = vld [vmem:[#allocation2 + $0x67] sm:$0xff]
      %v1869 = vld [vmem:[#allocation2 + $0x6f] sm:$0xff]
      %v1870 = vld [vmem:[#allocation2 + $0x77] sm:$0xff]
      %v1871 = vld [vmem:[#allocation2 + $0x7f] sm:$0xff]
      %s1872 = scalar_lea.vmem %s1, 112
      %v1873 = vld [vmem:[%s1872] sm:$0xff]
      %v1874 = vld [vmem:[%s1872 + $0x8] sm:$0xff]
      %v1876 = vsel %vm257, %v1856, 0
      %v1879 = vsel %vm257, %v1857, 0
      %v1882 = vsel %vm257, %v1858, 0
      %v1885 = vsel %vm257, %v1859, 0
      %v1888 = vsel %vm257, %v1860, 0
      %v1891 = vsel %vm257, %v1861, 0
      %v1894 = vsel %vm257, %v1862, 0
      %v1897 = vsel %vm257, %v1863, 0
      %v1900 = vsel %vm257, %v1864, 0
      %v1903 = vsel %vm257, %v1865, 0
      %v1906 = vsel %vm257, %v1866, 0
      %v1909 = vsel %vm257, %v1867, 0
      %v1912 = vsel %vm257, %v1868, 0
      %v1915 = vsel %vm257, %v1869, 0
      %v1918 = vsel %vm257, %v1870, 0
      %v1921 = vsel %vm257, %v1871, 0
      %1923 = vmatprep.subr.mxu0 0.0
      %1924 = vmatpush1.msra.mxu0 %v1873
      %1925 = vmatprep.subr.mxu0 0.0
      %1926 = vmatpush1.msra.mxu0 %v1874
      %1927 = vmatprep.subr.mxu0 0.0
      %1928 = vmatpush1.msra.mxu0 0.0
      %1929 = vmatprep.subr.mxu0 0.0
      %1930 = vmatpush1.msra.mxu0 0.0
      %1931 = vmatprep.subr.mxu0 0.0
      %1932 = vmatpush1.msra.mxu0 0.0
      %1933 = vmatprep.subr.mxu0 0.0
      %1934 = vmatpush1.msra.mxu0 0.0
      %1935 = vmatprep.subr.mxu0 0.0
      %1936 = vmatpush1.msra.mxu0 0.0
      %1937 = vmatprep.subr.mxu0 0.0
      %1938 = vmatpush1.msra.mxu0 0.0
      %1939 = vmatprep.subr.mxu0 0.0
      %1940 = vmatpush1.msra.mxu0 0.0
      %1941 = vmatprep.subr.mxu0 0.0
      %1942 = vmatpush1.msra.mxu0 0.0
      %1943 = vmatprep.subr.mxu0 0.0
      %1944 = vmatpush1.msra.mxu0 0.0
      %1945 = vmatprep.subr.mxu0 0.0
      %1946 = vmatpush1.msra.mxu0 0.0
      %1947 = vmatprep.subr.mxu0 0.0
      %1948 = vmatpush1.msra.mxu0 0.0
      %1949 = vmatprep.subr.mxu0 0.0
      %1950 = vmatpush1.msra.mxu0 0.0
      %1951 = vmatprep.subr.mxu0 0.0
      %1952 = vmatpush1.msra.mxu0 0.0
      %1953 = vmatprep.subr.mxu0 0.0
      %1954 = vmatpush1.msra.mxu0 0.0
      %1955 = vmatprep.subr.mxu0 0.0
      %1956 = vmatpush1.msra.mxu0 0.0
      %1957 = vmatprep.subr.mxu0 0.0
      %1958 = vmatpush1.msra.mxu0 0.0
      %1959 = vmatprep.subr.mxu0 0.0
      %1960 = vmatpush1.msra.mxu0 0.0
      %1961 = vmatprep.subr.mxu0 0.0
      %1962 = vmatpush1.msra.mxu0 0.0
      %1963 = vmatprep.subr.mxu0 0.0
      %1964 = vmatpush1.msra.mxu0 0.0
      %1965 = vmatprep.subr.mxu0 0.0
      %1966 = vmatpush1.msra.mxu0 0.0
      %1967 = vmatprep.subr.mxu0 0.0
      %1968 = vmatpush1.msra.mxu0 0.0
      %1969 = vmatprep.subr.mxu0 0.0
      %1970 = vmatpush1.msra.mxu0 0.0
      %1971 = vmatprep.subr.mxu0 0.0
      %1972 = vmatpush1.msra.mxu0 0.0
      %1973 = vmatprep.subr.mxu0 0.0
      %1974 = vmatpush1.msra.mxu0 0.0
      %1975 = vmatprep.subr.mxu0 0.0
      %1976 = vmatpush1.msra.mxu0 0.0
      %1977 = vmatprep.subr.mxu0 0.0
      %1978 = vmatpush1.msra.mxu0 0.0
      %1979 = vmatprep.subr.mxu0 0.0
      %1980 = vmatpush1.msra.mxu0 0.0
      %1981 = vmatprep.subr.mxu0 0.0
      %1982 = vmatpush1.msra.mxu0 0.0
      %1983 = vmatprep.subr.mxu0 0.0
      %1984 = vmatpush1.msra.mxu0 0.0
      %1985 = vmatprep.subr.mxu0 0.0
      %1986 = vmatpush1.msra.mxu0 0.0
      %1987 = vmatprep.mubr.f32.mxu0 0.0
      %1988 = vmatmul.mubr.f32.gmra.mrb[0].mxu0 %v1876
      %v1989 = vpop.f32.mrb[0].mxu0
      %v1990 = vadd.f32 0.0, %v1989
      %v1991 = vpop.f32.mrb[0].mxu0
      %1992 = vmatprep.mubr.f32.mxu0 0.0
      %1993 = vmatmul.mubr.f32.gmra.mrb[0].mxu0 %v1879
      %v1994 = vpop.f32.mrb[0].mxu0
      %v1995 = vadd.f32 0.0, %v1994
      %v1996 = vpop.f32.mrb[0].mxu0
      %1997 = vmatprep.mubr.f32.mxu0 0.0
      %1998 = vmatmul.mubr.f32.gmra.mrb[0].mxu0 %v1882
      %v1999 = vpop.f32.mrb[0].mxu0
      %v2000 = vadd.f32 0.0, %v1999
      %v2001 = vpop.f32.mrb[0].mxu0
      %2002 = vmatprep.mubr.f32.mxu0 0.0
      %2003 = vmatmul.mubr.f32.gmra.mrb[0].mxu0 %v1885
      %v2004 = vpop.f32.mrb[0].mxu0
      %v2005 = vadd.f32 0.0, %v2004
      %v2006 = vpop.f32.mrb[0].mxu0
      %2007 = vmatprep.mubr.f32.mxu0 0.0
      %2008 = vmatmul.mubr.f32.gmra.mrb[0].mxu0 %v1888
      %v2009 = vpop.f32.mrb[0].mxu0
      %v2010 = vadd.f32 0.0, %v2009
      %v2011 = vpop.f32.mrb[0].mxu0
      %2012 = vmatprep.mubr.f32.mxu0 0.0
      %2013 = vmatmul.mubr.f32.gmra.mrb[0].mxu0 %v1891
      %v2014 = vpop.f32.mrb[0].mxu0
      %v2015 = vadd.f32 0.0, %v2014
      %v2016 = vpop.f32.mrb[0].mxu0
      %2017 = vmatprep.mubr.f32.mxu0 0.0
      %2018 = vmatmul.mubr.f32.gmra.mrb[0].mxu0 %v1894
      %v2019 = vpop.f32.mrb[0].mxu0
      %v2020 = vadd.f32 0.0, %v2019
      %v2021 = vpop.f32.mrb[0].mxu0
      %2022 = vmatprep.mubr.f32.mxu0 0.0
      %2023 = vmatmul.mubr.f32.gmra.mrb[0].mxu0 %v1897
      %v2024 = vpop.f32.mrb[0].mxu0
      %v2025 = vadd.f32 0.0, %v2024
      %v2026 = vpop.f32.mrb[0].mxu0
      %2027 = vmatprep.mubr.f32.mxu0 0.0
      %2028 = vmatmul.mubr.f32.gmra.mrb[0].mxu0 %v1900
      %v2029 = vpop.f32.mrb[0].mxu0
      %v2030 = vadd.f32 0.0, %v2029
      %v2031 = vpop.f32.mrb[0].mxu0
      %2032 = vmatprep.mubr.f32.mxu0 0.0
      %2033 = vmatmul.mubr.f32.gmra.mrb[0].mxu0 %v1903
      %v2034 = vpop.f32.mrb[0].mxu0
      %v2035 = vadd.f32 0.0, %v2034
      %v2036 = vpop.f32.mrb[0].mxu0
      %2037 = vmatprep.mubr.f32.mxu0 0.0
      %2038 = vmatmul.mubr.f32.gmra.mrb[0].mxu0 %v1906
      %v2039 = vpop.f32.mrb[0].mxu0
      %v2040 = vadd.f32 0.0, %v2039
      %v2041 = vpop.f32.mrb[0].mxu0
      %2042 = vmatprep.mubr.f32.mxu0 0.0
      %2043 = vmatmul.mubr.f32.gmra.mrb[0].mxu0 %v1909
      %v2044 = vpop.f32.mrb[0].mxu0
      %v2045 = vadd.f32 0.0, %v2044
      %v2046 = vpop.f32.mrb[0].mxu0
      %2047 = vmatprep.mubr.f32.mxu0 0.0
      %2048 = vmatmul.mubr.f32.gmra.mrb[0].mxu0 %v1912
      %v2049 = vpop.f32.mrb[0].mxu0
      %v2050 = vadd.f32 0.0, %v2049
      %v2051 = vpop.f32.mrb[0].mxu0
      %2052 = vmatprep.mubr.f32.mxu0 0.0
      %2053 = vmatmul.mubr.f32.gmra.mrb[0].mxu0 %v1915
      %v2054 = vpop.f32.mrb[0].mxu0
      %v2055 = vadd.f32 0.0, %v2054
      %v2056 = vpop.f32.mrb[0].mxu0
      %2057 = vmatprep.mubr.f32.mxu0 0.0
      %2058 = vmatmul.mubr.f32.gmra.mrb[0].mxu0 %v1918
      %v2059 = vpop.f32.mrb[0].mxu0
      %v2060 = vadd.f32 0.0, %v2059
      %v2061 = vpop.f32.mrb[0].mxu0
      %2062 = vmatprep.mubr.f32.mxu0 0.0
      %2063 = vmatmul.mubr.f32.gmra.mrb[0].mxu0 %v1921
      %v2064 = vpop.f32.mrb[0].mxu0
      %v2065 = vadd.f32 0.0, %v2064
      %v2066 = vpop.f32.mrb[0].mxu0
      %2067 = vdwg.mxu0
      %v2068 = vadd.f32 %v1840, %v1990
      %v2069 = vadd.f32 %v1841, %v1995
      %v2070 = vadd.f32 %v1842, %v2000
      %v2071 = vadd.f32 %v1843, %v2005
      %v2072 = vadd.f32 %v1844, %v2010
      %v2073 = vadd.f32 %v1845, %v2015
      %v2074 = vadd.f32 %v1846, %v2020
      %v2075 = vadd.f32 %v1847, %v2025
      %v2076 = vadd.f32 %v1848, %v2030
      %v2077 = vadd.f32 %v1849, %v2035
      %v2078 = vadd.f32 %v1850, %v2040
      %v2079 = vadd.f32 %v1851, %v2045
      %v2080 = vadd.f32 %v1852, %v2050
      %v2081 = vadd.f32 %v1853, %v2055
      %v2082 = vadd.f32 %v1854, %v2060
      %v2083 = vadd.f32 %v1855, %v2065
      %v2084 = vld [vmem:[#allocation2 + $0x8] sm:$0xff]
      %v2085 = vld [vmem:[#allocation2 + $0x10] sm:$0xff]
      %v2086 = vld [vmem:[#allocation2 + $0x18] sm:$0xff]
      %v2087 = vld [vmem:[#allocation2 + $0x20] sm:$0xff]
      %v2088 = vld [vmem:[#allocation2 + $0x28] sm:$0xff]
      %v2089 = vld [vmem:[#allocation2 + $0x30] sm:$0xff]
      %v2090 = vld [vmem:[#allocation2 + $0x38] sm:$0xff]
      %v2091 = vld [vmem:[#allocation2 + $0x40] sm:$0xff]
      %v2092 = vld [vmem:[#allocation2 + $0x48] sm:$0xff]
      %v2093 = vld [vmem:[#allocation2 + $0x50] sm:$0xff]
      %v2094 = vld [vmem:[#allocation2 + $0x58] sm:$0xff]
      %v2095 = vld [vmem:[#allocation2 + $0x60] sm:$0xff]
      %v2096 = vld [vmem:[#allocation2 + $0x68] sm:$0xff]
      %v2097 = vld [vmem:[#allocation2 + $0x70] sm:$0xff]
      %v2098 = vld [vmem:[#allocation2 + $0x78] sm:$0xff]
      %v2099 = vld [vmem:[#allocation2 + $0x80] sm:$0xff]
      %s2100 = scalar_lea.vmem %s1, 128
      %v2101 = vld [vmem:[%s2100] sm:$0xff]
      %v2102 = vld [vmem:[%s2100 + $0x8] sm:$0xff]
      %v2104 = vsel %vm257, %v2084, 0
      %v2107 = vsel %vm257, %v2085, 0
      %v2110 = vsel %vm257, %v2086, 0
      %v2113 = vsel %vm257, %v2087, 0
      %v2116 = vsel %vm257, %v2088, 0
      %v2119 = vsel %vm257, %v2089, 0
      %v2122 = vsel %vm257, %v2090, 0
      %v2125 = vsel %vm257, %v2091, 0
      %v2128 = vsel %vm257, %v2092, 0
      %v2131 = vsel %vm257, %v2093, 0
      %v2134 = vsel %vm257, %v2094, 0
      %v2137 = vsel %vm257, %v2095, 0
      %v2140 = vsel %vm257, %v2096, 0
      %v2143 = vsel %vm257, %v2097, 0
      %v2146 = vsel %vm257, %v2098, 0
      %v2149 = vsel %vm257, %v2099, 0
      %2151 = vmatprep.subr.mxu0 0.0
      %2152 = vmatpush1.msra.mxu0 %v2101
      %2153 = vmatprep.subr.mxu0 0.0
      %2154 = vmatpush1.msra.mxu0 %v2102
      %2155 = vmatprep.subr.mxu0 0.0
      %2156 = vmatpush1.msra.mxu0 0.0
      %2157 = vmatprep.subr.mxu0 0.0
      %2158 = vmatpush1.msra.mxu0 0.0
      %2159 = vmatprep.subr.mxu0 0.0
      %2160 = vmatpush1.msra.mxu0 0.0
      %2161 = vmatprep.subr.mxu0 0.0
      %2162 = vmatpush1.msra.mxu0 0.0
      %2163 = vmatprep.subr.mxu0 0.0
      %2164 = vmatpush1.msra.mxu0 0.0
      %2165 = vmatprep.subr.mxu0 0.0
      %2166 = vmatpush1.msra.mxu0 0.0
      %2167 = vmatprep.subr.mxu0 0.0
      %2168 = vmatpush1.msra.mxu0 0.0
      %2169 = vmatprep.subr.mxu0 0.0
      %2170 = vmatpush1.msra.mxu0 0.0
      %2171 = vmatprep.subr.mxu0 0.0
      %2172 = vmatpush1.msra.mxu0 0.0
      %2173 = vmatprep.subr.mxu0 0.0
      %2174 = vmatpush1.msra.mxu0 0.0
      %2175 = vmatprep.subr.mxu0 0.0
      %2176 = vmatpush1.msra.mxu0 0.0
      %2177 = vmatprep.subr.mxu0 0.0
      %2178 = vmatpush1.msra.mxu0 0.0
      %2179 = vmatprep.subr.mxu0 0.0
      %2180 = vmatpush1.msra.mxu0 0.0
      %2181 = vmatprep.subr.mxu0 0.0
      %2182 = vmatpush1.msra.mxu0 0.0
      %2183 = vmatprep.subr.mxu0 0.0
      %2184 = vmatpush1.msra.mxu0 0.0
      %2185 = vmatprep.subr.mxu0 0.0
      %2186 = vmatpush1.msra.mxu0 0.0
      %2187 = vmatprep.subr.mxu0 0.0
      %2188 = vmatpush1.msra.mxu0 0.0
      %2189 = vmatprep.subr.mxu0 0.0
      %2190 = vmatpush1.msra.mxu0 0.0
      %2191 = vmatprep.subr.mxu0 0.0
      %2192 = vmatpush1.msra.mxu0 0.0
      %2193 = vmatprep.subr.mxu0 0.0
      %2194 = vmatpush1.msra.mxu0 0.0
      %2195 = vmatprep.subr.mxu0 0.0
      %2196 = vmatpush1.msra.mxu0 0.0
      %2197 = vmatprep.subr.mxu0 0.0
      %2198 = vmatpush1.msra.mxu0 0.0
      %2199 = vmatprep.subr.mxu0 0.0
      %2200 = vmatpush1.msra.mxu0 0.0
      %2201 = vmatprep.subr.mxu0 0.0
      %2202 = vmatpush1.msra.mxu0 0.0
      %2203 = vmatprep.subr.mxu0 0.0
      %2204 = vmatpush1.msra.mxu0 0.0
      %2205 = vmatprep.subr.mxu0 0.0
      %2206 = vmatpush1.msra.mxu0 0.0
      %2207 = vmatprep.subr.mxu0 0.0
      %2208 = vmatpush1.msra.mxu0 0.0
      %2209 = vmatprep.subr.mxu0 0.0
      %2210 = vmatpush1.msra.mxu0 0.0
      %2211 = vmatprep.subr.mxu0 0.0
      %2212 = vmatpush1.msra.mxu0 0.0
      %2213 = vmatprep.subr.mxu0 0.0
      %2214 = vmatpush1.msra.mxu0 0.0
      %2215 = vmatprep.mubr.f32.mxu0 0.0
      %2216 = vmatmul.mubr.f32.gmra.mrb[0].mxu0 %v2104
      %v2217 = vpop.f32.mrb[0].mxu0
      %v2218 = vadd.f32 0.0, %v2217
      %v2219 = vpop.f32.mrb[0].mxu0
      %2220 = vmatprep.mubr.f32.mxu0 0.0
      %2221 = vmatmul.mubr.f32.gmra.mrb[0].mxu0 %v2107
      %v2222 = vpop.f32.mrb[0].mxu0
      %v2223 = vadd.f32 0.0, %v2222
      %v2224 = vpop.f32.mrb[0].mxu0
      %2225 = vmatprep.mubr.f32.mxu0 0.0
      %2226 = vmatmul.mubr.f32.gmra.mrb[0].mxu0 %v2110
      %v2227 = vpop.f32.mrb[0].mxu0
      %v2228 = vadd.f32 0.0, %v2227
      %v2229 = vpop.f32.mrb[0].mxu0
      %2230 = vmatprep.mubr.f32.mxu0 0.0
      %2231 = vmatmul.mubr.f32.gmra.mrb[0].mxu0 %v2113
      %v2232 = vpop.f32.mrb[0].mxu0
      %v2233 = vadd.f32 0.0, %v2232
      %v2234 = vpop.f32.mrb[0].mxu0
      %2235 = vmatprep.mubr.f32.mxu0 0.0
      %2236 = vmatmul.mubr.f32.gmra.mrb[0].mxu0 %v2116
      %v2237 = vpop.f32.mrb[0].mxu0
      %v2238 = vadd.f32 0.0, %v2237
      %v2239 = vpop.f32.mrb[0].mxu0
      %2240 = vmatprep.mubr.f32.mxu0 0.0
      %2241 = vmatmul.mubr.f32.gmra.mrb[0].mxu0 %v2119
      %v2242 = vpop.f32.mrb[0].mxu0
      %v2243 = vadd.f32 0.0, %v2242
      %v2244 = vpop.f32.mrb[0].mxu0
      %2245 = vmatprep.mubr.f32.mxu0 0.0
      %2246 = vmatmul.mubr.f32.gmra.mrb[0].mxu0 %v2122
      %v2247 = vpop.f32.mrb[0].mxu0
      %v2248 = vadd.f32 0.0, %v2247
      %v2249 = vpop.f32.mrb[0].mxu0
      %2250 = vmatprep.mubr.f32.mxu0 0.0
      %2251 = vmatmul.mubr.f32.gmra.mrb[0].mxu0 %v2125
      %v2252 = vpop.f32.mrb[0].mxu0
      %v2253 = vadd.f32 0.0, %v2252
      %v2254 = vpop.f32.mrb[0].mxu0
      %2255 = vmatprep.mubr.f32.mxu0 0.0
      %2256 = vmatmul.mubr.f32.gmra.mrb[0].mxu0 %v2128
      %v2257 = vpop.f32.mrb[0].mxu0
      %v2258 = vadd.f32 0.0, %v2257
      %v2259 = vpop.f32.mrb[0].mxu0
      %2260 = vmatprep.mubr.f32.mxu0 0.0
      %2261 = vmatmul.mubr.f32.gmra.mrb[0].mxu0 %v2131
      %v2262 = vpop.f32.mrb[0].mxu0
      %v2263 = vadd.f32 0.0, %v2262
      %v2264 = vpop.f32.mrb[0].mxu0
      %2265 = vmatprep.mubr.f32.mxu0 0.0
      %2266 = vmatmul.mubr.f32.gmra.mrb[0].mxu0 %v2134
      %v2267 = vpop.f32.mrb[0].mxu0
      %v2268 = vadd.f32 0.0, %v2267
      %v2269 = vpop.f32.mrb[0].mxu0
      %2270 = vmatprep.mubr.f32.mxu0 0.0
      %2271 = vmatmul.mubr.f32.gmra.mrb[0].mxu0 %v2137
      %v2272 = vpop.f32.mrb[0].mxu0
      %v2273 = vadd.f32 0.0, %v2272
      %v2274 = vpop.f32.mrb[0].mxu0
      %2275 = vmatprep.mubr.f32.mxu0 0.0
      %2276 = vmatmul.mubr.f32.gmra.mrb[0].mxu0 %v2140
      %v2277 = vpop.f32.mrb[0].mxu0
      %v2278 = vadd.f32 0.0, %v2277
      %v2279 = vpop.f32.mrb[0].mxu0
      %2280 = vmatprep.mubr.f32.mxu0 0.0
      %2281 = vmatmul.mubr.f32.gmra.mrb[0].mxu0 %v2143
      %v2282 = vpop.f32.mrb[0].mxu0
      %v2283 = vadd.f32 0.0, %v2282
      %v2284 = vpop.f32.mrb[0].mxu0
      %2285 = vmatprep.mubr.f32.mxu0 0.0
      %2286 = vmatmul.mubr.f32.gmra.mrb[0].mxu0 %v2146
      %v2287 = vpop.f32.mrb[0].mxu0
      %v2288 = vadd.f32 0.0, %v2287
      %v2289 = vpop.f32.mrb[0].mxu0
      %2290 = vmatprep.mubr.f32.mxu0 0.0
      %2291 = vmatmul.mubr.f32.gmra.mrb[0].mxu0 %v2149
      %v2292 = vpop.f32.mrb[0].mxu0
      %v2293 = vadd.f32 0.0, %v2292
      %v2294 = vpop.f32.mrb[0].mxu0
      %2295 = vdwg.mxu0
      %v2296 = vadd.f32 %v2068, %v2218
      %v2297 = vadd.f32 %v2069, %v2223
      %v2298 = vadd.f32 %v2070, %v2228
      %v2299 = vadd.f32 %v2071, %v2233
      %v2300 = vadd.f32 %v2072, %v2238
      %v2301 = vadd.f32 %v2073, %v2243
      %v2302 = vadd.f32 %v2074, %v2248
      %v2303 = vadd.f32 %v2075, %v2253
      %v2304 = vadd.f32 %v2076, %v2258
      %v2305 = vadd.f32 %v2077, %v2263
      %v2306 = vadd.f32 %v2078, %v2268
      %v2307 = vadd.f32 %v2079, %v2273
      %v2308 = vadd.f32 %v2080, %v2278
      %v2309 = vadd.f32 %v2081, %v2283
      %v2310 = vadd.f32 %v2082, %v2288
      %v2311 = vadd.f32 %v2083, %v2293
      %v2312 = vld [vmem:[#allocation2 + $0x9] sm:$0xff]
      %v2313 = vld [vmem:[#allocation2 + $0x11] sm:$0xff]
      %v2314 = vld [vmem:[#allocation2 + $0x19] sm:$0xff]
      %v2315 = vld [vmem:[#allocation2 + $0x21] sm:$0xff]
      %v2316 = vld [vmem:[#allocation2 + $0x29] sm:$0xff]
      %v2317 = vld [vmem:[#allocation2 + $0x31] sm:$0xff]
      %v2318 = vld [vmem:[#allocation2 + $0x39] sm:$0xff]
      %v2319 = vld [vmem:[#allocation2 + $0x41] sm:$0xff]
      %v2320 = vld [vmem:[#allocation2 + $0x49] sm:$0xff]
      %v2321 = vld [vmem:[#allocation2 + $0x51] sm:$0xff]
      %v2322 = vld [vmem:[#allocation2 + $0x59] sm:$0xff]
      %v2323 = vld [vmem:[#allocation2 + $0x61] sm:$0xff]
      %v2324 = vld [vmem:[#allocation2 + $0x69] sm:$0xff]
      %v2325 = vld [vmem:[#allocation2 + $0x71] sm:$0xff]
      %v2326 = vld [vmem:[#allocation2 + $0x79] sm:$0xff]
      %v2327 = vld [vmem:[#allocation2 + $0x81] sm:$0xff]
      %s2328 = scalar_lea.vmem %s1, 144
      %v2329 = vld [vmem:[%s2328] sm:$0xff]
      %v2330 = vld [vmem:[%s2328 + $0x8] sm:$0xff]
      %v2332 = vsel %vm257, %v2312, 0
      %v2335 = vsel %vm257, %v2313, 0
      %v2338 = vsel %vm257, %v2314, 0
      %v2341 = vsel %vm257, %v2315, 0
      %v2344 = vsel %vm257, %v2316, 0
      %v2347 = vsel %vm257, %v2317, 0
      %v2350 = vsel %vm257, %v2318, 0
      %v2353 = vsel %vm257, %v2319, 0
      %v2356 = vsel %vm257, %v2320, 0
      %v2359 = vsel %vm257, %v2321, 0
      %v2362 = vsel %vm257, %v2322, 0
      %v2365 = vsel %vm257, %v2323, 0
      %v2368 = vsel %vm257, %v2324, 0
      %v2371 = vsel %vm257, %v2325, 0
      %v2374 = vsel %vm257, %v2326, 0
      %v2377 = vsel %vm257, %v2327, 0
      %2379 = vmatprep.subr.mxu0 0.0
      %2380 = vmatpush1.msra.mxu0 %v2329
      %2381 = vmatprep.subr.mxu0 0.0
      %2382 = vmatpush1.msra.mxu0 %v2330
      %2383 = vmatprep.subr.mxu0 0.0
      %2384 = vmatpush1.msra.mxu0 0.0
      %2385 = vmatprep.subr.mxu0 0.0
      %2386 = vmatpush1.msra.mxu0 0.0
      %2387 = vmatprep.subr.mxu0 0.0
      %2388 = vmatpush1.msra.mxu0 0.0
      %2389 = vmatprep.subr.mxu0 0.0
      %2390 = vmatpush1.msra.mxu0 0.0
      %2391 = vmatprep.subr.mxu0 0.0
      %2392 = vmatpush1.msra.mxu0 0.0
      %2393 = vmatprep.subr.mxu0 0.0
      %2394 = vmatpush1.msra.mxu0 0.0
      %2395 = vmatprep.subr.mxu0 0.0
      %2396 = vmatpush1.msra.mxu0 0.0
      %2397 = vmatprep.subr.mxu0 0.0
      %2398 = vmatpush1.msra.mxu0 0.0
      %2399 = vmatprep.subr.mxu0 0.0
      %2400 = vmatpush1.msra.mxu0 0.0
      %2401 = vmatprep.subr.mxu0 0.0
      %2402 = vmatpush1.msra.mxu0 0.0
      %2403 = vmatprep.subr.mxu0 0.0
      %2404 = vmatpush1.msra.mxu0 0.0
      %2405 = vmatprep.subr.mxu0 0.0
      %2406 = vmatpush1.msra.mxu0 0.0
      %2407 = vmatprep.subr.mxu0 0.0
      %2408 = vmatpush1.msra.mxu0 0.0
      %2409 = vmatprep.subr.mxu0 0.0
      %2410 = vmatpush1.msra.mxu0 0.0
      %2411 = vmatprep.subr.mxu0 0.0
      %2412 = vmatpush1.msra.mxu0 0.0
      %2413 = vmatprep.subr.mxu0 0.0
      %2414 = vmatpush1.msra.mxu0 0.0
      %2415 = vmatprep.subr.mxu0 0.0
      %2416 = vmatpush1.msra.mxu0 0.0
      %2417 = vmatprep.subr.mxu0 0.0
      %2418 = vmatpush1.msra.mxu0 0.0
      %2419 = vmatprep.subr.mxu0 0.0
      %2420 = vmatpush1.msra.mxu0 0.0
      %2421 = vmatprep.subr.mxu0 0.0
      %2422 = vmatpush1.msra.mxu0 0.0
      %2423 = vmatprep.subr.mxu0 0.0
      %2424 = vmatpush1.msra.mxu0 0.0
      %2425 = vmatprep.subr.mxu0 0.0
      %2426 = vmatpush1.msra.mxu0 0.0
      %2427 = vmatprep.subr.mxu0 0.0
      %2428 = vmatpush1.msra.mxu0 0.0
      %2429 = vmatprep.subr.mxu0 0.0
      %2430 = vmatpush1.msra.mxu0 0.0
      %2431 = vmatprep.subr.mxu0 0.0
      %2432 = vmatpush1.msra.mxu0 0.0
      %2433 = vmatprep.subr.mxu0 0.0
      %2434 = vmatpush1.msra.mxu0 0.0
      %2435 = vmatprep.subr.mxu0 0.0
      %2436 = vmatpush1.msra.mxu0 0.0
      %2437 = vmatprep.subr.mxu0 0.0
      %2438 = vmatpush1.msra.mxu0 0.0
      %2439 = vmatprep.subr.mxu0 0.0
      %2440 = vmatpush1.msra.mxu0 0.0
      %2441 = vmatprep.subr.mxu0 0.0
      %2442 = vmatpush1.msra.mxu0 0.0
      %2443 = vmatprep.mubr.f32.mxu0 0.0
      %2444 = vmatmul.mubr.f32.gmra.mrb[0].mxu0 %v2332
      %v2445 = vpop.f32.mrb[0].mxu0
      %v2446 = vadd.f32 0.0, %v2445
      %v2447 = vpop.f32.mrb[0].mxu0
      %2448 = vmatprep.mubr.f32.mxu0 0.0
      %2449 = vmatmul.mubr.f32.gmra.mrb[0].mxu0 %v2335
      %v2450 = vpop.f32.mrb[0].mxu0
      %v2451 = vadd.f32 0.0, %v2450
      %v2452 = vpop.f32.mrb[0].mxu0
      %2453 = vmatprep.mubr.f32.mxu0 0.0
      %2454 = vmatmul.mubr.f32.gmra.mrb[0].mxu0 %v2338
      %v2455 = vpop.f32.mrb[0].mxu0
      %v2456 = vadd.f32 0.0, %v2455
      %v2457 = vpop.f32.mrb[0].mxu0
      %2458 = vmatprep.mubr.f32.mxu0 0.0
      %2459 = vmatmul.mubr.f32.gmra.mrb[0].mxu0 %v2341
      %v2460 = vpop.f32.mrb[0].mxu0
      %v2461 = vadd.f32 0.0, %v2460
      %v2462 = vpop.f32.mrb[0].mxu0
      %2463 = vmatprep.mubr.f32.mxu0 0.0
      %2464 = vmatmul.mubr.f32.gmra.mrb[0].mxu0 %v2344
      %v2465 = vpop.f32.mrb[0].mxu0
      %v2466 = vadd.f32 0.0, %v2465
      %v2467 = vpop.f32.mrb[0].mxu0
      %2468 = vmatprep.mubr.f32.mxu0 0.0
      %2469 = vmatmul.mubr.f32.gmra.mrb[0].mxu0 %v2347
      %v2470 = vpop.f32.mrb[0].mxu0
      %v2471 = vadd.f32 0.0, %v2470
      %v2472 = vpop.f32.mrb[0].mxu0
      %2473 = vmatprep.mubr.f32.mxu0 0.0
      %2474 = vmatmul.mubr.f32.gmra.mrb[0].mxu0 %v2350
      %v2475 = vpop.f32.mrb[0].mxu0
      %v2476 = vadd.f32 0.0, %v2475
      %v2477 = vpop.f32.mrb[0].mxu0
      %2478 = vmatprep.mubr.f32.mxu0 0.0
      %2479 = vmatmul.mubr.f32.gmra.mrb[0].mxu0 %v2353
      %v2480 = vpop.f32.mrb[0].mxu0
      %v2481 = vadd.f32 0.0, %v2480
      %v2482 = vpop.f32.mrb[0].mxu0
      %2483 = vmatprep.mubr.f32.mxu0 0.0
      %2484 = vmatmul.mubr.f32.gmra.mrb[0].mxu0 %v2356
      %v2485 = vpop.f32.mrb[0].mxu0
      %v2486 = vadd.f32 0.0, %v2485
      %v2487 = vpop.f32.mrb[0].mxu0
      %2488 = vmatprep.mubr.f32.mxu0 0.0
      %2489 = vmatmul.mubr.f32.gmra.mrb[0].mxu0 %v2359
      %v2490 = vpop.f32.mrb[0].mxu0
      %v2491 = vadd.f32 0.0, %v2490
      %v2492 = vpop.f32.mrb[0].mxu0
      %2493 = vmatprep.mubr.f32.mxu0 0.0
      %2494 = vmatmul.mubr.f32.gmra.mrb[0].mxu0 %v2362
      %v2495 = vpop.f32.mrb[0].mxu0
      %v2496 = vadd.f32 0.0, %v2495
      %v2497 = vpop.f32.mrb[0].mxu0
      %2498 = vmatprep.mubr.f32.mxu0 0.0
      %2499 = vmatmul.mubr.f32.gmra.mrb[0].mxu0 %v2365
      %v2500 = vpop.f32.mrb[0].mxu0
      %v2501 = vadd.f32 0.0, %v2500
      %v2502 = vpop.f32.mrb[0].mxu0
      %2503 = vmatprep.mubr.f32.mxu0 0.0
      %2504 = vmatmul.mubr.f32.gmra.mrb[0].mxu0 %v2368
      %v2505 = vpop.f32.mrb[0].mxu0
      %v2506 = vadd.f32 0.0, %v2505
      %v2507 = vpop.f32.mrb[0].mxu0
      %2508 = vmatprep.mubr.f32.mxu0 0.0
      %2509 = vmatmul.mubr.f32.gmra.mrb[0].mxu0 %v2371
      %v2510 = vpop.f32.mrb[0].mxu0
      %v2511 = vadd.f32 0.0, %v2510
      %v2512 = vpop.f32.mrb[0].mxu0
      %2513 = vmatprep.mubr.f32.mxu0 0.0
      %2514 = vmatmul.mubr.f32.gmra.mrb[0].mxu0 %v2374
      %v2515 = vpop.f32.mrb[0].mxu0
      %v2516 = vadd.f32 0.0, %v2515
      %v2517 = vpop.f32.mrb[0].mxu0
      %2518 = vmatprep.mubr.f32.mxu0 0.0
      %2519 = vmatmul.mubr.f32.gmra.mrb[0].mxu0 %v2377
      %v2520 = vpop.f32.mrb[0].mxu0
      %v2521 = vadd.f32 0.0, %v2520
      %v2522 = vpop.f32.mrb[0].mxu0
      %2523 = vdwg.mxu0
      %v2524 = vadd.f32 %v2296, %v2446
      %v2525 = vadd.f32 %v2297, %v2451
      %v2526 = vadd.f32 %v2298, %v2456
      %v2527 = vadd.f32 %v2299, %v2461
      %v2528 = vadd.f32 %v2300, %v2466
      %v2529 = vadd.f32 %v2301, %v2471
      %v2530 = vadd.f32 %v2302, %v2476
      %v2531 = vadd.f32 %v2303, %v2481
      %v2532 = vadd.f32 %v2304, %v2486
      %v2533 = vadd.f32 %v2305, %v2491
      %v2534 = vadd.f32 %v2306, %v2496
      %v2535 = vadd.f32 %v2307, %v2501
      %v2536 = vadd.f32 %v2308, %v2506
      %v2537 = vadd.f32 %v2309, %v2511
      %v2538 = vadd.f32 %v2310, %v2516
      %v2539 = vadd.f32 %v2311, %v2521
      %v2540 = vld [vmem:[#allocation2 + $0xa] sm:$0xff]
      %v2541 = vld [vmem:[#allocation2 + $0x12] sm:$0xff]
      %v2542 = vld [vmem:[#allocation2 + $0x1a] sm:$0xff]
      %v2543 = vld [vmem:[#allocation2 + $0x22] sm:$0xff]
      %v2544 = vld [vmem:[#allocation2 + $0x2a] sm:$0xff]
      %v2545 = vld [vmem:[#allocation2 + $0x32] sm:$0xff]
      %v2546 = vld [vmem:[#allocation2 + $0x3a] sm:$0xff]
      %v2547 = vld [vmem:[#allocation2 + $0x42] sm:$0xff]
      %v2548 = vld [vmem:[#allocation2 + $0x4a] sm:$0xff]
      %v2549 = vld [vmem:[#allocation2 + $0x52] sm:$0xff]
      %v2550 = vld [vmem:[#allocation2 + $0x5a] sm:$0xff]
      %v2551 = vld [vmem:[#allocation2 + $0x62] sm:$0xff]
      %v2552 = vld [vmem:[#allocation2 + $0x6a] sm:$0xff]
      %v2553 = vld [vmem:[#allocation2 + $0x72] sm:$0xff]
      %v2554 = vld [vmem:[#allocation2 + $0x7a] sm:$0xff]
      %v2555 = vld [vmem:[#allocation2 + $0x82] sm:$0xff]
      %s2556 = scalar_lea.vmem %s1, 160
      %v2557 = vld [vmem:[%s2556] sm:$0xff]
      %v2558 = vld [vmem:[%s2556 + $0x8] sm:$0xff]
      %v2560 = vsel %vm257, %v2540, 0
      %v2563 = vsel %vm257, %v2541, 0
      %v2566 = vsel %vm257, %v2542, 0
      %v2569 = vsel %vm257, %v2543, 0
      %v2572 = vsel %vm257, %v2544, 0
      %v2575 = vsel %vm257, %v2545, 0
      %v2578 = vsel %vm257, %v2546, 0
      %v2581 = vsel %vm257, %v2547, 0
      %v2584 = vsel %vm257, %v2548, 0
      %v2587 = vsel %vm257, %v2549, 0
      %v2590 = vsel %vm257, %v2550, 0
      %v2593 = vsel %vm257, %v2551, 0
      %v2596 = vsel %vm257, %v2552, 0
      %v2599 = vsel %vm257, %v2553, 0
      %v2602 = vsel %vm257, %v2554, 0
      %v2605 = vsel %vm257, %v2555, 0
      %2607 = vmatprep.subr.mxu0 0.0
      %2608 = vmatpush1.msra.mxu0 %v2557
      %2609 = vmatprep.subr.mxu0 0.0
      %2610 = vmatpush1.msra.mxu0 %v2558
      %2611 = vmatprep.subr.mxu0 0.0
      %2612 = vmatpush1.msra.mxu0 0.0
      %2613 = vmatprep.subr.mxu0 0.0
      %2614 = vmatpush1.msra.mxu0 0.0
      %2615 = vmatprep.subr.mxu0 0.0
      %2616 = vmatpush1.msra.mxu0 0.0
      %2617 = vmatprep.subr.mxu0 0.0
      %2618 = vmatpush1.msra.mxu0 0.0
      %2619 = vmatprep.subr.mxu0 0.0
      %2620 = vmatpush1.msra.mxu0 0.0
      %2621 = vmatprep.subr.mxu0 0.0
      %2622 = vmatpush1.msra.mxu0 0.0
      %2623 = vmatprep.subr.mxu0 0.0
      %2624 = vmatpush1.msra.mxu0 0.0
      %2625 = vmatprep.subr.mxu0 0.0
      %2626 = vmatpush1.msra.mxu0 0.0
      %2627 = vmatprep.subr.mxu0 0.0
      %2628 = vmatpush1.msra.mxu0 0.0
      %2629 = vmatprep.subr.mxu0 0.0
      %2630 = vmatpush1.msra.mxu0 0.0
      %2631 = vmatprep.subr.mxu0 0.0
      %2632 = vmatpush1.msra.mxu0 0.0
      %2633 = vmatprep.subr.mxu0 0.0
      %2634 = vmatpush1.msra.mxu0 0.0
      %2635 = vmatprep.subr.mxu0 0.0
      %2636 = vmatpush1.msra.mxu0 0.0
      %2637 = vmatprep.subr.mxu0 0.0
      %2638 = vmatpush1.msra.mxu0 0.0
      %2639 = vmatprep.subr.mxu0 0.0
      %2640 = vmatpush1.msra.mxu0 0.0
      %2641 = vmatprep.subr.mxu0 0.0
      %2642 = vmatpush1.msra.mxu0 0.0
      %2643 = vmatprep.subr.mxu0 0.0
      %2644 = vmatpush1.msra.mxu0 0.0
      %2645 = vmatprep.subr.mxu0 0.0
      %2646 = vmatpush1.msra.mxu0 0.0
      %2647 = vmatprep.subr.mxu0 0.0
      %2648 = vmatpush1.msra.mxu0 0.0
      %2649 = vmatprep.subr.mxu0 0.0
      %2650 = vmatpush1.msra.mxu0 0.0
      %2651 = vmatprep.subr.mxu0 0.0
      %2652 = vmatpush1.msra.mxu0 0.0
      %2653 = vmatprep.subr.mxu0 0.0
      %2654 = vmatpush1.msra.mxu0 0.0
      %2655 = vmatprep.subr.mxu0 0.0
      %2656 = vmatpush1.msra.mxu0 0.0
      %2657 = vmatprep.subr.mxu0 0.0
      %2658 = vmatpush1.msra.mxu0 0.0
      %2659 = vmatprep.subr.mxu0 0.0
      %2660 = vmatpush1.msra.mxu0 0.0
      %2661 = vmatprep.subr.mxu0 0.0
      %2662 = vmatpush1.msra.mxu0 0.0
      %2663 = vmatprep.subr.mxu0 0.0
      %2664 = vmatpush1.msra.mxu0 0.0
      %2665 = vmatprep.subr.mxu0 0.0
      %2666 = vmatpush1.msra.mxu0 0.0
      %2667 = vmatprep.subr.mxu0 0.0
      %2668 = vmatpush1.msra.mxu0 0.0
      %2669 = vmatprep.subr.mxu0 0.0
      %2670 = vmatpush1.msra.mxu0 0.0
      %2671 = vmatprep.mubr.f32.mxu0 0.0
      %2672 = vmatmul.mubr.f32.gmra.mrb[0].mxu0 %v2560
      %v2673 = vpop.f32.mrb[0].mxu0
      %v2674 = vadd.f32 0.0, %v2673
      %v2675 = vpop.f32.mrb[0].mxu0
      %2676 = vmatprep.mubr.f32.mxu0 0.0
      %2677 = vmatmul.mubr.f32.gmra.mrb[0].mxu0 %v2563
      %v2678 = vpop.f32.mrb[0].mxu0
      %v2679 = vadd.f32 0.0, %v2678
      %v2680 = vpop.f32.mrb[0].mxu0
      %2681 = vmatprep.mubr.f32.mxu0 0.0
      %2682 = vmatmul.mubr.f32.gmra.mrb[0].mxu0 %v2566
      %v2683 = vpop.f32.mrb[0].mxu0
      %v2684 = vadd.f32 0.0, %v2683
      %v2685 = vpop.f32.mrb[0].mxu0
      %2686 = vmatprep.mubr.f32.mxu0 0.0
      %2687 = vmatmul.mubr.f32.gmra.mrb[0].mxu0 %v2569
      %v2688 = vpop.f32.mrb[0].mxu0
      %v2689 = vadd.f32 0.0, %v2688
      %v2690 = vpop.f32.mrb[0].mxu0
      %2691 = vmatprep.mubr.f32.mxu0 0.0
      %2692 = vmatmul.mubr.f32.gmra.mrb[0].mxu0 %v2572
      %v2693 = vpop.f32.mrb[0].mxu0
      %v2694 = vadd.f32 0.0, %v2693
      %v2695 = vpop.f32.mrb[0].mxu0
      %2696 = vmatprep.mubr.f32.mxu0 0.0
      %2697 = vmatmul.mubr.f32.gmra.mrb[0].mxu0 %v2575
      %v2698 = vpop.f32.mrb[0].mxu0
      %v2699 = vadd.f32 0.0, %v2698
      %v2700 = vpop.f32.mrb[0].mxu0
      %2701 = vmatprep.mubr.f32.mxu0 0.0
      %2702 = vmatmul.mubr.f32.gmra.mrb[0].mxu0 %v2578
      %v2703 = vpop.f32.mrb[0].mxu0
      %v2704 = vadd.f32 0.0, %v2703
      %v2705 = vpop.f32.mrb[0].mxu0
      %2706 = vmatprep.mubr.f32.mxu0 0.0
      %2707 = vmatmul.mubr.f32.gmra.mrb[0].mxu0 %v2581
      %v2708 = vpop.f32.mrb[0].mxu0
      %v2709 = vadd.f32 0.0, %v2708
      %v2710 = vpop.f32.mrb[0].mxu0
      %2711 = vmatprep.mubr.f32.mxu0 0.0
      %2712 = vmatmul.mubr.f32.gmra.mrb[0].mxu0 %v2584
      %v2713 = vpop.f32.mrb[0].mxu0
      %v2714 = vadd.f32 0.0, %v2713
      %v2715 = vpop.f32.mrb[0].mxu0
      %2716 = vmatprep.mubr.f32.mxu0 0.0
      %2717 = vmatmul.mubr.f32.gmra.mrb[0].mxu0 %v2587
      %v2718 = vpop.f32.mrb[0].mxu0
      %v2719 = vadd.f32 0.0, %v2718
      %v2720 = vpop.f32.mrb[0].mxu0
      %2721 = vmatprep.mubr.f32.mxu0 0.0
      %2722 = vmatmul.mubr.f32.gmra.mrb[0].mxu0 %v2590
      %v2723 = vpop.f32.mrb[0].mxu0
      %v2724 = vadd.f32 0.0, %v2723
      %v2725 = vpop.f32.mrb[0].mxu0
      %2726 = vmatprep.mubr.f32.mxu0 0.0
      %2727 = vmatmul.mubr.f32.gmra.mrb[0].mxu0 %v2593
      %v2728 = vpop.f32.mrb[0].mxu0
      %v2729 = vadd.f32 0.0, %v2728
      %v2730 = vpop.f32.mrb[0].mxu0
      %2731 = vmatprep.mubr.f32.mxu0 0.0
      %2732 = vmatmul.mubr.f32.gmra.mrb[0].mxu0 %v2596
      %v2733 = vpop.f32.mrb[0].mxu0
      %v2734 = vadd.f32 0.0, %v2733
      %v2735 = vpop.f32.mrb[0].mxu0
      %2736 = vmatprep.mubr.f32.mxu0 0.0
      %2737 = vmatmul.mubr.f32.gmra.mrb[0].mxu0 %v2599
      %v2738 = vpop.f32.mrb[0].mxu0
      %v2739 = vadd.f32 0.0, %v2738
      %v2740 = vpop.f32.mrb[0].mxu0
      %2741 = vmatprep.mubr.f32.mxu0 0.0
      %2742 = vmatmul.mubr.f32.gmra.mrb[0].mxu0 %v2602
      %v2743 = vpop.f32.mrb[0].mxu0
      %v2744 = vadd.f32 0.0, %v2743
      %v2745 = vpop.f32.mrb[0].mxu0
      %2746 = vmatprep.mubr.f32.mxu0 0.0
      %2747 = vmatmul.mubr.f32.gmra.mrb[0].mxu0 %v2605
      %v2748 = vpop.f32.mrb[0].mxu0
      %v2749 = vadd.f32 0.0, %v2748
      %v2750 = vpop.f32.mrb[0].mxu0
      %2751 = vdwg.mxu0
      %v2752 = vadd.f32 %v2524, %v2674
      %v2753 = vadd.f32 %v2525, %v2679
      %v2754 = vadd.f32 %v2526, %v2684
      %v2755 = vadd.f32 %v2527, %v2689
      %v2756 = vadd.f32 %v2528, %v2694
      %v2757 = vadd.f32 %v2529, %v2699
      %v2758 = vadd.f32 %v2530, %v2704
      %v2759 = vadd.f32 %v2531, %v2709
      %v2760 = vadd.f32 %v2532, %v2714
      %v2761 = vadd.f32 %v2533, %v2719
      %v2762 = vadd.f32 %v2534, %v2724
      %v2763 = vadd.f32 %v2535, %v2729
      %v2764 = vadd.f32 %v2536, %v2734
      %v2765 = vadd.f32 %v2537, %v2739
      %v2766 = vadd.f32 %v2538, %v2744
      %v2767 = vadd.f32 %v2539, %v2749
      %v2768 = vld [vmem:[#allocation2 + $0xb] sm:$0xff]
      %v2769 = vld [vmem:[#allocation2 + $0x13] sm:$0xff]
      %v2770 = vld [vmem:[#allocation2 + $0x1b] sm:$0xff]
      %v2771 = vld [vmem:[#allocation2 + $0x23] sm:$0xff]
      %v2772 = vld [vmem:[#allocation2 + $0x2b] sm:$0xff]
      %v2773 = vld [vmem:[#allocation2 + $0x33] sm:$0xff]
      %v2774 = vld [vmem:[#allocation2 + $0x3b] sm:$0xff]
      %v2775 = vld [vmem:[#allocation2 + $0x43] sm:$0xff]
      %v2776 = vld [vmem:[#allocation2 + $0x4b] sm:$0xff]
      %v2777 = vld [vmem:[#allocation2 + $0x53] sm:$0xff]
      %v2778 = vld [vmem:[#allocation2 + $0x5b] sm:$0xff]
      %v2779 = vld [vmem:[#allocation2 + $0x63] sm:$0xff]
      %v2780 = vld [vmem:[#allocation2 + $0x6b] sm:$0xff]
      %v2781 = vld [vmem:[#allocation2 + $0x73] sm:$0xff]
      %v2782 = vld [vmem:[#allocation2 + $0x7b] sm:$0xff]
      %v2783 = vld [vmem:[#allocation2 + $0x83] sm:$0xff]
      %s2784 = scalar_lea.vmem %s1, 176
      %v2785 = vld [vmem:[%s2784] sm:$0xff]
      %v2786 = vld [vmem:[%s2784 + $0x8] sm:$0xff]
      %v2788 = vsel %vm257, %v2768, 0
      %v2791 = vsel %vm257, %v2769, 0
      %v2794 = vsel %vm257, %v2770, 0
      %v2797 = vsel %vm257, %v2771, 0
      %v2800 = vsel %vm257, %v2772, 0
      %v2803 = vsel %vm257, %v2773, 0
      %v2806 = vsel %vm257, %v2774, 0
      %v2809 = vsel %vm257, %v2775, 0
      %v2812 = vsel %vm257, %v2776, 0
      %v2815 = vsel %vm257, %v2777, 0
      %v2818 = vsel %vm257, %v2778, 0
      %v2821 = vsel %vm257, %v2779, 0
      %v2824 = vsel %vm257, %v2780, 0
      %v2827 = vsel %vm257, %v2781, 0
      %v2830 = vsel %vm257, %v2782, 0
      %v2833 = vsel %vm257, %v2783, 0
      %2835 = vmatprep.subr.mxu0 0.0
      %2836 = vmatpush1.msra.mxu0 %v2785
      %2837 = vmatprep.subr.mxu0 0.0
      %2838 = vmatpush1.msra.mxu0 %v2786
      %2839 = vmatprep.subr.mxu0 0.0
      %2840 = vmatpush1.msra.mxu0 0.0
      %2841 = vmatprep.subr.mxu0 0.0
      %2842 = vmatpush1.msra.mxu0 0.0
      %2843 = vmatprep.subr.mxu0 0.0
      %2844 = vmatpush1.msra.mxu0 0.0
      %2845 = vmatprep.subr.mxu0 0.0
      %2846 = vmatpush1.msra.mxu0 0.0
      %2847 = vmatprep.subr.mxu0 0.0
      %2848 = vmatpush1.msra.mxu0 0.0
      %2849 = vmatprep.subr.mxu0 0.0
      %2850 = vmatpush1.msra.mxu0 0.0
      %2851 = vmatprep.subr.mxu0 0.0
      %2852 = vmatpush1.msra.mxu0 0.0
      %2853 = vmatprep.subr.mxu0 0.0
      %2854 = vmatpush1.msra.mxu0 0.0
      %2855 = vmatprep.subr.mxu0 0.0
      %2856 = vmatpush1.msra.mxu0 0.0
      %2857 = vmatprep.subr.mxu0 0.0
      %2858 = vmatpush1.msra.mxu0 0.0
      %2859 = vmatprep.subr.mxu0 0.0
      %2860 = vmatpush1.msra.mxu0 0.0
      %2861 = vmatprep.subr.mxu0 0.0
      %2862 = vmatpush1.msra.mxu0 0.0
      %2863 = vmatprep.subr.mxu0 0.0
      %2864 = vmatpush1.msra.mxu0 0.0
      %2865 = vmatprep.subr.mxu0 0.0
      %2866 = vmatpush1.msra.mxu0 0.0
      %2867 = vmatprep.subr.mxu0 0.0
      %2868 = vmatpush1.msra.mxu0 0.0
      %2869 = vmatprep.subr.mxu0 0.0
      %2870 = vmatpush1.msra.mxu0 0.0
      %2871 = vmatprep.subr.mxu0 0.0
      %2872 = vmatpush1.msra.mxu0 0.0
      %2873 = vmatprep.subr.mxu0 0.0
      %2874 = vmatpush1.msra.mxu0 0.0
      %2875 = vmatprep.subr.mxu0 0.0
      %2876 = vmatpush1.msra.mxu0 0.0
      %2877 = vmatprep.subr.mxu0 0.0
      %2878 = vmatpush1.msra.mxu0 0.0
      %2879 = vmatprep.subr.mxu0 0.0
      %2880 = vmatpush1.msra.mxu0 0.0
      %2881 = vmatprep.subr.mxu0 0.0
      %2882 = vmatpush1.msra.mxu0 0.0
      %2883 = vmatprep.subr.mxu0 0.0
      %2884 = vmatpush1.msra.mxu0 0.0
      %2885 = vmatprep.subr.mxu0 0.0
      %2886 = vmatpush1.msra.mxu0 0.0
      %2887 = vmatprep.subr.mxu0 0.0
      %2888 = vmatpush1.msra.mxu0 0.0
      %2889 = vmatprep.subr.mxu0 0.0
      %2890 = vmatpush1.msra.mxu0 0.0
      %2891 = vmatprep.subr.mxu0 0.0
      %2892 = vmatpush1.msra.mxu0 0.0
      %2893 = vmatprep.subr.mxu0 0.0
      %2894 = vmatpush1.msra.mxu0 0.0
      %2895 = vmatprep.subr.mxu0 0.0
      %2896 = vmatpush1.msra.mxu0 0.0
      %2897 = vmatprep.subr.mxu0 0.0
      %2898 = vmatpush1.msra.mxu0 0.0
      %2899 = vmatprep.mubr.f32.mxu0 0.0
      %2900 = vmatmul.mubr.f32.gmra.mrb[0].mxu0 %v2788
      %v2901 = vpop.f32.mrb[0].mxu0
      %v2902 = vadd.f32 0.0, %v2901
      %v2903 = vpop.f32.mrb[0].mxu0
      %2904 = vmatprep.mubr.f32.mxu0 0.0
      %2905 = vmatmul.mubr.f32.gmra.mrb[0].mxu0 %v2791
      %v2906 = vpop.f32.mrb[0].mxu0
      %v2907 = vadd.f32 0.0, %v2906
      %v2908 = vpop.f32.mrb[0].mxu0
      %2909 = vmatprep.mubr.f32.mxu0 0.0
      %2910 = vmatmul.mubr.f32.gmra.mrb[0].mxu0 %v2794
      %v2911 = vpop.f32.mrb[0].mxu0
      %v2912 = vadd.f32 0.0, %v2911
      %v2913 = vpop.f32.mrb[0].mxu0
      %2914 = vmatprep.mubr.f32.mxu0 0.0
      %2915 = vmatmul.mubr.f32.gmra.mrb[0].mxu0 %v2797
      %v2916 = vpop.f32.mrb[0].mxu0
      %v2917 = vadd.f32 0.0, %v2916
      %v2918 = vpop.f32.mrb[0].mxu0
      %2919 = vmatprep.mubr.f32.mxu0 0.0
      %2920 = vmatmul.mubr.f32.gmra.mrb[0].mxu0 %v2800
      %v2921 = vpop.f32.mrb[0].mxu0
      %v2922 = vadd.f32 0.0, %v2921
      %v2923 = vpop.f32.mrb[0].mxu0
      %2924 = vmatprep.mubr.f32.mxu0 0.0
      %2925 = vmatmul.mubr.f32.gmra.mrb[0].mxu0 %v2803
      %v2926 = vpop.f32.mrb[0].mxu0
      %v2927 = vadd.f32 0.0, %v2926
      %v2928 = vpop.f32.mrb[0].mxu0
      %2929 = vmatprep.mubr.f32.mxu0 0.0
      %2930 = vmatmul.mubr.f32.gmra.mrb[0].mxu0 %v2806
      %v2931 = vpop.f32.mrb[0].mxu0
      %v2932 = vadd.f32 0.0, %v2931
      %v2933 = vpop.f32.mrb[0].mxu0
      %2934 = vmatprep.mubr.f32.mxu0 0.0
      %2935 = vmatmul.mubr.f32.gmra.mrb[0].mxu0 %v2809
      %v2936 = vpop.f32.mrb[0].mxu0
      %v2937 = vadd.f32 0.0, %v2936
      %v2938 = vpop.f32.mrb[0].mxu0
      %2939 = vmatprep.mubr.f32.mxu0 0.0
      %2940 = vmatmul.mubr.f32.gmra.mrb[0].mxu0 %v2812
      %v2941 = vpop.f32.mrb[0].mxu0
      %v2942 = vadd.f32 0.0, %v2941
      %v2943 = vpop.f32.mrb[0].mxu0
      %2944 = vmatprep.mubr.f32.mxu0 0.0
      %2945 = vmatmul.mubr.f32.gmra.mrb[0].mxu0 %v2815
      %v2946 = vpop.f32.mrb[0].mxu0
      %v2947 = vadd.f32 0.0, %v2946
      %v2948 = vpop.f32.mrb[0].mxu0
      %2949 = vmatprep.mubr.f32.mxu0 0.0
      %2950 = vmatmul.mubr.f32.gmra.mrb[0].mxu0 %v2818
      %v2951 = vpop.f32.mrb[0].mxu0
      %v2952 = vadd.f32 0.0, %v2951
      %v2953 = vpop.f32.mrb[0].mxu0
      %2954 = vmatprep.mubr.f32.mxu0 0.0
      %2955 = vmatmul.mubr.f32.gmra.mrb[0].mxu0 %v2821
      %v2956 = vpop.f32.mrb[0].mxu0
      %v2957 = vadd.f32 0.0, %v2956
      %v2958 = vpop.f32.mrb[0].mxu0
      %2959 = vmatprep.mubr.f32.mxu0 0.0
      %2960 = vmatmul.mubr.f32.gmra.mrb[0].mxu0 %v2824
      %v2961 = vpop.f32.mrb[0].mxu0
      %v2962 = vadd.f32 0.0, %v2961
      %v2963 = vpop.f32.mrb[0].mxu0
      %2964 = vmatprep.mubr.f32.mxu0 0.0
      %2965 = vmatmul.mubr.f32.gmra.mrb[0].mxu0 %v2827
      %v2966 = vpop.f32.mrb[0].mxu0
      %v2967 = vadd.f32 0.0, %v2966
      %v2968 = vpop.f32.mrb[0].mxu0
      %2969 = vmatprep.mubr.f32.mxu0 0.0
      %2970 = vmatmul.mubr.f32.gmra.mrb[0].mxu0 %v2830
      %v2971 = vpop.f32.mrb[0].mxu0
      %v2972 = vadd.f32 0.0, %v2971
      %v2973 = vpop.f32.mrb[0].mxu0
      %2974 = vmatprep.mubr.f32.mxu0 0.0
      %2975 = vmatmul.mubr.f32.gmra.mrb[0].mxu0 %v2833
      %v2976 = vpop.f32.mrb[0].mxu0
      %v2977 = vadd.f32 0.0, %v2976
      %v2978 = vpop.f32.mrb[0].mxu0
      %2979 = vdwg.mxu0
      %v2980 = vadd.f32 %v2752, %v2902
      %v2981 = vadd.f32 %v2753, %v2907
      %v2982 = vadd.f32 %v2754, %v2912
      %v2983 = vadd.f32 %v2755, %v2917
      %v2984 = vadd.f32 %v2756, %v2922
      %v2985 = vadd.f32 %v2757, %v2927
      %v2986 = vadd.f32 %v2758, %v2932
      %v2987 = vadd.f32 %v2759, %v2937
      %v2988 = vadd.f32 %v2760, %v2942
      %v2989 = vadd.f32 %v2761, %v2947
      %v2990 = vadd.f32 %v2762, %v2952
      %v2991 = vadd.f32 %v2763, %v2957
      %v2992 = vadd.f32 %v2764, %v2962
      %v2993 = vadd.f32 %v2765, %v2967
      %v2994 = vadd.f32 %v2766, %v2972
      %v2995 = vadd.f32 %v2767, %v2977
      %v2996 = vld [vmem:[#allocation2 + $0xc] sm:$0xff]
      %v2997 = vld [vmem:[#allocation2 + $0x14] sm:$0xff]
      %v2998 = vld [vmem:[#allocation2 + $0x1c] sm:$0xff]
      %v2999 = vld [vmem:[#allocation2 + $0x24] sm:$0xff]
      %v3000 = vld [vmem:[#allocation2 + $0x2c] sm:$0xff]
      %v3001 = vld [vmem:[#allocation2 + $0x34] sm:$0xff]
      %v3002 = vld [vmem:[#allocation2 + $0x3c] sm:$0xff]
      %v3003 = vld [vmem:[#allocation2 + $0x44] sm:$0xff]
      %v3004 = vld [vmem:[#allocation2 + $0x4c] sm:$0xff]
      %v3005 = vld [vmem:[#allocation2 + $0x54] sm:$0xff]
      %v3006 = vld [vmem:[#allocation2 + $0x5c] sm:$0xff]
      %v3007 = vld [vmem:[#allocation2 + $0x64] sm:$0xff]
      %v3008 = vld [vmem:[#allocation2 + $0x6c] sm:$0xff]
      %v3009 = vld [vmem:[#allocation2 + $0x74] sm:$0xff]
      %v3010 = vld [vmem:[#allocation2 + $0x7c] sm:$0xff]
      %v3011 = vld [vmem:[#allocation2 + $0x84] sm:$0xff]
      %s3012 = scalar_lea.vmem %s1, 192
      %v3013 = vld [vmem:[%s3012] sm:$0xff]
      %v3014 = vld [vmem:[%s3012 + $0x8] sm:$0xff]
      %v3016 = vsel %vm257, %v2996, 0
      %v3019 = vsel %vm257, %v2997, 0
      %v3022 = vsel %vm257, %v2998, 0
      %v3025 = vsel %vm257, %v2999, 0
      %v3028 = vsel %vm257, %v3000, 0
      %v3031 = vsel %vm257, %v3001, 0
      %v3034 = vsel %vm257, %v3002, 0
      %v3037 = vsel %vm257, %v3003, 0
      %v3040 = vsel %vm257, %v3004, 0
      %v3043 = vsel %vm257, %v3005, 0
      %v3046 = vsel %vm257, %v3006, 0
      %v3049 = vsel %vm257, %v3007, 0
      %v3052 = vsel %vm257, %v3008, 0
      %v3055 = vsel %vm257, %v3009, 0
      %v3058 = vsel %vm257, %v3010, 0
      %v3061 = vsel %vm257, %v3011, 0
      %3063 = vmatprep.subr.mxu0 0.0
      %3064 = vmatpush1.msra.mxu0 %v3013
      %3065 = vmatprep.subr.mxu0 0.0
      %3066 = vmatpush1.msra.mxu0 %v3014
      %3067 = vmatprep.subr.mxu0 0.0
      %3068 = vmatpush1.msra.mxu0 0.0
      %3069 = vmatprep.subr.mxu0 0.0
      %3070 = vmatpush1.msra.mxu0 0.0
      %3071 = vmatprep.subr.mxu0 0.0
      %3072 = vmatpush1.msra.mxu0 0.0
      %3073 = vmatprep.subr.mxu0 0.0
      %3074 = vmatpush1.msra.mxu0 0.0
      %3075 = vmatprep.subr.mxu0 0.0
      %3076 = vmatpush1.msra.mxu0 0.0
      %3077 = vmatprep.subr.mxu0 0.0
      %3078 = vmatpush1.msra.mxu0 0.0
      %3079 = vmatprep.subr.mxu0 0.0
      %3080 = vmatpush1.msra.mxu0 0.0
      %3081 = vmatprep.subr.mxu0 0.0
      %3082 = vmatpush1.msra.mxu0 0.0
      %3083 = vmatprep.subr.mxu0 0.0
      %3084 = vmatpush1.msra.mxu0 0.0
      %3085 = vmatprep.subr.mxu0 0.0
      %3086 = vmatpush1.msra.mxu0 0.0
      %3087 = vmatprep.subr.mxu0 0.0
      %3088 = vmatpush1.msra.mxu0 0.0
      %3089 = vmatprep.subr.mxu0 0.0
      %3090 = vmatpush1.msra.mxu0 0.0
      %3091 = vmatprep.subr.mxu0 0.0
      %3092 = vmatpush1.msra.mxu0 0.0
      %3093 = vmatprep.subr.mxu0 0.0
      %3094 = vmatpush1.msra.mxu0 0.0
      %3095 = vmatprep.subr.mxu0 0.0
      %3096 = vmatpush1.msra.mxu0 0.0
      %3097 = vmatprep.subr.mxu0 0.0
      %3098 = vmatpush1.msra.mxu0 0.0
      %3099 = vmatprep.subr.mxu0 0.0
      %3100 = vmatpush1.msra.mxu0 0.0
      %3101 = vmatprep.subr.mxu0 0.0
      %3102 = vmatpush1.msra.mxu0 0.0
      %3103 = vmatprep.subr.mxu0 0.0
      %3104 = vmatpush1.msra.mxu0 0.0
      %3105 = vmatprep.subr.mxu0 0.0
      %3106 = vmatpush1.msra.mxu0 0.0
      %3107 = vmatprep.subr.mxu0 0.0
      %3108 = vmatpush1.msra.mxu0 0.0
      %3109 = vmatprep.subr.mxu0 0.0
      %3110 = vmatpush1.msra.mxu0 0.0
      %3111 = vmatprep.subr.mxu0 0.0
      %3112 = vmatpush1.msra.mxu0 0.0
      %3113 = vmatprep.subr.mxu0 0.0
      %3114 = vmatpush1.msra.mxu0 0.0
      %3115 = vmatprep.subr.mxu0 0.0
      %3116 = vmatpush1.msra.mxu0 0.0
      %3117 = vmatprep.subr.mxu0 0.0
      %3118 = vmatpush1.msra.mxu0 0.0
      %3119 = vmatprep.subr.mxu0 0.0
      %3120 = vmatpush1.msra.mxu0 0.0
      %3121 = vmatprep.subr.mxu0 0.0
      %3122 = vmatpush1.msra.mxu0 0.0
      %3123 = vmatprep.subr.mxu0 0.0
      %3124 = vmatpush1.msra.mxu0 0.0
      %3125 = vmatprep.subr.mxu0 0.0
      %3126 = vmatpush1.msra.mxu0 0.0
      %3127 = vmatprep.mubr.f32.mxu0 0.0
      %3128 = vmatmul.mubr.f32.gmra.mrb[0].mxu0 %v3016
      %v3129 = vpop.f32.mrb[0].mxu0
      %v3130 = vadd.f32 0.0, %v3129
      %v3131 = vpop.f32.mrb[0].mxu0
      %3132 = vmatprep.mubr.f32.mxu0 0.0
      %3133 = vmatmul.mubr.f32.gmra.mrb[0].mxu0 %v3019
      %v3134 = vpop.f32.mrb[0].mxu0
      %v3135 = vadd.f32 0.0, %v3134
      %v3136 = vpop.f32.mrb[0].mxu0
      %3137 = vmatprep.mubr.f32.mxu0 0.0
      %3138 = vmatmul.mubr.f32.gmra.mrb[0].mxu0 %v3022
      %v3139 = vpop.f32.mrb[0].mxu0
      %v3140 = vadd.f32 0.0, %v3139
      %v3141 = vpop.f32.mrb[0].mxu0
      %3142 = vmatprep.mubr.f32.mxu0 0.0
      %3143 = vmatmul.mubr.f32.gmra.mrb[0].mxu0 %v3025
      %v3144 = vpop.f32.mrb[0].mxu0
      %v3145 = vadd.f32 0.0, %v3144
      %v3146 = vpop.f32.mrb[0].mxu0
      %3147 = vmatprep.mubr.f32.mxu0 0.0
      %3148 = vmatmul.mubr.f32.gmra.mrb[0].mxu0 %v3028
      %v3149 = vpop.f32.mrb[0].mxu0
      %v3150 = vadd.f32 0.0, %v3149
      %v3151 = vpop.f32.mrb[0].mxu0
      %3152 = vmatprep.mubr.f32.mxu0 0.0
      %3153 = vmatmul.mubr.f32.gmra.mrb[0].mxu0 %v3031
      %v3154 = vpop.f32.mrb[0].mxu0
      %v3155 = vadd.f32 0.0, %v3154
      %v3156 = vpop.f32.mrb[0].mxu0
      %3157 = vmatprep.mubr.f32.mxu0 0.0
      %3158 = vmatmul.mubr.f32.gmra.mrb[0].mxu0 %v3034
      %v3159 = vpop.f32.mrb[0].mxu0
      %v3160 = vadd.f32 0.0, %v3159
      %v3161 = vpop.f32.mrb[0].mxu0
      %3162 = vmatprep.mubr.f32.mxu0 0.0
      %3163 = vmatmul.mubr.f32.gmra.mrb[0].mxu0 %v3037
      %v3164 = vpop.f32.mrb[0].mxu0
      %v3165 = vadd.f32 0.0, %v3164
      %v3166 = vpop.f32.mrb[0].mxu0
      %3167 = vmatprep.mubr.f32.mxu0 0.0
      %3168 = vmatmul.mubr.f32.gmra.mrb[0].mxu0 %v3040
      %v3169 = vpop.f32.mrb[0].mxu0
      %v3170 = vadd.f32 0.0, %v3169
      %v3171 = vpop.f32.mrb[0].mxu0
      %3172 = vmatprep.mubr.f32.mxu0 0.0
      %3173 = vmatmul.mubr.f32.gmra.mrb[0].mxu0 %v3043
      %v3174 = vpop.f32.mrb[0].mxu0
      %v3175 = vadd.f32 0.0, %v3174
      %v3176 = vpop.f32.mrb[0].mxu0
      %3177 = vmatprep.mubr.f32.mxu0 0.0
      %3178 = vmatmul.mubr.f32.gmra.mrb[0].mxu0 %v3046
      %v3179 = vpop.f32.mrb[0].mxu0
      %v3180 = vadd.f32 0.0, %v3179
      %v3181 = vpop.f32.mrb[0].mxu0
      %3182 = vmatprep.mubr.f32.mxu0 0.0
      %3183 = vmatmul.mubr.f32.gmra.mrb[0].mxu0 %v3049
      %v3184 = vpop.f32.mrb[0].mxu0
      %v3185 = vadd.f32 0.0, %v3184
      %v3186 = vpop.f32.mrb[0].mxu0
      %3187 = vmatprep.mubr.f32.mxu0 0.0
      %3188 = vmatmul.mubr.f32.gmra.mrb[0].mxu0 %v3052
      %v3189 = vpop.f32.mrb[0].mxu0
      %v3190 = vadd.f32 0.0, %v3189
      %v3191 = vpop.f32.mrb[0].mxu0
      %3192 = vmatprep.mubr.f32.mxu0 0.0
      %3193 = vmatmul.mubr.f32.gmra.mrb[0].mxu0 %v3055
      %v3194 = vpop.f32.mrb[0].mxu0
      %v3195 = vadd.f32 0.0, %v3194
      %v3196 = vpop.f32.mrb[0].mxu0
      %3197 = vmatprep.mubr.f32.mxu0 0.0
      %3198 = vmatmul.mubr.f32.gmra.mrb[0].mxu0 %v3058
      %v3199 = vpop.f32.mrb[0].mxu0
      %v3200 = vadd.f32 0.0, %v3199
      %v3201 = vpop.f32.mrb[0].mxu0
      %3202 = vmatprep.mubr.f32.mxu0 0.0
      %3203 = vmatmul.mubr.f32.gmra.mrb[0].mxu0 %v3061
      %v3204 = vpop.f32.mrb[0].mxu0
      %v3205 = vadd.f32 0.0, %v3204
      %v3206 = vpop.f32.mrb[0].mxu0
      %3207 = vdwg.mxu0
      %v3208 = vadd.f32 %v2980, %v3130
      %v3209 = vadd.f32 %v2981, %v3135
      %v3210 = vadd.f32 %v2982, %v3140
      %v3211 = vadd.f32 %v2983, %v3145
      %v3212 = vadd.f32 %v2984, %v3150
      %v3213 = vadd.f32 %v2985, %v3155
      %v3214 = vadd.f32 %v2986, %v3160
      %v3215 = vadd.f32 %v2987, %v3165
      %v3216 = vadd.f32 %v2988, %v3170
      %v3217 = vadd.f32 %v2989, %v3175
      %v3218 = vadd.f32 %v2990, %v3180
      %v3219 = vadd.f32 %v2991, %v3185
      %v3220 = vadd.f32 %v2992, %v3190
      %v3221 = vadd.f32 %v2993, %v3195
      %v3222 = vadd.f32 %v2994, %v3200
      %v3223 = vadd.f32 %v2995, %v3205
      %v3224 = vld [vmem:[#allocation2 + $0xd] sm:$0xff]
      %v3225 = vld [vmem:[#allocation2 + $0x15] sm:$0xff]
      %v3226 = vld [vmem:[#allocation2 + $0x1d] sm:$0xff]
      %v3227 = vld [vmem:[#allocation2 + $0x25] sm:$0xff]
      %v3228 = vld [vmem:[#allocation2 + $0x2d] sm:$0xff]
      %v3229 = vld [vmem:[#allocation2 + $0x35] sm:$0xff]
      %v3230 = vld [vmem:[#allocation2 + $0x3d] sm:$0xff]
      %v3231 = vld [vmem:[#allocation2 + $0x45] sm:$0xff]
      %v3232 = vld [vmem:[#allocation2 + $0x4d] sm:$0xff]
      %v3233 = vld [vmem:[#allocation2 + $0x55] sm:$0xff]
      %v3234 = vld [vmem:[#allocation2 + $0x5d] sm:$0xff]
      %v3235 = vld [vmem:[#allocation2 + $0x65] sm:$0xff]
      %v3236 = vld [vmem:[#allocation2 + $0x6d] sm:$0xff]
      %v3237 = vld [vmem:[#allocation2 + $0x75] sm:$0xff]
      %v3238 = vld [vmem:[#allocation2 + $0x7d] sm:$0xff]
      %v3239 = vld [vmem:[#allocation2 + $0x85] sm:$0xff]
      %s3240 = scalar_lea.vmem %s1, 208
      %v3241 = vld [vmem:[%s3240] sm:$0xff]
      %v3242 = vld [vmem:[%s3240 + $0x8] sm:$0xff]
      %v3244 = vsel %vm257, %v3224, 0
      %v3247 = vsel %vm257, %v3225, 0
      %v3250 = vsel %vm257, %v3226, 0
      %v3253 = vsel %vm257, %v3227, 0
      %v3256 = vsel %vm257, %v3228, 0
      %v3259 = vsel %vm257, %v3229, 0
      %v3262 = vsel %vm257, %v3230, 0
      %v3265 = vsel %vm257, %v3231, 0
      %v3268 = vsel %vm257, %v3232, 0
      %v3271 = vsel %vm257, %v3233, 0
      %v3274 = vsel %vm257, %v3234, 0
      %v3277 = vsel %vm257, %v3235, 0
      %v3280 = vsel %vm257, %v3236, 0
      %v3283 = vsel %vm257, %v3237, 0
      %v3286 = vsel %vm257, %v3238, 0
      %v3289 = vsel %vm257, %v3239, 0
      %3291 = vmatprep.subr.mxu0 0.0
      %3292 = vmatpush1.msra.mxu0 %v3241
      %3293 = vmatprep.subr.mxu0 0.0
      %3294 = vmatpush1.msra.mxu0 %v3242
      %3295 = vmatprep.subr.mxu0 0.0
      %3296 = vmatpush1.msra.mxu0 0.0
      %3297 = vmatprep.subr.mxu0 0.0
      %3298 = vmatpush1.msra.mxu0 0.0
      %3299 = vmatprep.subr.mxu0 0.0
      %3300 = vmatpush1.msra.mxu0 0.0
      %3301 = vmatprep.subr.mxu0 0.0
      %3302 = vmatpush1.msra.mxu0 0.0
      %3303 = vmatprep.subr.mxu0 0.0
      %3304 = vmatpush1.msra.mxu0 0.0
      %3305 = vmatprep.subr.mxu0 0.0
      %3306 = vmatpush1.msra.mxu0 0.0
      %3307 = vmatprep.subr.mxu0 0.0
      %3308 = vmatpush1.msra.mxu0 0.0
      %3309 = vmatprep.subr.mxu0 0.0
      %3310 = vmatpush1.msra.mxu0 0.0
      %3311 = vmatprep.subr.mxu0 0.0
      %3312 = vmatpush1.msra.mxu0 0.0
      %3313 = vmatprep.subr.mxu0 0.0
      %3314 = vmatpush1.msra.mxu0 0.0
      %3315 = vmatprep.subr.mxu0 0.0
      %3316 = vmatpush1.msra.mxu0 0.0
      %3317 = vmatprep.subr.mxu0 0.0
      %3318 = vmatpush1.msra.mxu0 0.0
      %3319 = vmatprep.subr.mxu0 0.0
      %3320 = vmatpush1.msra.mxu0 0.0
      %3321 = vmatprep.subr.mxu0 0.0
      %3322 = vmatpush1.msra.mxu0 0.0
      %3323 = vmatprep.subr.mxu0 0.0
      %3324 = vmatpush1.msra.mxu0 0.0
      %3325 = vmatprep.subr.mxu0 0.0
      %3326 = vmatpush1.msra.mxu0 0.0
      %3327 = vmatprep.subr.mxu0 0.0
      %3328 = vmatpush1.msra.mxu0 0.0
      %3329 = vmatprep.subr.mxu0 0.0
      %3330 = vmatpush1.msra.mxu0 0.0
      %3331 = vmatprep.subr.mxu0 0.0
      %3332 = vmatpush1.msra.mxu0 0.0
      %3333 = vmatprep.subr.mxu0 0.0
      %3334 = vmatpush1.msra.mxu0 0.0
      %3335 = vmatprep.subr.mxu0 0.0
      %3336 = vmatpush1.msra.mxu0 0.0
      %3337 = vmatprep.subr.mxu0 0.0
      %3338 = vmatpush1.msra.mxu0 0.0
      %3339 = vmatprep.subr.mxu0 0.0
      %3340 = vmatpush1.msra.mxu0 0.0
      %3341 = vmatprep.subr.mxu0 0.0
      %3342 = vmatpush1.msra.mxu0 0.0
      %3343 = vmatprep.subr.mxu0 0.0
      %3344 = vmatpush1.msra.mxu0 0.0
      %3345 = vmatprep.subr.mxu0 0.0
      %3346 = vmatpush1.msra.mxu0 0.0
      %3347 = vmatprep.subr.mxu0 0.0
      %3348 = vmatpush1.msra.mxu0 0.0
      %3349 = vmatprep.subr.mxu0 0.0
      %3350 = vmatpush1.msra.mxu0 0.0
      %3351 = vmatprep.subr.mxu0 0.0
      %3352 = vmatpush1.msra.mxu0 0.0
      %3353 = vmatprep.subr.mxu0 0.0
      %3354 = vmatpush1.msra.mxu0 0.0
      %3355 = vmatprep.mubr.f32.mxu0 0.0
      %3356 = vmatmul.mubr.f32.gmra.mrb[0].mxu0 %v3244
      %v3357 = vpop.f32.mrb[0].mxu0
      %v3358 = vadd.f32 0.0, %v3357
      %v3359 = vpop.f32.mrb[0].mxu0
      %3360 = vmatprep.mubr.f32.mxu0 0.0
      %3361 = vmatmul.mubr.f32.gmra.mrb[0].mxu0 %v3247
      %v3362 = vpop.f32.mrb[0].mxu0
      %v3363 = vadd.f32 0.0, %v3362
      %v3364 = vpop.f32.mrb[0].mxu0
      %3365 = vmatprep.mubr.f32.mxu0 0.0
      %3366 = vmatmul.mubr.f32.gmra.mrb[0].mxu0 %v3250
      %v3367 = vpop.f32.mrb[0].mxu0
      %v3368 = vadd.f32 0.0, %v3367
      %v3369 = vpop.f32.mrb[0].mxu0
      %3370 = vmatprep.mubr.f32.mxu0 0.0
      %3371 = vmatmul.mubr.f32.gmra.mrb[0].mxu0 %v3253
      %v3372 = vpop.f32.mrb[0].mxu0
      %v3373 = vadd.f32 0.0, %v3372
      %v3374 = vpop.f32.mrb[0].mxu0
      %3375 = vmatprep.mubr.f32.mxu0 0.0
      %3376 = vmatmul.mubr.f32.gmra.mrb[0].mxu0 %v3256
      %v3377 = vpop.f32.mrb[0].mxu0
      %v3378 = vadd.f32 0.0, %v3377
      %v3379 = vpop.f32.mrb[0].mxu0
      %3380 = vmatprep.mubr.f32.mxu0 0.0
      %3381 = vmatmul.mubr.f32.gmra.mrb[0].mxu0 %v3259
      %v3382 = vpop.f32.mrb[0].mxu0
      %v3383 = vadd.f32 0.0, %v3382
      %v3384 = vpop.f32.mrb[0].mxu0
      %3385 = vmatprep.mubr.f32.mxu0 0.0
      %3386 = vmatmul.mubr.f32.gmra.mrb[0].mxu0 %v3262
      %v3387 = vpop.f32.mrb[0].mxu0
      %v3388 = vadd.f32 0.0, %v3387
      %v3389 = vpop.f32.mrb[0].mxu0
      %3390 = vmatprep.mubr.f32.mxu0 0.0
      %3391 = vmatmul.mubr.f32.gmra.mrb[0].mxu0 %v3265
      %v3392 = vpop.f32.mrb[0].mxu0
      %v3393 = vadd.f32 0.0, %v3392
      %v3394 = vpop.f32.mrb[0].mxu0
      %3395 = vmatprep.mubr.f32.mxu0 0.0
      %3396 = vmatmul.mubr.f32.gmra.mrb[0].mxu0 %v3268
      %v3397 = vpop.f32.mrb[0].mxu0
      %v3398 = vadd.f32 0.0, %v3397
      %v3399 = vpop.f32.mrb[0].mxu0
      %3400 = vmatprep.mubr.f32.mxu0 0.0
      %3401 = vmatmul.mubr.f32.gmra.mrb[0].mxu0 %v3271
      %v3402 = vpop.f32.mrb[0].mxu0
      %v3403 = vadd.f32 0.0, %v3402
      %v3404 = vpop.f32.mrb[0].mxu0
      %3405 = vmatprep.mubr.f32.mxu0 0.0
      %3406 = vmatmul.mubr.f32.gmra.mrb[0].mxu0 %v3274
      %v3407 = vpop.f32.mrb[0].mxu0
      %v3408 = vadd.f32 0.0, %v3407
      %v3409 = vpop.f32.mrb[0].mxu0
      %3410 = vmatprep.mubr.f32.mxu0 0.0
      %3411 = vmatmul.mubr.f32.gmra.mrb[0].mxu0 %v3277
      %v3412 = vpop.f32.mrb[0].mxu0
      %v3413 = vadd.f32 0.0, %v3412
      %v3414 = vpop.f32.mrb[0].mxu0
      %3415 = vmatprep.mubr.f32.mxu0 0.0
      %3416 = vmatmul.mubr.f32.gmra.mrb[0].mxu0 %v3280
      %v3417 = vpop.f32.mrb[0].mxu0
      %v3418 = vadd.f32 0.0, %v3417
      %v3419 = vpop.f32.mrb[0].mxu0
      %3420 = vmatprep.mubr.f32.mxu0 0.0
      %3421 = vmatmul.mubr.f32.gmra.mrb[0].mxu0 %v3283
      %v3422 = vpop.f32.mrb[0].mxu0
      %v3423 = vadd.f32 0.0, %v3422
      %v3424 = vpop.f32.mrb[0].mxu0
      %3425 = vmatprep.mubr.f32.mxu0 0.0
      %3426 = vmatmul.mubr.f32.gmra.mrb[0].mxu0 %v3286
      %v3427 = vpop.f32.mrb[0].mxu0
      %v3428 = vadd.f32 0.0, %v3427
      %v3429 = vpop.f32.mrb[0].mxu0
      %3430 = vmatprep.mubr.f32.mxu0 0.0
      %3431 = vmatmul.mubr.f32.gmra.mrb[0].mxu0 %v3289
      %v3432 = vpop.f32.mrb[0].mxu0
      %v3433 = vadd.f32 0.0, %v3432
      %v3434 = vpop.f32.mrb[0].mxu0
      %3435 = vdwg.mxu0
      %v3436 = vadd.f32 %v3208, %v3358
      %v3437 = vadd.f32 %v3209, %v3363
      %v3438 = vadd.f32 %v3210, %v3368
      %v3439 = vadd.f32 %v3211, %v3373
      %v3440 = vadd.f32 %v3212, %v3378
      %v3441 = vadd.f32 %v3213, %v3383
      %v3442 = vadd.f32 %v3214, %v3388
      %v3443 = vadd.f32 %v3215, %v3393
      %v3444 = vadd.f32 %v3216, %v3398
      %v3445 = vadd.f32 %v3217, %v3403
      %v3446 = vadd.f32 %v3218, %v3408
      %v3447 = vadd.f32 %v3219, %v3413
      %v3448 = vadd.f32 %v3220, %v3418
      %v3449 = vadd.f32 %v3221, %v3423
      %v3450 = vadd.f32 %v3222, %v3428
      %v3451 = vadd.f32 %v3223, %v3433
      %v3452 = vld [vmem:[#allocation2 + $0xe] sm:$0xff]
      %v3453 = vld [vmem:[#allocation2 + $0x16] sm:$0xff]
      %v3454 = vld [vmem:[#allocation2 + $0x1e] sm:$0xff]
      %v3455 = vld [vmem:[#allocation2 + $0x26] sm:$0xff]
      %v3456 = vld [vmem:[#allocation2 + $0x2e] sm:$0xff]
      %v3457 = vld [vmem:[#allocation2 + $0x36] sm:$0xff]
      %v3458 = vld [vmem:[#allocation2 + $0x3e] sm:$0xff]
      %v3459 = vld [vmem:[#allocation2 + $0x46] sm:$0xff]
      %v3460 = vld [vmem:[#allocation2 + $0x4e] sm:$0xff]
      %v3461 = vld [vmem:[#allocation2 + $0x56] sm:$0xff]
      %v3462 = vld [vmem:[#allocation2 + $0x5e] sm:$0xff]
      %v3463 = vld [vmem:[#allocation2 + $0x66] sm:$0xff]
      %v3464 = vld [vmem:[#allocation2 + $0x6e] sm:$0xff]
      %v3465 = vld [vmem:[#allocation2 + $0x76] sm:$0xff]
      %v3466 = vld [vmem:[#allocation2 + $0x7e] sm:$0xff]
      %v3467 = vld [vmem:[#allocation2 + $0x86] sm:$0xff]
      %s3468 = scalar_lea.vmem %s1, 224
      %v3469 = vld [vmem:[%s3468] sm:$0xff]
      %v3470 = vld [vmem:[%s3468 + $0x8] sm:$0xff]
      %v3472 = vsel %vm257, %v3452, 0
      %v3475 = vsel %vm257, %v3453, 0
      %v3478 = vsel %vm257, %v3454, 0
      %v3481 = vsel %vm257, %v3455, 0
      %v3484 = vsel %vm257, %v3456, 0
      %v3487 = vsel %vm257, %v3457, 0
      %v3490 = vsel %vm257, %v3458, 0
      %v3493 = vsel %vm257, %v3459, 0
      %v3496 = vsel %vm257, %v3460, 0
      %v3499 = vsel %vm257, %v3461, 0
      %v3502 = vsel %vm257, %v3462, 0
      %v3505 = vsel %vm257, %v3463, 0
      %v3508 = vsel %vm257, %v3464, 0
      %v3511 = vsel %vm257, %v3465, 0
      %v3514 = vsel %vm257, %v3466, 0
      %v3517 = vsel %vm257, %v3467, 0
      %3519 = vmatprep.subr.mxu0 0.0
      %3520 = vmatpush1.msra.mxu0 %v3469
      %3521 = vmatprep.subr.mxu0 0.0
      %3522 = vmatpush1.msra.mxu0 %v3470
      %3523 = vmatprep.subr.mxu0 0.0
      %3524 = vmatpush1.msra.mxu0 0.0
      %3525 = vmatprep.subr.mxu0 0.0
      %3526 = vmatpush1.msra.mxu0 0.0
      %3527 = vmatprep.subr.mxu0 0.0
      %3528 = vmatpush1.msra.mxu0 0.0
      %3529 = vmatprep.subr.mxu0 0.0
      %3530 = vmatpush1.msra.mxu0 0.0
      %3531 = vmatprep.subr.mxu0 0.0
      %3532 = vmatpush1.msra.mxu0 0.0
      %3533 = vmatprep.subr.mxu0 0.0
      %3534 = vmatpush1.msra.mxu0 0.0
      %3535 = vmatprep.subr.mxu0 0.0
      %3536 = vmatpush1.msra.mxu0 0.0
      %3537 = vmatprep.subr.mxu0 0.0
      %3538 = vmatpush1.msra.mxu0 0.0
      %3539 = vmatprep.subr.mxu0 0.0
      %3540 = vmatpush1.msra.mxu0 0.0
      %3541 = vmatprep.subr.mxu0 0.0
      %3542 = vmatpush1.msra.mxu0 0.0
      %3543 = vmatprep.subr.mxu0 0.0
      %3544 = vmatpush1.msra.mxu0 0.0
      %3545 = vmatprep.subr.mxu0 0.0
      %3546 = vmatpush1.msra.mxu0 0.0
      %3547 = vmatprep.subr.mxu0 0.0
      %3548 = vmatpush1.msra.mxu0 0.0
      %3549 = vmatprep.subr.mxu0 0.0
      %3550 = vmatpush1.msra.mxu0 0.0
      %3551 = vmatprep.subr.mxu0 0.0
      %3552 = vmatpush1.msra.mxu0 0.0
      %3553 = vmatprep.subr.mxu0 0.0
      %3554 = vmatpush1.msra.mxu0 0.0
      %3555 = vmatprep.subr.mxu0 0.0
      %3556 = vmatpush1.msra.mxu0 0.0
      %3557 = vmatprep.subr.mxu0 0.0
      %3558 = vmatpush1.msra.mxu0 0.0
      %3559 = vmatprep.subr.mxu0 0.0
      %3560 = vmatpush1.msra.mxu0 0.0
      %3561 = vmatprep.subr.mxu0 0.0
      %3562 = vmatpush1.msra.mxu0 0.0
      %3563 = vmatprep.subr.mxu0 0.0
      %3564 = vmatpush1.msra.mxu0 0.0
      %3565 = vmatprep.subr.mxu0 0.0
      %3566 = vmatpush1.msra.mxu0 0.0
      %3567 = vmatprep.subr.mxu0 0.0
      %3568 = vmatpush1.msra.mxu0 0.0
      %3569 = vmatprep.subr.mxu0 0.0
      %3570 = vmatpush1.msra.mxu0 0.0
      %3571 = vmatprep.subr.mxu0 0.0
      %3572 = vmatpush1.msra.mxu0 0.0
      %3573 = vmatprep.subr.mxu0 0.0
      %3574 = vmatpush1.msra.mxu0 0.0
      %3575 = vmatprep.subr.mxu0 0.0
      %3576 = vmatpush1.msra.mxu0 0.0
      %3577 = vmatprep.subr.mxu0 0.0
      %3578 = vmatpush1.msra.mxu0 0.0
      %3579 = vmatprep.subr.mxu0 0.0
      %3580 = vmatpush1.msra.mxu0 0.0
      %3581 = vmatprep.subr.mxu0 0.0
      %3582 = vmatpush1.msra.mxu0 0.0
      %3583 = vmatprep.mubr.f32.mxu0 0.0
      %3584 = vmatmul.mubr.f32.gmra.mrb[0].mxu0 %v3472
      %v3585 = vpop.f32.mrb[0].mxu0
      %v3586 = vadd.f32 0.0, %v3585
      %v3587 = vpop.f32.mrb[0].mxu0
      %3588 = vmatprep.mubr.f32.mxu0 0.0
      %3589 = vmatmul.mubr.f32.gmra.mrb[0].mxu0 %v3475
      %v3590 = vpop.f32.mrb[0].mxu0
      %v3591 = vadd.f32 0.0, %v3590
      %v3592 = vpop.f32.mrb[0].mxu0
      %3593 = vmatprep.mubr.f32.mxu0 0.0
      %3594 = vmatmul.mubr.f32.gmra.mrb[0].mxu0 %v3478
      %v3595 = vpop.f32.mrb[0].mxu0
      %v3596 = vadd.f32 0.0, %v3595
      %v3597 = vpop.f32.mrb[0].mxu0
      %3598 = vmatprep.mubr.f32.mxu0 0.0
      %3599 = vmatmul.mubr.f32.gmra.mrb[0].mxu0 %v3481
      %v3600 = vpop.f32.mrb[0].mxu0
      %v3601 = vadd.f32 0.0, %v3600
      %v3602 = vpop.f32.mrb[0].mxu0
      %3603 = vmatprep.mubr.f32.mxu0 0.0
      %3604 = vmatmul.mubr.f32.gmra.mrb[0].mxu0 %v3484
      %v3605 = vpop.f32.mrb[0].mxu0
      %v3606 = vadd.f32 0.0, %v3605
      %v3607 = vpop.f32.mrb[0].mxu0
      %3608 = vmatprep.mubr.f32.mxu0 0.0
      %3609 = vmatmul.mubr.f32.gmra.mrb[0].mxu0 %v3487
      %v3610 = vpop.f32.mrb[0].mxu0
      %v3611 = vadd.f32 0.0, %v3610
      %v3612 = vpop.f32.mrb[0].mxu0
      %3613 = vmatprep.mubr.f32.mxu0 0.0
      %3614 = vmatmul.mubr.f32.gmra.mrb[0].mxu0 %v3490
      %v3615 = vpop.f32.mrb[0].mxu0
      %v3616 = vadd.f32 0.0, %v3615
      %v3617 = vpop.f32.mrb[0].mxu0
      %3618 = vmatprep.mubr.f32.mxu0 0.0
      %3619 = vmatmul.mubr.f32.gmra.mrb[0].mxu0 %v3493
      %v3620 = vpop.f32.mrb[0].mxu0
      %v3621 = vadd.f32 0.0, %v3620
      %v3622 = vpop.f32.mrb[0].mxu0
      %3623 = vmatprep.mubr.f32.mxu0 0.0
      %3624 = vmatmul.mubr.f32.gmra.mrb[0].mxu0 %v3496
      %v3625 = vpop.f32.mrb[0].mxu0
      %v3626 = vadd.f32 0.0, %v3625
      %v3627 = vpop.f32.mrb[0].mxu0
      %3628 = vmatprep.mubr.f32.mxu0 0.0
      %3629 = vmatmul.mubr.f32.gmra.mrb[0].mxu0 %v3499
      %v3630 = vpop.f32.mrb[0].mxu0
      %v3631 = vadd.f32 0.0, %v3630
      %v3632 = vpop.f32.mrb[0].mxu0
      %3633 = vmatprep.mubr.f32.mxu0 0.0
      %3634 = vmatmul.mubr.f32.gmra.mrb[0].mxu0 %v3502
      %v3635 = vpop.f32.mrb[0].mxu0
      %v3636 = vadd.f32 0.0, %v3635
      %v3637 = vpop.f32.mrb[0].mxu0
      %3638 = vmatprep.mubr.f32.mxu0 0.0
      %3639 = vmatmul.mubr.f32.gmra.mrb[0].mxu0 %v3505
      %v3640 = vpop.f32.mrb[0].mxu0
      %v3641 = vadd.f32 0.0, %v3640
      %v3642 = vpop.f32.mrb[0].mxu0
      %3643 = vmatprep.mubr.f32.mxu0 0.0
      %3644 = vmatmul.mubr.f32.gmra.mrb[0].mxu0 %v3508
      %v3645 = vpop.f32.mrb[0].mxu0
      %v3646 = vadd.f32 0.0, %v3645
      %v3647 = vpop.f32.mrb[0].mxu0
      %3648 = vmatprep.mubr.f32.mxu0 0.0
      %3649 = vmatmul.mubr.f32.gmra.mrb[0].mxu0 %v3511
      %v3650 = vpop.f32.mrb[0].mxu0
      %v3651 = vadd.f32 0.0, %v3650
      %v3652 = vpop.f32.mrb[0].mxu0
      %3653 = vmatprep.mubr.f32.mxu0 0.0
      %3654 = vmatmul.mubr.f32.gmra.mrb[0].mxu0 %v3514
      %v3655 = vpop.f32.mrb[0].mxu0
      %v3656 = vadd.f32 0.0, %v3655
      %v3657 = vpop.f32.mrb[0].mxu0
      %3658 = vmatprep.mubr.f32.mxu0 0.0
      %3659 = vmatmul.mubr.f32.gmra.mrb[0].mxu0 %v3517
      %v3660 = vpop.f32.mrb[0].mxu0
      %v3661 = vadd.f32 0.0, %v3660
      %v3662 = vpop.f32.mrb[0].mxu0
      %3663 = vdwg.mxu0
      %v3664 = vadd.f32 %v3436, %v3586
      %v3665 = vadd.f32 %v3437, %v3591
      %v3666 = vadd.f32 %v3438, %v3596
      %v3667 = vadd.f32 %v3439, %v3601
      %v3668 = vadd.f32 %v3440, %v3606
      %v3669 = vadd.f32 %v3441, %v3611
      %v3670 = vadd.f32 %v3442, %v3616
      %v3671 = vadd.f32 %v3443, %v3621
      %v3672 = vadd.f32 %v3444, %v3626
      %v3673 = vadd.f32 %v3445, %v3631
      %v3674 = vadd.f32 %v3446, %v3636
      %v3675 = vadd.f32 %v3447, %v3641
      %v3676 = vadd.f32 %v3448, %v3646
      %v3677 = vadd.f32 %v3449, %v3651
      %v3678 = vadd.f32 %v3450, %v3656
      %v3679 = vadd.f32 %v3451, %v3661
      %v3680 = vld [vmem:[%s3] sm:$0x1]
      %v3682 = vlaneseq
      %v3683 = vshrl.u32 %v3682, 7
      %v3684 = vsub.s32 0, %v3683
      %v3685 = vrot.slane %v3680, %v3684
      %v3687 = vmul.f32 %v3664, %v3685
      %v3688 = vmul.f32 %v3665, %v3685
      %v3689 = vmul.f32 %v3666, %v3685
      %v3690 = vmul.f32 %v3667, %v3685
      %v3691 = vmul.f32 %v3668, %v3685
      %v3692 = vmul.f32 %v3669, %v3685
      %v3693 = vmul.f32 %v3670, %v3685
      %v3694 = vmul.f32 %v3671, %v3685
      %v3695 = vmul.f32 %v3672, %v3685
      %v3696 = vmul.f32 %v3673, %v3685
      %v3697 = vmul.f32 %v3674, %v3685
      %v3698 = vmul.f32 %v3675, %v3685
      %v3699 = vmul.f32 %v3676, %v3685
      %v3700 = vmul.f32 %v3677, %v3685
      %v3701 = vmul.f32 %v3678, %v3685
      %v3702 = vmul.f32 %v3679, %v3685
      %v3703 = vld [vmem:[%s4] sm:$0x1]
      %v3705 = vlaneseq
      %v3706 = vshrl.u32 %v3705, 7
      %v3707 = vsub.s32 0, %v3706
      %v3708 = vrot.slane %v3703, %v3707
      %v3710 = vadd.f32 %v3687, %v3708
      %v3711 = vadd.f32 %v3688, %v3708
      %v3712 = vadd.f32 %v3689, %v3708
      %v3713 = vadd.f32 %v3690, %v3708
      %v3714 = vadd.f32 %v3691, %v3708
      %v3715 = vadd.f32 %v3692, %v3708
      %v3716 = vadd.f32 %v3693, %v3708
      %v3717 = vadd.f32 %v3694, %v3708
      %v3718 = vadd.f32 %v3695, %v3708
      %v3719 = vadd.f32 %v3696, %v3708
      %v3720 = vadd.f32 %v3697, %v3708
      %v3721 = vadd.f32 %v3698, %v3708
      %v3722 = vadd.f32 %v3699, %v3708
      %v3723 = vadd.f32 %v3700, %v3708
      %v3724 = vadd.f32 %v3701, %v3708
      %v3725 = vadd.f32 %v3702, %v3708
      %v3726 = vmax.f32 %v3710, 0.0
      %v3727 = vmax.f32 %v3711, 0.0
      %v3728 = vmax.f32 %v3712, 0.0
      %v3729 = vmax.f32 %v3713, 0.0
      %v3730 = vmax.f32 %v3714, 0.0
      %v3731 = vmax.f32 %v3715, 0.0
      %v3732 = vmax.f32 %v3716, 0.0
      %v3733 = vmax.f32 %v3717, 0.0
      %v3734 = vmax.f32 %v3718, 0.0
      %v3735 = vmax.f32 %v3719, 0.0
      %v3736 = vmax.f32 %v3720, 0.0
      %v3737 = vmax.f32 %v3721, 0.0
      %v3738 = vmax.f32 %v3722, 0.0
      %v3739 = vmax.f32 %v3723, 0.0
      %v3740 = vmax.f32 %v3724, 0.0
      %v3741 = vmax.f32 %v3725, 0.0
      %vm3742 = vcmask 261120
      %3743 = vst.msk [vmem:[#allocation3] sm:$0xff] %vm3742, 0.0
      %3744 = vst.msk [vmem:[#allocation3 + $0x8] sm:$0xff] %vm3742, 0.0
      %3745 = vst.msk [vmem:[#allocation3 + $0x10] sm:$0xff] %vm3742, 0.0
      %3746 = vst.msk [vmem:[#allocation3 + $0x18] sm:$0xff] %vm3742, 0.0
      %3747 = vst.msk [vmem:[#allocation3 + $0x20] sm:$0xff] %vm3742, 0.0
      %3748 = vst.msk [vmem:[#allocation3 + $0x28] sm:$0xff] %vm3742, 0.0
      %3749 = vst.msk [vmem:[#allocation3 + $0x30] sm:$0xff] %vm3742, 0.0
      %3750 = vst.msk [vmem:[#allocation3 + $0x38] sm:$0xff] %vm3742, 0.0
      %3751 = vst.msk [vmem:[#allocation3 + $0x40] sm:$0xff] %vm3742, 0.0
      %3752 = vst.msk [vmem:[#allocation3 + $0x48] sm:$0xff] %vm3742, 0.0
      %3753 = vst.msk [vmem:[#allocation3 + $0x50] sm:$0xff] %vm3742, 0.0
      %3754 = vst.msk [vmem:[#allocation3 + $0x58] sm:$0xff] %vm3742, 0.0
      %3755 = vst.msk [vmem:[#allocation3 + $0x60] sm:$0xff] %vm3742, 0.0
      %3756 = vst.msk [vmem:[#allocation3 + $0x68] sm:$0xff] %vm3742, 0.0
      %3757 = vst.msk [vmem:[#allocation3 + $0x70] sm:$0xff] %vm3742, 0.0
      %3758 = vst.msk [vmem:[#allocation3 + $0x78] sm:$0xff] %vm3742, 0.0
      %3759 = vst.msk [vmem:[#allocation3 + $0x80] sm:$0xff] %vm3742, 0.0
      %vm3760 = vcmask 259072
      %3761 = vst.msk [vmem:[#allocation3 + $0x88] sm:$0x3f] %vm3760, 0.0
      %3762 = vst.msk [vmem:[#allocation3 + $0x7] sm:$0xff] %vm3742, %v3726
      %3763 = vst.msk [vmem:[#allocation3 + $0xf] sm:$0xff] %vm3742, %v3727
      %3764 = vst.msk [vmem:[#allocation3 + $0x17] sm:$0xff] %vm3742, %v3728
      %3765 = vst.msk [vmem:[#allocation3 + $0x1f] sm:$0xff] %vm3742, %v3729
      %3766 = vst.msk [vmem:[#allocation3 + $0x27] sm:$0xff] %vm3742, %v3730
      %3767 = vst.msk [vmem:[#allocation3 + $0x2f] sm:$0xff] %vm3742, %v3731
      %3768 = vst.msk [vmem:[#allocation3 + $0x37] sm:$0xff] %vm3742, %v3732
      %3769 = vst.msk [vmem:[#allocation3 + $0x3f] sm:$0xff] %vm3742, %v3733
      %3770 = vst.msk [vmem:[#allocation3 + $0x47] sm:$0xff] %vm3742, %v3734
      %3771 = vst.msk [vmem:[#allocation3 + $0x4f] sm:$0xff] %vm3742, %v3735
      %3772 = vst.msk [vmem:[#allocation3 + $0x57] sm:$0xff] %vm3742, %v3736
      %3773 = vst.msk [vmem:[#allocation3 + $0x5f] sm:$0xff] %vm3742, %v3737
      %3774 = vst.msk [vmem:[#allocation3 + $0x67] sm:$0xff] %vm3742, %v3738
      %3775 = vst.msk [vmem:[#allocation3 + $0x6f] sm:$0xff] %vm3742, %v3739
      %3776 = vst.msk [vmem:[#allocation3 + $0x77] sm:$0xff] %vm3742, %v3740
      %3777 = vst.msk [vmem:[#allocation3 + $0x7f] sm:$0xff] %vm3742, %v3741
      %v3778 = vld [vmem:[#allocation3] sm:$0xff]
      %v3779 = vld [vmem:[#allocation3 + $0x8] sm:$0xff]
      %v3780 = vld [vmem:[#allocation3 + $0x10] sm:$0xff]
      %v3781 = vld [vmem:[#allocation3 + $0x18] sm:$0xff]
      %v3782 = vld [vmem:[#allocation3 + $0x20] sm:$0xff]
      %v3783 = vld [vmem:[#allocation3 + $0x28] sm:$0xff]
      %v3784 = vld [vmem:[#allocation3 + $0x30] sm:$0xff]
      %v3785 = vld [vmem:[#allocation3 + $0x38] sm:$0xff]
      %v3786 = vld [vmem:[#allocation3 + $0x40] sm:$0xff]
      %v3787 = vld [vmem:[#allocation3 + $0x48] sm:$0xff]
      %v3788 = vld [vmem:[#allocation3 + $0x50] sm:$0xff]
      %v3789 = vld [vmem:[#allocation3 + $0x58] sm:$0xff]
      %v3790 = vld [vmem:[#allocation3 + $0x60] sm:$0xff]
      %v3791 = vld [vmem:[#allocation3 + $0x68] sm:$0xff]
      %v3792 = vld [vmem:[#allocation3 + $0x70] sm:$0xff]
      %v3793 = vld [vmem:[#allocation3 + $0x78] sm:$0xff]
      %v3794 = vld [vmem:[%s2] sm:$0xff]
      %v3795 = vld [vmem:[%s2 + $0x8] sm:$0xff]
      %v3796 = vld [vmem:[%s2 + $0x10] sm:$0xff]
      %v3797 = vld [vmem:[%s2 + $0x18] sm:$0xff]
      %v3798 = vld [vmem:[#allocation3 + $0x1] sm:$0xff]
      %v3799 = vld [vmem:[#allocation3 + $0x9] sm:$0xff]
      %v3800 = vld [vmem:[#allocation3 + $0x11] sm:$0xff]
      %v3801 = vld [vmem:[#allocation3 + $0x19] sm:$0xff]
      %v3802 = vld [vmem:[#allocation3 + $0x21] sm:$0xff]
      %v3803 = vld [vmem:[#allocation3 + $0x29] sm:$0xff]
      %v3804 = vld [vmem:[#allocation3 + $0x31] sm:$0xff]
      %v3805 = vld [vmem:[#allocation3 + $0x39] sm:$0xff]
      %v3806 = vld [vmem:[#allocation3 + $0x41] sm:$0xff]
      %v3807 = vld [vmem:[#allocation3 + $0x49] sm:$0xff]
      %v3808 = vld [vmem:[#allocation3 + $0x51] sm:$0xff]
      %v3809 = vld [vmem:[#allocation3 + $0x59] sm:$0xff]
      %v3810 = vld [vmem:[#allocation3 + $0x61] sm:$0xff]
      %v3811 = vld [vmem:[#allocation3 + $0x69] sm:$0xff]
      %v3812 = vld [vmem:[#allocation3 + $0x71] sm:$0xff]
      %v3813 = vld [vmem:[#allocation3 + $0x79] sm:$0xff]
      %s3814 = scalar_lea.vmem %s2, 32
      %v3815 = vld [vmem:[%s3814] sm:$0xff]
      %v3816 = vld [vmem:[%s3814 + $0x8] sm:$0xff]
      %v3817 = vld [vmem:[%s3814 + $0x10] sm:$0xff]
      %v3818 = vld [vmem:[%s3814 + $0x18] sm:$0xff]
      %v3820 = vsel %vm3742, %v3798, 0
      %v3823 = vsel %vm3742, %v3799, 0
      %v3826 = vsel %vm3742, %v3800, 0
      %v3829 = vsel %vm3742, %v3801, 0
      %v3832 = vsel %vm3742, %v3802, 0
      %v3835 = vsel %vm3742, %v3803, 0
      %v3838 = vsel %vm3742, %v3804, 0
      %v3841 = vsel %vm3742, %v3805, 0
      %v3844 = vsel %vm3742, %v3806, 0
      %v3847 = vsel %vm3742, %v3807, 0
      %v3850 = vsel %vm3742, %v3808, 0
      %v3853 = vsel %vm3742, %v3809, 0
      %v3856 = vsel %vm3742, %v3810, 0
      %v3859 = vsel %vm3742, %v3811, 0
      %v3862 = vsel %vm3742, %v3812, 0
      %v3865 = vsel %vm3742, %v3813, 0
      %3867 = vmatprep.subr.mxu0 0.0
      %3868 = vmatpush1.msra.mxu0 %v3815
      %3869 = vmatprep.subr.mxu0 0.0
      %3870 = vmatpush1.msra.mxu0 %v3816
      %3871 = vmatprep.subr.mxu0 0.0
      %3872 = vmatpush1.msra.mxu0 %v3817
      %3873 = vmatprep.subr.mxu0 0.0
      %3874 = vmatpush1.msra.mxu0 %v3818
      %3875 = vmatprep.subr.mxu0 0.0
      %3876 = vmatpush1.msra.mxu0 0.0
      %3877 = vmatprep.subr.mxu0 0.0
      %3878 = vmatpush1.msra.mxu0 0.0
      %3879 = vmatprep.subr.mxu0 0.0
      %3880 = vmatpush1.msra.mxu0 0.0
      %3881 = vmatprep.subr.mxu0 0.0
      %3882 = vmatpush1.msra.mxu0 0.0
      %3883 = vmatprep.subr.mxu0 0.0
      %3884 = vmatpush1.msra.mxu0 0.0
      %3885 = vmatprep.subr.mxu0 0.0
      %3886 = vmatpush1.msra.mxu0 0.0
      %3887 = vmatprep.subr.mxu0 0.0
      %3888 = vmatpush1.msra.mxu0 0.0
      %3889 = vmatprep.subr.mxu0 0.0
      %3890 = vmatpush1.msra.mxu0 0.0
      %3891 = vmatprep.subr.mxu0 0.0
      %3892 = vmatpush1.msra.mxu0 0.0
      %3893 = vmatprep.subr.mxu0 0.0
      %3894 = vmatpush1.msra.mxu0 0.0
      %3895 = vmatprep.subr.mxu0 0.0
      %3896 = vmatpush1.msra.mxu0 0.0
      %3897 = vmatprep.subr.mxu0 0.0
      %3898 = vmatpush1.msra.mxu0 0.0
      %3899 = vmatprep.subr.mxu0 0.0
      %3900 = vmatpush1.msra.mxu0 0.0
      %3901 = vmatprep.subr.mxu0 0.0
      %3902 = vmatpush1.msra.mxu0 0.0
      %3903 = vmatprep.subr.mxu0 0.0
      %3904 = vmatpush1.msra.mxu0 0.0
      %3905 = vmatprep.subr.mxu0 0.0
      %3906 = vmatpush1.msra.mxu0 0.0
      %3907 = vmatprep.subr.mxu0 0.0
      %3908 = vmatpush1.msra.mxu0 0.0
      %3909 = vmatprep.subr.mxu0 0.0
      %3910 = vmatpush1.msra.mxu0 0.0
      %3911 = vmatprep.subr.mxu0 0.0
      %3912 = vmatpush1.msra.mxu0 0.0
      %3913 = vmatprep.subr.mxu0 0.0
      %3914 = vmatpush1.msra.mxu0 0.0
      %3915 = vmatprep.subr.mxu0 0.0
      %3916 = vmatpush1.msra.mxu0 0.0
      %3917 = vmatprep.subr.mxu0 0.0
      %3918 = vmatpush1.msra.mxu0 0.0
      %3919 = vmatprep.subr.mxu0 0.0
      %3920 = vmatpush1.msra.mxu0 0.0
      %3921 = vmatprep.subr.mxu0 0.0
      %3922 = vmatpush1.msra.mxu0 0.0
      %3923 = vmatprep.subr.mxu0 0.0
      %3924 = vmatpush1.msra.mxu0 0.0
      %3925 = vmatprep.subr.mxu0 0.0
      %3926 = vmatpush1.msra.mxu0 0.0
      %3927 = vmatprep.subr.mxu0 0.0
      %3928 = vmatpush1.msra.mxu0 0.0
      %3929 = vmatprep.subr.mxu0 0.0
      %3930 = vmatpush1.msra.mxu0 0.0
      %3931 = vmatprep.mubr.f32.mxu0 0.0
      %3932 = vmatmul.mubr.f32.gmra.mrb[0].mxu0 %v3820
      %v3933 = vpop.f32.mrb[0].mxu0
      %v3934 = vadd.f32 0.0, %v3933
      %v3935 = vpop.f32.mrb[0].mxu0
      %3936 = vmatprep.mubr.f32.mxu0 0.0
      %3937 = vmatmul.mubr.f32.gmra.mrb[0].mxu0 %v3823
      %v3938 = vpop.f32.mrb[0].mxu0
      %v3939 = vadd.f32 0.0, %v3938
      %v3940 = vpop.f32.mrb[0].mxu0
      %3941 = vmatprep.mubr.f32.mxu0 0.0
      %3942 = vmatmul.mubr.f32.gmra.mrb[0].mxu0 %v3826
      %v3943 = vpop.f32.mrb[0].mxu0
      %v3944 = vadd.f32 0.0, %v3943
      %v3945 = vpop.f32.mrb[0].mxu0
      %3946 = vmatprep.mubr.f32.mxu0 0.0
      %3947 = vmatmul.mubr.f32.gmra.mrb[0].mxu0 %v3829
      %v3948 = vpop.f32.mrb[0].mxu0
      %v3949 = vadd.f32 0.0, %v3948
      %v3950 = vpop.f32.mrb[0].mxu0
      %3951 = vmatprep.mubr.f32.mxu0 0.0
      %3952 = vmatmul.mubr.f32.gmra.mrb[0].mxu0 %v3832
      %v3953 = vpop.f32.mrb[0].mxu0
      %v3954 = vadd.f32 0.0, %v3953
      %v3955 = vpop.f32.mrb[0].mxu0
      %3956 = vmatprep.mubr.f32.mxu0 0.0
      %3957 = vmatmul.mubr.f32.gmra.mrb[0].mxu0 %v3835
      %v3958 = vpop.f32.mrb[0].mxu0
      %v3959 = vadd.f32 0.0, %v3958
      %v3960 = vpop.f32.mrb[0].mxu0
      %3961 = vmatprep.mubr.f32.mxu0 0.0
      %3962 = vmatmul.mubr.f32.gmra.mrb[0].mxu0 %v3838
      %v3963 = vpop.f32.mrb[0].mxu0
      %v3964 = vadd.f32 0.0, %v3963
      %v3965 = vpop.f32.mrb[0].mxu0
      %3966 = vmatprep.mubr.f32.mxu0 0.0
      %3967 = vmatmul.mubr.f32.gmra.mrb[0].mxu0 %v3841
      %v3968 = vpop.f32.mrb[0].mxu0
      %v3969 = vadd.f32 0.0, %v3968
      %v3970 = vpop.f32.mrb[0].mxu0
      %3971 = vmatprep.mubr.f32.mxu0 0.0
      %3972 = vmatmul.mubr.f32.gmra.mrb[0].mxu0 %v3844
      %v3973 = vpop.f32.mrb[0].mxu0
      %v3974 = vadd.f32 0.0, %v3973
      %v3975 = vpop.f32.mrb[0].mxu0
      %3976 = vmatprep.mubr.f32.mxu0 0.0
      %3977 = vmatmul.mubr.f32.gmra.mrb[0].mxu0 %v3847
      %v3978 = vpop.f32.mrb[0].mxu0
      %v3979 = vadd.f32 0.0, %v3978
      %v3980 = vpop.f32.mrb[0].mxu0
      %3981 = vmatprep.mubr.f32.mxu0 0.0
      %3982 = vmatmul.mubr.f32.gmra.mrb[0].mxu0 %v3850
      %v3983 = vpop.f32.mrb[0].mxu0
      %v3984 = vadd.f32 0.0, %v3983
      %v3985 = vpop.f32.mrb[0].mxu0
      %3986 = vmatprep.mubr.f32.mxu0 0.0
      %3987 = vmatmul.mubr.f32.gmra.mrb[0].mxu0 %v3853
      %v3988 = vpop.f32.mrb[0].mxu0
      %v3989 = vadd.f32 0.0, %v3988
      %v3990 = vpop.f32.mrb[0].mxu0
      %3991 = vmatprep.mubr.f32.mxu0 0.0
      %3992 = vmatmul.mubr.f32.gmra.mrb[0].mxu0 %v3856
      %v3993 = vpop.f32.mrb[0].mxu0
      %v3994 = vadd.f32 0.0, %v3993
      %v3995 = vpop.f32.mrb[0].mxu0
      %3996 = vmatprep.mubr.f32.mxu0 0.0
      %3997 = vmatmul.mubr.f32.gmra.mrb[0].mxu0 %v3859
      %v3998 = vpop.f32.mrb[0].mxu0
      %v3999 = vadd.f32 0.0, %v3998
      %v4000 = vpop.f32.mrb[0].mxu0
      %4001 = vmatprep.mubr.f32.mxu0 0.0
      %4002 = vmatmul.mubr.f32.gmra.mrb[0].mxu0 %v3862
      %v4003 = vpop.f32.mrb[0].mxu0
      %v4004 = vadd.f32 0.0, %v4003
      %v4005 = vpop.f32.mrb[0].mxu0
      %4006 = vmatprep.mubr.f32.mxu0 0.0
      %4007 = vmatmul.mubr.f32.gmra.mrb[0].mxu0 %v3865
      %v4008 = vpop.f32.mrb[0].mxu0
      %v4009 = vadd.f32 0.0, %v4008
      %v4010 = vpop.f32.mrb[0].mxu0
      %4011 = vdwg.mxu0
      %v4013 = vsel %vm3742, %v3778, 0
      %v4016 = vsel %vm3742, %v3779, 0
      %v4019 = vsel %vm3742, %v3780, 0
      %v4022 = vsel %vm3742, %v3781, 0
      %v4025 = vsel %vm3742, %v3782, 0
      %v4028 = vsel %vm3742, %v3783, 0
      %v4031 = vsel %vm3742, %v3784, 0
      %v4034 = vsel %vm3742, %v3785, 0
      %v4037 = vsel %vm3742, %v3786, 0
      %v4040 = vsel %vm3742, %v3787, 0
      %v4043 = vsel %vm3742, %v3788, 0
      %v4046 = vsel %vm3742, %v3789, 0
      %v4049 = vsel %vm3742, %v3790, 0
      %v4052 = vsel %vm3742, %v3791, 0
      %v4055 = vsel %vm3742, %v3792, 0
      %v4058 = vsel %vm3742, %v3793, 0
      %4060 = vmatprep.subr.mxu0 0.0
      %4061 = vmatpush1.msra.mxu0 %v3794
      %4062 = vmatprep.subr.mxu0 0.0
      %4063 = vmatpush1.msra.mxu0 %v3795
      %4064 = vmatprep.subr.mxu0 0.0
      %4065 = vmatpush1.msra.mxu0 %v3796
      %4066 = vmatprep.subr.mxu0 0.0
      %4067 = vmatpush1.msra.mxu0 %v3797
      %4068 = vmatprep.subr.mxu0 0.0
      %4069 = vmatpush1.msra.mxu0 0.0
      %4070 = vmatprep.subr.mxu0 0.0
      %4071 = vmatpush1.msra.mxu0 0.0
      %4072 = vmatprep.subr.mxu0 0.0
      %4073 = vmatpush1.msra.mxu0 0.0
      %4074 = vmatprep.subr.mxu0 0.0
      %4075 = vmatpush1.msra.mxu0 0.0
      %4076 = vmatprep.subr.mxu0 0.0
      %4077 = vmatpush1.msra.mxu0 0.0
      %4078 = vmatprep.subr.mxu0 0.0
      %4079 = vmatpush1.msra.mxu0 0.0
      %4080 = vmatprep.subr.mxu0 0.0
      %4081 = vmatpush1.msra.mxu0 0.0
      %4082 = vmatprep.subr.mxu0 0.0
      %4083 = vmatpush1.msra.mxu0 0.0
      %4084 = vmatprep.subr.mxu0 0.0
      %4085 = vmatpush1.msra.mxu0 0.0
      %4086 = vmatprep.subr.mxu0 0.0
      %4087 = vmatpush1.msra.mxu0 0.0
      %4088 = vmatprep.subr.mxu0 0.0
      %4089 = vmatpush1.msra.mxu0 0.0
      %4090 = vmatprep.subr.mxu0 0.0
      %4091 = vmatpush1.msra.mxu0 0.0
      %4092 = vmatprep.subr.mxu0 0.0
      %4093 = vmatpush1.msra.mxu0 0.0
      %4094 = vmatprep.subr.mxu0 0.0
      %4095 = vmatpush1.msra.mxu0 0.0
      %4096 = vmatprep.subr.mxu0 0.0
      %4097 = vmatpush1.msra.mxu0 0.0
      %4098 = vmatprep.subr.mxu0 0.0
      %4099 = vmatpush1.msra.mxu0 0.0
      %4100 = vmatprep.subr.mxu0 0.0
      %4101 = vmatpush1.msra.mxu0 0.0
      %4102 = vmatprep.subr.mxu0 0.0
      %4103 = vmatpush1.msra.mxu0 0.0
      %4104 = vmatprep.subr.mxu0 0.0
      %4105 = vmatpush1.msra.mxu0 0.0
      %4106 = vmatprep.subr.mxu0 0.0
      %4107 = vmatpush1.msra.mxu0 0.0
      %4108 = vmatprep.subr.mxu0 0.0
      %4109 = vmatpush1.msra.mxu0 0.0
      %4110 = vmatprep.subr.mxu0 0.0
      %4111 = vmatpush1.msra.mxu0 0.0
      %4112 = vmatprep.subr.mxu0 0.0
      %4113 = vmatpush1.msra.mxu0 0.0
      %4114 = vmatprep.subr.mxu0 0.0
      %4115 = vmatpush1.msra.mxu0 0.0
      %4116 = vmatprep.subr.mxu0 0.0
      %4117 = vmatpush1.msra.mxu0 0.0
      %4118 = vmatprep.subr.mxu0 0.0
      %4119 = vmatpush1.msra.mxu0 0.0
      %4120 = vmatprep.subr.mxu0 0.0
      %4121 = vmatpush1.msra.mxu0 0.0
      %4122 = vmatprep.subr.mxu0 0.0
      %4123 = vmatpush1.msra.mxu0 0.0
      %4124 = vmatprep.mubr.f32.mxu0 0.0
      %4125 = vmatmul.mubr.f32.gmra.mrb[0].mxu0 %v4013
      %v4126 = vpop.f32.mrb[0].mxu0
      %v4127 = vadd.f32 %v3934, %v4126
      %v4128 = vpop.f32.mrb[0].mxu0
      %4129 = vmatprep.mubr.f32.mxu0 0.0
      %4130 = vmatmul.mubr.f32.gmra.mrb[0].mxu0 %v4016
      %v4131 = vpop.f32.mrb[0].mxu0
      %v4132 = vadd.f32 %v3939, %v4131
      %v4133 = vpop.f32.mrb[0].mxu0
      %4134 = vmatprep.mubr.f32.mxu0 0.0
      %4135 = vmatmul.mubr.f32.gmra.mrb[0].mxu0 %v4019
      %v4136 = vpop.f32.mrb[0].mxu0
      %v4137 = vadd.f32 %v3944, %v4136
      %v4138 = vpop.f32.mrb[0].mxu0
      %4139 = vmatprep.mubr.f32.mxu0 0.0
      %4140 = vmatmul.mubr.f32.gmra.mrb[0].mxu0 %v4022
      %v4141 = vpop.f32.mrb[0].mxu0
      %v4142 = vadd.f32 %v3949, %v4141
      %v4143 = vpop.f32.mrb[0].mxu0
      %4144 = vmatprep.mubr.f32.mxu0 0.0
      %4145 = vmatmul.mubr.f32.gmra.mrb[0].mxu0 %v4025
      %v4146 = vpop.f32.mrb[0].mxu0
      %v4147 = vadd.f32 %v3954, %v4146
      %v4148 = vpop.f32.mrb[0].mxu0
      %4149 = vmatprep.mubr.f32.mxu0 0.0
      %4150 = vmatmul.mubr.f32.gmra.mrb[0].mxu0 %v4028
      %v4151 = vpop.f32.mrb[0].mxu0
      %v4152 = vadd.f32 %v3959, %v4151
      %v4153 = vpop.f32.mrb[0].mxu0
      %4154 = vmatprep.mubr.f32.mxu0 0.0
      %4155 = vmatmul.mubr.f32.gmra.mrb[0].mxu0 %v4031
      %v4156 = vpop.f32.mrb[0].mxu0
      %v4157 = vadd.f32 %v3964, %v4156
      %v4158 = vpop.f32.mrb[0].mxu0
      %4159 = vmatprep.mubr.f32.mxu0 0.0
      %4160 = vmatmul.mubr.f32.gmra.mrb[0].mxu0 %v4034
      %v4161 = vpop.f32.mrb[0].mxu0
      %v4162 = vadd.f32 %v3969, %v4161
      %v4163 = vpop.f32.mrb[0].mxu0
      %4164 = vmatprep.mubr.f32.mxu0 0.0
      %4165 = vmatmul.mubr.f32.gmra.mrb[0].mxu0 %v4037
      %v4166 = vpop.f32.mrb[0].mxu0
      %v4167 = vadd.f32 %v3974, %v4166
      %v4168 = vpop.f32.mrb[0].mxu0
      %4169 = vmatprep.mubr.f32.mxu0 0.0
      %4170 = vmatmul.mubr.f32.gmra.mrb[0].mxu0 %v4040
      %v4171 = vpop.f32.mrb[0].mxu0
      %v4172 = vadd.f32 %v3979, %v4171
      %v4173 = vpop.f32.mrb[0].mxu0
      %4174 = vmatprep.mubr.f32.mxu0 0.0
      %4175 = vmatmul.mubr.f32.gmra.mrb[0].mxu0 %v4043
      %v4176 = vpop.f32.mrb[0].mxu0
      %v4177 = vadd.f32 %v3984, %v4176
      %v4178 = vpop.f32.mrb[0].mxu0
      %4179 = vmatprep.mubr.f32.mxu0 0.0
      %4180 = vmatmul.mubr.f32.gmra.mrb[0].mxu0 %v4046
      %v4181 = vpop.f32.mrb[0].mxu0
      %v4182 = vadd.f32 %v3989, %v4181
      %v4183 = vpop.f32.mrb[0].mxu0
      %4184 = vmatprep.mubr.f32.mxu0 0.0
      %4185 = vmatmul.mubr.f32.gmra.mrb[0].mxu0 %v4049
      %v4186 = vpop.f32.mrb[0].mxu0
      %v4187 = vadd.f32 %v3994, %v4186
      %v4188 = vpop.f32.mrb[0].mxu0
      %4189 = vmatprep.mubr.f32.mxu0 0.0
      %4190 = vmatmul.mubr.f32.gmra.mrb[0].mxu0 %v4052
      %v4191 = vpop.f32.mrb[0].mxu0
      %v4192 = vadd.f32 %v3999, %v4191
      %v4193 = vpop.f32.mrb[0].mxu0
      %4194 = vmatprep.mubr.f32.mxu0 0.0
      %4195 = vmatmul.mubr.f32.gmra.mrb[0].mxu0 %v4055
      %v4196 = vpop.f32.mrb[0].mxu0
      %v4197 = vadd.f32 %v4004, %v4196
      %v4198 = vpop.f32.mrb[0].mxu0
      %4199 = vmatprep.mubr.f32.mxu0 0.0
      %4200 = vmatmul.mubr.f32.gmra.mrb[0].mxu0 %v4058
      %v4201 = vpop.f32.mrb[0].mxu0
      %v4202 = vadd.f32 %v4009, %v4201
      %v4203 = vpop.f32.mrb[0].mxu0
      %4204 = vdwg.mxu0
      %v4205 = vld [vmem:[#allocation3 + $0x2] sm:$0xff]
      %v4206 = vld [vmem:[#allocation3 + $0xa] sm:$0xff]
      %v4207 = vld [vmem:[#allocation3 + $0x12] sm:$0xff]
      %v4208 = vld [vmem:[#allocation3 + $0x1a] sm:$0xff]
      %v4209 = vld [vmem:[#allocation3 + $0x22] sm:$0xff]
      %v4210 = vld [vmem:[#allocation3 + $0x2a] sm:$0xff]
      %v4211 = vld [vmem:[#allocation3 + $0x32] sm:$0xff]
      %v4212 = vld [vmem:[#allocation3 + $0x3a] sm:$0xff]
      %v4213 = vld [vmem:[#allocation3 + $0x42] sm:$0xff]
      %v4214 = vld [vmem:[#allocation3 + $0x4a] sm:$0xff]
      %v4215 = vld [vmem:[#allocation3 + $0x52] sm:$0xff]
      %v4216 = vld [vmem:[#allocation3 + $0x5a] sm:$0xff]
      %v4217 = vld [vmem:[#allocation3 + $0x62] sm:$0xff]
      %v4218 = vld [vmem:[#allocation3 + $0x6a] sm:$0xff]
      %v4219 = vld [vmem:[#allocation3 + $0x72] sm:$0xff]
      %v4220 = vld [vmem:[#allocation3 + $0x7a] sm:$0xff]
      %s4221 = scalar_lea.vmem %s2, 64
      %v4222 = vld [vmem:[%s4221] sm:$0xff]
      %v4223 = vld [vmem:[%s4221 + $0x8] sm:$0xff]
      %v4224 = vld [vmem:[%s4221 + $0x10] sm:$0xff]
      %v4225 = vld [vmem:[%s4221 + $0x18] sm:$0xff]
      %v4227 = vsel %vm3742, %v4205, 0
      %v4230 = vsel %vm3742, %v4206, 0
      %v4233 = vsel %vm3742, %v4207, 0
      %v4236 = vsel %vm3742, %v4208, 0
      %v4239 = vsel %vm3742, %v4209, 0
      %v4242 = vsel %vm3742, %v4210, 0
      %v4245 = vsel %vm3742, %v4211, 0
      %v4248 = vsel %vm3742, %v4212, 0
      %v4251 = vsel %vm3742, %v4213, 0
      %v4254 = vsel %vm3742, %v4214, 0
      %v4257 = vsel %vm3742, %v4215, 0
      %v4260 = vsel %vm3742, %v4216, 0
      %v4263 = vsel %vm3742, %v4217, 0
      %v4266 = vsel %vm3742, %v4218, 0
      %v4269 = vsel %vm3742, %v4219, 0
      %v4272 = vsel %vm3742, %v4220, 0
      %4274 = vmatprep.subr.mxu0 0.0
      %4275 = vmatpush1.msra.mxu0 %v4222
      %4276 = vmatprep.subr.mxu0 0.0
      %4277 = vmatpush1.msra.mxu0 %v4223
      %4278 = vmatprep.subr.mxu0 0.0
      %4279 = vmatpush1.msra.mxu0 %v4224
      %4280 = vmatprep.subr.mxu0 0.0
      %4281 = vmatpush1.msra.mxu0 %v4225
      %4282 = vmatprep.subr.mxu0 0.0
      %4283 = vmatpush1.msra.mxu0 0.0
      %4284 = vmatprep.subr.mxu0 0.0
      %4285 = vmatpush1.msra.mxu0 0.0
      %4286 = vmatprep.subr.mxu0 0.0
      %4287 = vmatpush1.msra.mxu0 0.0
      %4288 = vmatprep.subr.mxu0 0.0
      %4289 = vmatpush1.msra.mxu0 0.0
      %4290 = vmatprep.subr.mxu0 0.0
      %4291 = vmatpush1.msra.mxu0 0.0
      %4292 = vmatprep.subr.mxu0 0.0
      %4293 = vmatpush1.msra.mxu0 0.0
      %4294 = vmatprep.subr.mxu0 0.0
      %4295 = vmatpush1.msra.mxu0 0.0
      %4296 = vmatprep.subr.mxu0 0.0
      %4297 = vmatpush1.msra.mxu0 0.0
      %4298 = vmatprep.subr.mxu0 0.0
      %4299 = vmatpush1.msra.mxu0 0.0
      %4300 = vmatprep.subr.mxu0 0.0
      %4301 = vmatpush1.msra.mxu0 0.0
      %4302 = vmatprep.subr.mxu0 0.0
      %4303 = vmatpush1.msra.mxu0 0.0
      %4304 = vmatprep.subr.mxu0 0.0
      %4305 = vmatpush1.msra.mxu0 0.0
      %4306 = vmatprep.subr.mxu0 0.0
      %4307 = vmatpush1.msra.mxu0 0.0
      %4308 = vmatprep.subr.mxu0 0.0
      %4309 = vmatpush1.msra.mxu0 0.0
      %4310 = vmatprep.subr.mxu0 0.0
      %4311 = vmatpush1.msra.mxu0 0.0
      %4312 = vmatprep.subr.mxu0 0.0
      %4313 = vmatpush1.msra.mxu0 0.0
      %4314 = vmatprep.subr.mxu0 0.0
      %4315 = vmatpush1.msra.mxu0 0.0
      %4316 = vmatprep.subr.mxu0 0.0
      %4317 = vmatpush1.msra.mxu0 0.0
      %4318 = vmatprep.subr.mxu0 0.0
      %4319 = vmatpush1.msra.mxu0 0.0
      %4320 = vmatprep.subr.mxu0 0.0
      %4321 = vmatpush1.msra.mxu0 0.0
      %4322 = vmatprep.subr.mxu0 0.0
      %4323 = vmatpush1.msra.mxu0 0.0
      %4324 = vmatprep.subr.mxu0 0.0
      %4325 = vmatpush1.msra.mxu0 0.0
      %4326 = vmatprep.subr.mxu0 0.0
      %4327 = vmatpush1.msra.mxu0 0.0
      %4328 = vmatprep.subr.mxu0 0.0
      %4329 = vmatpush1.msra.mxu0 0.0
      %4330 = vmatprep.subr.mxu0 0.0
      %4331 = vmatpush1.msra.mxu0 0.0
      %4332 = vmatprep.subr.mxu0 0.0
      %4333 = vmatpush1.msra.mxu0 0.0
      %4334 = vmatprep.subr.mxu0 0.0
      %4335 = vmatpush1.msra.mxu0 0.0
      %4336 = vmatprep.subr.mxu0 0.0
      %4337 = vmatpush1.msra.mxu0 0.0
      %4338 = vmatprep.mubr.f32.mxu0 0.0
      %4339 = vmatmul.mubr.f32.gmra.mrb[0].mxu0 %v4227
      %v4340 = vpop.f32.mrb[0].mxu0
      %v4341 = vadd.f32 0.0, %v4340
      %v4342 = vpop.f32.mrb[0].mxu0
      %4343 = vmatprep.mubr.f32.mxu0 0.0
      %4344 = vmatmul.mubr.f32.gmra.mrb[0].mxu0 %v4230
      %v4345 = vpop.f32.mrb[0].mxu0
      %v4346 = vadd.f32 0.0, %v4345
      %v4347 = vpop.f32.mrb[0].mxu0
      %4348 = vmatprep.mubr.f32.mxu0 0.0
      %4349 = vmatmul.mubr.f32.gmra.mrb[0].mxu0 %v4233
      %v4350 = vpop.f32.mrb[0].mxu0
      %v4351 = vadd.f32 0.0, %v4350
      %v4352 = vpop.f32.mrb[0].mxu0
      %4353 = vmatprep.mubr.f32.mxu0 0.0
      %4354 = vmatmul.mubr.f32.gmra.mrb[0].mxu0 %v4236
      %v4355 = vpop.f32.mrb[0].mxu0
      %v4356 = vadd.f32 0.0, %v4355
      %v4357 = vpop.f32.mrb[0].mxu0
      %4358 = vmatprep.mubr.f32.mxu0 0.0
      %4359 = vmatmul.mubr.f32.gmra.mrb[0].mxu0 %v4239
      %v4360 = vpop.f32.mrb[0].mxu0
      %v4361 = vadd.f32 0.0, %v4360
      %v4362 = vpop.f32.mrb[0].mxu0
      %4363 = vmatprep.mubr.f32.mxu0 0.0
      %4364 = vmatmul.mubr.f32.gmra.mrb[0].mxu0 %v4242
      %v4365 = vpop.f32.mrb[0].mxu0
      %v4366 = vadd.f32 0.0, %v4365
      %v4367 = vpop.f32.mrb[0].mxu0
      %4368 = vmatprep.mubr.f32.mxu0 0.0
      %4369 = vmatmul.mubr.f32.gmra.mrb[0].mxu0 %v4245
      %v4370 = vpop.f32.mrb[0].mxu0
      %v4371 = vadd.f32 0.0, %v4370
      %v4372 = vpop.f32.mrb[0].mxu0
      %4373 = vmatprep.mubr.f32.mxu0 0.0
      %4374 = vmatmul.mubr.f32.gmra.mrb[0].mxu0 %v4248
      %v4375 = vpop.f32.mrb[0].mxu0
      %v4376 = vadd.f32 0.0, %v4375
      %v4377 = vpop.f32.mrb[0].mxu0
      %4378 = vmatprep.mubr.f32.mxu0 0.0
      %4379 = vmatmul.mubr.f32.gmra.mrb[0].mxu0 %v4251
      %v4380 = vpop.f32.mrb[0].mxu0
      %v4381 = vadd.f32 0.0, %v4380
      %v4382 = vpop.f32.mrb[0].mxu0
      %4383 = vmatprep.mubr.f32.mxu0 0.0
      %4384 = vmatmul.mubr.f32.gmra.mrb[0].mxu0 %v4254
      %v4385 = vpop.f32.mrb[0].mxu0
      %v4386 = vadd.f32 0.0, %v4385
      %v4387 = vpop.f32.mrb[0].mxu0
      %4388 = vmatprep.mubr.f32.mxu0 0.0
      %4389 = vmatmul.mubr.f32.gmra.mrb[0].mxu0 %v4257
      %v4390 = vpop.f32.mrb[0].mxu0
      %v4391 = vadd.f32 0.0, %v4390
      %v4392 = vpop.f32.mrb[0].mxu0
      %4393 = vmatprep.mubr.f32.mxu0 0.0
      %4394 = vmatmul.mubr.f32.gmra.mrb[0].mxu0 %v4260
      %v4395 = vpop.f32.mrb[0].mxu0
      %v4396 = vadd.f32 0.0, %v4395
      %v4397 = vpop.f32.mrb[0].mxu0
      %4398 = vmatprep.mubr.f32.mxu0 0.0
      %4399 = vmatmul.mubr.f32.gmra.mrb[0].mxu0 %v4263
      %v4400 = vpop.f32.mrb[0].mxu0
      %v4401 = vadd.f32 0.0, %v4400
      %v4402 = vpop.f32.mrb[0].mxu0
      %4403 = vmatprep.mubr.f32.mxu0 0.0
      %4404 = vmatmul.mubr.f32.gmra.mrb[0].mxu0 %v4266
      %v4405 = vpop.f32.mrb[0].mxu0
      %v4406 = vadd.f32 0.0, %v4405
      %v4407 = vpop.f32.mrb[0].mxu0
      %4408 = vmatprep.mubr.f32.mxu0 0.0
      %4409 = vmatmul.mubr.f32.gmra.mrb[0].mxu0 %v4269
      %v4410 = vpop.f32.mrb[0].mxu0
      %v4411 = vadd.f32 0.0, %v4410
      %v4412 = vpop.f32.mrb[0].mxu0
      %4413 = vmatprep.mubr.f32.mxu0 0.0
      %4414 = vmatmul.mubr.f32.gmra.mrb[0].mxu0 %v4272
      %v4415 = vpop.f32.mrb[0].mxu0
      %v4416 = vadd.f32 0.0, %v4415
      %v4417 = vpop.f32.mrb[0].mxu0
      %4418 = vdwg.mxu0
      %v4419 = vadd.f32 %v4127, %v4341
      %v4420 = vadd.f32 %v4132, %v4346
      %v4421 = vadd.f32 %v4137, %v4351
      %v4422 = vadd.f32 %v4142, %v4356
      %v4423 = vadd.f32 %v4147, %v4361
      %v4424 = vadd.f32 %v4152, %v4366
      %v4425 = vadd.f32 %v4157, %v4371
      %v4426 = vadd.f32 %v4162, %v4376
      %v4427 = vadd.f32 %v4167, %v4381
      %v4428 = vadd.f32 %v4172, %v4386
      %v4429 = vadd.f32 %v4177, %v4391
      %v4430 = vadd.f32 %v4182, %v4396
      %v4431 = vadd.f32 %v4187, %v4401
      %v4432 = vadd.f32 %v4192, %v4406
      %v4433 = vadd.f32 %v4197, %v4411
      %v4434 = vadd.f32 %v4202, %v4416
      %v4435 = vld [vmem:[#allocation3 + $0x3] sm:$0xff]
      %v4436 = vld [vmem:[#allocation3 + $0xb] sm:$0xff]
      %v4437 = vld [vmem:[#allocation3 + $0x13] sm:$0xff]
      %v4438 = vld [vmem:[#allocation3 + $0x1b] sm:$0xff]
      %v4439 = vld [vmem:[#allocation3 + $0x23] sm:$0xff]
      %v4440 = vld [vmem:[#allocation3 + $0x2b] sm:$0xff]
      %v4441 = vld [vmem:[#allocation3 + $0x33] sm:$0xff]
      %v4442 = vld [vmem:[#allocation3 + $0x3b] sm:$0xff]
      %v4443 = vld [vmem:[#allocation3 + $0x43] sm:$0xff]
      %v4444 = vld [vmem:[#allocation3 + $0x4b] sm:$0xff]
      %v4445 = vld [vmem:[#allocation3 + $0x53] sm:$0xff]
      %v4446 = vld [vmem:[#allocation3 + $0x5b] sm:$0xff]
      %v4447 = vld [vmem:[#allocation3 + $0x63] sm:$0xff]
      %v4448 = vld [vmem:[#allocation3 + $0x6b] sm:$0xff]
      %v4449 = vld [vmem:[#allocation3 + $0x73] sm:$0xff]
      %v4450 = vld [vmem:[#allocation3 + $0x7b] sm:$0xff]
      %s4451 = scalar_lea.vmem %s2, 96
      %v4452 = vld [vmem:[%s4451] sm:$0xff]
      %v4453 = vld [vmem:[%s4451 + $0x8] sm:$0xff]
      %v4454 = vld [vmem:[%s4451 + $0x10] sm:$0xff]
      %v4455 = vld [vmem:[%s4451 + $0x18] sm:$0xff]
      %v4457 = vsel %vm3742, %v4435, 0
      %v4460 = vsel %vm3742, %v4436, 0
      %v4463 = vsel %vm3742, %v4437, 0
      %v4466 = vsel %vm3742, %v4438, 0
      %v4469 = vsel %vm3742, %v4439, 0
      %v4472 = vsel %vm3742, %v4440, 0
      %v4475 = vsel %vm3742, %v4441, 0
      %v4478 = vsel %vm3742, %v4442, 0
      %v4481 = vsel %vm3742, %v4443, 0
      %v4484 = vsel %vm3742, %v4444, 0
      %v4487 = vsel %vm3742, %v4445, 0
      %v4490 = vsel %vm3742, %v4446, 0
      %v4493 = vsel %vm3742, %v4447, 0
      %v4496 = vsel %vm3742, %v4448, 0
      %v4499 = vsel %vm3742, %v4449, 0
      %v4502 = vsel %vm3742, %v4450, 0
      %4504 = vmatprep.subr.mxu0 0.0
      %4505 = vmatpush1.msra.mxu0 %v4452
      %4506 = vmatprep.subr.mxu0 0.0
      %4507 = vmatpush1.msra.mxu0 %v4453
      %4508 = vmatprep.subr.mxu0 0.0
      %4509 = vmatpush1.msra.mxu0 %v4454
      %4510 = vmatprep.subr.mxu0 0.0
      %4511 = vmatpush1.msra.mxu0 %v4455
      %4512 = vmatprep.subr.mxu0 0.0
      %4513 = vmatpush1.msra.mxu0 0.0
      %4514 = vmatprep.subr.mxu0 0.0
      %4515 = vmatpush1.msra.mxu0 0.0
      %4516 = vmatprep.subr.mxu0 0.0
      %4517 = vmatpush1.msra.mxu0 0.0
      %4518 = vmatprep.subr.mxu0 0.0
      %4519 = vmatpush1.msra.mxu0 0.0
      %4520 = vmatprep.subr.mxu0 0.0
      %4521 = vmatpush1.msra.mxu0 0.0
      %4522 = vmatprep.subr.mxu0 0.0
      %4523 = vmatpush1.msra.mxu0 0.0
      %4524 = vmatprep.subr.mxu0 0.0
      %4525 = vmatpush1.msra.mxu0 0.0
      %4526 = vmatprep.subr.mxu0 0.0
      %4527 = vmatpush1.msra.mxu0 0.0
      %4528 = vmatprep.subr.mxu0 0.0
      %4529 = vmatpush1.msra.mxu0 0.0
      %4530 = vmatprep.subr.mxu0 0.0
      %4531 = vmatpush1.msra.mxu0 0.0
      %4532 = vmatprep.subr.mxu0 0.0
      %4533 = vmatpush1.msra.mxu0 0.0
      %4534 = vmatprep.subr.mxu0 0.0
      %4535 = vmatpush1.msra.mxu0 0.0
      %4536 = vmatprep.subr.mxu0 0.0
      %4537 = vmatpush1.msra.mxu0 0.0
      %4538 = vmatprep.subr.mxu0 0.0
      %4539 = vmatpush1.msra.mxu0 0.0
      %4540 = vmatprep.subr.mxu0 0.0
      %4541 = vmatpush1.msra.mxu0 0.0
      %4542 = vmatprep.subr.mxu0 0.0
      %4543 = vmatpush1.msra.mxu0 0.0
      %4544 = vmatprep.subr.mxu0 0.0
      %4545 = vmatpush1.msra.mxu0 0.0
      %4546 = vmatprep.subr.mxu0 0.0
      %4547 = vmatpush1.msra.mxu0 0.0
      %4548 = vmatprep.subr.mxu0 0.0
      %4549 = vmatpush1.msra.mxu0 0.0
      %4550 = vmatprep.subr.mxu0 0.0
      %4551 = vmatpush1.msra.mxu0 0.0
      %4552 = vmatprep.subr.mxu0 0.0
      %4553 = vmatpush1.msra.mxu0 0.0
      %4554 = vmatprep.subr.mxu0 0.0
      %4555 = vmatpush1.msra.mxu0 0.0
      %4556 = vmatprep.subr.mxu0 0.0
      %4557 = vmatpush1.msra.mxu0 0.0
      %4558 = vmatprep.subr.mxu0 0.0
      %4559 = vmatpush1.msra.mxu0 0.0
      %4560 = vmatprep.subr.mxu0 0.0
      %4561 = vmatpush1.msra.mxu0 0.0
      %4562 = vmatprep.subr.mxu0 0.0
      %4563 = vmatpush1.msra.mxu0 0.0
      %4564 = vmatprep.subr.mxu0 0.0
      %4565 = vmatpush1.msra.mxu0 0.0
      %4566 = vmatprep.subr.mxu0 0.0
      %4567 = vmatpush1.msra.mxu0 0.0
      %4568 = vmatprep.mubr.f32.mxu0 0.0
      %4569 = vmatmul.mubr.f32.gmra.mrb[0].mxu0 %v4457
      %v4570 = vpop.f32.mrb[0].mxu0
      %v4571 = vadd.f32 0.0, %v4570
      %v4572 = vpop.f32.mrb[0].mxu0
      %4573 = vmatprep.mubr.f32.mxu0 0.0
      %4574 = vmatmul.mubr.f32.gmra.mrb[0].mxu0 %v4460
      %v4575 = vpop.f32.mrb[0].mxu0
      %v4576 = vadd.f32 0.0, %v4575
      %v4577 = vpop.f32.mrb[0].mxu0
      %4578 = vmatprep.mubr.f32.mxu0 0.0
      %4579 = vmatmul.mubr.f32.gmra.mrb[0].mxu0 %v4463
      %v4580 = vpop.f32.mrb[0].mxu0
      %v4581 = vadd.f32 0.0, %v4580
      %v4582 = vpop.f32.mrb[0].mxu0
      %4583 = vmatprep.mubr.f32.mxu0 0.0
      %4584 = vmatmul.mubr.f32.gmra.mrb[0].mxu0 %v4466
      %v4585 = vpop.f32.mrb[0].mxu0
      %v4586 = vadd.f32 0.0, %v4585
      %v4587 = vpop.f32.mrb[0].mxu0
      %4588 = vmatprep.mubr.f32.mxu0 0.0
      %4589 = vmatmul.mubr.f32.gmra.mrb[0].mxu0 %v4469
      %v4590 = vpop.f32.mrb[0].mxu0
      %v4591 = vadd.f32 0.0, %v4590
      %v4592 = vpop.f32.mrb[0].mxu0
      %4593 = vmatprep.mubr.f32.mxu0 0.0
      %4594 = vmatmul.mubr.f32.gmra.mrb[0].mxu0 %v4472
      %v4595 = vpop.f32.mrb[0].mxu0
      %v4596 = vadd.f32 0.0, %v4595
      %v4597 = vpop.f32.mrb[0].mxu0
      %4598 = vmatprep.mubr.f32.mxu0 0.0
      %4599 = vmatmul.mubr.f32.gmra.mrb[0].mxu0 %v4475
      %v4600 = vpop.f32.mrb[0].mxu0
      %v4601 = vadd.f32 0.0, %v4600
      %v4602 = vpop.f32.mrb[0].mxu0
      %4603 = vmatprep.mubr.f32.mxu0 0.0
      %4604 = vmatmul.mubr.f32.gmra.mrb[0].mxu0 %v4478
      %v4605 = vpop.f32.mrb[0].mxu0
      %v4606 = vadd.f32 0.0, %v4605
      %v4607 = vpop.f32.mrb[0].mxu0
      %4608 = vmatprep.mubr.f32.mxu0 0.0
      %4609 = vmatmul.mubr.f32.gmra.mrb[0].mxu0 %v4481
      %v4610 = vpop.f32.mrb[0].mxu0
      %v4611 = vadd.f32 0.0, %v4610
      %v4612 = vpop.f32.mrb[0].mxu0
      %4613 = vmatprep.mubr.f32.mxu0 0.0
      %4614 = vmatmul.mubr.f32.gmra.mrb[0].mxu0 %v4484
      %v4615 = vpop.f32.mrb[0].mxu0
      %v4616 = vadd.f32 0.0, %v4615
      %v4617 = vpop.f32.mrb[0].mxu0
      %4618 = vmatprep.mubr.f32.mxu0 0.0
      %4619 = vmatmul.mubr.f32.gmra.mrb[0].mxu0 %v4487
      %v4620 = vpop.f32.mrb[0].mxu0
      %v4621 = vadd.f32 0.0, %v4620
      %v4622 = vpop.f32.mrb[0].mxu0
      %4623 = vmatprep.mubr.f32.mxu0 0.0
      %4624 = vmatmul.mubr.f32.gmra.mrb[0].mxu0 %v4490
      %v4625 = vpop.f32.mrb[0].mxu0
      %v4626 = vadd.f32 0.0, %v4625
      %v4627 = vpop.f32.mrb[0].mxu0
      %4628 = vmatprep.mubr.f32.mxu0 0.0
      %4629 = vmatmul.mubr.f32.gmra.mrb[0].mxu0 %v4493
      %v4630 = vpop.f32.mrb[0].mxu0
      %v4631 = vadd.f32 0.0, %v4630
      %v4632 = vpop.f32.mrb[0].mxu0
      %4633 = vmatprep.mubr.f32.mxu0 0.0
      %4634 = vmatmul.mubr.f32.gmra.mrb[0].mxu0 %v4496
      %v4635 = vpop.f32.mrb[0].mxu0
      %v4636 = vadd.f32 0.0, %v4635
      %v4637 = vpop.f32.mrb[0].mxu0
      %4638 = vmatprep.mubr.f32.mxu0 0.0
      %4639 = vmatmul.mubr.f32.gmra.mrb[0].mxu0 %v4499
      %v4640 = vpop.f32.mrb[0].mxu0
      %v4641 = vadd.f32 0.0, %v4640
      %v4642 = vpop.f32.mrb[0].mxu0
      %4643 = vmatprep.mubr.f32.mxu0 0.0
      %4644 = vmatmul.mubr.f32.gmra.mrb[0].mxu0 %v4502
      %v4645 = vpop.f32.mrb[0].mxu0
      %v4646 = vadd.f32 0.0, %v4645
      %v4647 = vpop.f32.mrb[0].mxu0
      %4648 = vdwg.mxu0
      %v4649 = vadd.f32 %v4419, %v4571
      %v4650 = vadd.f32 %v4420, %v4576
      %v4651 = vadd.f32 %v4421, %v4581
      %v4652 = vadd.f32 %v4422, %v4586
      %v4653 = vadd.f32 %v4423, %v4591
      %v4654 = vadd.f32 %v4424, %v4596
      %v4655 = vadd.f32 %v4425, %v4601
      %v4656 = vadd.f32 %v4426, %v4606
      %v4657 = vadd.f32 %v4427, %v4611
      %v4658 = vadd.f32 %v4428, %v4616
      %v4659 = vadd.f32 %v4429, %v4621
      %v4660 = vadd.f32 %v4430, %v4626
      %v4661 = vadd.f32 %v4431, %v4631
      %v4662 = vadd.f32 %v4432, %v4636
      %v4663 = vadd.f32 %v4433, %v4641
      %v4664 = vadd.f32 %v4434, %v4646
      %v4665 = vld [vmem:[#allocation3 + $0x4] sm:$0xff]
      %v4666 = vld [vmem:[#allocation3 + $0xc] sm:$0xff]
      %v4667 = vld [vmem:[#allocation3 + $0x14] sm:$0xff]
      %v4668 = vld [vmem:[#allocation3 + $0x1c] sm:$0xff]
      %v4669 = vld [vmem:[#allocation3 + $0x24] sm:$0xff]
      %v4670 = vld [vmem:[#allocation3 + $0x2c] sm:$0xff]
      %v4671 = vld [vmem:[#allocation3 + $0x34] sm:$0xff]
      %v4672 = vld [vmem:[#allocation3 + $0x3c] sm:$0xff]
      %v4673 = vld [vmem:[#allocation3 + $0x44] sm:$0xff]
      %v4674 = vld [vmem:[#allocation3 + $0x4c] sm:$0xff]
      %v4675 = vld [vmem:[#allocation3 + $0x54] sm:$0xff]
      %v4676 = vld [vmem:[#allocation3 + $0x5c] sm:$0xff]
      %v4677 = vld [vmem:[#allocation3 + $0x64] sm:$0xff]
      %v4678 = vld [vmem:[#allocation3 + $0x6c] sm:$0xff]
      %v4679 = vld [vmem:[#allocation3 + $0x74] sm:$0xff]
      %v4680 = vld [vmem:[#allocation3 + $0x7c] sm:$0xff]
      %s4681 = scalar_lea.vmem %s2, 128
      %v4682 = vld [vmem:[%s4681] sm:$0xff]
      %v4683 = vld [vmem:[%s4681 + $0x8] sm:$0xff]
      %v4684 = vld [vmem:[%s4681 + $0x10] sm:$0xff]
      %v4685 = vld [vmem:[%s4681 + $0x18] sm:$0xff]
      %v4687 = vsel %vm3742, %v4665, 0
      %v4690 = vsel %vm3742, %v4666, 0
      %v4693 = vsel %vm3742, %v4667, 0
      %v4696 = vsel %vm3742, %v4668, 0
      %v4699 = vsel %vm3742, %v4669, 0
      %v4702 = vsel %vm3742, %v4670, 0
      %v4705 = vsel %vm3742, %v4671, 0
      %v4708 = vsel %vm3742, %v4672, 0
      %v4711 = vsel %vm3742, %v4673, 0
      %v4714 = vsel %vm3742, %v4674, 0
      %v4717 = vsel %vm3742, %v4675, 0
      %v4720 = vsel %vm3742, %v4676, 0
      %v4723 = vsel %vm3742, %v4677, 0
      %v4726 = vsel %vm3742, %v4678, 0
      %v4729 = vsel %vm3742, %v4679, 0
      %v4732 = vsel %vm3742, %v4680, 0
      %4734 = vmatprep.subr.mxu0 0.0
      %4735 = vmatpush1.msra.mxu0 %v4682
      %4736 = vmatprep.subr.mxu0 0.0
      %4737 = vmatpush1.msra.mxu0 %v4683
      %4738 = vmatprep.subr.mxu0 0.0
      %4739 = vmatpush1.msra.mxu0 %v4684
      %4740 = vmatprep.subr.mxu0 0.0
      %4741 = vmatpush1.msra.mxu0 %v4685
      %4742 = vmatprep.subr.mxu0 0.0
      %4743 = vmatpush1.msra.mxu0 0.0
      %4744 = vmatprep.subr.mxu0 0.0
      %4745 = vmatpush1.msra.mxu0 0.0
      %4746 = vmatprep.subr.mxu0 0.0
      %4747 = vmatpush1.msra.mxu0 0.0
      %4748 = vmatprep.subr.mxu0 0.0
      %4749 = vmatpush1.msra.mxu0 0.0
      %4750 = vmatprep.subr.mxu0 0.0
      %4751 = vmatpush1.msra.mxu0 0.0
      %4752 = vmatprep.subr.mxu0 0.0
      %4753 = vmatpush1.msra.mxu0 0.0
      %4754 = vmatprep.subr.mxu0 0.0
      %4755 = vmatpush1.msra.mxu0 0.0
      %4756 = vmatprep.subr.mxu0 0.0
      %4757 = vmatpush1.msra.mxu0 0.0
      %4758 = vmatprep.subr.mxu0 0.0
      %4759 = vmatpush1.msra.mxu0 0.0
      %4760 = vmatprep.subr.mxu0 0.0
      %4761 = vmatpush1.msra.mxu0 0.0
      %4762 = vmatprep.subr.mxu0 0.0
      %4763 = vmatpush1.msra.mxu0 0.0
      %4764 = vmatprep.subr.mxu0 0.0
      %4765 = vmatpush1.msra.mxu0 0.0
      %4766 = vmatprep.subr.mxu0 0.0
      %4767 = vmatpush1.msra.mxu0 0.0
      %4768 = vmatprep.subr.mxu0 0.0
      %4769 = vmatpush1.msra.mxu0 0.0
      %4770 = vmatprep.subr.mxu0 0.0
      %4771 = vmatpush1.msra.mxu0 0.0
      %4772 = vmatprep.subr.mxu0 0.0
      %4773 = vmatpush1.msra.mxu0 0.0
      %4774 = vmatprep.subr.mxu0 0.0
      %4775 = vmatpush1.msra.mxu0 0.0
      %4776 = vmatprep.subr.mxu0 0.0
      %4777 = vmatpush1.msra.mxu0 0.0
      %4778 = vmatprep.subr.mxu0 0.0
      %4779 = vmatpush1.msra.mxu0 0.0
      %4780 = vmatprep.subr.mxu0 0.0
      %4781 = vmatpush1.msra.mxu0 0.0
      %4782 = vmatprep.subr.mxu0 0.0
      %4783 = vmatpush1.msra.mxu0 0.0
      %4784 = vmatprep.subr.mxu0 0.0
      %4785 = vmatpush1.msra.mxu0 0.0
      %4786 = vmatprep.subr.mxu0 0.0
      %4787 = vmatpush1.msra.mxu0 0.0
      %4788 = vmatprep.subr.mxu0 0.0
      %4789 = vmatpush1.msra.mxu0 0.0
      %4790 = vmatprep.subr.mxu0 0.0
      %4791 = vmatpush1.msra.mxu0 0.0
      %4792 = vmatprep.subr.mxu0 0.0
      %4793 = vmatpush1.msra.mxu0 0.0
      %4794 = vmatprep.subr.mxu0 0.0
      %4795 = vmatpush1.msra.mxu0 0.0
      %4796 = vmatprep.subr.mxu0 0.0
      %4797 = vmatpush1.msra.mxu0 0.0
      %4798 = vmatprep.mubr.f32.mxu0 0.0
      %4799 = vmatmul.mubr.f32.gmra.mrb[0].mxu0 %v4687
      %v4800 = vpop.f32.mrb[0].mxu0
      %v4801 = vadd.f32 0.0, %v4800
      %v4802 = vpop.f32.mrb[0].mxu0
      %4803 = vmatprep.mubr.f32.mxu0 0.0
      %4804 = vmatmul.mubr.f32.gmra.mrb[0].mxu0 %v4690
      %v4805 = vpop.f32.mrb[0].mxu0
      %v4806 = vadd.f32 0.0, %v4805
      %v4807 = vpop.f32.mrb[0].mxu0
      %4808 = vmatprep.mubr.f32.mxu0 0.0
      %4809 = vmatmul.mubr.f32.gmra.mrb[0].mxu0 %v4693
      %v4810 = vpop.f32.mrb[0].mxu0
      %v4811 = vadd.f32 0.0, %v4810
      %v4812 = vpop.f32.mrb[0].mxu0
      %4813 = vmatprep.mubr.f32.mxu0 0.0
      %4814 = vmatmul.mubr.f32.gmra.mrb[0].mxu0 %v4696
      %v4815 = vpop.f32.mrb[0].mxu0
      %v4816 = vadd.f32 0.0, %v4815
      %v4817 = vpop.f32.mrb[0].mxu0
      %4818 = vmatprep.mubr.f32.mxu0 0.0
      %4819 = vmatmul.mubr.f32.gmra.mrb[0].mxu0 %v4699
      %v4820 = vpop.f32.mrb[0].mxu0
      %v4821 = vadd.f32 0.0, %v4820
      %v4822 = vpop.f32.mrb[0].mxu0
      %4823 = vmatprep.mubr.f32.mxu0 0.0
      %4824 = vmatmul.mubr.f32.gmra.mrb[0].mxu0 %v4702
      %v4825 = vpop.f32.mrb[0].mxu0
      %v4826 = vadd.f32 0.0, %v4825
      %v4827 = vpop.f32.mrb[0].mxu0
      %4828 = vmatprep.mubr.f32.mxu0 0.0
      %4829 = vmatmul.mubr.f32.gmra.mrb[0].mxu0 %v4705
      %v4830 = vpop.f32.mrb[0].mxu0
      %v4831 = vadd.f32 0.0, %v4830
      %v4832 = vpop.f32.mrb[0].mxu0
      %4833 = vmatprep.mubr.f32.mxu0 0.0
      %4834 = vmatmul.mubr.f32.gmra.mrb[0].mxu0 %v4708
      %v4835 = vpop.f32.mrb[0].mxu0
      %v4836 = vadd.f32 0.0, %v4835
      %v4837 = vpop.f32.mrb[0].mxu0
      %4838 = vmatprep.mubr.f32.mxu0 0.0
      %4839 = vmatmul.mubr.f32.gmra.mrb[0].mxu0 %v4711
      %v4840 = vpop.f32.mrb[0].mxu0
      %v4841 = vadd.f32 0.0, %v4840
      %v4842 = vpop.f32.mrb[0].mxu0
      %4843 = vmatprep.mubr.f32.mxu0 0.0
      %4844 = vmatmul.mubr.f32.gmra.mrb[0].mxu0 %v4714
      %v4845 = vpop.f32.mrb[0].mxu0
      %v4846 = vadd.f32 0.0, %v4845
      %v4847 = vpop.f32.mrb[0].mxu0
      %4848 = vmatprep.mubr.f32.mxu0 0.0
      %4849 = vmatmul.mubr.f32.gmra.mrb[0].mxu0 %v4717
      %v4850 = vpop.f32.mrb[0].mxu0
      %v4851 = vadd.f32 0.0, %v4850
      %v4852 = vpop.f32.mrb[0].mxu0
      %4853 = vmatprep.mubr.f32.mxu0 0.0
      %4854 = vmatmul.mubr.f32.gmra.mrb[0].mxu0 %v4720
      %v4855 = vpop.f32.mrb[0].mxu0
      %v4856 = vadd.f32 0.0, %v4855
      %v4857 = vpop.f32.mrb[0].mxu0
      %4858 = vmatprep.mubr.f32.mxu0 0.0
      %4859 = vmatmul.mubr.f32.gmra.mrb[0].mxu0 %v4723
      %v4860 = vpop.f32.mrb[0].mxu0
      %v4861 = vadd.f32 0.0, %v4860
      %v4862 = vpop.f32.mrb[0].mxu0
      %4863 = vmatprep.mubr.f32.mxu0 0.0
      %4864 = vmatmul.mubr.f32.gmra.mrb[0].mxu0 %v4726
      %v4865 = vpop.f32.mrb[0].mxu0
      %v4866 = vadd.f32 0.0, %v4865
      %v4867 = vpop.f32.mrb[0].mxu0
      %4868 = vmatprep.mubr.f32.mxu0 0.0
      %4869 = vmatmul.mubr.f32.gmra.mrb[0].mxu0 %v4729
      %v4870 = vpop.f32.mrb[0].mxu0
      %v4871 = vadd.f32 0.0, %v4870
      %v4872 = vpop.f32.mrb[0].mxu0
      %4873 = vmatprep.mubr.f32.mxu0 0.0
      %4874 = vmatmul.mubr.f32.gmra.mrb[0].mxu0 %v4732
      %v4875 = vpop.f32.mrb[0].mxu0
      %v4876 = vadd.f32 0.0, %v4875
      %v4877 = vpop.f32.mrb[0].mxu0
      %4878 = vdwg.mxu0
      %v4879 = vadd.f32 %v4649, %v4801
      %v4880 = vadd.f32 %v4650, %v4806
      %v4881 = vadd.f32 %v4651, %v4811
      %v4882 = vadd.f32 %v4652, %v4816
      %v4883 = vadd.f32 %v4653, %v4821
      %v4884 = vadd.f32 %v4654, %v4826
      %v4885 = vadd.f32 %v4655, %v4831
      %v4886 = vadd.f32 %v4656, %v4836
      %v4887 = vadd.f32 %v4657, %v4841
      %v4888 = vadd.f32 %v4658, %v4846
      %v4889 = vadd.f32 %v4659, %v4851
      %v4890 = vadd.f32 %v4660, %v4856
      %v4891 = vadd.f32 %v4661, %v4861
      %v4892 = vadd.f32 %v4662, %v4866
      %v4893 = vadd.f32 %v4663, %v4871
      %v4894 = vadd.f32 %v4664, %v4876
      %v4895 = vld [vmem:[#allocation3 + $0x5] sm:$0xff]
      %v4896 = vld [vmem:[#allocation3 + $0xd] sm:$0xff]
      %v4897 = vld [vmem:[#allocation3 + $0x15] sm:$0xff]
      %v4898 = vld [vmem:[#allocation3 + $0x1d] sm:$0xff]
      %v4899 = vld [vmem:[#allocation3 + $0x25] sm:$0xff]
      %v4900 = vld [vmem:[#allocation3 + $0x2d] sm:$0xff]
      %v4901 = vld [vmem:[#allocation3 + $0x35] sm:$0xff]
      %v4902 = vld [vmem:[#allocation3 + $0x3d] sm:$0xff]
      %v4903 = vld [vmem:[#allocation3 + $0x45] sm:$0xff]
      %v4904 = vld [vmem:[#allocation3 + $0x4d] sm:$0xff]
      %v4905 = vld [vmem:[#allocation3 + $0x55] sm:$0xff]
      %v4906 = vld [vmem:[#allocation3 + $0x5d] sm:$0xff]
      %v4907 = vld [vmem:[#allocation3 + $0x65] sm:$0xff]
      %v4908 = vld [vmem:[#allocation3 + $0x6d] sm:$0xff]
      %v4909 = vld [vmem:[#allocation3 + $0x75] sm:$0xff]
      %v4910 = vld [vmem:[#allocation3 + $0x7d] sm:$0xff]
      %s4911 = scalar_lea.vmem %s2, 160
      %v4912 = vld [vmem:[%s4911] sm:$0xff]
      %v4913 = vld [vmem:[%s4911 + $0x8] sm:$0xff]
      %v4914 = vld [vmem:[%s4911 + $0x10] sm:$0xff]
      %v4915 = vld [vmem:[%s4911 + $0x18] sm:$0xff]
      %v4917 = vsel %vm3742, %v4895, 0
      %v4920 = vsel %vm3742, %v4896, 0
      %v4923 = vsel %vm3742, %v4897, 0
      %v4926 = vsel %vm3742, %v4898, 0
      %v4929 = vsel %vm3742, %v4899, 0
      %v4932 = vsel %vm3742, %v4900, 0
      %v4935 = vsel %vm3742, %v4901, 0
      %v4938 = vsel %vm3742, %v4902, 0
      %v4941 = vsel %vm3742, %v4903, 0
      %v4944 = vsel %vm3742, %v4904, 0
      %v4947 = vsel %vm3742, %v4905, 0
      %v4950 = vsel %vm3742, %v4906, 0
      %v4953 = vsel %vm3742, %v4907, 0
      %v4956 = vsel %vm3742, %v4908, 0
      %v4959 = vsel %vm3742, %v4909, 0
      %v4962 = vsel %vm3742, %v4910, 0
      %4964 = vmatprep.subr.mxu0 0.0
      %4965 = vmatpush1.msra.mxu0 %v4912
      %4966 = vmatprep.subr.mxu0 0.0
      %4967 = vmatpush1.msra.mxu0 %v4913
      %4968 = vmatprep.subr.mxu0 0.0
      %4969 = vmatpush1.msra.mxu0 %v4914
      %4970 = vmatprep.subr.mxu0 0.0
      %4971 = vmatpush1.msra.mxu0 %v4915
      %4972 = vmatprep.subr.mxu0 0.0
      %4973 = vmatpush1.msra.mxu0 0.0
      %4974 = vmatprep.subr.mxu0 0.0
      %4975 = vmatpush1.msra.mxu0 0.0
      %4976 = vmatprep.subr.mxu0 0.0
      %4977 = vmatpush1.msra.mxu0 0.0
      %4978 = vmatprep.subr.mxu0 0.0
      %4979 = vmatpush1.msra.mxu0 0.0
      %4980 = vmatprep.subr.mxu0 0.0
      %4981 = vmatpush1.msra.mxu0 0.0
      %4982 = vmatprep.subr.mxu0 0.0
      %4983 = vmatpush1.msra.mxu0 0.0
      %4984 = vmatprep.subr.mxu0 0.0
      %4985 = vmatpush1.msra.mxu0 0.0
      %4986 = vmatprep.subr.mxu0 0.0
      %4987 = vmatpush1.msra.mxu0 0.0
      %4988 = vmatprep.subr.mxu0 0.0
      %4989 = vmatpush1.msra.mxu0 0.0
      %4990 = vmatprep.subr.mxu0 0.0
      %4991 = vmatpush1.msra.mxu0 0.0
      %4992 = vmatprep.subr.mxu0 0.0
      %4993 = vmatpush1.msra.mxu0 0.0
      %4994 = vmatprep.subr.mxu0 0.0
      %4995 = vmatpush1.msra.mxu0 0.0
      %4996 = vmatprep.subr.mxu0 0.0
      %4997 = vmatpush1.msra.mxu0 0.0
      %4998 = vmatprep.subr.mxu0 0.0
      %4999 = vmatpush1.msra.mxu0 0.0
      %5000 = vmatprep.subr.mxu0 0.0
      %5001 = vmatpush1.msra.mxu0 0.0
      %5002 = vmatprep.subr.mxu0 0.0
      %5003 = vmatpush1.msra.mxu0 0.0
      %5004 = vmatprep.subr.mxu0 0.0
      %5005 = vmatpush1.msra.mxu0 0.0
      %5006 = vmatprep.subr.mxu0 0.0
      %5007 = vmatpush1.msra.mxu0 0.0
      %5008 = vmatprep.subr.mxu0 0.0
      %5009 = vmatpush1.msra.mxu0 0.0
      %5010 = vmatprep.subr.mxu0 0.0
      %5011 = vmatpush1.msra.mxu0 0.0
      %5012 = vmatprep.subr.mxu0 0.0
      %5013 = vmatpush1.msra.mxu0 0.0
      %5014 = vmatprep.subr.mxu0 0.0
      %5015 = vmatpush1.msra.mxu0 0.0
      %5016 = vmatprep.subr.mxu0 0.0
      %5017 = vmatpush1.msra.mxu0 0.0
      %5018 = vmatprep.subr.mxu0 0.0
      %5019 = vmatpush1.msra.mxu0 0.0
      %5020 = vmatprep.subr.mxu0 0.0
      %5021 = vmatpush1.msra.mxu0 0.0
      %5022 = vmatprep.subr.mxu0 0.0
      %5023 = vmatpush1.msra.mxu0 0.0
      %5024 = vmatprep.subr.mxu0 0.0
      %5025 = vmatpush1.msra.mxu0 0.0
      %5026 = vmatprep.subr.mxu0 0.0
      %5027 = vmatpush1.msra.mxu0 0.0
      %5028 = vmatprep.mubr.f32.mxu0 0.0
      %5029 = vmatmul.mubr.f32.gmra.mrb[0].mxu0 %v4917
      %v5030 = vpop.f32.mrb[0].mxu0
      %v5031 = vadd.f32 0.0, %v5030
      %v5032 = vpop.f32.mrb[0].mxu0
      %5033 = vmatprep.mubr.f32.mxu0 0.0
      %5034 = vmatmul.mubr.f32.gmra.mrb[0].mxu0 %v4920
      %v5035 = vpop.f32.mrb[0].mxu0
      %v5036 = vadd.f32 0.0, %v5035
      %v5037 = vpop.f32.mrb[0].mxu0
      %5038 = vmatprep.mubr.f32.mxu0 0.0
      %5039 = vmatmul.mubr.f32.gmra.mrb[0].mxu0 %v4923
      %v5040 = vpop.f32.mrb[0].mxu0
      %v5041 = vadd.f32 0.0, %v5040
      %v5042 = vpop.f32.mrb[0].mxu0
      %5043 = vmatprep.mubr.f32.mxu0 0.0
      %5044 = vmatmul.mubr.f32.gmra.mrb[0].mxu0 %v4926
      %v5045 = vpop.f32.mrb[0].mxu0
      %v5046 = vadd.f32 0.0, %v5045
      %v5047 = vpop.f32.mrb[0].mxu0
      %5048 = vmatprep.mubr.f32.mxu0 0.0
      %5049 = vmatmul.mubr.f32.gmra.mrb[0].mxu0 %v4929
      %v5050 = vpop.f32.mrb[0].mxu0
      %v5051 = vadd.f32 0.0, %v5050
      %v5052 = vpop.f32.mrb[0].mxu0
      %5053 = vmatprep.mubr.f32.mxu0 0.0
      %5054 = vmatmul.mubr.f32.gmra.mrb[0].mxu0 %v4932
      %v5055 = vpop.f32.mrb[0].mxu0
      %v5056 = vadd.f32 0.0, %v5055
      %v5057 = vpop.f32.mrb[0].mxu0
      %5058 = vmatprep.mubr.f32.mxu0 0.0
      %5059 = vmatmul.mubr.f32.gmra.mrb[0].mxu0 %v4935
      %v5060 = vpop.f32.mrb[0].mxu0
      %v5061 = vadd.f32 0.0, %v5060
      %v5062 = vpop.f32.mrb[0].mxu0
      %5063 = vmatprep.mubr.f32.mxu0 0.0
      %5064 = vmatmul.mubr.f32.gmra.mrb[0].mxu0 %v4938
      %v5065 = vpop.f32.mrb[0].mxu0
      %v5066 = vadd.f32 0.0, %v5065
      %v5067 = vpop.f32.mrb[0].mxu0
      %5068 = vmatprep.mubr.f32.mxu0 0.0
      %5069 = vmatmul.mubr.f32.gmra.mrb[0].mxu0 %v4941
      %v5070 = vpop.f32.mrb[0].mxu0
      %v5071 = vadd.f32 0.0, %v5070
      %v5072 = vpop.f32.mrb[0].mxu0
      %5073 = vmatprep.mubr.f32.mxu0 0.0
      %5074 = vmatmul.mubr.f32.gmra.mrb[0].mxu0 %v4944
      %v5075 = vpop.f32.mrb[0].mxu0
      %v5076 = vadd.f32 0.0, %v5075
      %v5077 = vpop.f32.mrb[0].mxu0
      %5078 = vmatprep.mubr.f32.mxu0 0.0
      %5079 = vmatmul.mubr.f32.gmra.mrb[0].mxu0 %v4947
      %v5080 = vpop.f32.mrb[0].mxu0
      %v5081 = vadd.f32 0.0, %v5080
      %v5082 = vpop.f32.mrb[0].mxu0
      %5083 = vmatprep.mubr.f32.mxu0 0.0
      %5084 = vmatmul.mubr.f32.gmra.mrb[0].mxu0 %v4950
      %v5085 = vpop.f32.mrb[0].mxu0
      %v5086 = vadd.f32 0.0, %v5085
      %v5087 = vpop.f32.mrb[0].mxu0
      %5088 = vmatprep.mubr.f32.mxu0 0.0
      %5089 = vmatmul.mubr.f32.gmra.mrb[0].mxu0 %v4953
      %v5090 = vpop.f32.mrb[0].mxu0
      %v5091 = vadd.f32 0.0, %v5090
      %v5092 = vpop.f32.mrb[0].mxu0
      %5093 = vmatprep.mubr.f32.mxu0 0.0
      %5094 = vmatmul.mubr.f32.gmra.mrb[0].mxu0 %v4956
      %v5095 = vpop.f32.mrb[0].mxu0
      %v5096 = vadd.f32 0.0, %v5095
      %v5097 = vpop.f32.mrb[0].mxu0
      %5098 = vmatprep.mubr.f32.mxu0 0.0
      %5099 = vmatmul.mubr.f32.gmra.mrb[0].mxu0 %v4959
      %v5100 = vpop.f32.mrb[0].mxu0
      %v5101 = vadd.f32 0.0, %v5100
      %v5102 = vpop.f32.mrb[0].mxu0
      %5103 = vmatprep.mubr.f32.mxu0 0.0
      %5104 = vmatmul.mubr.f32.gmra.mrb[0].mxu0 %v4962
      %v5105 = vpop.f32.mrb[0].mxu0
      %v5106 = vadd.f32 0.0, %v5105
      %v5107 = vpop.f32.mrb[0].mxu0
      %5108 = vdwg.mxu0
      %v5109 = vadd.f32 %v4879, %v5031
      %v5110 = vadd.f32 %v4880, %v5036
      %v5111 = vadd.f32 %v4881, %v5041
      %v5112 = vadd.f32 %v4882, %v5046
      %v5113 = vadd.f32 %v4883, %v5051
      %v5114 = vadd.f32 %v4884, %v5056
      %v5115 = vadd.f32 %v4885, %v5061
      %v5116 = vadd.f32 %v4886, %v5066
      %v5117 = vadd.f32 %v4887, %v5071
      %v5118 = vadd.f32 %v4888, %v5076
      %v5119 = vadd.f32 %v4889, %v5081
      %v5120 = vadd.f32 %v4890, %v5086
      %v5121 = vadd.f32 %v4891, %v5091
      %v5122 = vadd.f32 %v4892, %v5096
      %v5123 = vadd.f32 %v4893, %v5101
      %v5124 = vadd.f32 %v4894, %v5106
      %v5125 = vld [vmem:[#allocation3 + $0x6] sm:$0xff]
      %v5126 = vld [vmem:[#allocation3 + $0xe] sm:$0xff]
      %v5127 = vld [vmem:[#allocation3 + $0x16] sm:$0xff]
      %v5128 = vld [vmem:[#allocation3 + $0x1e] sm:$0xff]
      %v5129 = vld [vmem:[#allocation3 + $0x26] sm:$0xff]
      %v5130 = vld [vmem:[#allocation3 + $0x2e] sm:$0xff]
      %v5131 = vld [vmem:[#allocation3 + $0x36] sm:$0xff]
      %v5132 = vld [vmem:[#allocation3 + $0x3e] sm:$0xff]
      %v5133 = vld [vmem:[#allocation3 + $0x46] sm:$0xff]
      %v5134 = vld [vmem:[#allocation3 + $0x4e] sm:$0xff]
      %v5135 = vld [vmem:[#allocation3 + $0x56] sm:$0xff]
      %v5136 = vld [vmem:[#allocation3 + $0x5e] sm:$0xff]
      %v5137 = vld [vmem:[#allocation3 + $0x66] sm:$0xff]
      %v5138 = vld [vmem:[#allocation3 + $0x6e] sm:$0xff]
      %v5139 = vld [vmem:[#allocation3 + $0x76] sm:$0xff]
      %v5140 = vld [vmem:[#allocation3 + $0x7e] sm:$0xff]
      %s5141 = scalar_lea.vmem %s2, 192
      %v5142 = vld [vmem:[%s5141] sm:$0xff]
      %v5143 = vld [vmem:[%s5141 + $0x8] sm:$0xff]
      %v5144 = vld [vmem:[%s5141 + $0x10] sm:$0xff]
      %v5145 = vld [vmem:[%s5141 + $0x18] sm:$0xff]
      %v5147 = vsel %vm3742, %v5125, 0
      %v5150 = vsel %vm3742, %v5126, 0
      %v5153 = vsel %vm3742, %v5127, 0
      %v5156 = vsel %vm3742, %v5128, 0
      %v5159 = vsel %vm3742, %v5129, 0
      %v5162 = vsel %vm3742, %v5130, 0
      %v5165 = vsel %vm3742, %v5131, 0
      %v5168 = vsel %vm3742, %v5132, 0
      %v5171 = vsel %vm3742, %v5133, 0
      %v5174 = vsel %vm3742, %v5134, 0
      %v5177 = vsel %vm3742, %v5135, 0
      %v5180 = vsel %vm3742, %v5136, 0
      %v5183 = vsel %vm3742, %v5137, 0
      %v5186 = vsel %vm3742, %v5138, 0
      %v5189 = vsel %vm3742, %v5139, 0
      %v5192 = vsel %vm3742, %v5140, 0
      %5194 = vmatprep.subr.mxu0 0.0
      %5195 = vmatpush1.msra.mxu0 %v5142
      %5196 = vmatprep.subr.mxu0 0.0
      %5197 = vmatpush1.msra.mxu0 %v5143
      %5198 = vmatprep.subr.mxu0 0.0
      %5199 = vmatpush1.msra.mxu0 %v5144
      %5200 = vmatprep.subr.mxu0 0.0
      %5201 = vmatpush1.msra.mxu0 %v5145
      %5202 = vmatprep.subr.mxu0 0.0
      %5203 = vmatpush1.msra.mxu0 0.0
      %5204 = vmatprep.subr.mxu0 0.0
      %5205 = vmatpush1.msra.mxu0 0.0
      %5206 = vmatprep.subr.mxu0 0.0
      %5207 = vmatpush1.msra.mxu0 0.0
      %5208 = vmatprep.subr.mxu0 0.0
      %5209 = vmatpush1.msra.mxu0 0.0
      %5210 = vmatprep.subr.mxu0 0.0
      %5211 = vmatpush1.msra.mxu0 0.0
      %5212 = vmatprep.subr.mxu0 0.0
      %5213 = vmatpush1.msra.mxu0 0.0
      %5214 = vmatprep.subr.mxu0 0.0
      %5215 = vmatpush1.msra.mxu0 0.0
      %5216 = vmatprep.subr.mxu0 0.0
      %5217 = vmatpush1.msra.mxu0 0.0
      %5218 = vmatprep.subr.mxu0 0.0
      %5219 = vmatpush1.msra.mxu0 0.0
      %5220 = vmatprep.subr.mxu0 0.0
      %5221 = vmatpush1.msra.mxu0 0.0
      %5222 = vmatprep.subr.mxu0 0.0
      %5223 = vmatpush1.msra.mxu0 0.0
      %5224 = vmatprep.subr.mxu0 0.0
      %5225 = vmatpush1.msra.mxu0 0.0
      %5226 = vmatprep.subr.mxu0 0.0
      %5227 = vmatpush1.msra.mxu0 0.0
      %5228 = vmatprep.subr.mxu0 0.0
      %5229 = vmatpush1.msra.mxu0 0.0
      %5230 = vmatprep.subr.mxu0 0.0
      %5231 = vmatpush1.msra.mxu0 0.0
      %5232 = vmatprep.subr.mxu0 0.0
      %5233 = vmatpush1.msra.mxu0 0.0
      %5234 = vmatprep.subr.mxu0 0.0
      %5235 = vmatpush1.msra.mxu0 0.0
      %5236 = vmatprep.subr.mxu0 0.0
      %5237 = vmatpush1.msra.mxu0 0.0
      %5238 = vmatprep.subr.mxu0 0.0
      %5239 = vmatpush1.msra.mxu0 0.0
      %5240 = vmatprep.subr.mxu0 0.0
      %5241 = vmatpush1.msra.mxu0 0.0
      %5242 = vmatprep.subr.mxu0 0.0
      %5243 = vmatpush1.msra.mxu0 0.0
      %5244 = vmatprep.subr.mxu0 0.0
      %5245 = vmatpush1.msra.mxu0 0.0
      %5246 = vmatprep.subr.mxu0 0.0
      %5247 = vmatpush1.msra.mxu0 0.0
      %5248 = vmatprep.subr.mxu0 0.0
      %5249 = vmatpush1.msra.mxu0 0.0
      %5250 = vmatprep.subr.mxu0 0.0
      %5251 = vmatpush1.msra.mxu0 0.0
      %5252 = vmatprep.subr.mxu0 0.0
      %5253 = vmatpush1.msra.mxu0 0.0
      %5254 = vmatprep.subr.mxu0 0.0
      %5255 = vmatpush1.msra.mxu0 0.0
      %5256 = vmatprep.subr.mxu0 0.0
      %5257 = vmatpush1.msra.mxu0 0.0
      %5258 = vmatprep.mubr.f32.mxu0 0.0
      %5259 = vmatmul.mubr.f32.gmra.mrb[0].mxu0 %v5147
      %v5260 = vpop.f32.mrb[0].mxu0
      %v5261 = vadd.f32 0.0, %v5260
      %v5262 = vpop.f32.mrb[0].mxu0
      %5263 = vmatprep.mubr.f32.mxu0 0.0
      %5264 = vmatmul.mubr.f32.gmra.mrb[0].mxu0 %v5150
      %v5265 = vpop.f32.mrb[0].mxu0
      %v5266 = vadd.f32 0.0, %v5265
      %v5267 = vpop.f32.mrb[0].mxu0
      %5268 = vmatprep.mubr.f32.mxu0 0.0
      %5269 = vmatmul.mubr.f32.gmra.mrb[0].mxu0 %v5153
      %v5270 = vpop.f32.mrb[0].mxu0
      %v5271 = vadd.f32 0.0, %v5270
      %v5272 = vpop.f32.mrb[0].mxu0
      %5273 = vmatprep.mubr.f32.mxu0 0.0
      %5274 = vmatmul.mubr.f32.gmra.mrb[0].mxu0 %v5156
      %v5275 = vpop.f32.mrb[0].mxu0
      %v5276 = vadd.f32 0.0, %v5275
      %v5277 = vpop.f32.mrb[0].mxu0
      %5278 = vmatprep.mubr.f32.mxu0 0.0
      %5279 = vmatmul.mubr.f32.gmra.mrb[0].mxu0 %v5159
      %v5280 = vpop.f32.mrb[0].mxu0
      %v5281 = vadd.f32 0.0, %v5280
      %v5282 = vpop.f32.mrb[0].mxu0
      %5283 = vmatprep.mubr.f32.mxu0 0.0
      %5284 = vmatmul.mubr.f32.gmra.mrb[0].mxu0 %v5162
      %v5285 = vpop.f32.mrb[0].mxu0
      %v5286 = vadd.f32 0.0, %v5285
      %v5287 = vpop.f32.mrb[0].mxu0
      %5288 = vmatprep.mubr.f32.mxu0 0.0
      %5289 = vmatmul.mubr.f32.gmra.mrb[0].mxu0 %v5165
      %v5290 = vpop.f32.mrb[0].mxu0
      %v5291 = vadd.f32 0.0, %v5290
      %v5292 = vpop.f32.mrb[0].mxu0
      %5293 = vmatprep.mubr.f32.mxu0 0.0
      %5294 = vmatmul.mubr.f32.gmra.mrb[0].mxu0 %v5168
      %v5295 = vpop.f32.mrb[0].mxu0
      %v5296 = vadd.f32 0.0, %v5295
      %v5297 = vpop.f32.mrb[0].mxu0
      %5298 = vmatprep.mubr.f32.mxu0 0.0
      %5299 = vmatmul.mubr.f32.gmra.mrb[0].mxu0 %v5171
      %v5300 = vpop.f32.mrb[0].mxu0
      %v5301 = vadd.f32 0.0, %v5300
      %v5302 = vpop.f32.mrb[0].mxu0
      %5303 = vmatprep.mubr.f32.mxu0 0.0
      %5304 = vmatmul.mubr.f32.gmra.mrb[0].mxu0 %v5174
      %v5305 = vpop.f32.mrb[0].mxu0
      %v5306 = vadd.f32 0.0, %v5305
      %v5307 = vpop.f32.mrb[0].mxu0
      %5308 = vmatprep.mubr.f32.mxu0 0.0
      %5309 = vmatmul.mubr.f32.gmra.mrb[0].mxu0 %v5177
      %v5310 = vpop.f32.mrb[0].mxu0
      %v5311 = vadd.f32 0.0, %v5310
      %v5312 = vpop.f32.mrb[0].mxu0
      %5313 = vmatprep.mubr.f32.mxu0 0.0
      %5314 = vmatmul.mubr.f32.gmra.mrb[0].mxu0 %v5180
      %v5315 = vpop.f32.mrb[0].mxu0
      %v5316 = vadd.f32 0.0, %v5315
      %v5317 = vpop.f32.mrb[0].mxu0
      %5318 = vmatprep.mubr.f32.mxu0 0.0
      %5319 = vmatmul.mubr.f32.gmra.mrb[0].mxu0 %v5183
      %v5320 = vpop.f32.mrb[0].mxu0
      %v5321 = vadd.f32 0.0, %v5320
      %v5322 = vpop.f32.mrb[0].mxu0
      %5323 = vmatprep.mubr.f32.mxu0 0.0
      %5324 = vmatmul.mubr.f32.gmra.mrb[0].mxu0 %v5186
      %v5325 = vpop.f32.mrb[0].mxu0
      %v5326 = vadd.f32 0.0, %v5325
      %v5327 = vpop.f32.mrb[0].mxu0
      %5328 = vmatprep.mubr.f32.mxu0 0.0
      %5329 = vmatmul.mubr.f32.gmra.mrb[0].mxu0 %v5189
      %v5330 = vpop.f32.mrb[0].mxu0
      %v5331 = vadd.f32 0.0, %v5330
      %v5332 = vpop.f32.mrb[0].mxu0
      %5333 = vmatprep.mubr.f32.mxu0 0.0
      %5334 = vmatmul.mubr.f32.gmra.mrb[0].mxu0 %v5192
      %v5335 = vpop.f32.mrb[0].mxu0
      %v5336 = vadd.f32 0.0, %v5335
      %v5337 = vpop.f32.mrb[0].mxu0
      %5338 = vdwg.mxu0
      %v5339 = vadd.f32 %v5109, %v5261
      %v5340 = vadd.f32 %v5110, %v5266
      %v5341 = vadd.f32 %v5111, %v5271
      %v5342 = vadd.f32 %v5112, %v5276
      %v5343 = vadd.f32 %v5113, %v5281
      %v5344 = vadd.f32 %v5114, %v5286
      %v5345 = vadd.f32 %v5115, %v5291
      %v5346 = vadd.f32 %v5116, %v5296
      %v5347 = vadd.f32 %v5117, %v5301
      %v5348 = vadd.f32 %v5118, %v5306
      %v5349 = vadd.f32 %v5119, %v5311
      %v5350 = vadd.f32 %v5120, %v5316
      %v5351 = vadd.f32 %v5121, %v5321
      %v5352 = vadd.f32 %v5122, %v5326
      %v5353 = vadd.f32 %v5123, %v5331
      %v5354 = vadd.f32 %v5124, %v5336
      %v5355 = vld [vmem:[#allocation3 + $0x7] sm:$0xff]
      %v5356 = vld [vmem:[#allocation3 + $0xf] sm:$0xff]
      %v5357 = vld [vmem:[#allocation3 + $0x17] sm:$0xff]
      %v5358 = vld [vmem:[#allocation3 + $0x1f] sm:$0xff]
      %v5359 = vld [vmem:[#allocation3 + $0x27] sm:$0xff]
      %v5360 = vld [vmem:[#allocation3 + $0x2f] sm:$0xff]
      %v5361 = vld [vmem:[#allocation3 + $0x37] sm:$0xff]
      %v5362 = vld [vmem:[#allocation3 + $0x3f] sm:$0xff]
      %v5363 = vld [vmem:[#allocation3 + $0x47] sm:$0xff]
      %v5364 = vld [vmem:[#allocation3 + $0x4f] sm:$0xff]
      %v5365 = vld [vmem:[#allocation3 + $0x57] sm:$0xff]
      %v5366 = vld [vmem:[#allocation3 + $0x5f] sm:$0xff]
      %v5367 = vld [vmem:[#allocation3 + $0x67] sm:$0xff]
      %v5368 = vld [vmem:[#allocation3 + $0x6f] sm:$0xff]
      %v5369 = vld [vmem:[#allocation3 + $0x77] sm:$0xff]
      %v5370 = vld [vmem:[#allocation3 + $0x7f] sm:$0xff]
      %s5371 = scalar_lea.vmem %s2, 224
      %v5372 = vld [vmem:[%s5371] sm:$0xff]
      %v5373 = vld [vmem:[%s5371 + $0x8] sm:$0xff]
      %v5374 = vld [vmem:[%s5371 + $0x10] sm:$0xff]
      %v5375 = vld [vmem:[%s5371 + $0x18] sm:$0xff]
      %v5377 = vsel %vm3742, %v5355, 0
      %v5380 = vsel %vm3742, %v5356, 0
      %v5383 = vsel %vm3742, %v5357, 0
      %v5386 = vsel %vm3742, %v5358, 0
      %v5389 = vsel %vm3742, %v5359, 0
      %v5392 = vsel %vm3742, %v5360, 0
      %v5395 = vsel %vm3742, %v5361, 0
      %v5398 = vsel %vm3742, %v5362, 0
      %v5401 = vsel %vm3742, %v5363, 0
      %v5404 = vsel %vm3742, %v5364, 0
      %v5407 = vsel %vm3742, %v5365, 0
      %v5410 = vsel %vm3742, %v5366, 0
      %v5413 = vsel %vm3742, %v5367, 0
      %v5416 = vsel %vm3742, %v5368, 0
      %v5419 = vsel %vm3742, %v5369, 0
      %v5422 = vsel %vm3742, %v5370, 0
      %5424 = vmatprep.subr.mxu0 0.0
      %5425 = vmatpush1.msra.mxu0 %v5372
      %5426 = vmatprep.subr.mxu0 0.0
      %5427 = vmatpush1.msra.mxu0 %v5373
      %5428 = vmatprep.subr.mxu0 0.0
      %5429 = vmatpush1.msra.mxu0 %v5374
      %5430 = vmatprep.subr.mxu0 0.0
      %5431 = vmatpush1.msra.mxu0 %v5375
      %5432 = vmatprep.subr.mxu0 0.0
      %5433 = vmatpush1.msra.mxu0 0.0
      %5434 = vmatprep.subr.mxu0 0.0
      %5435 = vmatpush1.msra.mxu0 0.0
      %5436 = vmatprep.subr.mxu0 0.0
      %5437 = vmatpush1.msra.mxu0 0.0
      %5438 = vmatprep.subr.mxu0 0.0
      %5439 = vmatpush1.msra.mxu0 0.0
      %5440 = vmatprep.subr.mxu0 0.0
      %5441 = vmatpush1.msra.mxu0 0.0
      %5442 = vmatprep.subr.mxu0 0.0
      %5443 = vmatpush1.msra.mxu0 0.0
      %5444 = vmatprep.subr.mxu0 0.0
      %5445 = vmatpush1.msra.mxu0 0.0
      %5446 = vmatprep.subr.mxu0 0.0
      %5447 = vmatpush1.msra.mxu0 0.0
      %5448 = vmatprep.subr.mxu0 0.0
      %5449 = vmatpush1.msra.mxu0 0.0
      %5450 = vmatprep.subr.mxu0 0.0
      %5451 = vmatpush1.msra.mxu0 0.0
      %5452 = vmatprep.subr.mxu0 0.0
      %5453 = vmatpush1.msra.mxu0 0.0
      %5454 = vmatprep.subr.mxu0 0.0
      %5455 = vmatpush1.msra.mxu0 0.0
      %5456 = vmatprep.subr.mxu0 0.0
      %5457 = vmatpush1.msra.mxu0 0.0
      %5458 = vmatprep.subr.mxu0 0.0
      %5459 = vmatpush1.msra.mxu0 0.0
      %5460 = vmatprep.subr.mxu0 0.0
      %5461 = vmatpush1.msra.mxu0 0.0
      %5462 = vmatprep.subr.mxu0 0.0
      %5463 = vmatpush1.msra.mxu0 0.0
      %5464 = vmatprep.subr.mxu0 0.0
      %5465 = vmatpush1.msra.mxu0 0.0
      %5466 = vmatprep.subr.mxu0 0.0
      %5467 = vmatpush1.msra.mxu0 0.0
      %5468 = vmatprep.subr.mxu0 0.0
      %5469 = vmatpush1.msra.mxu0 0.0
      %5470 = vmatprep.subr.mxu0 0.0
      %5471 = vmatpush1.msra.mxu0 0.0
      %5472 = vmatprep.subr.mxu0 0.0
      %5473 = vmatpush1.msra.mxu0 0.0
      %5474 = vmatprep.subr.mxu0 0.0
      %5475 = vmatpush1.msra.mxu0 0.0
      %5476 = vmatprep.subr.mxu0 0.0
      %5477 = vmatpush1.msra.mxu0 0.0
      %5478 = vmatprep.subr.mxu0 0.0
      %5479 = vmatpush1.msra.mxu0 0.0
      %5480 = vmatprep.subr.mxu0 0.0
      %5481 = vmatpush1.msra.mxu0 0.0
      %5482 = vmatprep.subr.mxu0 0.0
      %5483 = vmatpush1.msra.mxu0 0.0
      %5484 = vmatprep.subr.mxu0 0.0
      %5485 = vmatpush1.msra.mxu0 0.0
      %5486 = vmatprep.subr.mxu0 0.0
      %5487 = vmatpush1.msra.mxu0 0.0
      %5488 = vmatprep.mubr.f32.mxu0 0.0
      %5489 = vmatmul.mubr.f32.gmra.mrb[0].mxu0 %v5377
      %v5490 = vpop.f32.mrb[0].mxu0
      %v5491 = vadd.f32 0.0, %v5490
      %v5492 = vpop.f32.mrb[0].mxu0
      %5493 = vmatprep.mubr.f32.mxu0 0.0
      %5494 = vmatmul.mubr.f32.gmra.mrb[0].mxu0 %v5380
      %v5495 = vpop.f32.mrb[0].mxu0
      %v5496 = vadd.f32 0.0, %v5495
      %v5497 = vpop.f32.mrb[0].mxu0
      %5498 = vmatprep.mubr.f32.mxu0 0.0
      %5499 = vmatmul.mubr.f32.gmra.mrb[0].mxu0 %v5383
      %v5500 = vpop.f32.mrb[0].mxu0
      %v5501 = vadd.f32 0.0, %v5500
      %v5502 = vpop.f32.mrb[0].mxu0
      %5503 = vmatprep.mubr.f32.mxu0 0.0
      %5504 = vmatmul.mubr.f32.gmra.mrb[0].mxu0 %v5386
      %v5505 = vpop.f32.mrb[0].mxu0
      %v5506 = vadd.f32 0.0, %v5505
      %v5507 = vpop.f32.mrb[0].mxu0
      %5508 = vmatprep.mubr.f32.mxu0 0.0
      %5509 = vmatmul.mubr.f32.gmra.mrb[0].mxu0 %v5389
      %v5510 = vpop.f32.mrb[0].mxu0
      %v5511 = vadd.f32 0.0, %v5510
      %v5512 = vpop.f32.mrb[0].mxu0
      %5513 = vmatprep.mubr.f32.mxu0 0.0
      %5514 = vmatmul.mubr.f32.gmra.mrb[0].mxu0 %v5392
      %v5515 = vpop.f32.mrb[0].mxu0
      %v5516 = vadd.f32 0.0, %v5515
      %v5517 = vpop.f32.mrb[0].mxu0
      %5518 = vmatprep.mubr.f32.mxu0 0.0
      %5519 = vmatmul.mubr.f32.gmra.mrb[0].mxu0 %v5395
      %v5520 = vpop.f32.mrb[0].mxu0
      %v5521 = vadd.f32 0.0, %v5520
      %v5522 = vpop.f32.mrb[0].mxu0
      %5523 = vmatprep.mubr.f32.mxu0 0.0
      %5524 = vmatmul.mubr.f32.gmra.mrb[0].mxu0 %v5398
      %v5525 = vpop.f32.mrb[0].mxu0
      %v5526 = vadd.f32 0.0, %v5525
      %v5527 = vpop.f32.mrb[0].mxu0
      %5528 = vmatprep.mubr.f32.mxu0 0.0
      %5529 = vmatmul.mubr.f32.gmra.mrb[0].mxu0 %v5401
      %v5530 = vpop.f32.mrb[0].mxu0
      %v5531 = vadd.f32 0.0, %v5530
      %v5532 = vpop.f32.mrb[0].mxu0
      %5533 = vmatprep.mubr.f32.mxu0 0.0
      %5534 = vmatmul.mubr.f32.gmra.mrb[0].mxu0 %v5404
      %v5535 = vpop.f32.mrb[0].mxu0
      %v5536 = vadd.f32 0.0, %v5535
      %v5537 = vpop.f32.mrb[0].mxu0
      %5538 = vmatprep.mubr.f32.mxu0 0.0
      %5539 = vmatmul.mubr.f32.gmra.mrb[0].mxu0 %v5407
      %v5540 = vpop.f32.mrb[0].mxu0
      %v5541 = vadd.f32 0.0, %v5540
      %v5542 = vpop.f32.mrb[0].mxu0
      %5543 = vmatprep.mubr.f32.mxu0 0.0
      %5544 = vmatmul.mubr.f32.gmra.mrb[0].mxu0 %v5410
      %v5545 = vpop.f32.mrb[0].mxu0
      %v5546 = vadd.f32 0.0, %v5545
      %v5547 = vpop.f32.mrb[0].mxu0
      %5548 = vmatprep.mubr.f32.mxu0 0.0
      %5549 = vmatmul.mubr.f32.gmra.mrb[0].mxu0 %v5413
      %v5550 = vpop.f32.mrb[0].mxu0
      %v5551 = vadd.f32 0.0, %v5550
      %v5552 = vpop.f32.mrb[0].mxu0
      %5553 = vmatprep.mubr.f32.mxu0 0.0
      %5554 = vmatmul.mubr.f32.gmra.mrb[0].mxu0 %v5416
      %v5555 = vpop.f32.mrb[0].mxu0
      %v5556 = vadd.f32 0.0, %v5555
      %v5557 = vpop.f32.mrb[0].mxu0
      %5558 = vmatprep.mubr.f32.mxu0 0.0
      %5559 = vmatmul.mubr.f32.gmra.mrb[0].mxu0 %v5419
      %v5560 = vpop.f32.mrb[0].mxu0
      %v5561 = vadd.f32 0.0, %v5560
      %v5562 = vpop.f32.mrb[0].mxu0
      %5563 = vmatprep.mubr.f32.mxu0 0.0
      %5564 = vmatmul.mubr.f32.gmra.mrb[0].mxu0 %v5422
      %v5565 = vpop.f32.mrb[0].mxu0
      %v5566 = vadd.f32 0.0, %v5565
      %v5567 = vpop.f32.mrb[0].mxu0
      %5568 = vdwg.mxu0
      %v5569 = vadd.f32 %v5339, %v5491
      %v5570 = vadd.f32 %v5340, %v5496
      %v5571 = vadd.f32 %v5341, %v5501
      %v5572 = vadd.f32 %v5342, %v5506
      %v5573 = vadd.f32 %v5343, %v5511
      %v5574 = vadd.f32 %v5344, %v5516
      %v5575 = vadd.f32 %v5345, %v5521
      %v5576 = vadd.f32 %v5346, %v5526
      %v5577 = vadd.f32 %v5347, %v5531
      %v5578 = vadd.f32 %v5348, %v5536
      %v5579 = vadd.f32 %v5349, %v5541
      %v5580 = vadd.f32 %v5350, %v5546
      %v5581 = vadd.f32 %v5351, %v5551
      %v5582 = vadd.f32 %v5352, %v5556
      %v5583 = vadd.f32 %v5353, %v5561
      %v5584 = vadd.f32 %v5354, %v5566
      %v5585 = vld [vmem:[#allocation3 + $0x8] sm:$0xff]
      %v5586 = vld [vmem:[#allocation3 + $0x10] sm:$0xff]
      %v5587 = vld [vmem:[#allocation3 + $0x18] sm:$0xff]
      %v5588 = vld [vmem:[#allocation3 + $0x20] sm:$0xff]
      %v5589 = vld [vmem:[#allocation3 + $0x28] sm:$0xff]
      %v5590 = vld [vmem:[#allocation3 + $0x30] sm:$0xff]
      %v5591 = vld [vmem:[#allocation3 + $0x38] sm:$0xff]
      %v5592 = vld [vmem:[#allocation3 + $0x40] sm:$0xff]
      %v5593 = vld [vmem:[#allocation3 + $0x48] sm:$0xff]
      %v5594 = vld [vmem:[#allocation3 + $0x50] sm:$0xff]
      %v5595 = vld [vmem:[#allocation3 + $0x58] sm:$0xff]
      %v5596 = vld [vmem:[#allocation3 + $0x60] sm:$0xff]
      %v5597 = vld [vmem:[#allocation3 + $0x68] sm:$0xff]
      %v5598 = vld [vmem:[#allocation3 + $0x70] sm:$0xff]
      %v5599 = vld [vmem:[#allocation3 + $0x78] sm:$0xff]
      %v5600 = vld [vmem:[#allocation3 + $0x80] sm:$0xff]
      %s5601 = scalar_lea.vmem %s2, 256
      %v5602 = vld [vmem:[%s5601] sm:$0xff]
      %v5603 = vld [vmem:[%s5601 + $0x8] sm:$0xff]
      %v5604 = vld [vmem:[%s5601 + $0x10] sm:$0xff]
      %v5605 = vld [vmem:[%s5601 + $0x18] sm:$0xff]
      %v5607 = vsel %vm3742, %v5585, 0
      %v5610 = vsel %vm3742, %v5586, 0
      %v5613 = vsel %vm3742, %v5587, 0
      %v5616 = vsel %vm3742, %v5588, 0
      %v5619 = vsel %vm3742, %v5589, 0
      %v5622 = vsel %vm3742, %v5590, 0
      %v5625 = vsel %vm3742, %v5591, 0
      %v5628 = vsel %vm3742, %v5592, 0
      %v5631 = vsel %vm3742, %v5593, 0
      %v5634 = vsel %vm3742, %v5594, 0
      %v5637 = vsel %vm3742, %v5595, 0
      %v5640 = vsel %vm3742, %v5596, 0
      %v5643 = vsel %vm3742, %v5597, 0
      %v5646 = vsel %vm3742, %v5598, 0
      %v5649 = vsel %vm3742, %v5599, 0
      %v5652 = vsel %vm3742, %v5600, 0
      %5654 = vmatprep.subr.mxu0 0.0
      %5655 = vmatpush1.msra.mxu0 %v5602
      %5656 = vmatprep.subr.mxu0 0.0
      %5657 = vmatpush1.msra.mxu0 %v5603
      %5658 = vmatprep.subr.mxu0 0.0
      %5659 = vmatpush1.msra.mxu0 %v5604
      %5660 = vmatprep.subr.mxu0 0.0
      %5661 = vmatpush1.msra.mxu0 %v5605
      %5662 = vmatprep.subr.mxu0 0.0
      %5663 = vmatpush1.msra.mxu0 0.0
      %5664 = vmatprep.subr.mxu0 0.0
      %5665 = vmatpush1.msra.mxu0 0.0
      %5666 = vmatprep.subr.mxu0 0.0
      %5667 = vmatpush1.msra.mxu0 0.0
      %5668 = vmatprep.subr.mxu0 0.0
      %5669 = vmatpush1.msra.mxu0 0.0
      %5670 = vmatprep.subr.mxu0 0.0
      %5671 = vmatpush1.msra.mxu0 0.0
      %5672 = vmatprep.subr.mxu0 0.0
      %5673 = vmatpush1.msra.mxu0 0.0
      %5674 = vmatprep.subr.mxu0 0.0
      %5675 = vmatpush1.msra.mxu0 0.0
      %5676 = vmatprep.subr.mxu0 0.0
      %5677 = vmatpush1.msra.mxu0 0.0
      %5678 = vmatprep.subr.mxu0 0.0
      %5679 = vmatpush1.msra.mxu0 0.0
      %5680 = vmatprep.subr.mxu0 0.0
      %5681 = vmatpush1.msra.mxu0 0.0
      %5682 = vmatprep.subr.mxu0 0.0
      %5683 = vmatpush1.msra.mxu0 0.0
      %5684 = vmatprep.subr.mxu0 0.0
      %5685 = vmatpush1.msra.mxu0 0.0
      %5686 = vmatprep.subr.mxu0 0.0
      %5687 = vmatpush1.msra.mxu0 0.0
      %5688 = vmatprep.subr.mxu0 0.0
      %5689 = vmatpush1.msra.mxu0 0.0
      %5690 = vmatprep.subr.mxu0 0.0
      %5691 = vmatpush1.msra.mxu0 0.0
      %5692 = vmatprep.subr.mxu0 0.0
      %5693 = vmatpush1.msra.mxu0 0.0
      %5694 = vmatprep.subr.mxu0 0.0
      %5695 = vmatpush1.msra.mxu0 0.0
      %5696 = vmatprep.subr.mxu0 0.0
      %5697 = vmatpush1.msra.mxu0 0.0
      %5698 = vmatprep.subr.mxu0 0.0
      %5699 = vmatpush1.msra.mxu0 0.0
      %5700 = vmatprep.subr.mxu0 0.0
      %5701 = vmatpush1.msra.mxu0 0.0
      %5702 = vmatprep.subr.mxu0 0.0
      %5703 = vmatpush1.msra.mxu0 0.0
      %5704 = vmatprep.subr.mxu0 0.0
      %5705 = vmatpush1.msra.mxu0 0.0
      %5706 = vmatprep.subr.mxu0 0.0
      %5707 = vmatpush1.msra.mxu0 0.0
      %5708 = vmatprep.subr.mxu0 0.0
      %5709 = vmatpush1.msra.mxu0 0.0
      %5710 = vmatprep.subr.mxu0 0.0
      %5711 = vmatpush1.msra.mxu0 0.0
      %5712 = vmatprep.subr.mxu0 0.0
      %5713 = vmatpush1.msra.mxu0 0.0
      %5714 = vmatprep.subr.mxu0 0.0
      %5715 = vmatpush1.msra.mxu0 0.0
      %5716 = vmatprep.subr.mxu0 0.0
      %5717 = vmatpush1.msra.mxu0 0.0
      %5718 = vmatprep.mubr.f32.mxu0 0.0
      %5719 = vmatmul.mubr.f32.gmra.mrb[0].mxu0 %v5607
      %v5720 = vpop.f32.mrb[0].mxu0
      %v5721 = vadd.f32 0.0, %v5720
      %v5722 = vpop.f32.mrb[0].mxu0
      %5723 = vmatprep.mubr.f32.mxu0 0.0
      %5724 = vmatmul.mubr.f32.gmra.mrb[0].mxu0 %v5610
      %v5725 = vpop.f32.mrb[0].mxu0
      %v5726 = vadd.f32 0.0, %v5725
      %v5727 = vpop.f32.mrb[0].mxu0
      %5728 = vmatprep.mubr.f32.mxu0 0.0
      %5729 = vmatmul.mubr.f32.gmra.mrb[0].mxu0 %v5613
      %v5730 = vpop.f32.mrb[0].mxu0
      %v5731 = vadd.f32 0.0, %v5730
      %v5732 = vpop.f32.mrb[0].mxu0
      %5733 = vmatprep.mubr.f32.mxu0 0.0
      %5734 = vmatmul.mubr.f32.gmra.mrb[0].mxu0 %v5616
      %v5735 = vpop.f32.mrb[0].mxu0
      %v5736 = vadd.f32 0.0, %v5735
      %v5737 = vpop.f32.mrb[0].mxu0
      %5738 = vmatprep.mubr.f32.mxu0 0.0
      %5739 = vmatmul.mubr.f32.gmra.mrb[0].mxu0 %v5619
      %v5740 = vpop.f32.mrb[0].mxu0
      %v5741 = vadd.f32 0.0, %v5740
      %v5742 = vpop.f32.mrb[0].mxu0
      %5743 = vmatprep.mubr.f32.mxu0 0.0
      %5744 = vmatmul.mubr.f32.gmra.mrb[0].mxu0 %v5622
      %v5745 = vpop.f32.mrb[0].mxu0
      %v5746 = vadd.f32 0.0, %v5745
      %v5747 = vpop.f32.mrb[0].mxu0
      %5748 = vmatprep.mubr.f32.mxu0 0.0
      %5749 = vmatmul.mubr.f32.gmra.mrb[0].mxu0 %v5625
      %v5750 = vpop.f32.mrb[0].mxu0
      %v5751 = vadd.f32 0.0, %v5750
      %v5752 = vpop.f32.mrb[0].mxu0
      %5753 = vmatprep.mubr.f32.mxu0 0.0
      %5754 = vmatmul.mubr.f32.gmra.mrb[0].mxu0 %v5628
      %v5755 = vpop.f32.mrb[0].mxu0
      %v5756 = vadd.f32 0.0, %v5755
      %v5757 = vpop.f32.mrb[0].mxu0
      %5758 = vmatprep.mubr.f32.mxu0 0.0
      %5759 = vmatmul.mubr.f32.gmra.mrb[0].mxu0 %v5631
      %v5760 = vpop.f32.mrb[0].mxu0
      %v5761 = vadd.f32 0.0, %v5760
      %v5762 = vpop.f32.mrb[0].mxu0
      %5763 = vmatprep.mubr.f32.mxu0 0.0
      %5764 = vmatmul.mubr.f32.gmra.mrb[0].mxu0 %v5634
      %v5765 = vpop.f32.mrb[0].mxu0
      %v5766 = vadd.f32 0.0, %v5765
      %v5767 = vpop.f32.mrb[0].mxu0
      %5768 = vmatprep.mubr.f32.mxu0 0.0
      %5769 = vmatmul.mubr.f32.gmra.mrb[0].mxu0 %v5637
      %v5770 = vpop.f32.mrb[0].mxu0
      %v5771 = vadd.f32 0.0, %v5770
      %v5772 = vpop.f32.mrb[0].mxu0
      %5773 = vmatprep.mubr.f32.mxu0 0.0
      %5774 = vmatmul.mubr.f32.gmra.mrb[0].mxu0 %v5640
      %v5775 = vpop.f32.mrb[0].mxu0
      %v5776 = vadd.f32 0.0, %v5775
      %v5777 = vpop.f32.mrb[0].mxu0
      %5778 = vmatprep.mubr.f32.mxu0 0.0
      %5779 = vmatmul.mubr.f32.gmra.mrb[0].mxu0 %v5643
      %v5780 = vpop.f32.mrb[0].mxu0
      %v5781 = vadd.f32 0.0, %v5780
      %v5782 = vpop.f32.mrb[0].mxu0
      %5783 = vmatprep.mubr.f32.mxu0 0.0
      %5784 = vmatmul.mubr.f32.gmra.mrb[0].mxu0 %v5646
      %v5785 = vpop.f32.mrb[0].mxu0
      %v5786 = vadd.f32 0.0, %v5785
      %v5787 = vpop.f32.mrb[0].mxu0
      %5788 = vmatprep.mubr.f32.mxu0 0.0
      %5789 = vmatmul.mubr.f32.gmra.mrb[0].mxu0 %v5649
      %v5790 = vpop.f32.mrb[0].mxu0
      %v5791 = vadd.f32 0.0, %v5790
      %v5792 = vpop.f32.mrb[0].mxu0
      %5793 = vmatprep.mubr.f32.mxu0 0.0
      %5794 = vmatmul.mubr.f32.gmra.mrb[0].mxu0 %v5652
      %v5795 = vpop.f32.mrb[0].mxu0
      %v5796 = vadd.f32 0.0, %v5795
      %v5797 = vpop.f32.mrb[0].mxu0
      %5798 = vdwg.mxu0
      %v5799 = vadd.f32 %v5569, %v5721
      %v5800 = vadd.f32 %v5570, %v5726
      %v5801 = vadd.f32 %v5571, %v5731
      %v5802 = vadd.f32 %v5572, %v5736
      %v5803 = vadd.f32 %v5573, %v5741
      %v5804 = vadd.f32 %v5574, %v5746
      %v5805 = vadd.f32 %v5575, %v5751
      %v5806 = vadd.f32 %v5576, %v5756
      %v5807 = vadd.f32 %v5577, %v5761
      %v5808 = vadd.f32 %v5578, %v5766
      %v5809 = vadd.f32 %v5579, %v5771
      %v5810 = vadd.f32 %v5580, %v5776
      %v5811 = vadd.f32 %v5581, %v5781
      %v5812 = vadd.f32 %v5582, %v5786
      %v5813 = vadd.f32 %v5583, %v5791
      %v5814 = vadd.f32 %v5584, %v5796
      %v5815 = vld [vmem:[#allocation3 + $0x9] sm:$0xff]
      %v5816 = vld [vmem:[#allocation3 + $0x11] sm:$0xff]
      %v5817 = vld [vmem:[#allocation3 + $0x19] sm:$0xff]
      %v5818 = vld [vmem:[#allocation3 + $0x21] sm:$0xff]
      %v5819 = vld [vmem:[#allocation3 + $0x29] sm:$0xff]
      %v5820 = vld [vmem:[#allocation3 + $0x31] sm:$0xff]
      %v5821 = vld [vmem:[#allocation3 + $0x39] sm:$0xff]
      %v5822 = vld [vmem:[#allocation3 + $0x41] sm:$0xff]
      %v5823 = vld [vmem:[#allocation3 + $0x49] sm:$0xff]
      %v5824 = vld [vmem:[#allocation3 + $0x51] sm:$0xff]
      %v5825 = vld [vmem:[#allocation3 + $0x59] sm:$0xff]
      %v5826 = vld [vmem:[#allocation3 + $0x61] sm:$0xff]
      %v5827 = vld [vmem:[#allocation3 + $0x69] sm:$0xff]
      %v5828 = vld [vmem:[#allocation3 + $0x71] sm:$0xff]
      %v5829 = vld [vmem:[#allocation3 + $0x79] sm:$0xff]
      %v5830 = vld [vmem:[#allocation3 + $0x81] sm:$0xff]
      %s5831 = scalar_lea.vmem %s2, 288
      %v5832 = vld [vmem:[%s5831] sm:$0xff]
      %v5833 = vld [vmem:[%s5831 + $0x8] sm:$0xff]
      %v5834 = vld [vmem:[%s5831 + $0x10] sm:$0xff]
      %v5835 = vld [vmem:[%s5831 + $0x18] sm:$0xff]
      %v5837 = vsel %vm3742, %v5815, 0
      %v5840 = vsel %vm3742, %v5816, 0
      %v5843 = vsel %vm3742, %v5817, 0
      %v5846 = vsel %vm3742, %v5818, 0
      %v5849 = vsel %vm3742, %v5819, 0
      %v5852 = vsel %vm3742, %v5820, 0
      %v5855 = vsel %vm3742, %v5821, 0
      %v5858 = vsel %vm3742, %v5822, 0
      %v5861 = vsel %vm3742, %v5823, 0
      %v5864 = vsel %vm3742, %v5824, 0
      %v5867 = vsel %vm3742, %v5825, 0
      %v5870 = vsel %vm3742, %v5826, 0
      %v5873 = vsel %vm3742, %v5827, 0
      %v5876 = vsel %vm3742, %v5828, 0
      %v5879 = vsel %vm3742, %v5829, 0
      %v5882 = vsel %vm3742, %v5830, 0
      %5884 = vmatprep.subr.mxu0 0.0
      %5885 = vmatpush1.msra.mxu0 %v5832
      %5886 = vmatprep.subr.mxu0 0.0
      %5887 = vmatpush1.msra.mxu0 %v5833
      %5888 = vmatprep.subr.mxu0 0.0
      %5889 = vmatpush1.msra.mxu0 %v5834
      %5890 = vmatprep.subr.mxu0 0.0
      %5891 = vmatpush1.msra.mxu0 %v5835
      %5892 = vmatprep.subr.mxu0 0.0
      %5893 = vmatpush1.msra.mxu0 0.0
      %5894 = vmatprep.subr.mxu0 0.0
      %5895 = vmatpush1.msra.mxu0 0.0
      %5896 = vmatprep.subr.mxu0 0.0
      %5897 = vmatpush1.msra.mxu0 0.0
      %5898 = vmatprep.subr.mxu0 0.0
      %5899 = vmatpush1.msra.mxu0 0.0
      %5900 = vmatprep.subr.mxu0 0.0
      %5901 = vmatpush1.msra.mxu0 0.0
      %5902 = vmatprep.subr.mxu0 0.0
      %5903 = vmatpush1.msra.mxu0 0.0
      %5904 = vmatprep.subr.mxu0 0.0
      %5905 = vmatpush1.msra.mxu0 0.0
      %5906 = vmatprep.subr.mxu0 0.0
      %5907 = vmatpush1.msra.mxu0 0.0
      %5908 = vmatprep.subr.mxu0 0.0
      %5909 = vmatpush1.msra.mxu0 0.0
      %5910 = vmatprep.subr.mxu0 0.0
      %5911 = vmatpush1.msra.mxu0 0.0
      %5912 = vmatprep.subr.mxu0 0.0
      %5913 = vmatpush1.msra.mxu0 0.0
      %5914 = vmatprep.subr.mxu0 0.0
      %5915 = vmatpush1.msra.mxu0 0.0
      %5916 = vmatprep.subr.mxu0 0.0
      %5917 = vmatpush1.msra.mxu0 0.0
      %5918 = vmatprep.subr.mxu0 0.0
      %5919 = vmatpush1.msra.mxu0 0.0
      %5920 = vmatprep.subr.mxu0 0.0
      %5921 = vmatpush1.msra.mxu0 0.0
      %5922 = vmatprep.subr.mxu0 0.0
      %5923 = vmatpush1.msra.mxu0 0.0
      %5924 = vmatprep.subr.mxu0 0.0
      %5925 = vmatpush1.msra.mxu0 0.0
      %5926 = vmatprep.subr.mxu0 0.0
      %5927 = vmatpush1.msra.mxu0 0.0
      %5928 = vmatprep.subr.mxu0 0.0
      %5929 = vmatpush1.msra.mxu0 0.0
      %5930 = vmatprep.subr.mxu0 0.0
      %5931 = vmatpush1.msra.mxu0 0.0
      %5932 = vmatprep.subr.mxu0 0.0
      %5933 = vmatpush1.msra.mxu0 0.0
      %5934 = vmatprep.subr.mxu0 0.0
      %5935 = vmatpush1.msra.mxu0 0.0
      %5936 = vmatprep.subr.mxu0 0.0
      %5937 = vmatpush1.msra.mxu0 0.0
      %5938 = vmatprep.subr.mxu0 0.0
      %5939 = vmatpush1.msra.mxu0 0.0
      %5940 = vmatprep.subr.mxu0 0.0
      %5941 = vmatpush1.msra.mxu0 0.0
      %5942 = vmatprep.subr.mxu0 0.0
      %5943 = vmatpush1.msra.mxu0 0.0
      %5944 = vmatprep.subr.mxu0 0.0
      %5945 = vmatpush1.msra.mxu0 0.0
      %5946 = vmatprep.subr.mxu0 0.0
      %5947 = vmatpush1.msra.mxu0 0.0
      %5948 = vmatprep.mubr.f32.mxu0 0.0
      %5949 = vmatmul.mubr.f32.gmra.mrb[0].mxu0 %v5837
      %v5950 = vpop.f32.mrb[0].mxu0
      %v5951 = vadd.f32 0.0, %v5950
      %v5952 = vpop.f32.mrb[0].mxu0
      %5953 = vmatprep.mubr.f32.mxu0 0.0
      %5954 = vmatmul.mubr.f32.gmra.mrb[0].mxu0 %v5840
      %v5955 = vpop.f32.mrb[0].mxu0
      %v5956 = vadd.f32 0.0, %v5955
      %v5957 = vpop.f32.mrb[0].mxu0
      %5958 = vmatprep.mubr.f32.mxu0 0.0
      %5959 = vmatmul.mubr.f32.gmra.mrb[0].mxu0 %v5843
      %v5960 = vpop.f32.mrb[0].mxu0
      %v5961 = vadd.f32 0.0, %v5960
      %v5962 = vpop.f32.mrb[0].mxu0
      %5963 = vmatprep.mubr.f32.mxu0 0.0
      %5964 = vmatmul.mubr.f32.gmra.mrb[0].mxu0 %v5846
      %v5965 = vpop.f32.mrb[0].mxu0
      %v5966 = vadd.f32 0.0, %v5965
      %v5967 = vpop.f32.mrb[0].mxu0
      %5968 = vmatprep.mubr.f32.mxu0 0.0
      %5969 = vmatmul.mubr.f32.gmra.mrb[0].mxu0 %v5849
      %v5970 = vpop.f32.mrb[0].mxu0
      %v5971 = vadd.f32 0.0, %v5970
      %v5972 = vpop.f32.mrb[0].mxu0
      %5973 = vmatprep.mubr.f32.mxu0 0.0
      %5974 = vmatmul.mubr.f32.gmra.mrb[0].mxu0 %v5852
      %v5975 = vpop.f32.mrb[0].mxu0
      %v5976 = vadd.f32 0.0, %v5975
      %v5977 = vpop.f32.mrb[0].mxu0
      %5978 = vmatprep.mubr.f32.mxu0 0.0
      %5979 = vmatmul.mubr.f32.gmra.mrb[0].mxu0 %v5855
      %v5980 = vpop.f32.mrb[0].mxu0
      %v5981 = vadd.f32 0.0, %v5980
      %v5982 = vpop.f32.mrb[0].mxu0
      %5983 = vmatprep.mubr.f32.mxu0 0.0
      %5984 = vmatmul.mubr.f32.gmra.mrb[0].mxu0 %v5858
      %v5985 = vpop.f32.mrb[0].mxu0
      %v5986 = vadd.f32 0.0, %v5985
      %v5987 = vpop.f32.mrb[0].mxu0
      %5988 = vmatprep.mubr.f32.mxu0 0.0
      %5989 = vmatmul.mubr.f32.gmra.mrb[0].mxu0 %v5861
      %v5990 = vpop.f32.mrb[0].mxu0
      %v5991 = vadd.f32 0.0, %v5990
      %v5992 = vpop.f32.mrb[0].mxu0
      %5993 = vmatprep.mubr.f32.mxu0 0.0
      %5994 = vmatmul.mubr.f32.gmra.mrb[0].mxu0 %v5864
      %v5995 = vpop.f32.mrb[0].mxu0
      %v5996 = vadd.f32 0.0, %v5995
      %v5997 = vpop.f32.mrb[0].mxu0
      %5998 = vmatprep.mubr.f32.mxu0 0.0
      %5999 = vmatmul.mubr.f32.gmra.mrb[0].mxu0 %v5867
      %v6000 = vpop.f32.mrb[0].mxu0
      %v6001 = vadd.f32 0.0, %v6000
      %v6002 = vpop.f32.mrb[0].mxu0
      %6003 = vmatprep.mubr.f32.mxu0 0.0
      %6004 = vmatmul.mubr.f32.gmra.mrb[0].mxu0 %v5870
      %v6005 = vpop.f32.mrb[0].mxu0
      %v6006 = vadd.f32 0.0, %v6005
      %v6007 = vpop.f32.mrb[0].mxu0
      %6008 = vmatprep.mubr.f32.mxu0 0.0
      %6009 = vmatmul.mubr.f32.gmra.mrb[0].mxu0 %v5873
      %v6010 = vpop.f32.mrb[0].mxu0
      %v6011 = vadd.f32 0.0, %v6010
      %v6012 = vpop.f32.mrb[0].mxu0
      %6013 = vmatprep.mubr.f32.mxu0 0.0
      %6014 = vmatmul.mubr.f32.gmra.mrb[0].mxu0 %v5876
      %v6015 = vpop.f32.mrb[0].mxu0
      %v6016 = vadd.f32 0.0, %v6015
      %v6017 = vpop.f32.mrb[0].mxu0
      %6018 = vmatprep.mubr.f32.mxu0 0.0
      %6019 = vmatmul.mubr.f32.gmra.mrb[0].mxu0 %v5879
      %v6020 = vpop.f32.mrb[0].mxu0
      %v6021 = vadd.f32 0.0, %v6020
      %v6022 = vpop.f32.mrb[0].mxu0
      %6023 = vmatprep.mubr.f32.mxu0 0.0
      %6024 = vmatmul.mubr.f32.gmra.mrb[0].mxu0 %v5882
      %v6025 = vpop.f32.mrb[0].mxu0
      %v6026 = vadd.f32 0.0, %v6025
      %v6027 = vpop.f32.mrb[0].mxu0
      %6028 = vdwg.mxu0
      %v6029 = vadd.f32 %v5799, %v5951
      %v6030 = vadd.f32 %v5800, %v5956
      %v6031 = vadd.f32 %v5801, %v5961
      %v6032 = vadd.f32 %v5802, %v5966
      %v6033 = vadd.f32 %v5803, %v5971
      %v6034 = vadd.f32 %v5804, %v5976
      %v6035 = vadd.f32 %v5805, %v5981
      %v6036 = vadd.f32 %v5806, %v5986
      %v6037 = vadd.f32 %v5807, %v5991
      %v6038 = vadd.f32 %v5808, %v5996
      %v6039 = vadd.f32 %v5809, %v6001
      %v6040 = vadd.f32 %v5810, %v6006
      %v6041 = vadd.f32 %v5811, %v6011
      %v6042 = vadd.f32 %v5812, %v6016
      %v6043 = vadd.f32 %v5813, %v6021
      %v6044 = vadd.f32 %v5814, %v6026
      %v6045 = vld [vmem:[#allocation3 + $0xa] sm:$0xff]
      %v6046 = vld [vmem:[#allocation3 + $0x12] sm:$0xff]
      %v6047 = vld [vmem:[#allocation3 + $0x1a] sm:$0xff]
      %v6048 = vld [vmem:[#allocation3 + $0x22] sm:$0xff]
      %v6049 = vld [vmem:[#allocation3 + $0x2a] sm:$0xff]
      %v6050 = vld [vmem:[#allocation3 + $0x32] sm:$0xff]
      %v6051 = vld [vmem:[#allocation3 + $0x3a] sm:$0xff]
      %v6052 = vld [vmem:[#allocation3 + $0x42] sm:$0xff]
      %v6053 = vld [vmem:[#allocation3 + $0x4a] sm:$0xff]
      %v6054 = vld [vmem:[#allocation3 + $0x52] sm:$0xff]
      %v6055 = vld [vmem:[#allocation3 + $0x5a] sm:$0xff]
      %v6056 = vld [vmem:[#allocation3 + $0x62] sm:$0xff]
      %v6057 = vld [vmem:[#allocation3 + $0x6a] sm:$0xff]
      %v6058 = vld [vmem:[#allocation3 + $0x72] sm:$0xff]
      %v6059 = vld [vmem:[#allocation3 + $0x7a] sm:$0xff]
      %v6060 = vld [vmem:[#allocation3 + $0x82] sm:$0xff]
      %s6061 = scalar_lea.vmem %s2, 320
      %v6062 = vld [vmem:[%s6061] sm:$0xff]
      %v6063 = vld [vmem:[%s6061 + $0x8] sm:$0xff]
      %v6064 = vld [vmem:[%s6061 + $0x10] sm:$0xff]
      %v6065 = vld [vmem:[%s6061 + $0x18] sm:$0xff]
      %v6067 = vsel %vm3742, %v6045, 0
      %v6070 = vsel %vm3742, %v6046, 0
      %v6073 = vsel %vm3742, %v6047, 0
      %v6076 = vsel %vm3742, %v6048, 0
      %v6079 = vsel %vm3742, %v6049, 0
      %v6082 = vsel %vm3742, %v6050, 0
      %v6085 = vsel %vm3742, %v6051, 0
      %v6088 = vsel %vm3742, %v6052, 0
      %v6091 = vsel %vm3742, %v6053, 0
      %v6094 = vsel %vm3742, %v6054, 0
      %v6097 = vsel %vm3742, %v6055, 0
      %v6100 = vsel %vm3742, %v6056, 0
      %v6103 = vsel %vm3742, %v6057, 0
      %v6106 = vsel %vm3742, %v6058, 0
      %v6109 = vsel %vm3742, %v6059, 0
      %v6112 = vsel %vm3742, %v6060, 0
      %6114 = vmatprep.subr.mxu0 0.0
      %6115 = vmatpush1.msra.mxu0 %v6062
      %6116 = vmatprep.subr.mxu0 0.0
      %6117 = vmatpush1.msra.mxu0 %v6063
      %6118 = vmatprep.subr.mxu0 0.0
      %6119 = vmatpush1.msra.mxu0 %v6064
      %6120 = vmatprep.subr.mxu0 0.0
      %6121 = vmatpush1.msra.mxu0 %v6065
      %6122 = vmatprep.subr.mxu0 0.0
      %6123 = vmatpush1.msra.mxu0 0.0
      %6124 = vmatprep.subr.mxu0 0.0
      %6125 = vmatpush1.msra.mxu0 0.0
      %6126 = vmatprep.subr.mxu0 0.0
      %6127 = vmatpush1.msra.mxu0 0.0
      %6128 = vmatprep.subr.mxu0 0.0
      %6129 = vmatpush1.msra.mxu0 0.0
      %6130 = vmatprep.subr.mxu0 0.0
      %6131 = vmatpush1.msra.mxu0 0.0
      %6132 = vmatprep.subr.mxu0 0.0
      %6133 = vmatpush1.msra.mxu0 0.0
      %6134 = vmatprep.subr.mxu0 0.0
      %6135 = vmatpush1.msra.mxu0 0.0
      %6136 = vmatprep.subr.mxu0 0.0
      %6137 = vmatpush1.msra.mxu0 0.0
      %6138 = vmatprep.subr.mxu0 0.0
      %6139 = vmatpush1.msra.mxu0 0.0
      %6140 = vmatprep.subr.mxu0 0.0
      %6141 = vmatpush1.msra.mxu0 0.0
      %6142 = vmatprep.subr.mxu0 0.0
      %6143 = vmatpush1.msra.mxu0 0.0
      %6144 = vmatprep.subr.mxu0 0.0
      %6145 = vmatpush1.msra.mxu0 0.0
      %6146 = vmatprep.subr.mxu0 0.0
      %6147 = vmatpush1.msra.mxu0 0.0
      %6148 = vmatprep.subr.mxu0 0.0
      %6149 = vmatpush1.msra.mxu0 0.0
      %6150 = vmatprep.subr.mxu0 0.0
      %6151 = vmatpush1.msra.mxu0 0.0
      %6152 = vmatprep.subr.mxu0 0.0
      %6153 = vmatpush1.msra.mxu0 0.0
      %6154 = vmatprep.subr.mxu0 0.0
      %6155 = vmatpush1.msra.mxu0 0.0
      %6156 = vmatprep.subr.mxu0 0.0
      %6157 = vmatpush1.msra.mxu0 0.0
      %6158 = vmatprep.subr.mxu0 0.0
      %6159 = vmatpush1.msra.mxu0 0.0
      %6160 = vmatprep.subr.mxu0 0.0
      %6161 = vmatpush1.msra.mxu0 0.0
      %6162 = vmatprep.subr.mxu0 0.0
      %6163 = vmatpush1.msra.mxu0 0.0
      %6164 = vmatprep.subr.mxu0 0.0
      %6165 = vmatpush1.msra.mxu0 0.0
      %6166 = vmatprep.subr.mxu0 0.0
      %6167 = vmatpush1.msra.mxu0 0.0
      %6168 = vmatprep.subr.mxu0 0.0
      %6169 = vmatpush1.msra.mxu0 0.0
      %6170 = vmatprep.subr.mxu0 0.0
      %6171 = vmatpush1.msra.mxu0 0.0
      %6172 = vmatprep.subr.mxu0 0.0
      %6173 = vmatpush1.msra.mxu0 0.0
      %6174 = vmatprep.subr.mxu0 0.0
      %6175 = vmatpush1.msra.mxu0 0.0
      %6176 = vmatprep.subr.mxu0 0.0
      %6177 = vmatpush1.msra.mxu0 0.0
      %6178 = vmatprep.mubr.f32.mxu0 0.0
      %6179 = vmatmul.mubr.f32.gmra.mrb[0].mxu0 %v6067
      %v6180 = vpop.f32.mrb[0].mxu0
      %v6181 = vadd.f32 0.0, %v6180
      %v6182 = vpop.f32.mrb[0].mxu0
      %6183 = vmatprep.mubr.f32.mxu0 0.0
      %6184 = vmatmul.mubr.f32.gmra.mrb[0].mxu0 %v6070
      %v6185 = vpop.f32.mrb[0].mxu0
      %v6186 = vadd.f32 0.0, %v6185
      %v6187 = vpop.f32.mrb[0].mxu0
      %6188 = vmatprep.mubr.f32.mxu0 0.0
      %6189 = vmatmul.mubr.f32.gmra.mrb[0].mxu0 %v6073
      %v6190 = vpop.f32.mrb[0].mxu0
      %v6191 = vadd.f32 0.0, %v6190
      %v6192 = vpop.f32.mrb[0].mxu0
      %6193 = vmatprep.mubr.f32.mxu0 0.0
      %6194 = vmatmul.mubr.f32.gmra.mrb[0].mxu0 %v6076
      %v6195 = vpop.f32.mrb[0].mxu0
      %v6196 = vadd.f32 0.0, %v6195
      %v6197 = vpop.f32.mrb[0].mxu0
      %6198 = vmatprep.mubr.f32.mxu0 0.0
      %6199 = vmatmul.mubr.f32.gmra.mrb[0].mxu0 %v6079
      %v6200 = vpop.f32.mrb[0].mxu0
      %v6201 = vadd.f32 0.0, %v6200
      %v6202 = vpop.f32.mrb[0].mxu0
      %6203 = vmatprep.mubr.f32.mxu0 0.0
      %6204 = vmatmul.mubr.f32.gmra.mrb[0].mxu0 %v6082
      %v6205 = vpop.f32.mrb[0].mxu0
      %v6206 = vadd.f32 0.0, %v6205
      %v6207 = vpop.f32.mrb[0].mxu0
      %6208 = vmatprep.mubr.f32.mxu0 0.0
      %6209 = vmatmul.mubr.f32.gmra.mrb[0].mxu0 %v6085
      %v6210 = vpop.f32.mrb[0].mxu0
      %v6211 = vadd.f32 0.0, %v6210
      %v6212 = vpop.f32.mrb[0].mxu0
      %6213 = vmatprep.mubr.f32.mxu0 0.0
      %6214 = vmatmul.mubr.f32.gmra.mrb[0].mxu0 %v6088
      %v6215 = vpop.f32.mrb[0].mxu0
      %v6216 = vadd.f32 0.0, %v6215
      %v6217 = vpop.f32.mrb[0].mxu0
      %6218 = vmatprep.mubr.f32.mxu0 0.0
      %6219 = vmatmul.mubr.f32.gmra.mrb[0].mxu0 %v6091
      %v6220 = vpop.f32.mrb[0].mxu0
      %v6221 = vadd.f32 0.0, %v6220
      %v6222 = vpop.f32.mrb[0].mxu0
      %6223 = vmatprep.mubr.f32.mxu0 0.0
      %6224 = vmatmul.mubr.f32.gmra.mrb[0].mxu0 %v6094
      %v6225 = vpop.f32.mrb[0].mxu0
      %v6226 = vadd.f32 0.0, %v6225
      %v6227 = vpop.f32.mrb[0].mxu0
      %6228 = vmatprep.mubr.f32.mxu0 0.0
      %6229 = vmatmul.mubr.f32.gmra.mrb[0].mxu0 %v6097
      %v6230 = vpop.f32.mrb[0].mxu0
      %v6231 = vadd.f32 0.0, %v6230
      %v6232 = vpop.f32.mrb[0].mxu0
      %6233 = vmatprep.mubr.f32.mxu0 0.0
      %6234 = vmatmul.mubr.f32.gmra.mrb[0].mxu0 %v6100
      %v6235 = vpop.f32.mrb[0].mxu0
      %v6236 = vadd.f32 0.0, %v6235
      %v6237 = vpop.f32.mrb[0].mxu0
      %6238 = vmatprep.mubr.f32.mxu0 0.0
      %6239 = vmatmul.mubr.f32.gmra.mrb[0].mxu0 %v6103
      %v6240 = vpop.f32.mrb[0].mxu0
      %v6241 = vadd.f32 0.0, %v6240
      %v6242 = vpop.f32.mrb[0].mxu0
      %6243 = vmatprep.mubr.f32.mxu0 0.0
      %6244 = vmatmul.mubr.f32.gmra.mrb[0].mxu0 %v6106
      %v6245 = vpop.f32.mrb[0].mxu0
      %v6246 = vadd.f32 0.0, %v6245
      %v6247 = vpop.f32.mrb[0].mxu0
      %6248 = vmatprep.mubr.f32.mxu0 0.0
      %6249 = vmatmul.mubr.f32.gmra.mrb[0].mxu0 %v6109
      %v6250 = vpop.f32.mrb[0].mxu0
      %v6251 = vadd.f32 0.0, %v6250
      %v6252 = vpop.f32.mrb[0].mxu0
      %6253 = vmatprep.mubr.f32.mxu0 0.0
      %6254 = vmatmul.mubr.f32.gmra.mrb[0].mxu0 %v6112
      %v6255 = vpop.f32.mrb[0].mxu0
      %v6256 = vadd.f32 0.0, %v6255
      %v6257 = vpop.f32.mrb[0].mxu0
      %6258 = vdwg.mxu0
      %v6259 = vadd.f32 %v6029, %v6181
      %v6260 = vadd.f32 %v6030, %v6186
      %v6261 = vadd.f32 %v6031, %v6191
      %v6262 = vadd.f32 %v6032, %v6196
      %v6263 = vadd.f32 %v6033, %v6201
      %v6264 = vadd.f32 %v6034, %v6206
      %v6265 = vadd.f32 %v6035, %v6211
      %v6266 = vadd.f32 %v6036, %v6216
      %v6267 = vadd.f32 %v6037, %v6221
      %v6268 = vadd.f32 %v6038, %v6226
      %v6269 = vadd.f32 %v6039, %v6231
      %v6270 = vadd.f32 %v6040, %v6236
      %v6271 = vadd.f32 %v6041, %v6241
      %v6272 = vadd.f32 %v6042, %v6246
      %v6273 = vadd.f32 %v6043, %v6251
      %v6274 = vadd.f32 %v6044, %v6256
      %v6275 = vld [vmem:[#allocation3 + $0xb] sm:$0xff]
      %v6276 = vld [vmem:[#allocation3 + $0x13] sm:$0xff]
      %v6277 = vld [vmem:[#allocation3 + $0x1b] sm:$0xff]
      %v6278 = vld [vmem:[#allocation3 + $0x23] sm:$0xff]
      %v6279 = vld [vmem:[#allocation3 + $0x2b] sm:$0xff]
      %v6280 = vld [vmem:[#allocation3 + $0x33] sm:$0xff]
      %v6281 = vld [vmem:[#allocation3 + $0x3b] sm:$0xff]
      %v6282 = vld [vmem:[#allocation3 + $0x43] sm:$0xff]
      %v6283 = vld [vmem:[#allocation3 + $0x4b] sm:$0xff]
      %v6284 = vld [vmem:[#allocation3 + $0x53] sm:$0xff]
      %v6285 = vld [vmem:[#allocation3 + $0x5b] sm:$0xff]
      %v6286 = vld [vmem:[#allocation3 + $0x63] sm:$0xff]
      %v6287 = vld [vmem:[#allocation3 + $0x6b] sm:$0xff]
      %v6288 = vld [vmem:[#allocation3 + $0x73] sm:$0xff]
      %v6289 = vld [vmem:[#allocation3 + $0x7b] sm:$0xff]
      %v6290 = vld [vmem:[#allocation3 + $0x83] sm:$0xff]
      %s6291 = scalar_lea.vmem %s2, 352
      %v6292 = vld [vmem:[%s6291] sm:$0xff]
      %v6293 = vld [vmem:[%s6291 + $0x8] sm:$0xff]
      %v6294 = vld [vmem:[%s6291 + $0x10] sm:$0xff]
      %v6295 = vld [vmem:[%s6291 + $0x18] sm:$0xff]
      %v6297 = vsel %vm3742, %v6275, 0
      %v6300 = vsel %vm3742, %v6276, 0
      %v6303 = vsel %vm3742, %v6277, 0
      %v6306 = vsel %vm3742, %v6278, 0
      %v6309 = vsel %vm3742, %v6279, 0
      %v6312 = vsel %vm3742, %v6280, 0
      %v6315 = vsel %vm3742, %v6281, 0
      %v6318 = vsel %vm3742, %v6282, 0
      %v6321 = vsel %vm3742, %v6283, 0
      %v6324 = vsel %vm3742, %v6284, 0
      %v6327 = vsel %vm3742, %v6285, 0
      %v6330 = vsel %vm3742, %v6286, 0
      %v6333 = vsel %vm3742, %v6287, 0
      %v6336 = vsel %vm3742, %v6288, 0
      %v6339 = vsel %vm3742, %v6289, 0
      %v6342 = vsel %vm3742, %v6290, 0
      %6344 = vmatprep.subr.mxu0 0.0
      %6345 = vmatpush1.msra.mxu0 %v6292
      %6346 = vmatprep.subr.mxu0 0.0
      %6347 = vmatpush1.msra.mxu0 %v6293
      %6348 = vmatprep.subr.mxu0 0.0
      %6349 = vmatpush1.msra.mxu0 %v6294
      %6350 = vmatprep.subr.mxu0 0.0
      %6351 = vmatpush1.msra.mxu0 %v6295
      %6352 = vmatprep.subr.mxu0 0.0
      %6353 = vmatpush1.msra.mxu0 0.0
      %6354 = vmatprep.subr.mxu0 0.0
      %6355 = vmatpush1.msra.mxu0 0.0
      %6356 = vmatprep.subr.mxu0 0.0
      %6357 = vmatpush1.msra.mxu0 0.0
      %6358 = vmatprep.subr.mxu0 0.0
      %6359 = vmatpush1.msra.mxu0 0.0
      %6360 = vmatprep.subr.mxu0 0.0
      %6361 = vmatpush1.msra.mxu0 0.0
      %6362 = vmatprep.subr.mxu0 0.0
      %6363 = vmatpush1.msra.mxu0 0.0
      %6364 = vmatprep.subr.mxu0 0.0
      %6365 = vmatpush1.msra.mxu0 0.0
      %6366 = vmatprep.subr.mxu0 0.0
      %6367 = vmatpush1.msra.mxu0 0.0
      %6368 = vmatprep.subr.mxu0 0.0
      %6369 = vmatpush1.msra.mxu0 0.0
      %6370 = vmatprep.subr.mxu0 0.0
      %6371 = vmatpush1.msra.mxu0 0.0
      %6372 = vmatprep.subr.mxu0 0.0
      %6373 = vmatpush1.msra.mxu0 0.0
      %6374 = vmatprep.subr.mxu0 0.0
      %6375 = vmatpush1.msra.mxu0 0.0
      %6376 = vmatprep.subr.mxu0 0.0
      %6377 = vmatpush1.msra.mxu0 0.0
      %6378 = vmatprep.subr.mxu0 0.0
      %6379 = vmatpush1.msra.mxu0 0.0
      %6380 = vmatprep.subr.mxu0 0.0
      %6381 = vmatpush1.msra.mxu0 0.0
      %6382 = vmatprep.subr.mxu0 0.0
      %6383 = vmatpush1.msra.mxu0 0.0
      %6384 = vmatprep.subr.mxu0 0.0
      %6385 = vmatpush1.msra.mxu0 0.0
      %6386 = vmatprep.subr.mxu0 0.0
      %6387 = vmatpush1.msra.mxu0 0.0
      %6388 = vmatprep.subr.mxu0 0.0
      %6389 = vmatpush1.msra.mxu0 0.0
      %6390 = vmatprep.subr.mxu0 0.0
      %6391 = vmatpush1.msra.mxu0 0.0
      %6392 = vmatprep.subr.mxu0 0.0
      %6393 = vmatpush1.msra.mxu0 0.0
      %6394 = vmatprep.subr.mxu0 0.0
      %6395 = vmatpush1.msra.mxu0 0.0
      %6396 = vmatprep.subr.mxu0 0.0
      %6397 = vmatpush1.msra.mxu0 0.0
      %6398 = vmatprep.subr.mxu0 0.0
      %6399 = vmatpush1.msra.mxu0 0.0
      %6400 = vmatprep.subr.mxu0 0.0
      %6401 = vmatpush1.msra.mxu0 0.0
      %6402 = vmatprep.subr.mxu0 0.0
      %6403 = vmatpush1.msra.mxu0 0.0
      %6404 = vmatprep.subr.mxu0 0.0
      %6405 = vmatpush1.msra.mxu0 0.0
      %6406 = vmatprep.subr.mxu0 0.0
      %6407 = vmatpush1.msra.mxu0 0.0
      %6408 = vmatprep.mubr.f32.mxu0 0.0
      %6409 = vmatmul.mubr.f32.gmra.mrb[0].mxu0 %v6297
      %v6410 = vpop.f32.mrb[0].mxu0
      %v6411 = vadd.f32 0.0, %v6410
      %v6412 = vpop.f32.mrb[0].mxu0
      %6413 = vmatprep.mubr.f32.mxu0 0.0
      %6414 = vmatmul.mubr.f32.gmra.mrb[0].mxu0 %v6300
      %v6415 = vpop.f32.mrb[0].mxu0
      %v6416 = vadd.f32 0.0, %v6415
      %v6417 = vpop.f32.mrb[0].mxu0
      %6418 = vmatprep.mubr.f32.mxu0 0.0
      %6419 = vmatmul.mubr.f32.gmra.mrb[0].mxu0 %v6303
      %v6420 = vpop.f32.mrb[0].mxu0
      %v6421 = vadd.f32 0.0, %v6420
      %v6422 = vpop.f32.mrb[0].mxu0
      %6423 = vmatprep.mubr.f32.mxu0 0.0
      %6424 = vmatmul.mubr.f32.gmra.mrb[0].mxu0 %v6306
      %v6425 = vpop.f32.mrb[0].mxu0
      %v6426 = vadd.f32 0.0, %v6425
      %v6427 = vpop.f32.mrb[0].mxu0
      %6428 = vmatprep.mubr.f32.mxu0 0.0
      %6429 = vmatmul.mubr.f32.gmra.mrb[0].mxu0 %v6309
      %v6430 = vpop.f32.mrb[0].mxu0
      %v6431 = vadd.f32 0.0, %v6430
      %v6432 = vpop.f32.mrb[0].mxu0
      %6433 = vmatprep.mubr.f32.mxu0 0.0
      %6434 = vmatmul.mubr.f32.gmra.mrb[0].mxu0 %v6312
      %v6435 = vpop.f32.mrb[0].mxu0
      %v6436 = vadd.f32 0.0, %v6435
      %v6437 = vpop.f32.mrb[0].mxu0
      %6438 = vmatprep.mubr.f32.mxu0 0.0
      %6439 = vmatmul.mubr.f32.gmra.mrb[0].mxu0 %v6315
      %v6440 = vpop.f32.mrb[0].mxu0
      %v6441 = vadd.f32 0.0, %v6440
      %v6442 = vpop.f32.mrb[0].mxu0
      %6443 = vmatprep.mubr.f32.mxu0 0.0
      %6444 = vmatmul.mubr.f32.gmra.mrb[0].mxu0 %v6318
      %v6445 = vpop.f32.mrb[0].mxu0
      %v6446 = vadd.f32 0.0, %v6445
      %v6447 = vpop.f32.mrb[0].mxu0
      %6448 = vmatprep.mubr.f32.mxu0 0.0
      %6449 = vmatmul.mubr.f32.gmra.mrb[0].mxu0 %v6321
      %v6450 = vpop.f32.mrb[0].mxu0
      %v6451 = vadd.f32 0.0, %v6450
      %v6452 = vpop.f32.mrb[0].mxu0
      %6453 = vmatprep.mubr.f32.mxu0 0.0
      %6454 = vmatmul.mubr.f32.gmra.mrb[0].mxu0 %v6324
      %v6455 = vpop.f32.mrb[0].mxu0
      %v6456 = vadd.f32 0.0, %v6455
      %v6457 = vpop.f32.mrb[0].mxu0
      %6458 = vmatprep.mubr.f32.mxu0 0.0
      %6459 = vmatmul.mubr.f32.gmra.mrb[0].mxu0 %v6327
      %v6460 = vpop.f32.mrb[0].mxu0
      %v6461 = vadd.f32 0.0, %v6460
      %v6462 = vpop.f32.mrb[0].mxu0
      %6463 = vmatprep.mubr.f32.mxu0 0.0
      %6464 = vmatmul.mubr.f32.gmra.mrb[0].mxu0 %v6330
      %v6465 = vpop.f32.mrb[0].mxu0
      %v6466 = vadd.f32 0.0, %v6465
      %v6467 = vpop.f32.mrb[0].mxu0
      %6468 = vmatprep.mubr.f32.mxu0 0.0
      %6469 = vmatmul.mubr.f32.gmra.mrb[0].mxu0 %v6333
      %v6470 = vpop.f32.mrb[0].mxu0
      %v6471 = vadd.f32 0.0, %v6470
      %v6472 = vpop.f32.mrb[0].mxu0
      %6473 = vmatprep.mubr.f32.mxu0 0.0
      %6474 = vmatmul.mubr.f32.gmra.mrb[0].mxu0 %v6336
      %v6475 = vpop.f32.mrb[0].mxu0
      %v6476 = vadd.f32 0.0, %v6475
      %v6477 = vpop.f32.mrb[0].mxu0
      %6478 = vmatprep.mubr.f32.mxu0 0.0
      %6479 = vmatmul.mubr.f32.gmra.mrb[0].mxu0 %v6339
      %v6480 = vpop.f32.mrb[0].mxu0
      %v6481 = vadd.f32 0.0, %v6480
      %v6482 = vpop.f32.mrb[0].mxu0
      %6483 = vmatprep.mubr.f32.mxu0 0.0
      %6484 = vmatmul.mubr.f32.gmra.mrb[0].mxu0 %v6342
      %v6485 = vpop.f32.mrb[0].mxu0
      %v6486 = vadd.f32 0.0, %v6485
      %v6487 = vpop.f32.mrb[0].mxu0
      %6488 = vdwg.mxu0
      %v6489 = vadd.f32 %v6259, %v6411
      %v6490 = vadd.f32 %v6260, %v6416
      %v6491 = vadd.f32 %v6261, %v6421
      %v6492 = vadd.f32 %v6262, %v6426
      %v6493 = vadd.f32 %v6263, %v6431
      %v6494 = vadd.f32 %v6264, %v6436
      %v6495 = vadd.f32 %v6265, %v6441
      %v6496 = vadd.f32 %v6266, %v6446
      %v6497 = vadd.f32 %v6267, %v6451
      %v6498 = vadd.f32 %v6268, %v6456
      %v6499 = vadd.f32 %v6269, %v6461
      %v6500 = vadd.f32 %v6270, %v6466
      %v6501 = vadd.f32 %v6271, %v6471
      %v6502 = vadd.f32 %v6272, %v6476
      %v6503 = vadd.f32 %v6273, %v6481
      %v6504 = vadd.f32 %v6274, %v6486
      %v6505 = vld [vmem:[#allocation3 + $0xc] sm:$0xff]
      %v6506 = vld [vmem:[#allocation3 + $0x14] sm:$0xff]
      %v6507 = vld [vmem:[#allocation3 + $0x1c] sm:$0xff]
      %v6508 = vld [vmem:[#allocation3 + $0x24] sm:$0xff]
      %v6509 = vld [vmem:[#allocation3 + $0x2c] sm:$0xff]
      %v6510 = vld [vmem:[#allocation3 + $0x34] sm:$0xff]
      %v6511 = vld [vmem:[#allocation3 + $0x3c] sm:$0xff]
      %v6512 = vld [vmem:[#allocation3 + $0x44] sm:$0xff]
      %v6513 = vld [vmem:[#allocation3 + $0x4c] sm:$0xff]
      %v6514 = vld [vmem:[#allocation3 + $0x54] sm:$0xff]
      %v6515 = vld [vmem:[#allocation3 + $0x5c] sm:$0xff]
      %v6516 = vld [vmem:[#allocation3 + $0x64] sm:$0xff]
      %v6517 = vld [vmem:[#allocation3 + $0x6c] sm:$0xff]
      %v6518 = vld [vmem:[#allocation3 + $0x74] sm:$0xff]
      %v6519 = vld [vmem:[#allocation3 + $0x7c] sm:$0xff]
      %v6520 = vld [vmem:[#allocation3 + $0x84] sm:$0xff]
      %s6521 = scalar_lea.vmem %s2, 384
      %v6522 = vld [vmem:[%s6521] sm:$0xff]
      %v6523 = vld [vmem:[%s6521 + $0x8] sm:$0xff]
      %v6524 = vld [vmem:[%s6521 + $0x10] sm:$0xff]
      %v6525 = vld [vmem:[%s6521 + $0x18] sm:$0xff]
      %v6527 = vsel %vm3742, %v6505, 0
      %v6530 = vsel %vm3742, %v6506, 0
      %v6533 = vsel %vm3742, %v6507, 0
      %v6536 = vsel %vm3742, %v6508, 0
      %v6539 = vsel %vm3742, %v6509, 0
      %v6542 = vsel %vm3742, %v6510, 0
      %v6545 = vsel %vm3742, %v6511, 0
      %v6548 = vsel %vm3742, %v6512, 0
      %v6551 = vsel %vm3742, %v6513, 0
      %v6554 = vsel %vm3742, %v6514, 0
      %v6557 = vsel %vm3742, %v6515, 0
      %v6560 = vsel %vm3742, %v6516, 0
      %v6563 = vsel %vm3742, %v6517, 0
      %v6566 = vsel %vm3742, %v6518, 0
      %v6569 = vsel %vm3742, %v6519, 0
      %v6572 = vsel %vm3742, %v6520, 0
      %6574 = vmatprep.subr.mxu0 0.0
      %6575 = vmatpush1.msra.mxu0 %v6522
      %6576 = vmatprep.subr.mxu0 0.0
      %6577 = vmatpush1.msra.mxu0 %v6523
      %6578 = vmatprep.subr.mxu0 0.0
      %6579 = vmatpush1.msra.mxu0 %v6524
      %6580 = vmatprep.subr.mxu0 0.0
      %6581 = vmatpush1.msra.mxu0 %v6525
      %6582 = vmatprep.subr.mxu0 0.0
      %6583 = vmatpush1.msra.mxu0 0.0
      %6584 = vmatprep.subr.mxu0 0.0
      %6585 = vmatpush1.msra.mxu0 0.0
      %6586 = vmatprep.subr.mxu0 0.0
      %6587 = vmatpush1.msra.mxu0 0.0
      %6588 = vmatprep.subr.mxu0 0.0
      %6589 = vmatpush1.msra.mxu0 0.0
      %6590 = vmatprep.subr.mxu0 0.0
      %6591 = vmatpush1.msra.mxu0 0.0
      %6592 = vmatprep.subr.mxu0 0.0
      %6593 = vmatpush1.msra.mxu0 0.0
      %6594 = vmatprep.subr.mxu0 0.0
      %6595 = vmatpush1.msra.mxu0 0.0
      %6596 = vmatprep.subr.mxu0 0.0
      %6597 = vmatpush1.msra.mxu0 0.0
      %6598 = vmatprep.subr.mxu0 0.0
      %6599 = vmatpush1.msra.mxu0 0.0
      %6600 = vmatprep.subr.mxu0 0.0
      %6601 = vmatpush1.msra.mxu0 0.0
      %6602 = vmatprep.subr.mxu0 0.0
      %6603 = vmatpush1.msra.mxu0 0.0
      %6604 = vmatprep.subr.mxu0 0.0
      %6605 = vmatpush1.msra.mxu0 0.0
      %6606 = vmatprep.subr.mxu0 0.0
      %6607 = vmatpush1.msra.mxu0 0.0
      %6608 = vmatprep.subr.mxu0 0.0
      %6609 = vmatpush1.msra.mxu0 0.0
      %6610 = vmatprep.subr.mxu0 0.0
      %6611 = vmatpush1.msra.mxu0 0.0
      %6612 = vmatprep.subr.mxu0 0.0
      %6613 = vmatpush1.msra.mxu0 0.0
      %6614 = vmatprep.subr.mxu0 0.0
      %6615 = vmatpush1.msra.mxu0 0.0
      %6616 = vmatprep.subr.mxu0 0.0
      %6617 = vmatpush1.msra.mxu0 0.0
      %6618 = vmatprep.subr.mxu0 0.0
      %6619 = vmatpush1.msra.mxu0 0.0
      %6620 = vmatprep.subr.mxu0 0.0
      %6621 = vmatpush1.msra.mxu0 0.0
      %6622 = vmatprep.subr.mxu0 0.0
      %6623 = vmatpush1.msra.mxu0 0.0
      %6624 = vmatprep.subr.mxu0 0.0
      %6625 = vmatpush1.msra.mxu0 0.0
      %6626 = vmatprep.subr.mxu0 0.0
      %6627 = vmatpush1.msra.mxu0 0.0
      %6628 = vmatprep.subr.mxu0 0.0
      %6629 = vmatpush1.msra.mxu0 0.0
      %6630 = vmatprep.subr.mxu0 0.0
      %6631 = vmatpush1.msra.mxu0 0.0
      %6632 = vmatprep.subr.mxu0 0.0
      %6633 = vmatpush1.msra.mxu0 0.0
      %6634 = vmatprep.subr.mxu0 0.0
      %6635 = vmatpush1.msra.mxu0 0.0
      %6636 = vmatprep.subr.mxu0 0.0
      %6637 = vmatpush1.msra.mxu0 0.0
      %6638 = vmatprep.mubr.f32.mxu0 0.0
      %6639 = vmatmul.mubr.f32.gmra.mrb[0].mxu0 %v6527
      %v6640 = vpop.f32.mrb[0].mxu0
      %v6641 = vadd.f32 0.0, %v6640
      %v6642 = vpop.f32.mrb[0].mxu0
      %6643 = vmatprep.mubr.f32.mxu0 0.0
      %6644 = vmatmul.mubr.f32.gmra.mrb[0].mxu0 %v6530
      %v6645 = vpop.f32.mrb[0].mxu0
      %v6646 = vadd.f32 0.0, %v6645
      %v6647 = vpop.f32.mrb[0].mxu0
      %6648 = vmatprep.mubr.f32.mxu0 0.0
      %6649 = vmatmul.mubr.f32.gmra.mrb[0].mxu0 %v6533
      %v6650 = vpop.f32.mrb[0].mxu0
      %v6651 = vadd.f32 0.0, %v6650
      %v6652 = vpop.f32.mrb[0].mxu0
      %6653 = vmatprep.mubr.f32.mxu0 0.0
      %6654 = vmatmul.mubr.f32.gmra.mrb[0].mxu0 %v6536
      %v6655 = vpop.f32.mrb[0].mxu0
      %v6656 = vadd.f32 0.0, %v6655
      %v6657 = vpop.f32.mrb[0].mxu0
      %6658 = vmatprep.mubr.f32.mxu0 0.0
      %6659 = vmatmul.mubr.f32.gmra.mrb[0].mxu0 %v6539
      %v6660 = vpop.f32.mrb[0].mxu0
      %v6661 = vadd.f32 0.0, %v6660
      %v6662 = vpop.f32.mrb[0].mxu0
      %6663 = vmatprep.mubr.f32.mxu0 0.0
      %6664 = vmatmul.mubr.f32.gmra.mrb[0].mxu0 %v6542
      %v6665 = vpop.f32.mrb[0].mxu0
      %v6666 = vadd.f32 0.0, %v6665
      %v6667 = vpop.f32.mrb[0].mxu0
      %6668 = vmatprep.mubr.f32.mxu0 0.0
      %6669 = vmatmul.mubr.f32.gmra.mrb[0].mxu0 %v6545
      %v6670 = vpop.f32.mrb[0].mxu0
      %v6671 = vadd.f32 0.0, %v6670
      %v6672 = vpop.f32.mrb[0].mxu0
      %6673 = vmatprep.mubr.f32.mxu0 0.0
      %6674 = vmatmul.mubr.f32.gmra.mrb[0].mxu0 %v6548
      %v6675 = vpop.f32.mrb[0].mxu0
      %v6676 = vadd.f32 0.0, %v6675
      %v6677 = vpop.f32.mrb[0].mxu0
      %6678 = vmatprep.mubr.f32.mxu0 0.0
      %6679 = vmatmul.mubr.f32.gmra.mrb[0].mxu0 %v6551
      %v6680 = vpop.f32.mrb[0].mxu0
      %v6681 = vadd.f32 0.0, %v6680
      %v6682 = vpop.f32.mrb[0].mxu0
      %6683 = vmatprep.mubr.f32.mxu0 0.0
      %6684 = vmatmul.mubr.f32.gmra.mrb[0].mxu0 %v6554
      %v6685 = vpop.f32.mrb[0].mxu0
      %v6686 = vadd.f32 0.0, %v6685
      %v6687 = vpop.f32.mrb[0].mxu0
      %6688 = vmatprep.mubr.f32.mxu0 0.0
      %6689 = vmatmul.mubr.f32.gmra.mrb[0].mxu0 %v6557
      %v6690 = vpop.f32.mrb[0].mxu0
      %v6691 = vadd.f32 0.0, %v6690
      %v6692 = vpop.f32.mrb[0].mxu0
      %6693 = vmatprep.mubr.f32.mxu0 0.0
      %6694 = vmatmul.mubr.f32.gmra.mrb[0].mxu0 %v6560
      %v6695 = vpop.f32.mrb[0].mxu0
      %v6696 = vadd.f32 0.0, %v6695
      %v6697 = vpop.f32.mrb[0].mxu0
      %6698 = vmatprep.mubr.f32.mxu0 0.0
      %6699 = vmatmul.mubr.f32.gmra.mrb[0].mxu0 %v6563
      %v6700 = vpop.f32.mrb[0].mxu0
      %v6701 = vadd.f32 0.0, %v6700
      %v6702 = vpop.f32.mrb[0].mxu0
      %6703 = vmatprep.mubr.f32.mxu0 0.0
      %6704 = vmatmul.mubr.f32.gmra.mrb[0].mxu0 %v6566
      %v6705 = vpop.f32.mrb[0].mxu0
      %v6706 = vadd.f32 0.0, %v6705
      %v6707 = vpop.f32.mrb[0].mxu0
      %6708 = vmatprep.mubr.f32.mxu0 0.0
      %6709 = vmatmul.mubr.f32.gmra.mrb[0].mxu0 %v6569
      %v6710 = vpop.f32.mrb[0].mxu0
      %v6711 = vadd.f32 0.0, %v6710
      %v6712 = vpop.f32.mrb[0].mxu0
      %6713 = vmatprep.mubr.f32.mxu0 0.0
      %6714 = vmatmul.mubr.f32.gmra.mrb[0].mxu0 %v6572
      %v6715 = vpop.f32.mrb[0].mxu0
      %v6716 = vadd.f32 0.0, %v6715
      %v6717 = vpop.f32.mrb[0].mxu0
      %6718 = vdwg.mxu0
      %v6719 = vadd.f32 %v6489, %v6641
      %v6720 = vadd.f32 %v6490, %v6646
      %v6721 = vadd.f32 %v6491, %v6651
      %v6722 = vadd.f32 %v6492, %v6656
      %v6723 = vadd.f32 %v6493, %v6661
      %v6724 = vadd.f32 %v6494, %v6666
      %v6725 = vadd.f32 %v6495, %v6671
      %v6726 = vadd.f32 %v6496, %v6676
      %v6727 = vadd.f32 %v6497, %v6681
      %v6728 = vadd.f32 %v6498, %v6686
      %v6729 = vadd.f32 %v6499, %v6691
      %v6730 = vadd.f32 %v6500, %v6696
      %v6731 = vadd.f32 %v6501, %v6701
      %v6732 = vadd.f32 %v6502, %v6706
      %v6733 = vadd.f32 %v6503, %v6711
      %v6734 = vadd.f32 %v6504, %v6716
      %v6735 = vld [vmem:[#allocation3 + $0xd] sm:$0xff]
      %v6736 = vld [vmem:[#allocation3 + $0x15] sm:$0xff]
      %v6737 = vld [vmem:[#allocation3 + $0x1d] sm:$0xff]
      %v6738 = vld [vmem:[#allocation3 + $0x25] sm:$0xff]
      %v6739 = vld [vmem:[#allocation3 + $0x2d] sm:$0xff]
      %v6740 = vld [vmem:[#allocation3 + $0x35] sm:$0xff]
      %v6741 = vld [vmem:[#allocation3 + $0x3d] sm:$0xff]
      %v6742 = vld [vmem:[#allocation3 + $0x45] sm:$0xff]
      %v6743 = vld [vmem:[#allocation3 + $0x4d] sm:$0xff]
      %v6744 = vld [vmem:[#allocation3 + $0x55] sm:$0xff]
      %v6745 = vld [vmem:[#allocation3 + $0x5d] sm:$0xff]
      %v6746 = vld [vmem:[#allocation3 + $0x65] sm:$0xff]
      %v6747 = vld [vmem:[#allocation3 + $0x6d] sm:$0xff]
      %v6748 = vld [vmem:[#allocation3 + $0x75] sm:$0xff]
      %v6749 = vld [vmem:[#allocation3 + $0x7d] sm:$0xff]
      %v6750 = vld [vmem:[#allocation3 + $0x85] sm:$0xff]
      %s6751 = scalar_lea.vmem %s2, 416
      %v6752 = vld [vmem:[%s6751] sm:$0xff]
      %v6753 = vld [vmem:[%s6751 + $0x8] sm:$0xff]
      %v6754 = vld [vmem:[%s6751 + $0x10] sm:$0xff]
      %v6755 = vld [vmem:[%s6751 + $0x18] sm:$0xff]
      %v6757 = vsel %vm3742, %v6735, 0
      %v6760 = vsel %vm3742, %v6736, 0
      %v6763 = vsel %vm3742, %v6737, 0
      %v6766 = vsel %vm3742, %v6738, 0
      %v6769 = vsel %vm3742, %v6739, 0
      %v6772 = vsel %vm3742, %v6740, 0
      %v6775 = vsel %vm3742, %v6741, 0
      %v6778 = vsel %vm3742, %v6742, 0
      %v6781 = vsel %vm3742, %v6743, 0
      %v6784 = vsel %vm3742, %v6744, 0
      %v6787 = vsel %vm3742, %v6745, 0
      %v6790 = vsel %vm3742, %v6746, 0
      %v6793 = vsel %vm3742, %v6747, 0
      %v6796 = vsel %vm3742, %v6748, 0
      %v6799 = vsel %vm3742, %v6749, 0
      %v6802 = vsel %vm3742, %v6750, 0
      %6804 = vmatprep.subr.mxu0 0.0
      %6805 = vmatpush1.msra.mxu0 %v6752
      %6806 = vmatprep.subr.mxu0 0.0
      %6807 = vmatpush1.msra.mxu0 %v6753
      %6808 = vmatprep.subr.mxu0 0.0
      %6809 = vmatpush1.msra.mxu0 %v6754
      %6810 = vmatprep.subr.mxu0 0.0
      %6811 = vmatpush1.msra.mxu0 %v6755
      %6812 = vmatprep.subr.mxu0 0.0
      %6813 = vmatpush1.msra.mxu0 0.0
      %6814 = vmatprep.subr.mxu0 0.0
      %6815 = vmatpush1.msra.mxu0 0.0
      %6816 = vmatprep.subr.mxu0 0.0
      %6817 = vmatpush1.msra.mxu0 0.0
      %6818 = vmatprep.subr.mxu0 0.0
      %6819 = vmatpush1.msra.mxu0 0.0
      %6820 = vmatprep.subr.mxu0 0.0
      %6821 = vmatpush1.msra.mxu0 0.0
      %6822 = vmatprep.subr.mxu0 0.0
      %6823 = vmatpush1.msra.mxu0 0.0
      %6824 = vmatprep.subr.mxu0 0.0
      %6825 = vmatpush1.msra.mxu0 0.0
      %6826 = vmatprep.subr.mxu0 0.0
      %6827 = vmatpush1.msra.mxu0 0.0
      %6828 = vmatprep.subr.mxu0 0.0
      %6829 = vmatpush1.msra.mxu0 0.0
      %6830 = vmatprep.subr.mxu0 0.0
      %6831 = vmatpush1.msra.mxu0 0.0
      %6832 = vmatprep.subr.mxu0 0.0
      %6833 = vmatpush1.msra.mxu0 0.0
      %6834 = vmatprep.subr.mxu0 0.0
      %6835 = vmatpush1.msra.mxu0 0.0
      %6836 = vmatprep.subr.mxu0 0.0
      %6837 = vmatpush1.msra.mxu0 0.0
      %6838 = vmatprep.subr.mxu0 0.0
      %6839 = vmatpush1.msra.mxu0 0.0
      %6840 = vmatprep.subr.mxu0 0.0
      %6841 = vmatpush1.msra.mxu0 0.0
      %6842 = vmatprep.subr.mxu0 0.0
      %6843 = vmatpush1.msra.mxu0 0.0
      %6844 = vmatprep.subr.mxu0 0.0
      %6845 = vmatpush1.msra.mxu0 0.0
      %6846 = vmatprep.subr.mxu0 0.0
      %6847 = vmatpush1.msra.mxu0 0.0
      %6848 = vmatprep.subr.mxu0 0.0
      %6849 = vmatpush1.msra.mxu0 0.0
      %6850 = vmatprep.subr.mxu0 0.0
      %6851 = vmatpush1.msra.mxu0 0.0
      %6852 = vmatprep.subr.mxu0 0.0
      %6853 = vmatpush1.msra.mxu0 0.0
      %6854 = vmatprep.subr.mxu0 0.0
      %6855 = vmatpush1.msra.mxu0 0.0
      %6856 = vmatprep.subr.mxu0 0.0
      %6857 = vmatpush1.msra.mxu0 0.0
      %6858 = vmatprep.subr.mxu0 0.0
      %6859 = vmatpush1.msra.mxu0 0.0
      %6860 = vmatprep.subr.mxu0 0.0
      %6861 = vmatpush1.msra.mxu0 0.0
      %6862 = vmatprep.subr.mxu0 0.0
      %6863 = vmatpush1.msra.mxu0 0.0
      %6864 = vmatprep.subr.mxu0 0.0
      %6865 = vmatpush1.msra.mxu0 0.0
      %6866 = vmatprep.subr.mxu0 0.0
      %6867 = vmatpush1.msra.mxu0 0.0
      %6868 = vmatprep.mubr.f32.mxu0 0.0
      %6869 = vmatmul.mubr.f32.gmra.mrb[0].mxu0 %v6757
      %v6870 = vpop.f32.mrb[0].mxu0
      %v6871 = vadd.f32 0.0, %v6870
      %v6872 = vpop.f32.mrb[0].mxu0
      %6873 = vmatprep.mubr.f32.mxu0 0.0
      %6874 = vmatmul.mubr.f32.gmra.mrb[0].mxu0 %v6760
      %v6875 = vpop.f32.mrb[0].mxu0
      %v6876 = vadd.f32 0.0, %v6875
      %v6877 = vpop.f32.mrb[0].mxu0
      %6878 = vmatprep.mubr.f32.mxu0 0.0
      %6879 = vmatmul.mubr.f32.gmra.mrb[0].mxu0 %v6763
      %v6880 = vpop.f32.mrb[0].mxu0
      %v6881 = vadd.f32 0.0, %v6880
      %v6882 = vpop.f32.mrb[0].mxu0
      %6883 = vmatprep.mubr.f32.mxu0 0.0
      %6884 = vmatmul.mubr.f32.gmra.mrb[0].mxu0 %v6766
      %v6885 = vpop.f32.mrb[0].mxu0
      %v6886 = vadd.f32 0.0, %v6885
      %v6887 = vpop.f32.mrb[0].mxu0
      %6888 = vmatprep.mubr.f32.mxu0 0.0
      %6889 = vmatmul.mubr.f32.gmra.mrb[0].mxu0 %v6769
      %v6890 = vpop.f32.mrb[0].mxu0
      %v6891 = vadd.f32 0.0, %v6890
      %v6892 = vpop.f32.mrb[0].mxu0
      %6893 = vmatprep.mubr.f32.mxu0 0.0
      %6894 = vmatmul.mubr.f32.gmra.mrb[0].mxu0 %v6772
      %v6895 = vpop.f32.mrb[0].mxu0
      %v6896 = vadd.f32 0.0, %v6895
      %v6897 = vpop.f32.mrb[0].mxu0
      %6898 = vmatprep.mubr.f32.mxu0 0.0
      %6899 = vmatmul.mubr.f32.gmra.mrb[0].mxu0 %v6775
      %v6900 = vpop.f32.mrb[0].mxu0
      %v6901 = vadd.f32 0.0, %v6900
      %v6902 = vpop.f32.mrb[0].mxu0
      %6903 = vmatprep.mubr.f32.mxu0 0.0
      %6904 = vmatmul.mubr.f32.gmra.mrb[0].mxu0 %v6778
      %v6905 = vpop.f32.mrb[0].mxu0
      %v6906 = vadd.f32 0.0, %v6905
      %v6907 = vpop.f32.mrb[0].mxu0
      %6908 = vmatprep.mubr.f32.mxu0 0.0
      %6909 = vmatmul.mubr.f32.gmra.mrb[0].mxu0 %v6781
      %v6910 = vpop.f32.mrb[0].mxu0
      %v6911 = vadd.f32 0.0, %v6910
      %v6912 = vpop.f32.mrb[0].mxu0
      %6913 = vmatprep.mubr.f32.mxu0 0.0
      %6914 = vmatmul.mubr.f32.gmra.mrb[0].mxu0 %v6784
      %v6915 = vpop.f32.mrb[0].mxu0
      %v6916 = vadd.f32 0.0, %v6915
      %v6917 = vpop.f32.mrb[0].mxu0
      %6918 = vmatprep.mubr.f32.mxu0 0.0
      %6919 = vmatmul.mubr.f32.gmra.mrb[0].mxu0 %v6787
      %v6920 = vpop.f32.mrb[0].mxu0
      %v6921 = vadd.f32 0.0, %v6920
      %v6922 = vpop.f32.mrb[0].mxu0
      %6923 = vmatprep.mubr.f32.mxu0 0.0
      %6924 = vmatmul.mubr.f32.gmra.mrb[0].mxu0 %v6790
      %v6925 = vpop.f32.mrb[0].mxu0
      %v6926 = vadd.f32 0.0, %v6925
      %v6927 = vpop.f32.mrb[0].mxu0
      %6928 = vmatprep.mubr.f32.mxu0 0.0
      %6929 = vmatmul.mubr.f32.gmra.mrb[0].mxu0 %v6793
      %v6930 = vpop.f32.mrb[0].mxu0
      %v6931 = vadd.f32 0.0, %v6930
      %v6932 = vpop.f32.mrb[0].mxu0
      %6933 = vmatprep.mubr.f32.mxu0 0.0
      %6934 = vmatmul.mubr.f32.gmra.mrb[0].mxu0 %v6796
      %v6935 = vpop.f32.mrb[0].mxu0
      %v6936 = vadd.f32 0.0, %v6935
      %v6937 = vpop.f32.mrb[0].mxu0
      %6938 = vmatprep.mubr.f32.mxu0 0.0
      %6939 = vmatmul.mubr.f32.gmra.mrb[0].mxu0 %v6799
      %v6940 = vpop.f32.mrb[0].mxu0
      %v6941 = vadd.f32 0.0, %v6940
      %v6942 = vpop.f32.mrb[0].mxu0
      %6943 = vmatprep.mubr.f32.mxu0 0.0
      %6944 = vmatmul.mubr.f32.gmra.mrb[0].mxu0 %v6802
      %v6945 = vpop.f32.mrb[0].mxu0
      %v6946 = vadd.f32 0.0, %v6945
      %v6947 = vpop.f32.mrb[0].mxu0
      %6948 = vdwg.mxu0
      %v6949 = vadd.f32 %v6719, %v6871
      %v6950 = vadd.f32 %v6720, %v6876
      %v6951 = vadd.f32 %v6721, %v6881
      %v6952 = vadd.f32 %v6722, %v6886
      %v6953 = vadd.f32 %v6723, %v6891
      %v6954 = vadd.f32 %v6724, %v6896
      %v6955 = vadd.f32 %v6725, %v6901
      %v6956 = vadd.f32 %v6726, %v6906
      %v6957 = vadd.f32 %v6727, %v6911
      %v6958 = vadd.f32 %v6728, %v6916
      %v6959 = vadd.f32 %v6729, %v6921
      %v6960 = vadd.f32 %v6730, %v6926
      %v6961 = vadd.f32 %v6731, %v6931
      %v6962 = vadd.f32 %v6732, %v6936
      %v6963 = vadd.f32 %v6733, %v6941
      %v6964 = vadd.f32 %v6734, %v6946
      %v6965 = vld [vmem:[#allocation3 + $0xe] sm:$0xff]
      %v6966 = vld [vmem:[#allocation3 + $0x16] sm:$0xff]
      %v6967 = vld [vmem:[#allocation3 + $0x1e] sm:$0xff]
      %v6968 = vld [vmem:[#allocation3 + $0x26] sm:$0xff]
      %v6969 = vld [vmem:[#allocation3 + $0x2e] sm:$0xff]
      %v6970 = vld [vmem:[#allocation3 + $0x36] sm:$0xff]
      %v6971 = vld [vmem:[#allocation3 + $0x3e] sm:$0xff]
      %v6972 = vld [vmem:[#allocation3 + $0x46] sm:$0xff]
      %v6973 = vld [vmem:[#allocation3 + $0x4e] sm:$0xff]
      %v6974 = vld [vmem:[#allocation3 + $0x56] sm:$0xff]
      %v6975 = vld [vmem:[#allocation3 + $0x5e] sm:$0xff]
      %v6976 = vld [vmem:[#allocation3 + $0x66] sm:$0xff]
      %v6977 = vld [vmem:[#allocation3 + $0x6e] sm:$0xff]
      %v6978 = vld [vmem:[#allocation3 + $0x76] sm:$0xff]
      %v6979 = vld [vmem:[#allocation3 + $0x7e] sm:$0xff]
      %v6980 = vld [vmem:[#allocation3 + $0x86] sm:$0xff]
      %s6981 = scalar_lea.vmem %s2, 448
      %v6982 = vld [vmem:[%s6981] sm:$0xff]
      %v6983 = vld [vmem:[%s6981 + $0x8] sm:$0xff]
      %v6984 = vld [vmem:[%s6981 + $0x10] sm:$0xff]
      %v6985 = vld [vmem:[%s6981 + $0x18] sm:$0xff]
      %v6987 = vsel %vm3742, %v6965, 0
      %v6990 = vsel %vm3742, %v6966, 0
      %v6993 = vsel %vm3742, %v6967, 0
      %v6996 = vsel %vm3742, %v6968, 0
      %v6999 = vsel %vm3742, %v6969, 0
      %v7002 = vsel %vm3742, %v6970, 0
      %v7005 = vsel %vm3742, %v6971, 0
      %v7008 = vsel %vm3742, %v6972, 0
      %v7011 = vsel %vm3742, %v6973, 0
      %v7014 = vsel %vm3742, %v6974, 0
      %v7017 = vsel %vm3742, %v6975, 0
      %v7020 = vsel %vm3742, %v6976, 0
      %v7023 = vsel %vm3742, %v6977, 0
      %v7026 = vsel %vm3742, %v6978, 0
      %v7029 = vsel %vm3742, %v6979, 0
      %v7032 = vsel %vm3742, %v6980, 0
      %7034 = vmatprep.subr.mxu0 0.0
      %7035 = vmatpush1.msra.mxu0 %v6982
      %7036 = vmatprep.subr.mxu0 0.0
      %7037 = vmatpush1.msra.mxu0 %v6983
      %7038 = vmatprep.subr.mxu0 0.0
      %7039 = vmatpush1.msra.mxu0 %v6984
      %7040 = vmatprep.subr.mxu0 0.0
      %7041 = vmatpush1.msra.mxu0 %v6985
      %7042 = vmatprep.subr.mxu0 0.0
      %7043 = vmatpush1.msra.mxu0 0.0
      %7044 = vmatprep.subr.mxu0 0.0
      %7045 = vmatpush1.msra.mxu0 0.0
      %7046 = vmatprep.subr.mxu0 0.0
      %7047 = vmatpush1.msra.mxu0 0.0
      %7048 = vmatprep.subr.mxu0 0.0
      %7049 = vmatpush1.msra.mxu0 0.0
      %7050 = vmatprep.subr.mxu0 0.0
      %7051 = vmatpush1.msra.mxu0 0.0
      %7052 = vmatprep.subr.mxu0 0.0
      %7053 = vmatpush1.msra.mxu0 0.0
      %7054 = vmatprep.subr.mxu0 0.0
      %7055 = vmatpush1.msra.mxu0 0.0
      %7056 = vmatprep.subr.mxu0 0.0
      %7057 = vmatpush1.msra.mxu0 0.0
      %7058 = vmatprep.subr.mxu0 0.0
      %7059 = vmatpush1.msra.mxu0 0.0
      %7060 = vmatprep.subr.mxu0 0.0
      %7061 = vmatpush1.msra.mxu0 0.0
      %7062 = vmatprep.subr.mxu0 0.0
      %7063 = vmatpush1.msra.mxu0 0.0
      %7064 = vmatprep.subr.mxu0 0.0
      %7065 = vmatpush1.msra.mxu0 0.0
      %7066 = vmatprep.subr.mxu0 0.0
      %7067 = vmatpush1.msra.mxu0 0.0
      %7068 = vmatprep.subr.mxu0 0.0
      %7069 = vmatpush1.msra.mxu0 0.0
      %7070 = vmatprep.subr.mxu0 0.0
      %7071 = vmatpush1.msra.mxu0 0.0
      %7072 = vmatprep.subr.mxu0 0.0
      %7073 = vmatpush1.msra.mxu0 0.0
      %7074 = vmatprep.subr.mxu0 0.0
      %7075 = vmatpush1.msra.mxu0 0.0
      %7076 = vmatprep.subr.mxu0 0.0
      %7077 = vmatpush1.msra.mxu0 0.0
      %7078 = vmatprep.subr.mxu0 0.0
      %7079 = vmatpush1.msra.mxu0 0.0
      %7080 = vmatprep.subr.mxu0 0.0
      %7081 = vmatpush1.msra.mxu0 0.0
      %7082 = vmatprep.subr.mxu0 0.0
      %7083 = vmatpush1.msra.mxu0 0.0
      %7084 = vmatprep.subr.mxu0 0.0
      %7085 = vmatpush1.msra.mxu0 0.0
      %7086 = vmatprep.subr.mxu0 0.0
      %7087 = vmatpush1.msra.mxu0 0.0
      %7088 = vmatprep.subr.mxu0 0.0
      %7089 = vmatpush1.msra.mxu0 0.0
      %7090 = vmatprep.subr.mxu0 0.0
      %7091 = vmatpush1.msra.mxu0 0.0
      %7092 = vmatprep.subr.mxu0 0.0
      %7093 = vmatpush1.msra.mxu0 0.0
      %7094 = vmatprep.subr.mxu0 0.0
      %7095 = vmatpush1.msra.mxu0 0.0
      %7096 = vmatprep.subr.mxu0 0.0
      %7097 = vmatpush1.msra.mxu0 0.0
      %7098 = vmatprep.mubr.f32.mxu0 0.0
      %7099 = vmatmul.mubr.f32.gmra.mrb[0].mxu0 %v6987
      %v7100 = vpop.f32.mrb[0].mxu0
      %v7101 = vadd.f32 0.0, %v7100
      %v7102 = vpop.f32.mrb[0].mxu0
      %7103 = vmatprep.mubr.f32.mxu0 0.0
      %7104 = vmatmul.mubr.f32.gmra.mrb[0].mxu0 %v6990
      %v7105 = vpop.f32.mrb[0].mxu0
      %v7106 = vadd.f32 0.0, %v7105
      %v7107 = vpop.f32.mrb[0].mxu0
      %7108 = vmatprep.mubr.f32.mxu0 0.0
      %7109 = vmatmul.mubr.f32.gmra.mrb[0].mxu0 %v6993
      %v7110 = vpop.f32.mrb[0].mxu0
      %v7111 = vadd.f32 0.0, %v7110
      %v7112 = vpop.f32.mrb[0].mxu0
      %7113 = vmatprep.mubr.f32.mxu0 0.0
      %7114 = vmatmul.mubr.f32.gmra.mrb[0].mxu0 %v6996
      %v7115 = vpop.f32.mrb[0].mxu0
      %v7116 = vadd.f32 0.0, %v7115
      %v7117 = vpop.f32.mrb[0].mxu0
      %7118 = vmatprep.mubr.f32.mxu0 0.0
      %7119 = vmatmul.mubr.f32.gmra.mrb[0].mxu0 %v6999
      %v7120 = vpop.f32.mrb[0].mxu0
      %v7121 = vadd.f32 0.0, %v7120
      %v7122 = vpop.f32.mrb[0].mxu0
      %7123 = vmatprep.mubr.f32.mxu0 0.0
      %7124 = vmatmul.mubr.f32.gmra.mrb[0].mxu0 %v7002
      %v7125 = vpop.f32.mrb[0].mxu0
      %v7126 = vadd.f32 0.0, %v7125
      %v7127 = vpop.f32.mrb[0].mxu0
      %7128 = vmatprep.mubr.f32.mxu0 0.0
      %7129 = vmatmul.mubr.f32.gmra.mrb[0].mxu0 %v7005
      %v7130 = vpop.f32.mrb[0].mxu0
      %v7131 = vadd.f32 0.0, %v7130
      %v7132 = vpop.f32.mrb[0].mxu0
      %7133 = vmatprep.mubr.f32.mxu0 0.0
      %7134 = vmatmul.mubr.f32.gmra.mrb[0].mxu0 %v7008
      %v7135 = vpop.f32.mrb[0].mxu0
      %v7136 = vadd.f32 0.0, %v7135
      %v7137 = vpop.f32.mrb[0].mxu0
      %7138 = vmatprep.mubr.f32.mxu0 0.0
      %7139 = vmatmul.mubr.f32.gmra.mrb[0].mxu0 %v7011
      %v7140 = vpop.f32.mrb[0].mxu0
      %v7141 = vadd.f32 0.0, %v7140
      %v7142 = vpop.f32.mrb[0].mxu0
      %7143 = vmatprep.mubr.f32.mxu0 0.0
      %7144 = vmatmul.mubr.f32.gmra.mrb[0].mxu0 %v7014
      %v7145 = vpop.f32.mrb[0].mxu0
      %v7146 = vadd.f32 0.0, %v7145
      %v7147 = vpop.f32.mrb[0].mxu0
      %7148 = vmatprep.mubr.f32.mxu0 0.0
      %7149 = vmatmul.mubr.f32.gmra.mrb[0].mxu0 %v7017
      %v7150 = vpop.f32.mrb[0].mxu0
      %v7151 = vadd.f32 0.0, %v7150
      %v7152 = vpop.f32.mrb[0].mxu0
      %7153 = vmatprep.mubr.f32.mxu0 0.0
      %7154 = vmatmul.mubr.f32.gmra.mrb[0].mxu0 %v7020
      %v7155 = vpop.f32.mrb[0].mxu0
      %v7156 = vadd.f32 0.0, %v7155
      %v7157 = vpop.f32.mrb[0].mxu0
      %7158 = vmatprep.mubr.f32.mxu0 0.0
      %7159 = vmatmul.mubr.f32.gmra.mrb[0].mxu0 %v7023
      %v7160 = vpop.f32.mrb[0].mxu0
      %v7161 = vadd.f32 0.0, %v7160
      %v7162 = vpop.f32.mrb[0].mxu0
      %7163 = vmatprep.mubr.f32.mxu0 0.0
      %7164 = vmatmul.mubr.f32.gmra.mrb[0].mxu0 %v7026
      %v7165 = vpop.f32.mrb[0].mxu0
      %v7166 = vadd.f32 0.0, %v7165
      %v7167 = vpop.f32.mrb[0].mxu0
      %7168 = vmatprep.mubr.f32.mxu0 0.0
      %7169 = vmatmul.mubr.f32.gmra.mrb[0].mxu0 %v7029
      %v7170 = vpop.f32.mrb[0].mxu0
      %v7171 = vadd.f32 0.0, %v7170
      %v7172 = vpop.f32.mrb[0].mxu0
      %7173 = vmatprep.mubr.f32.mxu0 0.0
      %7174 = vmatmul.mubr.f32.gmra.mrb[0].mxu0 %v7032
      %v7175 = vpop.f32.mrb[0].mxu0
      %v7176 = vadd.f32 0.0, %v7175
      %v7177 = vpop.f32.mrb[0].mxu0
      %7178 = vdwg.mxu0
      %v7179 = vadd.f32 %v6949, %v7101
      %v7180 = vadd.f32 %v6950, %v7106
      %v7181 = vadd.f32 %v6951, %v7111
      %v7182 = vadd.f32 %v6952, %v7116
      %v7183 = vadd.f32 %v6953, %v7121
      %v7184 = vadd.f32 %v6954, %v7126
      %v7185 = vadd.f32 %v6955, %v7131
      %v7186 = vadd.f32 %v6956, %v7136
      %v7187 = vadd.f32 %v6957, %v7141
      %v7188 = vadd.f32 %v6958, %v7146
      %v7189 = vadd.f32 %v6959, %v7151
      %v7190 = vadd.f32 %v6960, %v7156
      %v7191 = vadd.f32 %v6961, %v7161
      %v7192 = vadd.f32 %v6962, %v7166
      %v7193 = vadd.f32 %v6963, %v7171
      %v7194 = vadd.f32 %v6964, %v7176
      %7211 = vrot.lane.b32.xlu0 %v7179, 16
      %v7212 = vpop.permute.xlu0 %7211
      %7213 = vrot.lane.b32.xlu0 %v7180, 16
      %v7214 = vpop.permute.xlu0 %7213
      %7215 = vrot.lane.b32.xlu0 %v7181, 16
      %v7216 = vpop.permute.xlu0 %7215
      %7217 = vrot.lane.b32.xlu0 %v7182, 16
      %v7218 = vpop.permute.xlu0 %7217
      %7219 = vrot.lane.b32.xlu0 %v7183, 16
      %v7220 = vpop.permute.xlu0 %7219
      %7221 = vrot.lane.b32.xlu0 %v7184, 16
      %v7222 = vpop.permute.xlu0 %7221
      %7223 = vrot.lane.b32.xlu0 %v7185, 16
      %v7224 = vpop.permute.xlu0 %7223
      %7225 = vrot.lane.b32.xlu0 %v7186, 16
      %v7226 = vpop.permute.xlu0 %7225
      %7227 = vrot.lane.b32.xlu0 %v7187, 16
      %v7228 = vpop.permute.xlu0 %7227
      %7229 = vrot.lane.b32.xlu0 %v7188, 16
      %v7230 = vpop.permute.xlu0 %7229
      %7231 = vrot.lane.b32.xlu0 %v7189, 16
      %v7232 = vpop.permute.xlu0 %7231
      %7233 = vrot.lane.b32.xlu0 %v7190, 16
      %v7234 = vpop.permute.xlu0 %7233
      %7235 = vrot.lane.b32.xlu0 %v7191, 16
      %v7236 = vpop.permute.xlu0 %7235
      %7237 = vrot.lane.b32.xlu0 %v7192, 16
      %v7238 = vpop.permute.xlu0 %7237
      %7239 = vrot.lane.b32.xlu0 %v7193, 16
      %v7240 = vpop.permute.xlu0 %7239
      %7241 = vrot.lane.b32.xlu0 %v7194, 16
      %v7242 = vpop.permute.xlu0 %7241
      %v7259 = vsel %vm257, %v241, %v7212
      %v7260 = vsel %vm257, %v242, %v7214
      %v7261 = vsel %vm257, %v243, %v7216
      %v7262 = vsel %vm257, %v244, %v7218
      %v7263 = vsel %vm257, %v245, %v7220
      %v7264 = vsel %vm257, %v246, %v7222
      %v7265 = vsel %vm257, %v247, %v7224
      %v7266 = vsel %vm257, %v248, %v7226
      %v7267 = vsel %vm257, %v249, %v7228
      %v7268 = vsel %vm257, %v250, %v7230
      %v7269 = vsel %vm257, %v251, %v7232
      %v7270 = vsel %vm257, %v252, %v7234
      %v7271 = vsel %vm257, %v253, %v7236
      %v7272 = vsel %vm257, %v254, %v7238
      %v7273 = vsel %vm257, %v255, %v7240
      %v7274 = vsel %vm257, %v256, %v7242
      %7275 = vst.msk [vmem:[%s224] sm:$0xff] %vm3742, %v7259
      %7276 = vst.msk [vmem:[%s224 + $0x8] sm:$0xff] %vm3742, %v7260
      %7277 = vst.msk [vmem:[%s224 + $0x10] sm:$0xff] %vm3742, %v7261
      %7278 = vst.msk [vmem:[%s224 + $0x18] sm:$0xff] %vm3742, %v7262
      %7279 = vst.msk [vmem:[%s224 + $0x20] sm:$0xff] %vm3742, %v7263
      %7280 = vst.msk [vmem:[%s224 + $0x28] sm:$0xff] %vm3742, %v7264
      %7281 = vst.msk [vmem:[%s224 + $0x30] sm:$0xff] %vm3742, %v7265
      %7282 = vst.msk [vmem:[%s224 + $0x38] sm:$0xff] %vm3742, %v7266
      %7283 = vst.msk [vmem:[%s224 + $0x40] sm:$0xff] %vm3742, %v7267
      %7284 = vst.msk [vmem:[%s224 + $0x48] sm:$0xff] %vm3742, %v7268
      %7285 = vst.msk [vmem:[%s224 + $0x50] sm:$0xff] %vm3742, %v7269
      %7286 = vst.msk [vmem:[%s224 + $0x58] sm:$0xff] %vm3742, %v7270
      %7287 = vst.msk [vmem:[%s224 + $0x60] sm:$0xff] %vm3742, %v7271
      %7288 = vst.msk [vmem:[%s224 + $0x68] sm:$0xff] %vm3742, %v7272
      %7289 = vst.msk [vmem:[%s224 + $0x70] sm:$0xff] %vm3742, %v7273
      %7290 = vst.msk [vmem:[%s224 + $0x78] sm:$0xff] %vm3742, %v7274
      %p7291 = scmp.lt.s32.totalorder %s16, 1
      %s7292 = scalar_select %p7291, %s16, 1
      %s7293 = smul.addr %s7292, 16
      %s7294 = smul.addr %s7293, 8
      %s7295 = scalar_lea.vmem %s5, %s7294
      // Predicated region
      $region41: #{encoder_layer_forward.1} parent=39 // pred_check
        %p7296 = pneg %p144
      $region42: #{encoder_layer_forward.1} parent=39 // pred_check_branch
        %7298 = sbr.rel (%p7296) target = $region44
      $region43: #{encoder_layer_forward.1} parent=39 // pred_region
        _
      $region44: #{encoder_layer_forward.1} parent=39 // pred_fallthru
        _
    $region40: #{encoder_layer_forward.1} parent=5 // pred_fallthru
      _
    %p7299 = scmp.le.s32.totalorder 2, %s11
    // Predicated region
    $region45: #{encoder_layer_forward.1} parent=5 // pred_check
      %p7300 = pneg %p7299
    $region46: #{encoder_layer_forward.1} parent=5 // pred_check_branch
      %7302 = sbr.rel (%p7300) target = $region48
    $region47: #{encoder_layer_forward.1} parent=5 // pred_region
      %s7303 = ssub.s32 %s11, 2
      // Predicated region
      $region49: #{encoder_layer_forward.1} parent=47 // pred_check
        %p7304 = pneg %p150
      $region50: #{encoder_layer_forward.1} parent=47 // pred_check_branch
        %7306 = sbr.rel (%p7304) target = $region52
      $region51: #{encoder_layer_forward.1} parent=47 // pred_region
        %p7307 = scmp.lt.s32.totalorder %s17, 1
        %s7308 = scalar_select %p7307, %s17, 1
        %s7309 = smul.addr %s7308, 16
        %s7310 = smul.addr %s7309, 8
        %s7311 = scalar_lea.vmem %s5, %s7310
      $region52: #{encoder_layer_forward.1} parent=47 // pred_fallthru
        _
    $region48: #{encoder_layer_forward.1} parent=5 // pred_fallthru
      _
  $region6: #{encoder_layer_forward.1} parent=0 // loop_footer
    %s15 = sadd.s32 1, %s11
  $region7: #{encoder_layer_forward.1} parent=0 // loop_footer_branch
    %10 = sbr.rel target = $region3
  $region8: #{encoder_layer_forward.1} parent=0 // loop_exit
    _

</llo_original>
